<compile_context>
chip_gen: v5e
topology: v5e:2x2
jax: 0.10.0
libtpu: 0.0.40
codegen_flags: <defaults>
</compile_context>

<pallas_src>
import functools

import jax
import jax.numpy as jnp
import numpy as np
from jax import lax
from jax.experimental import pallas as pl
from jax.experimental.pallas import tpu as pltpu

HIGHEST = lax.Precision.HIGHEST


def _round_up(x, m):
    return (x + m - 1) // m * m


def _pick_tile(hw, max_tile):
    """Largest row tile <= max_tile that keeps padding minimal (multiple of 8)."""
    n_tiles = max(1, (hw + max_tile - 1) // max_tile)
    tile = _round_up((hw + n_tiles - 1) // n_tiles, 8)
    return tile, tile * n_tiles


def _tpu_config():
    """Per-generation tiling / scoped-VMEM budget (review items: v5e/v6e/v7x)."""
    try:
        kind = jax.devices()[0].device_kind.lower()
    except Exception:  # pragma: no cover
        kind = ""
    if "v7" in kind:
        # v7x: 64 MiB physical VMEM per TensorCore -> conservative budget.
        return {"vmem": 32 * 1024 * 1024, "tile_hw": 512}
    if "v6" in kind or "v5e" in kind or ("v5" in kind and "lite" in kind):
        # v5e / v6e: 128 MiB VMEM -> bigger tiles for the mem-bound kernels.
        return {"vmem": 80 * 1024 * 1024, "tile_hw": 1024}
    # Unknown / older generations: stay conservative.
    return {"vmem": 32 * 1024 * 1024, "tile_hw": 512}


# ----------------------------------------------------------------------------
# Kernel 1: 1x1 conv as tiled matmul + fused BN affine + activation.
# Optionally emits a second accumulator output with the SE global-average-pool
# (mean over spatial rows), so the SE branch never re-reads the activations.
# ----------------------------------------------------------------------------
def _conv1x1_kernel(x_ref, w_ref, scale_ref, bias_ref, *out_refs,
                    act, want_pool, tile, hw, inv_hw):
    o_ref = out_refs[0]
    y = jnp.dot(x_ref[0], w_ref[...], preferred_element_type=jnp.float32)
    y = y * scale_ref[...] + bias_ref[...]
    if act == "relu":
        y = jnp.maximum(y, 0.0)
    o_ref[0] = y.astype(o_ref.dtype)

    if want_pool:
        pool_ref = out_refs[1]
        t = pl.program_id(1)

        @pl.when(t == 0)
        def _():
            pool_ref[...] = jnp.zeros(pool_ref.shape, pool_ref.dtype)

        # Mask any padded rows so they do not contribute to the mean.
        row = t * tile + lax.broadcasted_iota(jnp.int32, (tile, 1), 0)
        contrib = jnp.sum(jnp.where(row < hw, y, 0.0), axis=0, keepdims=True)
        pool_ref[0] += contrib * inv_hw


def conv1x1_bn_act(x_flat, p, act, compute_dtype, cfg, want_pool=False):
    """x_flat: (N, HW, Cin) -> (N, HW, Cout) [, pooled mean (N, 1, Cout) f32]."""
    N, HW, Cin = x_flat.shape
    Cout = p["w"].shape[-1]
    tile, HWp = _pick_tile(HW, cfg["tile_hw"])
    a = x_flat if HWp == HW else jnp.pad(x_flat, ((0, 0), (0, HWp - HW), (0, 0)))
    itm = jnp.dtype(compute_dtype).itemsize

    if want_pool:
        out_shape = (jax.ShapeDtypeStruct((N, HWp, Cout), compute_dtype),
                     jax.ShapeDtypeStruct((N, 1, Cout), jnp.float32))
        out_specs = (pl.BlockSpec((1, tile, Cout), lambda n, t: (n, t, 0)),
                     pl.BlockSpec((1, 1, Cout), lambda n, t: (n, 0, 0)))
        semantics = ("parallel", "arbitrary")   # pooled output revisited over t
    else:
        out_shape = jax.ShapeDtypeStruct((N, HWp, Cout), compute_dtype)
        out_specs = pl.BlockSpec((1, tile, Cout), lambda n, t: (n, t, 0))
        semantics = ("parallel", "parallel")

    res = pl.pallas_call(
        functools.partial(_conv1x1_kernel, act=act, want_pool=want_pool,
                          tile=tile, hw=HW, inv_hw=1.0 / HW),
        out_shape=out_shape,
        grid=(N, HWp // tile),
        in_specs=[pl.BlockSpec((1, tile, Cin), lambda n, t: (n, t, 0)),
                  pl.BlockSpec((Cin, Cout), lambda n, t: (0, 0)),
                  pl.BlockSpec((1, Cout), lambda n, t: (0, 0)),
                  pl.BlockSpec((1, Cout), lambda n, t: (0, 0))],
        out_specs=out_specs,
        compiler_params=pltpu.CompilerParams(
            dimension_semantics=semantics, vmem_limit_bytes=cfg["vmem"]),
        cost_estimate=pl.CostEstimate(
            flops=int(2 * N * HWp * Cin * Cout), transcendentals=0,
            bytes_accessed=int((N * HWp * (Cin + Cout) + Cin * Cout) * itm)),
    )(a, p["w"], p["scale"], p["bias"])

    out, pooled = (res if want_pool else (res, None))
    if HWp != HW:
        out = out[:, :HW]
    return out, pooled


# ----------------------------------------------------------------------------
# Kernel 2: 3x3 conv (stride 1/2, optional groups) with the nine taps
# accumulated in-kernel (no im2col), BN affine + activation fused.
#   stride 1 input block : (1, H+2, W+2, C)        (padded plane)
#   stride 2 input block : (1, 4, Hh, Wh, C)       (space-to-depth phase planes)
# ----------------------------------------------------------------------------
def _conv3x3_kernel(x_ref, w_ref, scale_ref, bias_ref, o_ref, *,
                    groups, act, stride, Ho, Wo):
    cin_g = w_ref.shape[-2]
    cout_g = w_ref.shape[-1]

    def tap_slab(kh, kw, g):
        c0 = g * cin_g
        if stride == 1:
            s = x_ref[0, kh:kh + Ho, kw:kw + Wo, c0:c0 + cin_g]
        else:
            ph = (kh % 2) * 2 + (kw % 2)
            s = x_ref[0, ph, kh // 2:kh // 2 + Ho, kw // 2:kw // 2 + Wo,
                      c0:c0 + cin_g]
        return s.reshape(Ho * Wo, cin_g)

    cols = []
    for g in range(groups):
        acc = jnp.zeros((Ho * Wo, cout_g), jnp.float32)
        for kh in range(3):
            for kw in range(3):
                acc = acc + jnp.dot(tap_slab(kh, kw, g),
                                    w_ref[(kh * 3 + kw) * groups + g],
                                    preferred_element_type=jnp.float32)
        cols.append(acc)
    y = cols[0] if groups == 1 else jnp.concatenate(cols, axis=-1)
    y = y * scale_ref[...] + bias_ref[...]
    if act == "relu":
        y = jnp.maximum(y, 0.0)
    o_ref[0] = y.astype(o_ref.dtype)


def conv3x3_bn_act(x_flat, p, H, W, stride, groups, act, compute_dtype, cfg):
    """x_flat: (N, H*W, C) -> (N, Ho*Wo, Cout).  padding=1, 3x3 kernel."""
    N, HW, C = x_flat.shape
    w = p["w"]                                    # (9*groups, cin_g, cout_g)
    cout_g = w.shape[-1]
    Cout = groups * cout_g
    Ho = (H - 1) // stride + 1
    Wo = (W - 1) // stride + 1

    xp = jnp.pad(x_flat.reshape(N, H, W, C), ((0, 0), (1, 1), (1, 1), (0, 0)))
    if stride == 2:
        # Space-to-depth into 4 phase planes so every in-kernel tap is a
        # static unit-stride slice (one extra XLA pass instead of a 2.25x
        # im2col).
        Hp, Wp = H + 2 + (H % 2), W + 2 + (W % 2)
        if (Hp, Wp) != (H + 2, W + 2):
            xp = jnp.pad(xp, ((0, 0), (0, Hp - H - 2), (0, Wp - W - 2), (0, 0)))
        Hh, Wh = Hp // 2, Wp // 2
        xin = xp.reshape(N, Hh, 2, Wh, 2, C).transpose(0, 2, 4, 1, 3, 5)
        xin = xin.reshape(N, 4, Hh, Wh, C)
        in_spec = pl.BlockSpec((1, 4, Hh, Wh, C), lambda n: (n, 0, 0, 0, 0))
    else:
        xin = xp
        in_spec = pl.BlockSpec((1, H + 2, W + 2, C), lambda n: (n, 0, 0, 0))

    # TODO(synk): for very large feature maps, add a haloed row-tile grid axis
    # (manual DMA) instead of one whole plane per batch step.
    itm = jnp.dtype(compute_dtype).itemsize
    out = pl.pallas_call(
        functools.partial(_conv3x3_kernel, groups=groups, act=act,
                          stride=stride, Ho=Ho, Wo=Wo),
        out_shape=jax.ShapeDtypeStruct((N, Ho * Wo, Cout), compute_dtype),
        grid=(N,),
        in_specs=[in_spec,
                  pl.BlockSpec(w.shape, lambda n: (0, 0, 0)),
                  pl.BlockSpec((1, Cout), lambda n: (0, 0)),
                  pl.BlockSpec((1, Cout), lambda n: (0, 0))],
        out_specs=pl.BlockSpec((1, Ho * Wo, Cout), lambda n: (n, 0, 0)),
        compiler_params=pltpu.CompilerParams(
            dimension_semantics=("parallel",), vmem_limit_bytes=cfg["vmem"]),
        cost_estimate=pl.CostEstimate(
            flops=int(2 * N * Ho * Wo * 9 * C * Cout // groups),
            transcendentals=0,
            bytes_accessed=int((xin.size + w.size + N * Ho * Wo * Cout) * itm)),
    )(xin, w, p["scale"], p["bias"])
    return out


# ----------------------------------------------------------------------------
# Kernel 3: SE FC block on the fused-pooled means: fc1 -> relu -> fc2 -> sigmoid
# ----------------------------------------------------------------------------
def _se_fc_kernel(p_ref, w1_ref, b1_ref, w2_ref, b2_ref, s_ref):
    p = p_ref[:, 0, :].astype(jnp.float32)                 # (N, C)
    n = p.shape[0]
    if n < 8:                                              # pad rows for MXU
        p = jnp.concatenate(
            [p, jnp.zeros((8 - n, p.shape[1]), jnp.float32)], axis=0)
    h = jnp.dot(p, w1_ref[...], preferred_element_type=jnp.float32) + b1_ref[...]
    h = jnp.maximum(h, 0.0)
    z = jnp.dot(h, w2_ref[...], preferred_element_type=jnp.float32) + b2_ref[...]
    s_ref[:, 0, :] = jax.nn.sigmoid(z[:n])


def se_fc_scale(pooled, se, cfg):
    """pooled: (N, 1, C) f32 channel means -> (N, 1, C) f32 sigmoid scales."""
    N, _, C = pooled.shape
    return pl.pallas_call(
        _se_fc_kernel,
        out_shape=jax.ShapeDtypeStruct((N, 1, C), jnp.float32),
        grid=(1,),
        in_specs=[pl.BlockSpec((N, 1, C), lambda i: (0, 0, 0)),
                  pl.BlockSpec((C, C), lambda i: (0, 0)),
                  pl.BlockSpec((1, C), lambda i: (0, 0)),
                  pl.BlockSpec((C, C), lambda i: (0, 0)),
                  pl.BlockSpec((1, C), lambda i: (0, 0))],
        out_specs=pl.BlockSpec((N, 1, C), lambda i: (0, 0, 0)),
        compiler_params=pltpu.CompilerParams(vmem_limit_bytes=cfg["vmem"]),
    )(pooled, se["w1"], se["b1"], se["w2"], se["b2"])


# ----------------------------------------------------------------------------
# Kernel 4a: fused tail for stride-1 blocks
#   out = concat(relu(proj), relu(x * se_scale + residual))  (single store)
# ----------------------------------------------------------------------------
def _merge_relu_kernel(*refs, has_res, has_se):
    i = 0
    proj_ref = refs[i]; i += 1
    x_ref = refs[i]; i += 1
    res_ref = None
    if has_res:
        res_ref = refs[i]; i += 1
    s_ref = None
    if has_se:
        s_ref = refs[i]; i += 1
    o_ref = refs[i]

    p = jnp.maximum(proj_ref[0].astype(jnp.float32), 0.0)
    x = x_ref[0].astype(jnp.float32)
    if has_se:
        x = x * s_ref[0]
    if has_res:
        x = x + res_ref[0].astype(jnp.float32)
    x = jnp.maximum(x, 0.0)
    o_ref[0] = jnp.concatenate([p, x], axis=-1).astype(o_ref.dtype)


def merge_concat_relu(proj, x, res, s, compute_dtype, cfg):
    N, HW, Cx = x.shape
    Cp = proj.shape[-1]
    tile, HWp = _pick_tile(HW, cfg["tile_hw"])

    def prep(t):
        return t if HWp == HW else jnp.pad(t, ((0, 0), (0, HWp - HW), (0, 0)))

    inputs = [prep(proj), prep(x)]
    in_specs = [pl.BlockSpec((1, tile, Cp), lambda n, t: (n, t, 0)),
                pl.BlockSpec((1, tile, Cx), lambda n, t: (n, t, 0))]
    if res is not None:
        inputs.append(prep(res))
        in_specs.append(pl.BlockSpec((1, tile, Cx), lambda n, t: (n, t, 0)))
    if s is not None:
        inputs.append(s)
        in_specs.append(pl.BlockSpec((1, 1, Cx), lambda n, t: (n, 0, 0)))

    out = pl.pallas_call(
        functools.partial(_merge_relu_kernel, has_res=res is not None,
                          has_se=s is not None),
        out_shape=jax.ShapeDtypeStruct((N, HWp, Cp + Cx), compute_dtype),
        grid=(N, HWp // tile),
        in_specs=in_specs,
        out_specs=pl.BlockSpec((1, tile, Cp + Cx), lambda n, t: (n, t, 0)),
        compiler_params=pltpu.CompilerParams(
            dimension_semantics=("parallel", "parallel"),
            vmem_limit_bytes=cfg["vmem"]),
    )(*inputs)
    return out[:, :HW] if HWp != HW else out


# ----------------------------------------------------------------------------
# Kernel 4b: fused tail for stride-2 blocks
#   out = relu(BN(conv1x1_down(concat(relu(proj), relu(x * se_scale)))))
#   The concat is folded into the matmul by splitting the down-weight rows.
# ----------------------------------------------------------------------------
def _merge_down_kernel(*refs, has_se):
    i = 0
    proj_ref = refs[i]; i += 1
    x_ref = refs[i]; i += 1
    s_ref = None
    if has_se:
        s_ref = refs[i]; i += 1
    wp_ref, wx_ref, scale_ref, bias_ref, o_ref = refs[i:i + 5]

    p = jnp.maximum(proj_ref[0].astype(jnp.float32), 0.0)
    x = x_ref[0].astype(jnp.float32)
    if has_se:
        x = x * s_ref[0]
    x = jnp.maximum(x, 0.0)
    cdt = wp_ref.dtype
    y = jnp.dot(p.astype(cdt), wp_ref[...], preferred_element_type=jnp.float32)
    y = y + jnp.dot(x.astype(cdt), wx_ref[...], preferred_element_type=jnp.float32)
    y = y * scale_ref[...] + bias_ref[...]
    o_ref[0] = jnp.maximum(y, 0.0).astype(o_ref.dtype)


def merge_concat_down_relu(proj, x, s, down, compute_dtype, cfg):
    N, HW, Cx = x.shape
    Cp = proj.shape[-1]
    Cd = down["wp"].shape[-1]
    tile, HWp = _pick_tile(HW, cfg["tile_hw"])

    def prep(t):
        return t if HWp == HW else jnp.pad(t, ((0, 0), (0, HWp - HW), (0, 0)))

    inputs = [prep(proj), prep(x)]
    in_specs = [pl.BlockSpec((1, tile, Cp), lambda n, t: (n, t, 0)),
                pl.BlockSpec((1, tile, Cx), lambda n, t: (n, t, 0))]
    if s is not None:
        inputs.append(s)
        in_specs.append(pl.BlockSpec((1, 1, Cx), lambda n, t: (n, 0, 0)))
    inputs += [down["wp"], down["wx"], down["scale"], down["bias"]]
    in_specs += [pl.BlockSpec((Cp, Cd), lambda n, t: (0, 0)),
                 pl.BlockSpec((Cx, Cd), lambda n, t: (0, 0)),
                 pl.BlockSpec((1, Cd), lambda n, t: (0, 0)),
                 pl.BlockSpec((1, Cd), lambda n, t: (0, 0))]

    out = pl.pallas_call(
        functools.partial(_merge_down_kernel, has_se=s is not None),
        out_shape=jax.ShapeDtypeStruct((N, HWp, Cd), compute_dtype),
        grid=(N, HWp // tile),
        in_specs=in_specs,
        out_specs=pl.BlockSpec((1, tile, Cd), lambda n, t: (n, t, 0)),
        compiler_params=pltpu.CompilerParams(
            dimension_semantics=("parallel", "parallel"),
            vmem_limit_bytes=cfg["vmem"]),
    )(*inputs)
    return out[:, :HW] if HWp != HW else out


# ----------------------------------------------------------------------------
# One-time parameter preparation (all layout transforms hoisted out of forward)
# ----------------------------------------------------------------------------
def prepare_params(params, *, stride, groups, has_proj, has_se, compute_dtype):
    cdt = compute_dtype

    def prep_1x1(p):
        cout, cin = p["w"].shape[0], p["w"].shape[1]
        return dict(
            w=jnp.transpose(p["w"].reshape(cout, cin), (1, 0)).astype(cdt),
            scale=p["scale"].reshape(1, cout).astype(jnp.float32),
            bias=p["bias"].reshape(1, cout).astype(jnp.float32))

    def prep_3x3(p, g):
        cout, cin_g = p["w"].shape[0], p["w"].shape[1]
        cout_g = cout // g
        w = p["w"].reshape(g, cout_g, cin_g, 3, 3)
        w = jnp.transpose(w, (3, 4, 0, 2, 1)).reshape(9 * g, cin_g, cout_g)
        return dict(w=w.astype(cdt),
                    scale=p["scale"].reshape(1, cout).astype(jnp.float32),
                    bias=p["bias"].reshape(1, cout).astype(jnp.float32))

    prep = {"bm1": prep_1x1(params["bm1"]),
            "bm2": prep_3x3(params["bm2"], groups),
            "bm3": prep_1x1(params["bm3"])}
    if has_proj:
        prep["proj"] = prep_3x3(params["proj"], 1)
    if stride == 2:
        p = params["down"]
        cd, ctot = p["w"].shape[0], p["w"].shape[1]
        cp = ctot // 2
        wm = jnp.transpose(p["w"].reshape(cd, ctot), (1, 0)).astype(cdt)
        prep["down"] = dict(wp=wm[:cp], wx=wm[cp:],
                            scale=p["scale"].reshape(1, cd).astype(jnp.float32),
                            bias=p["bias"].reshape(1, cd).astype(jnp.float32))
    if has_se:
        c = params["se_w1"].shape[0]
        prep["se"] = dict(
            w1=jnp.transpose(params["se_w1"]).astype(jnp.float32),
            b1=params["se_b1"].reshape(1, c).astype(jnp.float32),
            w2=jnp.transpose(params["se_w2"]).astype(jnp.float32),
            b2=params["se_b2"].reshape(1, c).astype(jnp.float32))
    return prep


# ----------------------------------------------------------------------------
# ShuffleV2Block forward (Pallas path)
# ----------------------------------------------------------------------------
def shuffle_v2_block_forward(prep, old_x_nchw, *, stride, groups, has_proj,
                             has_se, compute_dtype=jnp.bfloat16, cfg=None):
    assert stride in (1, 2)
    assert has_proj or stride == 1, "stride-2 blocks require a projection branch"
    cfg = cfg or _tpu_config()

    N, C2, H, W = old_x_nchw.shape
    # Single NCHW->NHWC transpose + even/odd channel deinterleave (the PyTorch
    # channel_shuffle) at the block boundary; all intermediates stay flat
    # (N, H*W, C) in the compute dtype.
    # TODO(synk): fold the even/odd deinterleave into the consuming conv
    # weights / an in-kernel bf16-pair trick to drop the two strided copies.
    x_nhwc = jnp.transpose(old_x_nchw, (0, 2, 3, 1)).astype(compute_dtype)
    proj = x_nhwc[..., 0::2].reshape(N, H * W, C2 // 2)
    x = x_nhwc[..., 1::2].reshape(N, H * W, C2 // 2)
    x_proj = x

    if has_proj:
        proj = conv3x3_bn_act(proj, prep["proj"], H, W, stride, 1, "none",
                              compute_dtype, cfg)

    x, _ = conv1x1_bn_act(x, prep["bm1"], "relu", compute_dtype, cfg)
    x = conv3x3_bn_act(x, prep["bm2"], H, W, stride, groups, "relu",
                       compute_dtype, cfg)
    x, pooled = conv1x1_bn_act(x, prep["bm3"], "none", compute_dtype, cfg,
                               want_pool=has_se)

    s = se_fc_scale(pooled, prep["se"], cfg) if has_se else None

    if stride == 1:
        out = merge_concat_relu(proj, x, None if has_proj else x_proj, s,
                                compute_dtype, cfg)
    else:
        out = merge_concat_down_relu(proj, x, s, prep["down"], compute_dtype, cfg)

    Ho = (H - 1) // stride + 1
    Wo = (W - 1) // stride + 1
    out = out.reshape(N, Ho, Wo, out.shape[-1])
    # Up-cast only at the block boundary (merge kernels write compute_dtype).
    return jnp.transpose(out, (0, 3, 1, 2)).astype(jnp.float32)


# ----------------------------------------------------------------------------
# Deterministic parameter construction (BN folded to scale/bias)
# ----------------------------------------------------------------------------
def make_params(key, in_ch, out_ch, stride, groups, has_proj, has_se):
    def conv_bn(k, cin, cout, ksize, g=1):
        k1, k2, k3, k4, k5 = jax.random.split(k, 5)
        w = jax.random.normal(k1, (cout, cin // g, ksize, ksize), jnp.float32) * 0.1
        gamma = jax.random.uniform(k2, (cout,), jnp.float32, 0.5, 1.5)
        beta = jax.random.normal(k3, (cout,), jnp.float32) * 0.1
        mean = jax.random.normal(k4, (cout,), jnp.float32) * 0.1
        var = jax.random.uniform(k5, (cout,), jnp.float32, 0.5, 1.5)
        scale = gamma / jnp.sqrt(var + 1e-9)
        bias = beta - mean * scale
        return dict(w=w, scale=scale, bias=bias)

    keys = jax.random.split(key, 9)
    params = {
        "bm1": conv_bn(keys[0], in_ch, out_ch, 1),
        "bm2": conv_bn(keys[1], out_ch, out_ch, 3, g=groups),
        "bm3": conv_bn(keys[2], out_ch, out_ch, 1),
    }
    if has_proj:
        params["proj"] = conv_bn(keys[3], in_ch, out_ch, 3)
    if stride == 2:
        params["down"] = conv_bn(keys[4], out_ch * 2, out_ch * 2, 1)
    if has_se:
        params["se_w1"] = jax.random.normal(keys[5], (out_ch, out_ch), jnp.float32) * 0.1
        params["se_b1"] = jax.random.normal(keys[6], (out_ch,), jnp.float32) * 0.1
        params["se_w2"] = jax.random.normal(keys[7], (out_ch, out_ch), jnp.float32) * 0.1
        params["se_b2"] = jax.random.normal(keys[8], (out_ch,), jnp.float32) * 0.1
    return params


# ----------------------------------------------------------------------------
# Pure-JAX reference (NCHW, lax.conv) for correctness checking
# ----------------------------------------------------------------------------
def _ref_conv_bn(x, w, scale, bias, stride, padding, groups, relu):
    y = lax.conv_general_dilated(
        x, w, (stride, stride), [(padding, padding)] * 2,
        dimension_numbers=("NCHW", "OIHW", "NCHW"),
        feature_group_count=groups, precision=HIGHEST)
    y = y * scale[None, :, None, None] + bias[None, :, None, None]
    return jnp.maximum(y, 0.0) if relu else y


def reference_forward(params, old_x, *, stride, groups, has_proj, has_se):
    proj = old_x[:, 0::2]
    x = old_x[:, 1::2]
    x_proj = x
    if has_proj:
        p = params["proj"]
        proj = _ref_conv_bn(proj, p["w"], p["scale"], p["bias"], stride, 1, 1, False)
    p = params["bm1"]
    x = _ref_conv_bn(x, p["w"], p["scale"], p["bias"], 1, 0, 1, True)
    p = params["bm2"]
    x = _ref_conv_bn(x, p["w"], p["scale"], p["bias"], stride, 1, groups, True)
    p = params["bm3"]
    x = _ref_conv_bn(x, p["w"], p["scale"], p["bias"], 1, 0, 1, False)
    if has_se:
        pooled = jnp.mean(x, axis=(2, 3))
        h = jnp.maximum(
            jnp.dot(pooled, params["se_w1"].T, precision=HIGHEST) + params["se_b1"], 0.0)
        s = jax.nn.sigmoid(
            jnp.dot(h, params["se_w2"].T, precision=HIGHEST) + params["se_b2"])
        x = x * s[:, :, None, None]
    if not has_proj:
        x = x_proj + x
    x = jnp.maximum(jnp.concatenate([proj, x], axis=1), 0.0)
    if stride == 2:
        p = params["down"]
        x = _ref_conv_bn(x, p["w"], p["scale"], p["bias"], 1, 0, 1, True)
    return x


# ----------------------------------------------------------------------------
if __name__ == "__main__":
    key = jax.random.PRNGKey(0)
    kx, kp1, kp2, kp3 = jax.random.split(key, 4)
    # old_x: NCHW, num_channels = 2 * in_channels (channel shuffle halves it)
    x = jax.random.normal(kx, (2, 16, 16, 16), jnp.float32)
    tcfg = _tpu_config()

    configs = [
        # stride-1 residual block (no proj, no SE)
        dict(in_ch=8, out_ch=8, stride=1, groups=2, has_proj=False, has_se=False),
        # stride-2 downsample block with projection, SE and the trailing `down` conv
        dict(in_ch=8, out_ch=16, stride=2, groups=4, has_proj=True, has_se=True),
        # stride-1 block with projection and SE (no residual)
        dict(in_ch=8, out_ch=8, stride=1, groups=1, has_proj=True, has_se=True),
    ]
    for blk, kparam in zip(configs, (kp1, kp2, kp3)):
        params = make_params(kparam, **blk)
        kwargs = dict(stride=blk["stride"], groups=blk["groups"],
                      has_proj=blk["has_proj"], has_se=blk["has_se"])
        ref = np.asarray(reference_forward(params, x, **kwargs))

        for cdt, tol in ((jnp.float32, 1e-2), (jnp.bfloat16, 6e-2)):
            prep = prepare_params(params, compute_dtype=cdt, **kwargs)
            fwd = jax.jit(functools.partial(
                shuffle_v2_block_forward, compute_dtype=cdt, cfg=tcfg, **kwargs))
            out = jax.block_until_ready(fwd(prep, x))
            np.testing.assert_allclose(np.asarray(out), ref, rtol=tol, atol=tol)

    print("KERNEL_OK")
</pallas_src>

<mosaic_0001>
module attributes {stable_mosaic.version = 11 : i64} {
  func.func @_conv1x1_kernel(%arg0: i32, %arg1: i32, %arg2: memref<1x256x8xf32, #tpu.memory_space<vmem>>, %arg3: memref<8x8xf32, #tpu.memory_space<vmem>>, %arg4: memref<1x8xf32, #tpu.memory_space<vmem>>, %arg5: memref<1x8xf32, #tpu.memory_space<vmem>>, %arg6: memref<1x256x8xf32, #tpu.memory_space<vmem>>) attributes {dimension_semantics = [#tpu.dimension_semantics<parallel>, #tpu.dimension_semantics<parallel>], iteration_bounds = array<i64: 2, 1>, scalar_prefetch = 0 : i64, scratch_operands = 0 : i64, tpu.core_type = #tpu.core_type<tc>, window_params = [{transform_indices = @transform_0, window_bounds = array<i64: 1, 256, 8>}, {pipeline_mode = #tpu.pipeline_mode<synchronous>, transform_indices = @transform_1, window_bounds = array<i64: 8, 8>}, {pipeline_mode = #tpu.pipeline_mode<synchronous>, transform_indices = @transform_2, window_bounds = array<i64: 1, 8>}, {pipeline_mode = #tpu.pipeline_mode<synchronous>, transform_indices = @transform_3, window_bounds = array<i64: 1, 8>}, {transform_indices = @transform_4, window_bounds = array<i64: 1, 256, 8>}]} {
    %c0 = arith.constant 0 : index
    %c0_0 = arith.constant 0 : index
    %c0_1 = arith.constant 0 : index
    %0 = vector.load %arg2[%c0, %c0_0, %c0_1] : memref<1x256x8xf32, #tpu.memory_space<vmem>>, vector<1x256x8xf32>
    %1 = vector.shape_cast %0 : vector<1x256x8xf32> to vector<256x8xf32>
    %c0_2 = arith.constant 0 : index
    %c0_3 = arith.constant 0 : index
    %2 = vector.load %arg3[%c0_2, %c0_3] : memref<8x8xf32, #tpu.memory_space<vmem>>, vector<8x8xf32>
    %cst = arith.constant dense<0.000000e+00> : vector<256x8xf32>
    %3 = tpu.matmul %1, %2, %cst {dimension_numbers = #tpu.dot_dimension_numbers<[1], [0], [0], [1], [0, 0, 1, 1], [], []>} : vector<256x8xf32>, vector<8x8xf32>, vector<256x8xf32> -> vector<256x8xf32>
    %c0_4 = arith.constant 0 : index
    %c0_5 = arith.constant 0 : index
    %4 = vector.load %arg4[%c0_4, %c0_5] : memref<1x8xf32, #tpu.memory_space<vmem>>, vector<1x8xf32>
    %5 = vector.broadcast %4 : vector<1x8xf32> to vector<256x8xf32>
    %6 = arith.mulf %3, %5 : vector<256x8xf32>
    %c0_6 = arith.constant 0 : index
    %c0_7 = arith.constant 0 : index
    %7 = vector.load %arg5[%c0_6, %c0_7] : memref<1x8xf32, #tpu.memory_space<vmem>>, vector<1x8xf32>
    %8 = vector.broadcast %7 : vector<1x8xf32> to vector<256x8xf32>
    %9 = arith.addf %6, %8 : vector<256x8xf32>
    %cst_8 = arith.constant 0.000000e+00 : f32
    %10 = vector.broadcast %cst_8 : f32 to vector<256x8xf32>
    %11 = arith.maximumf %9, %10 : vector<256x8xf32>
    %c0_9 = arith.constant 0 : index
    %c0_10 = arith.constant 0 : index
    %c0_11 = arith.constant 0 : index
    %12 = vector.load %arg6[%c0_9, %c0_10, %c0_11] : memref<1x256x8xf32, #tpu.memory_space<vmem>>, vector<1x256x8xf32>
    %13 = vector.shape_cast %12 : vector<1x256x8xf32> to vector<256x8xf32>
    %14 = vector.shape_cast %11 : vector<256x8xf32> to vector<1x256x8xf32>
    tpu.vector_store %arg6[%c0_9, %c0_10, %c0_11], %14 {strides = array<i32>} : memref<1x256x8xf32, #tpu.memory_space<vmem>>, vector<1x256x8xf32>,
    return
  }
  func.func @transform_0(%arg0: i32, %arg1: i32) -> (i32, i32, i32) {
    %c0_i32 = arith.constant 0 : i32
    %c0_i32_0 = arith.constant 0 : i32
    return %arg0, %arg1, %c0_i32 : i32, i32, i32
  }
  func.func @transform_1(%arg0: i32, %arg1: i32) -> (i32, i32) {
    %c0_i32 = arith.constant 0 : i32
    %c0_i32_0 = arith.constant 0 : i32
    %c0_i32_1 = arith.constant 0 : i32
    return %c0_i32, %c0_i32_0 : i32, i32
  }
  func.func @transform_2(%arg0: i32, %arg1: i32) -> (i32, i32) {
    %c0_i32 = arith.constant 0 : i32
    %c0_i32_0 = arith.constant 0 : i32
    %c0_i32_1 = arith.constant 0 : i32
    return %c0_i32, %c0_i32_0 : i32, i32
  }
  func.func @transform_3(%arg0: i32, %arg1: i32) -> (i32, i32) {
    %c0_i32 = arith.constant 0 : i32
    %c0_i32_0 = arith.constant 0 : i32
    %c0_i32_1 = arith.constant 0 : i32
    return %c0_i32, %c0_i32_0 : i32, i32
  }
  func.func @transform_4(%arg0: i32, %arg1: i32) -> (i32, i32, i32) {
    %c0_i32 = arith.constant 0 : i32
    %c0_i32_0 = arith.constant 0 : i32
    return %arg0, %arg1, %c0_i32 : i32, i32, i32
  }
}

module attributes {stable_mosaic.version = 11 : i64} {
  func.func @_conv1x1_kernel(%arg0: i32, %arg1: i32, %arg2: memref<1x256x8xf32, #tpu.memory_space<vmem>>, %arg3: memref<8x8xf32, #tpu.memory_space<vmem>>, %arg4: memref<1x8xf32, #tpu.memory_space<vmem>>, %arg5: memref<1x8xf32, #tpu.memory_space<vmem>>, %arg6: memref<1x256x8xf32, #tpu.memory_space<vmem>>) attributes {dimension_semantics = [#tpu.dimension_semantics<parallel>, #tpu.dimension_semantics<parallel>], iteration_bounds = array<i64: 2, 1>, scalar_prefetch = 0 : i64, scratch_operands = 0 : i64, tpu.core_type = #tpu.core_type<tc>, window_params = [{transform_indices = @transform_0, window_bounds = array<i64: 1, 256, 8>}, {pipeline_mode = #tpu.pipeline_mode<synchronous>, transform_indices = @transform_1, window_bounds = array<i64: 8, 8>}, {pipeline_mode = #tpu.pipeline_mode<synchronous>, transform_indices = @transform_2, window_bounds = array<i64: 1, 8>}, {pipeline_mode = #tpu.pipeline_mode<synchronous>, transform_indices = @transform_3, window_bounds = array<i64: 1, 8>}, {transform_indices = @transform_4, window_bounds = array<i64: 1, 256, 8>}]} {
    %c0 = arith.constant 0 : index
    %c0_0 = arith.constant 0 : index
    %c0_1 = arith.constant 0 : index
    %0 = vector.load %arg2[%c0, %c0_0, %c0_1] : memref<1x256x8xf32, #tpu.memory_space<vmem>>, vector<1x256x8xf32>
    %1 = vector.shape_cast %0 : vector<1x256x8xf32> to vector<256x8xf32>
    %c0_2 = arith.constant 0 : index
    %c0_3 = arith.constant 0 : index
    %2 = vector.load %arg3[%c0_2, %c0_3] : memref<8x8xf32, #tpu.memory_space<vmem>>, vector<8x8xf32>
    %cst = arith.constant dense<0.000000e+00> : vector<256x8xf32>
    %3 = tpu.matmul %1, %2, %cst {dimension_numbers = #tpu.dot_dimension_numbers<[1], [0], [0], [1], [0, 0, 1, 1], [], []>} : vector<256x8xf32>, vector<8x8xf32>, vector<256x8xf32> -> vector<256x8xf32>
    %c0_4 = arith.constant 0 : index
    %c0_5 = arith.constant 0 : index
    %4 = vector.load %arg4[%c0_4, %c0_5] : memref<1x8xf32, #tpu.memory_space<vmem>>, vector<1x8xf32>
    %5 = vector.broadcast %4 : vector<1x8xf32> to vector<256x8xf32>
    %6 = arith.mulf %3, %5 : vector<256x8xf32>
    %c0_6 = arith.constant 0 : index
    %c0_7 = arith.constant 0 : index
    %7 = vector.load %arg5[%c0_6, %c0_7] : memref<1x8xf32, #tpu.memory_space<vmem>>, vector<1x8xf32>
    %8 = vector.broadcast %7 : vector<1x8xf32> to vector<256x8xf32>
    %9 = arith.addf %6, %8 : vector<256x8xf32>
    %c0_8 = arith.constant 0 : index
    %c0_9 = arith.constant 0 : index
    %c0_10 = arith.constant 0 : index
    %10 = vector.load %arg6[%c0_8, %c0_9, %c0_10] : memref<1x256x8xf32, #tpu.memory_space<vmem>>, vector<1x256x8xf32>
    %11 = vector.shape_cast %10 : vector<1x256x8xf32> to vector<256x8xf32>
    %12 = vector.shape_cast %9 : vector<256x8xf32> to vector<1x256x8xf32>
    tpu.vector_store %arg6[%c0_8, %c0_9, %c0_10], %12 {strides = array<i32>} : memref<1x256x8xf32, #tpu.memory_space<vmem>>, vector<1x256x8xf32>,
    return
  }
  func.func @transform_0(%arg0: i32, %arg1: i32) -> (i32, i32, i32) {
    %c0_i32 = arith.constant 0 : i32
    %c0_i32_0 = arith.constant 0 : i32
    return %arg0, %arg1, %c0_i32 : i32, i32, i32
  }
  func.func @transform_1(%arg0: i32, %arg1: i32) -> (i32, i32) {
    %c0_i32 = arith.constant 0 : i32
    %c0_i32_0 = arith.constant 0 : i32
    %c0_i32_1 = arith.constant 0 : i32
    return %c0_i32, %c0_i32_0 : i32, i32
  }
  func.func @transform_2(%arg0: i32, %arg1: i32) -> (i32, i32) {
    %c0_i32 = arith.constant 0 : i32
    %c0_i32_0 = arith.constant 0 : i32
    %c0_i32_1 = arith.constant 0 : i32
    return %c0_i32, %c0_i32_0 : i32, i32
  }
  func.func @transform_3(%arg0: i32, %arg1: i32) -> (i32, i32) {
    %c0_i32 = arith.constant 0 : i32
    %c0_i32_0 = arith.constant 0 : i32
    %c0_i32_1 = arith.constant 0 : i32
    return %c0_i32, %c0_i32_0 : i32, i32
  }
  func.func @transform_4(%arg0: i32, %arg1: i32) -> (i32, i32, i32) {
    %c0_i32 = arith.constant 0 : i32
    %c0_i32_0 = arith.constant 0 : i32
    return %arg0, %arg1, %c0_i32 : i32, i32, i32
  }
}

module attributes {stable_mosaic.version = 11 : i64} {
  func.func @_conv3x3_kernel(%arg0: i32, %arg1: memref<1x18x18x8xf32, #tpu.memory_space<vmem>>, %arg2: memref<18x4x4xf32, #tpu.memory_space<vmem>>, %arg3: memref<1x8xf32, #tpu.memory_space<vmem>>, %arg4: memref<1x8xf32, #tpu.memory_space<vmem>>, %arg5: memref<1x256x8xf32, #tpu.memory_space<vmem>>) attributes {dimension_semantics = [#tpu.dimension_semantics<parallel>], iteration_bounds = array<i64: 2>, scalar_prefetch = 0 : i64, scratch_operands = 0 : i64, tpu.core_type = #tpu.core_type<tc>, window_params = [{transform_indices = @transform_0, window_bounds = array<i64: 1, 18, 18, 8>}, {pipeline_mode = #tpu.pipeline_mode<synchronous>, transform_indices = @transform_1, window_bounds = array<i64: 18, 4, 4>}, {pipeline_mode = #tpu.pipeline_mode<synchronous>, transform_indices = @transform_2, window_bounds = array<i64: 1, 8>}, {pipeline_mode = #tpu.pipeline_mode<synchronous>, transform_indices = @transform_3, window_bounds = array<i64: 1, 8>}, {transform_indices = @transform_4, window_bounds = array<i64: 1, 256, 8>}]} {
    %cst = arith.constant 0.000000e+00 : f32
    %0 = vector.broadcast %cst : f32 to vector<256x4xf32>
    %c0 = arith.constant 0 : index
    %c0_0 = arith.constant 0 : index
    %c0_1 = arith.constant 0 : index
    %c0_2 = arith.constant 0 : index
    %1 = vector.load %arg1[%c0, %c0_0, %c0_1, %c0_2] : memref<1x18x18x8xf32, #tpu.memory_space<vmem>>, vector<1x16x16x4xf32>
    %2 = vector.shape_cast %1 : vector<1x16x16x4xf32> to vector<16x16x4xf32>
    %3 = vector.shape_cast %2 : vector<16x16x4xf32> to vector<256x4xf32>
    %c0_3 = arith.constant 0 : index
    %c0_4 = arith.constant 0 : index
    %c0_5 = arith.constant 0 : index
    %4 = vector.load %arg2[%c0_3, %c0_4, %c0_5] : memref<18x4x4xf32, #tpu.memory_space<vmem>>, vector<1x4x4xf32>
    %5 = vector.shape_cast %4 : vector<1x4x4xf32> to vector<4x4xf32>
    %cst_6 = arith.constant dense<0.000000e+00> : vector<256x4xf32>
    %6 = tpu.matmul %3, %5, %cst_6 {dimension_numbers = #tpu.dot_dimension_numbers<[1], [0], [0], [1], [0, 0, 1, 1], [], []>} : vector<256x4xf32>, vector<4x4xf32>, vector<256x4xf32> -> vector<256x4xf32>
    %7 = arith.addf %0, %6 : vector<256x4xf32>
    %c0_7 = arith.constant 0 : index
    %c0_8 = arith.constant 0 : index
    %c1 = arith.constant 1 : index
    %c0_9 = arith.constant 0 : index
    %8 = vector.load %arg1[%c0_7, %c0_8, %c1, %c0_9] : memref<1x18x18x8xf32, #tpu.memory_space<vmem>>, vector<1x16x16x4xf32>
    %9 = vector.shape_cast %8 : vector<1x16x16x4xf32> to vector<16x16x4xf32>
    %10 = vector.shape_cast %9 : vector<16x16x4xf32> to vector<256x4xf32>
    %c2 = arith.constant 2 : index
    %c0_10 = arith.constant 0 : index
    %c0_11 = arith.constant 0 : index
    %11 = vector.load %arg2[%c2, %c0_10, %c0_11] : memref<18x4x4xf32, #tpu.memory_space<vmem>>, vector<1x4x4xf32>
    %12 = vector.shape_cast %11 : vector<1x4x4xf32> to vector<4x4xf32>
    %cst_12 = arith.constant dense<0.000000e+00> : vector<256x4xf32>
    %13 = tpu.matmul %10, %12, %cst_12 {dimension_numbers = #tpu.dot_dimension_numbers<[1], [0], [0], [1], [0, 0, 1, 1], [], []>} : vector<256x4xf32>, vector<4x4xf32>, vector<256x4xf32> -> vector<256x4xf32>
    %14 = arith.addf %7, %13 : vector<256x4xf32>
    %c0_13 = arith.constant 0 : index
    %c0_14 = arith.constant 0 : index
    %c2_15 = arith.constant 2 : index
    %c0_16 = arith.constant 0 : index
    %15 = vector.load %arg1[%c0_13, %c0_14, %c2_15, %c0_16] : memref<1x18x18x8xf32, #tpu.memory_space<vmem>>, vector<1x16x16x4xf32>
    %16 = vector.shape_cast %15 : vector<1x16x16x4xf32> to vector<16x16x4xf32>
    %17 = vector.shape_cast %16 : vector<16x16x4xf32> to vector<256x4xf32>
    %c4 = arith.constant 4 : index
    %c0_17 = arith.constant 0 : index
    %c0_18 = arith.constant 0 : index
    %18 = vector.load %arg2[%c4, %c0_17, %c0_18] : memref<18x4x4xf32, #tpu.memory_space<vmem>>, vector<1x4x4xf32>
    %19 = vector.shape_cast %18 : vector<1x4x4xf32> to vector<4x4xf32>
    %cst_19 = arith.constant dense<0.000000e+00> : vector<256x4xf32>
    %20 = tpu.matmul %17, %19, %cst_19 {dimension_numbers = #tpu.dot_dimension_numbers<[1], [0], [0], [1], [0, 0, 1, 1], [], []>} : vector<256x4xf32>, vector<4x4xf32>, vector<256x4xf32> -> vector<256x4xf32>
    %21 = arith.addf %14, %20 : vector<256x4xf32>
    %c0_20 = arith.constant 0 : index
    %c1_21 = arith.constant 1 : index
    %c0_22 = arith.constant 0 : index
    %c0_23 = arith.constant 0 : index
    %22 = vector.load %arg1[%c0_20, %c1_21, %c0_22, %c0_23] : memref<1x18x18x8xf32, #tpu.memory_space<vmem>>, vector<1x16x16x4xf32>
    %23 = vector.shape_cast %22 : vector<1x16x16x4xf32> to vector<16x16x4xf32>
    %24 = vector.shape_cast %23 : vector<16x16x4xf32> to vector<256x4xf32>
    %c6 = arith.constant 6 : index
    %c0_24 = arith.constant 0 : index
    %c0_25 = arith.constant 0 : index
    %25 = vector.load %arg2[%c6, %c0_24, %c0_25] : memref<18x4x4xf32, #tpu.memory_space<vmem>>, vector<1x4x4xf32>
    %26 = vector.shape_cast %25 : vector<1x4x4xf32> to vector<4x4xf32>
    %cst_26 = arith.constant dense<0.000000e+00> : vector<256x4xf32>
    %27 = tpu.matmul %24, %26, %cst_26 {dimension_numbers = #tpu.dot_dimension_numbers<[1], [0], [0], [1], [0, 0, 1, 1], [], []>} : vector<256x4xf32>, vector<4x4xf32>, vector<256x4xf32> -> vector<256x4xf32>
    %28 = arith.addf %21, %27 : vector<256x4xf32>
    %c0_27 = arith.constant 0 : index
    %c1_28 = arith.constant 1 : index
    %c1_29 = arith.constant 1 : index
    %c0_30 = arith.constant 0 : index
    %29 = vector.load %arg1[%c0_27, %c1_28, %c1_29, %c0_30] : memref<1x18x18x8xf32, #tpu.memory_space<vmem>>, vector<1x16x16x4xf32>
    %30 = vector.shape_cast %29 : vector<1x16x16x4xf32> to vector<16x16x4xf32>
    %31 = vector.shape_cast %30 : vector<16x16x4xf32> to vector<256x4xf32>
    %c8 = arith.constant 8 : index
    %c0_31 = arith.constant 0 : index
    %c0_32 = arith.constant 0 : index
    %32 = vector.load %arg2[%c8, %c0_31, %c0_32] : memref<18x4x4xf32, #tpu.memory_space<vmem>>, vector<1x4x4xf32>
    %33 = vector.shape_cast %32 : vector<1x4x4xf32> to vector<4x4xf32>
    %cst_33 = arith.constant dense<0.000000e+00> : vector<256x4xf32>
    %34 = tpu.matmul %31, %33, %cst_33 {dimension_numbers = #tpu.dot_dimension_numbers<[1], [0], [0], [1], [0, 0, 1, 1], [], []>} : vector<256x4xf32>, vector<4x4xf32>, vector<256x4xf32> -> vector<256x4xf32>
    %35 = arith.addf %28, %34 : vector<256x4xf32>
    %c0_34 = arith.constant 0 : index
    %c1_35 = arith.constant 1 : index
    %c2_36 = arith.constant 2 : index
    %c0_37 = arith.constant 0 : index
    %36 = vector.load %arg1[%c0_34, %c1_35, %c2_36, %c0_37] : memref<1x18x18x8xf32, #tpu.memory_space<vmem>>, vector<1x16x16x4xf32>
    %37 = vector.shape_cast %36 : vector<1x16x16x4xf32> to vector<16x16x4xf32>
    %38 = vector.shape_cast %37 : vector<16x16x4xf32> to vector<256x4xf32>
    %c10 = arith.constant 10 : index
    %c0_38 = arith.constant 0 : index
    %c0_39 = arith.constant 0 : index
    %39 = vector.load %arg2[%c10, %c0_38, %c0_39] : memref<18x4x4xf32, #tpu.memory_space<vmem>>, vector<1x4x4xf32>
    %40 = vector.shape_cast %39 : vector<1x4x4xf32> to vector<4x4xf32>
    %cst_40 = arith.constant dense<0.000000e+00> : vector<256x4xf32>
    %41 = tpu.matmul %38, %40, %cst_40 {dimension_numbers = #tpu.dot_dimension_numbers<[1], [0], [0], [1], [0, 0, 1, 1], [], []>} : vector<256x4xf32>, vector<4x4xf32>, vector<256x4xf32> -> vector<256x4xf32>
    %42 = arith.addf %35, %41 : vector<256x4xf32>
    %c0_41 = arith.constant 0 : index
    %c2_42 = arith.constant 2 : index
    %c0_43 = arith.constant 0 : index
    %c0_44 = arith.constant 0 : index
    %43 = vector.load %arg1[%c0_41, %c2_42, %c0_43, %c0_44] : memref<1x18x18x8xf32, #tpu.memory_space<vmem>>, vector<1x16x16x4xf32>
    %44 = vector.shape_cast %43 : vector<1x16x16x4xf32> to vector<16x16x4xf32>
    %45 = vector.shape_cast %44 : vector<16x16x4xf32> to vector<256x4xf32>
    %c12 = arith.constant 12 : index
    %c0_45 = arith.constant 0 : index
    %c0_46 = arith.constant 0 : index
    %46 = vector.load %arg2[%c12, %c0_45, %c0_46] : memref<18x4x4xf32, #tpu.memory_space<vmem>>, vector<1x4x4xf32>
    %47 = vector.shape_cast %46 : vector<1x4x4xf32> to vector<4x4xf32>
    %cst_47 = arith.constant dense<0.000000e+00> : vector<256x4xf32>
    %48 = tpu.matmul %45, %47, %cst_47 {dimension_numbers = #tpu.dot_dimension_numbers<[1], [0], [0], [1], [0, 0, 1, 1], [], []>} : vector<256x4xf32>, vector<4x4xf32>, vector<256x4xf32> -> vector<256x4xf32>
    %49 = arith.addf %42, %48 : vector<256x4xf32>
    %c0_48 = arith.constant 0 : index
    %c2_49 = arith.constant 2 : index
    %c1_50 = arith.constant 1 : index
    %c0_51 = arith.constant 0 : index
    %50 = vector.load %arg1[%c0_48, %c2_49, %c1_50, %c0_51] : memref<1x18x18x8xf32, #tpu.memory_space<vmem>>, vector<1x16x16x4xf32>
    %51 = vector.shape_cast %50 : vector<1x16x16x4xf32> to vector<16x16x4xf32>
    %52 = vector.shape_cast %51 : vector<16x16x4xf32> to vector<256x4xf32>
    %c14 = arith.constant 14 : index
    %c0_52 = arith.constant 0 : index
    %c0_53 = arith.constant 0 : index
    %53 = vector.load %arg2[%c14, %c0_52, %c0_53] : memref<18x4x4xf32, #tpu.memory_space<vmem>>, vector<1x4x4xf32>
    %54 = vector.shape_cast %53 : vector<1x4x4xf32> to vector<4x4xf32>
    %cst_54 = arith.constant dense<0.000000e+00> : vector<256x4xf32>
    %55 = tpu.matmul %52, %54, %cst_54 {dimension_numbers = #tpu.dot_dimension_numbers<[1], [0], [0], [1], [0, 0, 1, 1], [], []>} : vector<256x4xf32>, vector<4x4xf32>, vector<256x4xf32> -> vector<256x4xf32>
    %56 = arith.addf %49, %55 : vector<256x4xf32>
    %c0_55 = arith.constant 0 : index
    %c2_56 = arith.constant 2 : index
    %c2_57 = arith.constant 2 : index
    %c0_58 = arith.constant 0 : index
    %57 = vector.load %arg1[%c0_55, %c2_56, %c2_57, %c0_58] : memref<1x18x18x8xf32, #tpu.memory_space<vmem>>, vector<1x16x16x4xf32>
    %58 = vector.shape_cast %57 : vector<1x16x16x4xf32> to vector<16x16x4xf32>
    %59 = vector.shape_cast %58 : vector<16x16x4xf32> to vector<256x4xf32>
    %c16 = arith.constant 16 : index
    %c0_59 = arith.constant 0 : index
    %c0_60 = arith.constant 0 : index
    %60 = vector.load %arg2[%c16, %c0_59, %c0_60] : memref<18x4x4xf32, #tpu.memory_space<vmem>>, vector<1x4x4xf32>
    %61 = vector.shape_cast %60 : vector<1x4x4xf32> to vector<4x4xf32>
    %cst_61 = arith.constant dense<0.000000e+00> : vector<256x4xf32>
    %62 = tpu.matmul %59, %61, %cst_61 {dimension_numbers = #tpu.dot_dimension_numbers<[1], [0], [0], [1], [0, 0, 1, 1], [], []>} : vector<256x4xf32>, vector<4x4xf32>, vector<256x4xf32> -> vector<256x4xf32>
    %63 = arith.addf %56, %62 : vector<256x4xf32>
    %cst_62 = arith.constant 0.000000e+00 : f32
    %64 = vector.broadcast %cst_62 : f32 to vector<256x4xf32>
    %c0_63 = arith.constant 0 : index
    %c0_64 = arith.constant 0 : index
    %c0_65 = arith.constant 0 : index
    %c4_66 = arith.constant 4 : index
    %65 = vector.load %arg1[%c0_63, %c0_64, %c0_65, %c4_66] : memref<1x18x18x8xf32, #tpu.memory_space<vmem>>, vector<1x16x16x4xf32>
    %66 = vector.shape_cast %65 : vector<1x16x16x4xf32> to vector<16x16x4xf32>
    %67 = vector.shape_cast %66 : vector<16x16x4xf32> to vector<256x4xf32>
    %c1_67 = arith.constant 1 : index
    %c0_68 = arith.constant 0 : index
    %c0_69 = arith.constant 0 : index
    %68 = vector.load %arg2[%c1_67, %c0_68, %c0_69] : memref<18x4x4xf32, #tpu.memory_space<vmem>>, vector<1x4x4xf32>
    %69 = vector.shape_cast %68 : vector<1x4x4xf32> to vector<4x4xf32>
    %cst_70 = arith.constant dense<0.000000e+00> : vector<256x4xf32>
    %70 = tpu.matmul %67, %69, %cst_70 {dimension_numbers = #tpu.dot_dimension_numbers<[1], [0], [0], [1], [0, 0, 1, 1], [], []>} : vector<256x4xf32>, vector<4x4xf32>, vector<256x4xf32> -> vector<256x4xf32>
    %71 = arith.addf %64, %70 : vector<256x4xf32>
    %c0_71 = arith.constant 0 : index
    %c0_72 = arith.constant 0 : index
    %c1_73 = arith.constant 1 : index
    %c4_74 = arith.constant 4 : index
    %72 = vector.load %arg1[%c0_71, %c0_72, %c1_73, %c4_74] : memref<1x18x18x8xf32, #tpu.memory_space<vmem>>, vector<1x16x16x4xf32>
    %73 = vector.shape_cast %72 : vector<1x16x16x4xf32> to vector<16x16x4xf32>
    %74 = vector.shape_cast %73 : vector<16x16x4xf32> to vector<256x4xf32>
    %c3 = arith.constant 3 : index
    %c0_75 = arith.constant 0 : index
    %c0_76 = arith.constant 0 : index
    %75 = vector.load %arg2[%c3, %c0_75, %c0_76] : memref<18x4x4xf32, #tpu.memory_space<vmem>>, vector<1x4x4xf32>
    %76 = vector.shape_cast %75 : vector<1x4x4xf32> to vector<4x4xf32>
    %cst_77 = arith.constant dense<0.000000e+00> : vector<256x4xf32>
    %77 = tpu.matmul %74, %76, %cst_77 {dimension_numbers = #tpu.dot_dimension_numbers<[1], [0], [0], [1], [0, 0, 1, 1], [], []>} : vector<256x4xf32>, vector<4x4xf32>, vector<256x4xf32> -> vector<256x4xf32>
    %78 = arith.addf %71, %77 : vector<256x4xf32>
    %c0_78 = arith.constant 0 : index
    %c0_79 = arith.constant 0 : index
    %c2_80 = arith.constant 2 : index
    %c4_81 = arith.constant 4 : index
    %79 = vector.load %arg1[%c0_78, %c0_79, %c2_80, %c4_81] : memref<1x18x18x8xf32, #tpu.memory_space<vmem>>, vector<1x16x16x4xf32>
    %80 = vector.shape_cast %79 : vector<1x16x16x4xf32> to vector<16x16x4xf32>
    %81 = vector.shape_cast %80 : vector<16x16x4xf32> to vector<256x4xf32>
    %c5 = arith.constant 5 : index
    %c0_82 = arith.constant 0 : index
    %c0_83 = arith.constant 0 : index
    %82 = vector.load %arg2[%c5, %c0_82, %c0_83] : memref<18x4x4xf32, #tpu.memory_space<vmem>>, vector<1x4x4xf32>
    %83 = vector.shape_cast %82 : vector<1x4x4xf32> to vector<4x4xf32>
    %cst_84 = arith.constant dense<0.000000e+00> : vector<256x4xf32>
    %84 = tpu.matmul %81, %83, %cst_84 {dimension_numbers = #tpu.dot_dimension_numbers<[1], [0], [0], [1], [0, 0, 1, 1], [], []>} : vector<256x4xf32>, vector<4x4xf32>, vector<256x4xf32> -> vector<256x4xf32>
    %85 = arith.addf %78, %84 : vector<256x4xf32>
    %c0_85 = arith.constant 0 : index
    %c1_86 = arith.constant 1 : index
    %c0_87 = arith.constant 0 : index
    %c4_88 = arith.constant 4 : index
    %86 = vector.load %arg1[%c0_85, %c1_86, %c0_87, %c4_88] : memref<1x18x18x8xf32, #tpu.memory_space<vmem>>, vector<1x16x16x4xf32>
    %87 = vector.shape_cast %86 : vector<1x16x16x4xf32> to vector<16x16x4xf32>
    %88 = vector.shape_cast %87 : vector<16x16x4xf32> to vector<256x4xf32>
    %c7 = arith.constant 7 : index
    %c0_89 = arith.constant 0 : index
    %c0_90 = arith.constant 0 : index
    %89 = vector.load %arg2[%c7, %c0_89, %c0_90] : memref<18x4x4xf32, #tpu.memory_space<vmem>>, vector<1x4x4xf32>
    %90 = vector.shape_cast %89 : vector<1x4x4xf32> to vector<4x4xf32>
    %cst_91 = arith.constant dense<0.000000e+00> : vector<256x4xf32>
    %91 = tpu.matmul %88, %90, %cst_91 {dimension_numbers = #tpu.dot_dimension_numbers<[1], [0], [0], [1], [0, 0, 1, 1], [], []>} : vector<256x4xf32>, vector<4x4xf32>, vector<256x4xf32> -> vector<256x4xf32>
    %92 = arith.addf %85, %91 : vector<256x4xf32>
    %c0_92 = arith.constant 0 : index
    %c1_93 = arith.constant 1 : index
    %c1_94 = arith.constant 1 : index
    %c4_95 = arith.constant 4 : index
    %93 = vector.load %arg1[%c0_92, %c1_93, %c1_94, %c4_95] : memref<1x18x18x8xf32, #tpu.memory_space<vmem>>, vector<1x16x16x4xf32>
    %94 = vector.shape_cast %93 : vector<1x16x16x4xf32> to vector<16x16x4xf32>
    %95 = vector.shape_cast %94 : vector<16x16x4xf32> to vector<256x4xf32>
    %c9 = arith.constant 9 : index
    %c0_96 = arith.constant 0 : index
    %c0_97 = arith.constant 0 : index
    %96 = vector.load %arg2[%c9, %c0_96, %c0_97] : memref<18x4x4xf32, #tpu.memory_space<vmem>>, vector<1x4x4xf32>
    %97 = vector.shape_cast %96 : vector<1x4x4xf32> to vector<4x4xf32>
    %cst_98 = arith.constant dense<0.000000e+00> : vector<256x4xf32>
    %98 = tpu.matmul %95, %97, %cst_98 {dimension_numbers = #tpu.dot_dimension_numbers<[1], [0], [0], [1], [0, 0, 1, 1], [], []>} : vector<256x4xf32>, vector<4x4xf32>, vector<256x4xf32> -> vector<256x4xf32>
    %99 = arith.addf %92, %98 : vector<256x4xf32>
    %c0_99 = arith.constant 0 : index
    %c1_100 = arith.constant 1 : index
    %c2_101 = arith.constant 2 : index
    %c4_102 = arith.constant 4 : index
    %100 = vector.load %arg1[%c0_99, %c1_100, %c2_101, %c4_102] : memref<1x18x18x8xf32, #tpu.memory_space<vmem>>, vector<1x16x16x4xf32>
    %101 = vector.shape_cast %100 : vector<1x16x16x4xf32> to vector<16x16x4xf32>
    %102 = vector.shape_cast %101 : vector<16x16x4xf32> to vector<256x4xf32>
    %c11 = arith.constant 11 : index
    %c0_103 = arith.constant 0 : index
    %c0_104 = arith.constant 0 : index
    %103 = vector.load %arg2[%c11, %c0_103, %c0_104] : memref<18x4x4xf32, #tpu.memory_space<vmem>>, vector<1x4x4xf32>
    %104 = vector.shape_cast %103 : vector<1x4x4xf32> to vector<4x4xf32>
    %cst_105 = arith.constant dense<0.000000e+00> : vector<256x4xf32>
    %105 = tpu.matmul %102, %104, %cst_105 {dimension_numbers = #tpu.dot_dimension_numbers<[1], [0], [0], [1], [0, 0, 1, 1], [], []>} : vector<256x4xf32>, vector<4x4xf32>, vector<256x4xf32> -> vector<256x4xf32>
    %106 = arith.addf %99, %105 : vector<256x4xf32>
    %c0_106 = arith.constant 0 : index
    %c2_107 = arith.constant 2 : index
    %c0_108 = arith.constant 0 : index
    %c4_109 = arith.constant 4 : index
    %107 = vector.load %arg1[%c0_106, %c2_107, %c0_108, %c4_109] : memref<1x18x18x8xf32, #tpu.memory_space<vmem>>, vector<1x16x16x4xf32>
    %108 = vector.shape_cast %107 : vector<1x16x16x4xf32> to vector<16x16x4xf32>
    %109 = vector.shape_cast %108 : vector<16x16x4xf32> to vector<256x4xf32>
    %c13 = arith.constant 13 : index
    %c0_110 = arith.constant 0 : index
    %c0_111 = arith.constant 0 : index
    %110 = vector.load %arg2[%c13, %c0_110, %c0_111] : memref<18x4x4xf32, #tpu.memory_space<vmem>>, vector<1x4x4xf32>
    %111 = vector.shape_cast %110 : vector<1x4x4xf32> to vector<4x4xf32>
    %cst_112 = arith.constant dense<0.000000e+00> : vector<256x4xf32>
    %112 = tpu.matmul %109, %111, %cst_112 {dimension_numbers = #tpu.dot_dimension_numbers<[1], [0], [0], [1], [0, 0, 1, 1], [], []>} : vector<256x4xf32>, vector<4x4xf32>, vector<256x4xf32> -> vector<256x4xf32>
    %113 = arith.addf %106, %112 : vector<256x4xf32>
    %c0_113 = arith.constant 0 : index
    %c2_114 = arith.constant 2 : index
    %c1_115 = arith.constant 1 : index
    %c4_116 = arith.constant 4 : index
    %114 = vector.load %arg1[%c0_113, %c2_114, %c1_115, %c4_116] : memref<1x18x18x8xf32, #tpu.memory_space<vmem>>, vector<1x16x16x4xf32>
    %115 = vector.shape_cast %114 : vector<1x16x16x4xf32> to vector<16x16x4xf32>
    %116 = vector.shape_cast %115 : vector<16x16x4xf32> to vector<256x4xf32>
    %c15 = arith.constant 15 : index
    %c0_117 = arith.constant 0 : index
    %c0_118 = arith.constant 0 : index
    %117 = vector.load %arg2[%c15, %c0_117, %c0_118] : memref<18x4x4xf32, #tpu.memory_space<vmem>>, vector<1x4x4xf32>
    %118 = vector.shape_cast %117 : vector<1x4x4xf32> to vector<4x4xf32>
    %cst_119 = arith.constant dense<0.000000e+00> : vector<256x4xf32>
    %119 = tpu.matmul %116, %118, %cst_119 {dimension_numbers = #tpu.dot_dimension_numbers<[1], [0], [0], [1], [0, 0, 1, 1], [], []>} : vector<256x4xf32>, vector<4x4xf32>, vector<256x4xf32> -> vector<256x4xf32>
    %120 = arith.addf %113, %119 : vector<256x4xf32>
    %c0_120 = arith.constant 0 : index
    %c2_121 = arith.constant 2 : index
    %c2_122 = arith.constant 2 : index
    %c4_123 = arith.constant 4 : index
    %121 = vector.load %arg1[%c0_120, %c2_121, %c2_122, %c4_123] : memref<1x18x18x8xf32, #tpu.memory_space<vmem>>, vector<1x16x16x4xf32>
    %122 = vector.shape_cast %121 : vector<1x16x16x4xf32> to vector<16x16x4xf32>
    %123 = vector.shape_cast %122 : vector<16x16x4xf32> to vector<256x4xf32>
    %c17 = arith.constant 17 : index
    %c0_124 = arith.constant 0 : index
    %c0_125 = arith.constant 0 : index
    %124 = vector.load %arg2[%c17, %c0_124, %c0_125] : memref<18x4x4xf32, #tpu.memory_space<vmem>>, vector<1x4x4xf32>
    %125 = vector.shape_cast %124 : vector<1x4x4xf32> to vector<4x4xf32>
    %cst_126 = arith.constant dense<0.000000e+00> : vector<256x4xf32>
    %126 = tpu.matmul %123, %125, %cst_126 {dimension_numbers = #tpu.dot_dimension_numbers<[1], [0], [0], [1], [0, 0, 1, 1], [], []>} : vector<256x4xf32>, vector<4x4xf32>, vector<256x4xf32> -> vector<256x4xf32>
    %127 = arith.addf %120, %126 : vector<256x4xf32>
    %128 = tpu.concatenate %63, %127 in 1 : vector<256x4xf32>, vector<256x4xf32> -> vector<256x8xf32>
    %c0_127 = arith.constant 0 : index
    %c0_128 = arith.constant 0 : index
    %129 = vector.load %arg3[%c0_127, %c0_128] : memref<1x8xf32, #tpu.memory_space<vmem>>, vector<1x8xf32>
    %130 = vector.broadcast %129 : vector<1x8xf32> to vector<256x8xf32>
    %131 = arith.mulf %128, %130 : vector<256x8xf32>
    %c0_129 = arith.constant 0 : index
    %c0_130 = arith.constant 0 : index
    %132 = vector.load %arg4[%c0_129, %c0_130] : memref<1x8xf32, #tpu.memory_space<vmem>>, vector<1x8xf32>
    %133 = vector.broadcast %132 : vector<1x8xf32> to vector<256x8xf32>
    %134 = arith.addf %131, %133 : vector<256x8xf32>
    %cst_131 = arith.constant 0.000000e+00 : f32
    %135 = vector.broadcast %cst_131 : f32 to vector<256x8xf32>
    %136 = arith.maximumf %134, %135 : vector<256x8xf32>
    %c0_132 = arith.constant 0 : index
    %c0_133 = arith.constant 0 : index
    %c0_134 = arith.constant 0 : index
    %137 = vector.load %arg5[%c0_132, %c0_133, %c0_134] : memref<1x256x8xf32, #tpu.memory_space<vmem>>, vector<1x256x8xf32>
    %138 = vector.shape_cast %137 : vector<1x256x8xf32> to vector<256x8xf32>
    %139 = vector.shape_cast %136 : vector<256x8xf32> to vector<1x256x8xf32>
    tpu.vector_store %arg5[%c0_132, %c0_133, %c0_134], %139 {strides = array<i32>} : memref<1x256x8xf32, #tpu.memory_space<vmem>>, vector<1x256x8xf32>,
    return
  }
  func.func @transform_0(%arg0: i32) -> (i32, i32, i32, i32) {
    %c0_i32 = arith.constant 0 : i32
    %c0_i32_0 = arith.constant 0 : i32
    %c0_i32_1 = arith.constant 0 : i32
    %c0_i32_2 = arith.constant 0 : i32
    return %arg0, %c0_i32, %c0_i32_0, %c0_i32_1 : i32, i32, i32, i32
  }
  func.func @transform_1(%arg0: i32) -> (i32, i32, i32) {
    %c0_i32 = arith.constant 0 : i32
    %c0_i32_0 = arith.constant 0 : i32
    %c0_i32_1 = arith.constant 0 : i32
    %c0_i32_2 = arith.constant 0 : i32
    return %c0_i32, %c0_i32_0, %c0_i32_1 : i32, i32, i32
  }
  func.func @transform_2(%arg0: i32) -> (i32, i32) {
    %c0_i32 = arith.constant 0 : i32
    %c0_i32_0 = arith.constant 0 : i32
    %c0_i32_1 = arith.constant 0 : i32
    return %c0_i32, %c0_i32_0 : i32, i32
  }
  func.func @transform_3(%arg0: i32) -> (i32, i32) {
    %c0_i32 = arith.constant 0 : i32
    %c0_i32_0 = arith.constant 0 : i32
    %c0_i32_1 = arith.constant 0 : i32
    return %c0_i32, %c0_i32_0 : i32, i32
  }
  func.func @transform_4(%arg0: i32) -> (i32, i32, i32) {
    %c0_i32 = arith.constant 0 : i32
    %c0_i32_0 = arith.constant 0 : i32
    %c0_i32_1 = arith.constant 0 : i32
    return %arg0, %c0_i32, %c0_i32_0 : i32, i32, i32
  }
}

module attributes {stable_mosaic.version = 11 : i64} {
  func.func @_merge_relu_kernel(%arg0: i32, %arg1: i32, %arg2: memref<1x256x8xf32, #tpu.memory_space<vmem>>, %arg3: memref<1x256x8xf32, #tpu.memory_space<vmem>>, %arg4: memref<1x256x8xf32, #tpu.memory_space<vmem>>, %arg5: memref<1x256x16xf32, #tpu.memory_space<vmem>>) attributes {dimension_semantics = [#tpu.dimension_semantics<parallel>, #tpu.dimension_semantics<parallel>], iteration_bounds = array<i64: 2, 1>, scalar_prefetch = 0 : i64, scratch_operands = 0 : i64, tpu.core_type = #tpu.core_type<tc>, window_params = [{transform_indices = @transform_0, window_bounds = array<i64: 1, 256, 8>}, {transform_indices = @transform_1, window_bounds = array<i64: 1, 256, 8>}, {transform_indices = @transform_2, window_bounds = array<i64: 1, 256, 8>}, {transform_indices = @transform_3, window_bounds = array<i64: 1, 256, 16>}]} {
    %c0 = arith.constant 0 : index
    %c0_0 = arith.constant 0 : index
    %c0_1 = arith.constant 0 : index
    %0 = vector.load %arg2[%c0, %c0_0, %c0_1] : memref<1x256x8xf32, #tpu.memory_space<vmem>>, vector<1x256x8xf32>
    %1 = vector.shape_cast %0 : vector<1x256x8xf32> to vector<256x8xf32>
    %cst = arith.constant 0.000000e+00 : f32
    %2 = vector.broadcast %cst : f32 to vector<256x8xf32>
    %3 = arith.maximumf %1, %2 : vector<256x8xf32>
    %c0_2 = arith.constant 0 : index
    %c0_3 = arith.constant 0 : index
    %c0_4 = arith.constant 0 : index
    %4 = vector.load %arg3[%c0_2, %c0_3, %c0_4] : memref<1x256x8xf32, #tpu.memory_space<vmem>>, vector<1x256x8xf32>
    %5 = vector.shape_cast %4 : vector<1x256x8xf32> to vector<256x8xf32>
    %c0_5 = arith.constant 0 : index
    %c0_6 = arith.constant 0 : index
    %c0_7 = arith.constant 0 : index
    %6 = vector.load %arg4[%c0_5, %c0_6, %c0_7] : memref<1x256x8xf32, #tpu.memory_space<vmem>>, vector<1x256x8xf32>
    %7 = vector.shape_cast %6 : vector<1x256x8xf32> to vector<256x8xf32>
    %8 = arith.addf %5, %7 : vector<256x8xf32>
    %cst_8 = arith.constant 0.000000e+00 : f32
    %9 = vector.broadcast %cst_8 : f32 to vector<256x8xf32>
    %10 = arith.maximumf %8, %9 : vector<256x8xf32>
    %11 = tpu.concatenate %3, %10 in 1 : vector<256x8xf32>, vector<256x8xf32> -> vector<256x16xf32>
    %c0_9 = arith.constant 0 : index
    %c0_10 = arith.constant 0 : index
    %c0_11 = arith.constant 0 : index
    %12 = vector.load %arg5[%c0_9, %c0_10, %c0_11] : memref<1x256x16xf32, #tpu.memory_space<vmem>>, vector<1x256x16xf32>
    %13 = vector.shape_cast %12 : vector<1x256x16xf32> to vector<256x16xf32>
    %14 = vector.shape_cast %11 : vector<256x16xf32> to vector<1x256x16xf32>
    tpu.vector_store %arg5[%c0_9, %c0_10, %c0_11], %14 {strides = array<i32>} : memref<1x256x16xf32, #tpu.memory_space<vmem>>, vector<1x256x16xf32>,
    return
  }
  func.func @transform_0(%arg0: i32, %arg1: i32) -> (i32, i32, i32) {
    %c0_i32 = arith.constant 0 : i32
    %c0_i32_0 = arith.constant 0 : i32
    return %arg0, %arg1, %c0_i32 : i32, i32, i32
  }
  func.func @transform_1(%arg0: i32, %arg1: i32) -> (i32, i32, i32) {
    %c0_i32 = arith.constant 0 : i32
    %c0_i32_0 = arith.constant 0 : i32
    return %arg0, %arg1, %c0_i32 : i32, i32, i32
  }
  func.func @transform_2(%arg0: i32, %arg1: i32) -> (i32, i32, i32) {
    %c0_i32 = arith.constant 0 : i32
    %c0_i32_0 = arith.constant 0 : i32
    return %arg0, %arg1, %c0_i32 : i32, i32, i32
  }
  func.func @transform_3(%arg0: i32, %arg1: i32) -> (i32, i32, i32) {
    %c0_i32 = arith.constant 0 : i32
    %c0_i32_0 = arith.constant 0 : i32
    return %arg0, %arg1, %c0_i32 : i32, i32, i32
  }
}

</mosaic_0001>

<llo_original>
// kernel: shuffle_v2_block_forward.6
$region0: #{shuffle_v2_block_forward.6}
  #allocation0 [shape = 'u32[]', space=smem, size = 0x4, offset = 0x4, fixed_abs, tag = 'smem constant byte address 0x4 - core index']
  #allocation1 [shape = 'u32[72,128]{1,0:T(1,128)}', space=vmem, size = 0x9000, scoped, tag = 'internal scratch']
  %s0 = inlined_call_operand.vmem [shape: f32[2,256,8], index: 0, kind: input, shape index: {}]
  %s1 = inlined_call_operand.vmem [shape: f32[8,8], index: 1, kind: input, shape index: {}]
  %s2 = inlined_call_operand.vmem [shape: f32[1,8], index: 2, kind: input, shape index: {}]
  %s3 = inlined_call_operand.vmem [shape: f32[1,8], index: 3, kind: input, shape index: {}]
  %s4 = inlined_call_operand.vmem [shape: f32[2,256,8], index: 4, kind: output, shape index: {}]
  %s5 = sld [smem:[#allocation0]]
  $region49: #{shuffle_v2_block_forward.6} parent=0
    _
  %s7 = ssub.s32 1, %s5
  %s8 = scalar_select 0, %s7, %s5
  loop: start=0, step=1, limit=4
  $region2: #{shuffle_v2_block_forward.6} parent=0 // loop_pre_header
    _
  $region3: #{shuffle_v2_block_forward.6} parent=0 // loop_header
    %s10 = sphi 0, %s14
    %p11 = scmp.ge.s32.totalorder %s10, 4
    %s17 = sphi 0, %s29
    %s18 = sphi 0, %s25
    %s19 = sphi 0, %s17
    %s20 = sphi 0, %s18
    %s21 = sphi 0, %s19
    %s22 = sphi 0, %s20
    %s34 = sphi 0, %s36
    %s37 = sphi 0, %s34
    %s38 = sphi 0, %s37
    %s54 = sphi 0, %s38
    %s58 = sphi 0, %s58
    %s60 = sphi 0, %s58
    %s61 = sphi 0, %s60
    %s75 = sphi 0, %s61
    %s79 = sphi 0, %s79
    %s81 = sphi 0, %s79
    %s82 = sphi 0, %s81
    %s96 = sphi 0, %s82
    %s100 = sphi 0, %s100
    %s102 = sphi 0, %s100
    %s103 = sphi 0, %s102
    %s117 = sphi 0, %s103
    %s125 = sphi 0, %s127
    %s128 = sphi 0, %s125
    %s129 = sphi 0, %s128
    %s145 = sphi 0, %s129
  $region4: #{shuffle_v2_block_forward.6} parent=0 // loop_header_branch
    %13 = sbr.rel (%p11) target = $region8
  $region5: #{shuffle_v2_block_forward.6} parent=0 // loop_body
    %s15 = ssub.s32 %s10, 1
    %s16 = ssub.s32 %s10, 2
    %s23 = sadd.s32 1, %s18
    %p24 = scmp.ge.s32.totalorder %s23, 1
    %s25 = scalar_select %p24, 0, %s23
    %s26 = sadd.s32 1, %s17
    %s27 = scalar_select %p24, %s26, %s17
    %p28 = scmp.ge.s32.totalorder %s27, 2
    %s29 = scalar_select %p28, 0, %s27
    %s30 = ssub.s32 %s17, %s29
    %s31 = ssub.s32 %s18, %s25
    %s32 = sor.u32 %s30, %s31
    %p33 = scmp.eq.s32.totalorder %s32, 0
    %s35 = sadd.s32 %s34, 1
    %s36 = scalar_select %p33, %s34, %s35
    %p39 = pneg %p33
    %p40 = scmp.eq.s32.totalorder %s10, 1
    %p41 = por %p39, %p40
    %p42 = scmp.ne.s32.totalorder %s34, %s37
    %p43 = scmp.eq.s32.totalorder %s10, 0
    %p44 = por %p42, %p43
    %p45 = scmp.ne.s32.totalorder %s34, %s37
    %p46 = scmp.eq.s32.totalorder %s15, 1
    %p47 = por %p45, %p46
    %p48 = scmp.ne.s32.totalorder %s37, %s38
    %p49 = scmp.eq.s32.totalorder %s15, 0
    %p50 = por %p48, %p49
    %p51 = scmp.ne.s32.totalorder %s37, %s38
    %p52 = scmp.eq.s32.totalorder %s16, 1
    %p53 = por %p51, %p52
    %p55 = scmp.ne.s32.totalorder %s38, %s54
    %p56 = scmp.eq.s32.totalorder %s16, 0
    %p57 = por %p55, %p56
    %s59 = sadd.s32 %s58, 1
    %p62 = scmp.eq.s32.totalorder %s10, 1
    %p63 = scmp.ne.s32.totalorder %s58, %s60
    %p64 = scmp.eq.s32.totalorder %s10, 0
    %p65 = por %p63, %p64
    %p66 = scmp.ne.s32.totalorder %s58, %s60
    %p67 = scmp.eq.s32.totalorder %s15, 1
    %p68 = por %p66, %p67
    %p69 = scmp.ne.s32.totalorder %s60, %s61
    %p70 = scmp.eq.s32.totalorder %s15, 0
    %p71 = por %p69, %p70
    %p72 = scmp.ne.s32.totalorder %s60, %s61
    %p73 = scmp.eq.s32.totalorder %s16, 1
    %p74 = por %p72, %p73
    %p76 = scmp.ne.s32.totalorder %s61, %s75
    %p77 = scmp.eq.s32.totalorder %s16, 0
    %p78 = por %p76, %p77
    %s80 = sadd.s32 %s79, 1
    %p83 = scmp.eq.s32.totalorder %s10, 1
    %p84 = scmp.ne.s32.totalorder %s79, %s81
    %p85 = scmp.eq.s32.totalorder %s10, 0
    %p86 = por %p84, %p85
    %p87 = scmp.ne.s32.totalorder %s79, %s81
    %p88 = scmp.eq.s32.totalorder %s15, 1
    %p89 = por %p87, %p88
    %p90 = scmp.ne.s32.totalorder %s81, %s82
    %p91 = scmp.eq.s32.totalorder %s15, 0
    %p92 = por %p90, %p91
    %p93 = scmp.ne.s32.totalorder %s81, %s82
    %p94 = scmp.eq.s32.totalorder %s16, 1
    %p95 = por %p93, %p94
    %p97 = scmp.ne.s32.totalorder %s82, %s96
    %p98 = scmp.eq.s32.totalorder %s16, 0
    %p99 = por %p97, %p98
    %s101 = sadd.s32 %s100, 1
    %p104 = scmp.eq.s32.totalorder %s10, 1
    %p105 = scmp.ne.s32.totalorder %s100, %s102
    %p106 = scmp.eq.s32.totalorder %s10, 0
    %p107 = por %p105, %p106
    %p108 = scmp.ne.s32.totalorder %s100, %s102
    %p109 = scmp.eq.s32.totalorder %s15, 1
    %p110 = por %p108, %p109
    %p111 = scmp.ne.s32.totalorder %s102, %s103
    %p112 = scmp.eq.s32.totalorder %s15, 0
    %p113 = por %p111, %p112
    %p114 = scmp.ne.s32.totalorder %s102, %s103
    %p115 = scmp.eq.s32.totalorder %s16, 1
    %p116 = por %p114, %p115
    %p118 = scmp.ne.s32.totalorder %s103, %s117
    %p119 = scmp.eq.s32.totalorder %s16, 0
    %p120 = por %p118, %p119
    %s121 = ssub.s32 %s17, %s29
    %s122 = ssub.s32 %s18, %s25
    %s123 = sor.u32 %s121, %s122
    %p124 = scmp.eq.s32.totalorder %s123, 0
    %s126 = sadd.s32 %s125, 1
    %s127 = scalar_select %p124, %s125, %s126
    %p130 = pneg %p124
    %p131 = scmp.eq.s32.totalorder %s10, 1
    %p132 = por %p130, %p131
    %p133 = scmp.ne.s32.totalorder %s125, %s128
    %p134 = scmp.eq.s32.totalorder %s10, 0
    %p135 = por %p133, %p134
    %p136 = scmp.ne.s32.totalorder %s125, %s128
    %p137 = scmp.eq.s32.totalorder %s15, 1
    %p138 = por %p136, %p137
    %p139 = scmp.ne.s32.totalorder %s128, %s129
    %p140 = scmp.eq.s32.totalorder %s15, 0
    %p141 = por %p139, %p140
    %p142 = scmp.ne.s32.totalorder %s128, %s129
    %p143 = scmp.eq.s32.totalorder %s16, 1
    %p144 = por %p142, %p143
    %p146 = scmp.ne.s32.totalorder %s129, %s145
    %p147 = scmp.eq.s32.totalorder %s16, 0
    %p148 = por %p146, %p147
    %p149 = scmp.le.s32.totalorder 1, %s10
    %p150 = scmp.lt.s32.totalorder %s10, 3
    %p151 = pnand %p149, %p150
    %p152 = pneg %p151
    // Predicated region
    $region9: #{shuffle_v2_block_forward.6} parent=5 // pred_check
      _
    $region10: #{shuffle_v2_block_forward.6} parent=5 // pred_check_branch
      %154 = sbr.rel (%p151) target = $region12
    $region11: #{shuffle_v2_block_forward.6} parent=5 // pred_region
      %s155 = ssub.s32 %s10, 1
      // Predicated region
      $region13: #{shuffle_v2_block_forward.6} parent=11 // pred_check
        %p156 = pneg %p71
      $region14: #{shuffle_v2_block_forward.6} parent=11 // pred_check_branch
        %158 = sbr.rel (%p156) target = $region16
      $region15: #{shuffle_v2_block_forward.6} parent=11 // pred_region
        _
      $region16: #{shuffle_v2_block_forward.6} parent=11 // pred_fallthru
        _
      // Predicated region
      $region17: #{shuffle_v2_block_forward.6} parent=11 // pred_check
        %p159 = pneg %p92
      $region18: #{shuffle_v2_block_forward.6} parent=11 // pred_check_branch
        %161 = sbr.rel (%p159) target = $region20
      $region19: #{shuffle_v2_block_forward.6} parent=11 // pred_region
        _
      $region20: #{shuffle_v2_block_forward.6} parent=11 // pred_fallthru
        _
      // Predicated region
      $region21: #{shuffle_v2_block_forward.6} parent=11 // pred_check
        %p162 = pneg %p113
      $region22: #{shuffle_v2_block_forward.6} parent=11 // pred_check_branch
        %164 = sbr.rel (%p162) target = $region24
      $region23: #{shuffle_v2_block_forward.6} parent=11 // pred_region
        _
      $region24: #{shuffle_v2_block_forward.6} parent=11 // pred_fallthru
        _
    $region12: #{shuffle_v2_block_forward.6} parent=5 // pred_fallthru
      _
    %p165 = scmp.lt.s32.totalorder %s10, 2
    // Predicated region
    $region25: #{shuffle_v2_block_forward.6} parent=5 // pred_check
      %p166 = pneg %p165
    $region26: #{shuffle_v2_block_forward.6} parent=5 // pred_check_branch
      %168 = sbr.rel (%p166) target = $region28
    $region27: #{shuffle_v2_block_forward.6} parent=5 // pred_region
      // Predicated region
      $region29: #{shuffle_v2_block_forward.6} parent=27 // pred_check
        %p169 = pneg %p44
      $region30: #{shuffle_v2_block_forward.6} parent=27 // pred_check_branch
        %171 = sbr.rel (%p169) target = $region32
      $region31: #{shuffle_v2_block_forward.6} parent=27 // pred_region
        %s172 = smul.u32 32, %s18
        %p173 = scmp.lt.s32.totalorder %s17, 1
        %s174 = scalar_select %p173, %s17, 1
        %p175 = scmp.lt.s32.totalorder %s172, 31
        %s176 = scalar_select %p175, %s172, 31
        %s177 = smul.addr %s174, 32
        %s178 = sadd.s32 %s176, %s177
        %s179 = smul.addr %s178, 8
        %s180 = scalar_lea.vmem %s0, %s179
        %s181 = smul.u32 32, %s18
      $region32: #{shuffle_v2_block_forward.6} parent=27 // pred_fallthru
        _
    $region28: #{shuffle_v2_block_forward.6} parent=5 // pred_fallthru
      _
    %p182 = scmp.le.s32.totalorder 1, %s10
    %p183 = scmp.lt.s32.totalorder %s10, 3
    %p184 = pnand %p182, %p183
    %p185 = pneg %p184
    // Predicated region
    $region33: #{shuffle_v2_block_forward.6} parent=5 // pred_check
      _
    $region34: #{shuffle_v2_block_forward.6} parent=5 // pred_check_branch
      %187 = sbr.rel (%p184) target = $region36
    $region35: #{shuffle_v2_block_forward.6} parent=5 // pred_region
      %s188 = ssub.s32 %s10, 1
      %s189 = smul.u32 32, %s20
      %p190 = scmp.lt.s32.totalorder %s19, 1
      %s191 = scalar_select %p190, %s19, 1
      %p192 = scmp.lt.s32.totalorder %s189, 31
      %s193 = scalar_select %p192, %s189, 31
      %s194 = smul.addr %s191, 32
      %s195 = sadd.s32 %s193, %s194
      %s196 = smul.addr %s195, 8
      %s197 = scalar_lea.vmem %s0, %s196
      %p198 = pneg %p50
      %p199 = pneg %p47
      %p200 = pneg %p71
      %p201 = pneg %p68
      %p202 = pneg %p92
      %p203 = pneg %p89
      %p204 = pneg %p113
      %p205 = pneg %p110
      %p206 = pneg %p141
      %p207 = pneg %p138
      %s208 = smul.u32 32, %s20
      %p209 = scmp.lt.s32.totalorder %s19, 1
      %s210 = scalar_select %p209, %s19, 1
      %p211 = scmp.lt.s32.totalorder %s208, 31
      %s212 = scalar_select %p211, %s208, 31
      %s213 = smul.addr %s210, 32
      %s214 = sadd.s32 %s212, %s213
      %s215 = smul.addr %s214, 8
      %s216 = scalar_lea.vmem %s4, %s215
      %s217 = smul.u32 32, %s20
      %p218 = scmp.lt.s32.totalorder %s19, 1
      %s219 = scalar_select %p218, %s19, 1
      %p220 = scmp.lt.s32.totalorder %s217, 31
      %s221 = scalar_select %p220, %s217, 31
      %s222 = smul.addr %s219, 32
      %s223 = sadd.s32 %s221, %s222
      %s224 = smul.addr %s223, 8
      %s225 = scalar_lea.vmem %s0, %s224
      %s226 = smul.u32 32, %s20
      %s227 = smul.u32 32, %s20
      %p228 = scmp.lt.s32.totalorder %s19, 1
      %s229 = scalar_select %p228, %s19, 1
      %p230 = scmp.lt.s32.totalorder %s227, 31
      %s231 = scalar_select %p230, %s227, 31
      %s232 = smul.addr %s229, 32
      %s233 = sadd.s32 %s231, %s232
      %s234 = smul.addr %s233, 8
      %s235 = scalar_lea.vmem %s4, %s234
      %s236 = smul.u32 32, %s20
      %v237 = vld [vmem:[%s225] sm:$0xff]
      %v238 = vld [vmem:[%s225 + $0x8] sm:$0xff]
      %v239 = vld [vmem:[%s225 + $0x10] sm:$0xff]
      %v240 = vld [vmem:[%s225 + $0x18] sm:$0xff]
      %v241 = vld [vmem:[%s225 + $0x20] sm:$0xff]
      %v242 = vld [vmem:[%s225 + $0x28] sm:$0xff]
      %v243 = vld [vmem:[%s225 + $0x30] sm:$0xff]
      %v244 = vld [vmem:[%s225 + $0x38] sm:$0xff]
      %v245 = vld [vmem:[%s225 + $0x40] sm:$0xff]
      %v246 = vld [vmem:[%s225 + $0x48] sm:$0xff]
      %v247 = vld [vmem:[%s225 + $0x50] sm:$0xff]
      %v248 = vld [vmem:[%s225 + $0x58] sm:$0xff]
      %v249 = vld [vmem:[%s225 + $0x60] sm:$0xff]
      %v250 = vld [vmem:[%s225 + $0x68] sm:$0xff]
      %v251 = vld [vmem:[%s225 + $0x70] sm:$0xff]
      %v252 = vld [vmem:[%s225 + $0x78] sm:$0xff]
      %v253 = vld [vmem:[%s225 + $0x80] sm:$0xff]
      %v254 = vld [vmem:[%s225 + $0x88] sm:$0xff]
      %v255 = vld [vmem:[%s225 + $0x90] sm:$0xff]
      %v256 = vld [vmem:[%s225 + $0x98] sm:$0xff]
      %v257 = vld [vmem:[%s225 + $0xa0] sm:$0xff]
      %v258 = vld [vmem:[%s225 + $0xa8] sm:$0xff]
      %v259 = vld [vmem:[%s225 + $0xb0] sm:$0xff]
      %v260 = vld [vmem:[%s225 + $0xb8] sm:$0xff]
      %v261 = vld [vmem:[%s225 + $0xc0] sm:$0xff]
      %v262 = vld [vmem:[%s225 + $0xc8] sm:$0xff]
      %v263 = vld [vmem:[%s225 + $0xd0] sm:$0xff]
      %v264 = vld [vmem:[%s225 + $0xd8] sm:$0xff]
      %v265 = vld [vmem:[%s225 + $0xe0] sm:$0xff]
      %v266 = vld [vmem:[%s225 + $0xe8] sm:$0xff]
      %v267 = vld [vmem:[%s225 + $0xf0] sm:$0xff]
      %v268 = vld [vmem:[%s225 + $0xf8] sm:$0xff]
      %v269 = vld [vmem:[%s1] sm:$0xff]
      %vm270 = vcmask 64512
      %v272 = vsel %vm270, %v237, 0
      %v275 = vsel %vm270, %v238, 0
      %v278 = vsel %vm270, %v239, 0
      %v281 = vsel %vm270, %v240, 0
      %v284 = vsel %vm270, %v241, 0
      %v287 = vsel %vm270, %v242, 0
      %v290 = vsel %vm270, %v243, 0
      %v293 = vsel %vm270, %v244, 0
      %v296 = vsel %vm270, %v245, 0
      %v299 = vsel %vm270, %v246, 0
      %v302 = vsel %vm270, %v247, 0
      %v305 = vsel %vm270, %v248, 0
      %v308 = vsel %vm270, %v249, 0
      %v311 = vsel %vm270, %v250, 0
      %v314 = vsel %vm270, %v251, 0
      %v317 = vsel %vm270, %v252, 0
      %v320 = vsel %vm270, %v253, 0
      %v323 = vsel %vm270, %v254, 0
      %v326 = vsel %vm270, %v255, 0
      %v329 = vsel %vm270, %v256, 0
      %v332 = vsel %vm270, %v257, 0
      %v335 = vsel %vm270, %v258, 0
      %v338 = vsel %vm270, %v259, 0
      %v341 = vsel %vm270, %v260, 0
      %v344 = vsel %vm270, %v261, 0
      %v347 = vsel %vm270, %v262, 0
      %v350 = vsel %vm270, %v263, 0
      %v353 = vsel %vm270, %v264, 0
      %v356 = vsel %vm270, %v265, 0
      %v359 = vsel %vm270, %v266, 0
      %v362 = vsel %vm270, %v267, 0
      %v365 = vsel %vm270, %v268, 0
      %367 = vmatpush.msra.mxu0 0.0
      %368 = vmatpush.msra.mxu0 0.0
      %369 = vmatpush.msra.mxu0 0.0
      %370 = vmatpush.msra.mxu0 0.0
      %371 = vmatpush.msra.mxu0 0.0
      %372 = vmatpush.msra.mxu0 0.0
      %373 = vmatpush.msra.mxu0 0.0
      %374 = vmatpush.msra.mxu0 0.0
      %375 = vmatpush.msra.mxu0 0.0
      %376 = vmatpush.msra.mxu0 0.0
      %377 = vmatpush.msra.mxu0 0.0
      %378 = vmatpush.msra.mxu0 0.0
      %379 = vmatpush.msra.mxu0 0.0
      %380 = vmatpush.msra.mxu0 0.0
      %381 = vmatpush.msra.mxu0 0.0
      %382 = vmatpush.msra.mxu0 %v269
      %383 = vmatmul.f32.gmra.mxu0 %v272
      %v384 = vpop.f32.mrf.mxu0
      %v385 = vadd.f32 0.0, %v384
      %386 = vmatmul.f32.gmra.mxu0 %v275
      %v387 = vpop.f32.mrf.mxu0
      %v388 = vadd.f32 0.0, %v387
      %389 = vmatmul.f32.gmra.mxu0 %v278
      %v390 = vpop.f32.mrf.mxu0
      %v391 = vadd.f32 0.0, %v390
      %392 = vmatmul.f32.gmra.mxu0 %v281
      %v393 = vpop.f32.mrf.mxu0
      %v394 = vadd.f32 0.0, %v393
      %395 = vmatmul.f32.gmra.mxu0 %v284
      %v396 = vpop.f32.mrf.mxu0
      %v397 = vadd.f32 0.0, %v396
      %398 = vmatmul.f32.gmra.mxu0 %v287
      %v399 = vpop.f32.mrf.mxu0
      %v400 = vadd.f32 0.0, %v399
      %401 = vmatmul.f32.gmra.mxu0 %v290
      %v402 = vpop.f32.mrf.mxu0
      %v403 = vadd.f32 0.0, %v402
      %404 = vmatmul.f32.gmra.mxu0 %v293
      %v405 = vpop.f32.mrf.mxu0
      %v406 = vadd.f32 0.0, %v405
      %407 = vmatmul.f32.gmra.mxu0 %v296
      %v408 = vpop.f32.mrf.mxu0
      %v409 = vadd.f32 0.0, %v408
      %410 = vmatmul.f32.gmra.mxu0 %v299
      %v411 = vpop.f32.mrf.mxu0
      %v412 = vadd.f32 0.0, %v411
      %413 = vmatmul.f32.gmra.mxu0 %v302
      %v414 = vpop.f32.mrf.mxu0
      %v415 = vadd.f32 0.0, %v414
      %416 = vmatmul.f32.gmra.mxu0 %v305
      %v417 = vpop.f32.mrf.mxu0
      %v418 = vadd.f32 0.0, %v417
      %419 = vmatmul.f32.gmra.mxu0 %v308
      %v420 = vpop.f32.mrf.mxu0
      %v421 = vadd.f32 0.0, %v420
      %422 = vmatmul.f32.gmra.mxu0 %v311
      %v423 = vpop.f32.mrf.mxu0
      %v424 = vadd.f32 0.0, %v423
      %425 = vmatmul.f32.gmra.mxu0 %v314
      %v426 = vpop.f32.mrf.mxu0
      %v427 = vadd.f32 0.0, %v426
      %428 = vmatmul.f32.gmra.mxu0 %v317
      %v429 = vpop.f32.mrf.mxu0
      %v430 = vadd.f32 0.0, %v429
      %431 = vmatmul.f32.gmra.mxu0 %v320
      %v432 = vpop.f32.mrf.mxu0
      %v433 = vadd.f32 0.0, %v432
      %434 = vmatmul.f32.gmra.mxu0 %v323
      %v435 = vpop.f32.mrf.mxu0
      %v436 = vadd.f32 0.0, %v435
      %437 = vmatmul.f32.gmra.mxu0 %v326
      %v438 = vpop.f32.mrf.mxu0
      %v439 = vadd.f32 0.0, %v438
      %440 = vmatmul.f32.gmra.mxu0 %v329
      %v441 = vpop.f32.mrf.mxu0
      %v442 = vadd.f32 0.0, %v441
      %443 = vmatmul.f32.gmra.mxu0 %v332
      %v444 = vpop.f32.mrf.mxu0
      %v445 = vadd.f32 0.0, %v444
      %446 = vmatmul.f32.gmra.mxu0 %v335
      %v447 = vpop.f32.mrf.mxu0
      %v448 = vadd.f32 0.0, %v447
      %449 = vmatmul.f32.gmra.mxu0 %v338
      %v450 = vpop.f32.mrf.mxu0
      %v451 = vadd.f32 0.0, %v450
      %452 = vmatmul.f32.gmra.mxu0 %v341
      %v453 = vpop.f32.mrf.mxu0
      %v454 = vadd.f32 0.0, %v453
      %455 = vmatmul.f32.gmra.mxu0 %v344
      %v456 = vpop.f32.mrf.mxu0
      %v457 = vadd.f32 0.0, %v456
      %458 = vmatmul.f32.gmra.mxu0 %v347
      %v459 = vpop.f32.mrf.mxu0
      %v460 = vadd.f32 0.0, %v459
      %461 = vmatmul.f32.gmra.mxu0 %v350
      %v462 = vpop.f32.mrf.mxu0
      %v463 = vadd.f32 0.0, %v462
      %464 = vmatmul.f32.gmra.mxu0 %v353
      %v465 = vpop.f32.mrf.mxu0
      %v466 = vadd.f32 0.0, %v465
      %467 = vmatmul.f32.gmra.mxu0 %v356
      %v468 = vpop.f32.mrf.mxu0
      %v469 = vadd.f32 0.0, %v468
      %470 = vmatmul.f32.gmra.mxu0 %v359
      %v471 = vpop.f32.mrf.mxu0
      %v472 = vadd.f32 0.0, %v471
      %473 = vmatmul.f32.gmra.mxu0 %v362
      %v474 = vpop.f32.mrf.mxu0
      %v475 = vadd.f32 0.0, %v474
      %476 = vmatmul.f32.gmra.mxu0 %v365
      %v477 = vpop.f32.mrf.mxu0
      %v478 = vadd.f32 0.0, %v477
      %479 = vdwg.mxu0
      %v480 = vld [vmem:[%s2] sm:$0x1]
      %v482 = vperm.slane %v480, 0
      %v484 = vmul.f32 %v385, %v482
      %v485 = vmul.f32 %v388, %v482
      %v486 = vmul.f32 %v391, %v482
      %v487 = vmul.f32 %v394, %v482
      %v488 = vmul.f32 %v397, %v482
      %v489 = vmul.f32 %v400, %v482
      %v490 = vmul.f32 %v403, %v482
      %v491 = vmul.f32 %v406, %v482
      %v492 = vmul.f32 %v409, %v482
      %v493 = vmul.f32 %v412, %v482
      %v494 = vmul.f32 %v415, %v482
      %v495 = vmul.f32 %v418, %v482
      %v496 = vmul.f32 %v421, %v482
      %v497 = vmul.f32 %v424, %v482
      %v498 = vmul.f32 %v427, %v482
      %v499 = vmul.f32 %v430, %v482
      %v500 = vmul.f32 %v433, %v482
      %v501 = vmul.f32 %v436, %v482
      %v502 = vmul.f32 %v439, %v482
      %v503 = vmul.f32 %v442, %v482
      %v504 = vmul.f32 %v445, %v482
      %v505 = vmul.f32 %v448, %v482
      %v506 = vmul.f32 %v451, %v482
      %v507 = vmul.f32 %v454, %v482
      %v508 = vmul.f32 %v457, %v482
      %v509 = vmul.f32 %v460, %v482
      %v510 = vmul.f32 %v463, %v482
      %v511 = vmul.f32 %v466, %v482
      %v512 = vmul.f32 %v469, %v482
      %v513 = vmul.f32 %v472, %v482
      %v514 = vmul.f32 %v475, %v482
      %v515 = vmul.f32 %v478, %v482
      %v516 = vld [vmem:[%s3] sm:$0x1]
      %v518 = vperm.slane %v516, 0
      %v520 = vadd.f32 %v484, %v518
      %v521 = vadd.f32 %v485, %v518
      %v522 = vadd.f32 %v486, %v518
      %v523 = vadd.f32 %v487, %v518
      %v524 = vadd.f32 %v488, %v518
      %v525 = vadd.f32 %v489, %v518
      %v526 = vadd.f32 %v490, %v518
      %v527 = vadd.f32 %v491, %v518
      %v528 = vadd.f32 %v492, %v518
      %v529 = vadd.f32 %v493, %v518
      %v530 = vadd.f32 %v494, %v518
      %v531 = vadd.f32 %v495, %v518
      %v532 = vadd.f32 %v496, %v518
      %v533 = vadd.f32 %v497, %v518
      %v534 = vadd.f32 %v498, %v518
      %v535 = vadd.f32 %v499, %v518
      %v536 = vadd.f32 %v500, %v518
      %v537 = vadd.f32 %v501, %v518
      %v538 = vadd.f32 %v502, %v518
      %v539 = vadd.f32 %v503, %v518
      %v540 = vadd.f32 %v504, %v518
      %v541 = vadd.f32 %v505, %v518
      %v542 = vadd.f32 %v506, %v518
      %v543 = vadd.f32 %v507, %v518
      %v544 = vadd.f32 %v508, %v518
      %v545 = vadd.f32 %v509, %v518
      %v546 = vadd.f32 %v510, %v518
      %v547 = vadd.f32 %v511, %v518
      %v548 = vadd.f32 %v512, %v518
      %v549 = vadd.f32 %v513, %v518
      %v550 = vadd.f32 %v514, %v518
      %v551 = vadd.f32 %v515, %v518
      %552 = vst.msk [vmem:[%s235] sm:$0xff] %vm270, %v520
      %553 = vst.msk [vmem:[%s235 + $0x8] sm:$0xff] %vm270, %v521
      %554 = vst.msk [vmem:[%s235 + $0x10] sm:$0xff] %vm270, %v522
      %555 = vst.msk [vmem:[%s235 + $0x18] sm:$0xff] %vm270, %v523
      %556 = vst.msk [vmem:[%s235 + $0x20] sm:$0xff] %vm270, %v524
      %557 = vst.msk [vmem:[%s235 + $0x28] sm:$0xff] %vm270, %v525
      %558 = vst.msk [vmem:[%s235 + $0x30] sm:$0xff] %vm270, %v526
      %559 = vst.msk [vmem:[%s235 + $0x38] sm:$0xff] %vm270, %v527
      %560 = vst.msk [vmem:[%s235 + $0x40] sm:$0xff] %vm270, %v528
      %561 = vst.msk [vmem:[%s235 + $0x48] sm:$0xff] %vm270, %v529
      %562 = vst.msk [vmem:[%s235 + $0x50] sm:$0xff] %vm270, %v530
      %563 = vst.msk [vmem:[%s235 + $0x58] sm:$0xff] %vm270, %v531
      %564 = vst.msk [vmem:[%s235 + $0x60] sm:$0xff] %vm270, %v532
      %565 = vst.msk [vmem:[%s235 + $0x68] sm:$0xff] %vm270, %v533
      %566 = vst.msk [vmem:[%s235 + $0x70] sm:$0xff] %vm270, %v534
      %567 = vst.msk [vmem:[%s235 + $0x78] sm:$0xff] %vm270, %v535
      %568 = vst.msk [vmem:[%s235 + $0x80] sm:$0xff] %vm270, %v536
      %569 = vst.msk [vmem:[%s235 + $0x88] sm:$0xff] %vm270, %v537
      %570 = vst.msk [vmem:[%s235 + $0x90] sm:$0xff] %vm270, %v538
      %571 = vst.msk [vmem:[%s235 + $0x98] sm:$0xff] %vm270, %v539
      %572 = vst.msk [vmem:[%s235 + $0xa0] sm:$0xff] %vm270, %v540
      %573 = vst.msk [vmem:[%s235 + $0xa8] sm:$0xff] %vm270, %v541
      %574 = vst.msk [vmem:[%s235 + $0xb0] sm:$0xff] %vm270, %v542
      %575 = vst.msk [vmem:[%s235 + $0xb8] sm:$0xff] %vm270, %v543
      %576 = vst.msk [vmem:[%s235 + $0xc0] sm:$0xff] %vm270, %v544
      %577 = vst.msk [vmem:[%s235 + $0xc8] sm:$0xff] %vm270, %v545
      %578 = vst.msk [vmem:[%s235 + $0xd0] sm:$0xff] %vm270, %v546
      %579 = vst.msk [vmem:[%s235 + $0xd8] sm:$0xff] %vm270, %v547
      %580 = vst.msk [vmem:[%s235 + $0xe0] sm:$0xff] %vm270, %v548
      %581 = vst.msk [vmem:[%s235 + $0xe8] sm:$0xff] %vm270, %v549
      %582 = vst.msk [vmem:[%s235 + $0xf0] sm:$0xff] %vm270, %v550
      %583 = vst.msk [vmem:[%s235 + $0xf8] sm:$0xff] %vm270, %v551
      %s584 = smul.u32 32, %s20
      %p585 = scmp.lt.s32.totalorder %s19, 1
      %s586 = scalar_select %p585, %s19, 1
      %p587 = scmp.lt.s32.totalorder %s584, 31
      %s588 = scalar_select %p587, %s584, 31
      %s589 = smul.addr %s586, 32
      %s590 = sadd.s32 %s588, %s589
      %s591 = smul.addr %s590, 8
      %s592 = scalar_lea.vmem %s4, %s591
      // Predicated region
      $region37: #{shuffle_v2_block_forward.6} parent=35 // pred_check
        %p593 = pneg %p138
      $region38: #{shuffle_v2_block_forward.6} parent=35 // pred_check_branch
        %595 = sbr.rel (%p593) target = $region40
      $region39: #{shuffle_v2_block_forward.6} parent=35 // pred_region
        %s596 = smul.u32 32, %s20
      $region40: #{shuffle_v2_block_forward.6} parent=35 // pred_fallthru
        _
    $region36: #{shuffle_v2_block_forward.6} parent=5 // pred_fallthru
      _
    %p597 = scmp.le.s32.totalorder 2, %s10
    // Predicated region
    $region41: #{shuffle_v2_block_forward.6} parent=5 // pred_check
      %p598 = pneg %p597
    $region42: #{shuffle_v2_block_forward.6} parent=5 // pred_check_branch
      %600 = sbr.rel (%p598) target = $region44
    $region43: #{shuffle_v2_block_forward.6} parent=5 // pred_region
      %s601 = ssub.s32 %s10, 2
      // Predicated region
      $region45: #{shuffle_v2_block_forward.6} parent=43 // pred_check
        %p602 = pneg %p144
      $region46: #{shuffle_v2_block_forward.6} parent=43 // pred_check_branch
        %604 = sbr.rel (%p602) target = $region48
      $region47: #{shuffle_v2_block_forward.6} parent=43 // pred_region
        %s605 = smul.u32 32, %s22
        %p606 = scmp.lt.s32.totalorder %s21, 1
        %s607 = scalar_select %p606, %s21, 1
        %p608 = scmp.lt.s32.totalorder %s605, 31
        %s609 = scalar_select %p608, %s605, 31
        %s610 = smul.addr %s607, 32
        %s611 = sadd.s32 %s609, %s610
        %s612 = smul.addr %s611, 8
        %s613 = scalar_lea.vmem %s4, %s612
      $region48: #{shuffle_v2_block_forward.6} parent=43 // pred_fallthru
        _
    $region44: #{shuffle_v2_block_forward.6} parent=5 // pred_fallthru
      _
  $region6: #{shuffle_v2_block_forward.6} parent=0 // loop_footer
    %s14 = sadd.s32 1, %s10
  $region7: #{shuffle_v2_block_forward.6} parent=0 // loop_footer_branch
    %9 = sbr.rel target = $region3
  $region8: #{shuffle_v2_block_forward.6} parent=0 // loop_exit
    _

// kernel: shuffle_v2_block_forward.4
$region0: #{shuffle_v2_block_forward.4}
  #allocation0 [shape = 'u32[]', space=smem, size = 0x4, offset = 0x4, fixed_abs, tag = 'smem constant byte address 0x4 - core index']
  #allocation1 [shape = 'u32[72,128]{1,0:T(1,128)}', space=vmem, size = 0x9000, scoped, tag = 'internal scratch']
  %s0 = inlined_call_operand.vmem [shape: f32[2,256,8], index: 0, kind: input, shape index: {}]
  %s1 = inlined_call_operand.vmem [shape: f32[8,8], index: 1, kind: input, shape index: {}]
  %s2 = inlined_call_operand.vmem [shape: f32[1,8], index: 2, kind: input, shape index: {}]
  %s3 = inlined_call_operand.vmem [shape: f32[1,8], index: 3, kind: input, shape index: {}]
  %s4 = inlined_call_operand.vmem [shape: f32[2,256,8], index: 4, kind: output, shape index: {}]
  %s5 = sld [smem:[#allocation0]]
  $region49: #{shuffle_v2_block_forward.4} parent=0
    _
  %s7 = ssub.s32 1, %s5
  %s8 = scalar_select 0, %s7, %s5
  loop: start=0, step=1, limit=4
  $region2: #{shuffle_v2_block_forward.4} parent=0 // loop_pre_header
    _
  $region3: #{shuffle_v2_block_forward.4} parent=0 // loop_header
    %s10 = sphi 0, %s14
    %p11 = scmp.ge.s32.totalorder %s10, 4
    %s17 = sphi 0, %s29
    %s18 = sphi 0, %s25
    %s19 = sphi 0, %s17
    %s20 = sphi 0, %s18
    %s21 = sphi 0, %s19
    %s22 = sphi 0, %s20
    %s34 = sphi 0, %s36
    %s37 = sphi 0, %s34
    %s38 = sphi 0, %s37
    %s54 = sphi 0, %s38
    %s58 = sphi 0, %s58
    %s60 = sphi 0, %s58
    %s61 = sphi 0, %s60
    %s75 = sphi 0, %s61
    %s79 = sphi 0, %s79
    %s81 = sphi 0, %s79
    %s82 = sphi 0, %s81
    %s96 = sphi 0, %s82
    %s100 = sphi 0, %s100
    %s102 = sphi 0, %s100
    %s103 = sphi 0, %s102
    %s117 = sphi 0, %s103
    %s125 = sphi 0, %s127
    %s128 = sphi 0, %s125
    %s129 = sphi 0, %s128
    %s145 = sphi 0, %s129
  $region4: #{shuffle_v2_block_forward.4} parent=0 // loop_header_branch
    %13 = sbr.rel (%p11) target = $region8
  $region5: #{shuffle_v2_block_forward.4} parent=0 // loop_body
    %s15 = ssub.s32 %s10, 1
    %s16 = ssub.s32 %s10, 2
    %s23 = sadd.s32 1, %s18
    %p24 = scmp.ge.s32.totalorder %s23, 1
    %s25 = scalar_select %p24, 0, %s23
    %s26 = sadd.s32 1, %s17
    %s27 = scalar_select %p24, %s26, %s17
    %p28 = scmp.ge.s32.totalorder %s27, 2
    %s29 = scalar_select %p28, 0, %s27
    %s30 = ssub.s32 %s17, %s29
    %s31 = ssub.s32 %s18, %s25
    %s32 = sor.u32 %s30, %s31
    %p33 = scmp.eq.s32.totalorder %s32, 0
    %s35 = sadd.s32 %s34, 1
    %s36 = scalar_select %p33, %s34, %s35
    %p39 = pneg %p33
    %p40 = scmp.eq.s32.totalorder %s10, 1
    %p41 = por %p39, %p40
    %p42 = scmp.ne.s32.totalorder %s34, %s37
    %p43 = scmp.eq.s32.totalorder %s10, 0
    %p44 = por %p42, %p43
    %p45 = scmp.ne.s32.totalorder %s34, %s37
    %p46 = scmp.eq.s32.totalorder %s15, 1
    %p47 = por %p45, %p46
    %p48 = scmp.ne.s32.totalorder %s37, %s38
    %p49 = scmp.eq.s32.totalorder %s15, 0
    %p50 = por %p48, %p49
    %p51 = scmp.ne.s32.totalorder %s37, %s38
    %p52 = scmp.eq.s32.totalorder %s16, 1
    %p53 = por %p51, %p52
    %p55 = scmp.ne.s32.totalorder %s38, %s54
    %p56 = scmp.eq.s32.totalorder %s16, 0
    %p57 = por %p55, %p56
    %s59 = sadd.s32 %s58, 1
    %p62 = scmp.eq.s32.totalorder %s10, 1
    %p63 = scmp.ne.s32.totalorder %s58, %s60
    %p64 = scmp.eq.s32.totalorder %s10, 0
    %p65 = por %p63, %p64
    %p66 = scmp.ne.s32.totalorder %s58, %s60
    %p67 = scmp.eq.s32.totalorder %s15, 1
    %p68 = por %p66, %p67
    %p69 = scmp.ne.s32.totalorder %s60, %s61
    %p70 = scmp.eq.s32.totalorder %s15, 0
    %p71 = por %p69, %p70
    %p72 = scmp.ne.s32.totalorder %s60, %s61
    %p73 = scmp.eq.s32.totalorder %s16, 1
    %p74 = por %p72, %p73
    %p76 = scmp.ne.s32.totalorder %s61, %s75
    %p77 = scmp.eq.s32.totalorder %s16, 0
    %p78 = por %p76, %p77
    %s80 = sadd.s32 %s79, 1
    %p83 = scmp.eq.s32.totalorder %s10, 1
    %p84 = scmp.ne.s32.totalorder %s79, %s81
    %p85 = scmp.eq.s32.totalorder %s10, 0
    %p86 = por %p84, %p85
    %p87 = scmp.ne.s32.totalorder %s79, %s81
    %p88 = scmp.eq.s32.totalorder %s15, 1
    %p89 = por %p87, %p88
    %p90 = scmp.ne.s32.totalorder %s81, %s82
    %p91 = scmp.eq.s32.totalorder %s15, 0
    %p92 = por %p90, %p91
    %p93 = scmp.ne.s32.totalorder %s81, %s82
    %p94 = scmp.eq.s32.totalorder %s16, 1
    %p95 = por %p93, %p94
    %p97 = scmp.ne.s32.totalorder %s82, %s96
    %p98 = scmp.eq.s32.totalorder %s16, 0
    %p99 = por %p97, %p98
    %s101 = sadd.s32 %s100, 1
    %p104 = scmp.eq.s32.totalorder %s10, 1
    %p105 = scmp.ne.s32.totalorder %s100, %s102
    %p106 = scmp.eq.s32.totalorder %s10, 0
    %p107 = por %p105, %p106
    %p108 = scmp.ne.s32.totalorder %s100, %s102
    %p109 = scmp.eq.s32.totalorder %s15, 1
    %p110 = por %p108, %p109
    %p111 = scmp.ne.s32.totalorder %s102, %s103
    %p112 = scmp.eq.s32.totalorder %s15, 0
    %p113 = por %p111, %p112
    %p114 = scmp.ne.s32.totalorder %s102, %s103
    %p115 = scmp.eq.s32.totalorder %s16, 1
    %p116 = por %p114, %p115
    %p118 = scmp.ne.s32.totalorder %s103, %s117
    %p119 = scmp.eq.s32.totalorder %s16, 0
    %p120 = por %p118, %p119
    %s121 = ssub.s32 %s17, %s29
    %s122 = ssub.s32 %s18, %s25
    %s123 = sor.u32 %s121, %s122
    %p124 = scmp.eq.s32.totalorder %s123, 0
    %s126 = sadd.s32 %s125, 1
    %s127 = scalar_select %p124, %s125, %s126
    %p130 = pneg %p124
    %p131 = scmp.eq.s32.totalorder %s10, 1
    %p132 = por %p130, %p131
    %p133 = scmp.ne.s32.totalorder %s125, %s128
    %p134 = scmp.eq.s32.totalorder %s10, 0
    %p135 = por %p133, %p134
    %p136 = scmp.ne.s32.totalorder %s125, %s128
    %p137 = scmp.eq.s32.totalorder %s15, 1
    %p138 = por %p136, %p137
    %p139 = scmp.ne.s32.totalorder %s128, %s129
    %p140 = scmp.eq.s32.totalorder %s15, 0
    %p141 = por %p139, %p140
    %p142 = scmp.ne.s32.totalorder %s128, %s129
    %p143 = scmp.eq.s32.totalorder %s16, 1
    %p144 = por %p142, %p143
    %p146 = scmp.ne.s32.totalorder %s129, %s145
    %p147 = scmp.eq.s32.totalorder %s16, 0
    %p148 = por %p146, %p147
    %p149 = scmp.le.s32.totalorder 1, %s10
    %p150 = scmp.lt.s32.totalorder %s10, 3
    %p151 = pnand %p149, %p150
    %p152 = pneg %p151
    // Predicated region
    $region9: #{shuffle_v2_block_forward.4} parent=5 // pred_check
      _
    $region10: #{shuffle_v2_block_forward.4} parent=5 // pred_check_branch
      %154 = sbr.rel (%p151) target = $region12
    $region11: #{shuffle_v2_block_forward.4} parent=5 // pred_region
      %s155 = ssub.s32 %s10, 1
      // Predicated region
      $region13: #{shuffle_v2_block_forward.4} parent=11 // pred_check
        %p156 = pneg %p71
      $region14: #{shuffle_v2_block_forward.4} parent=11 // pred_check_branch
        %158 = sbr.rel (%p156) target = $region16
      $region15: #{shuffle_v2_block_forward.4} parent=11 // pred_region
        _
      $region16: #{shuffle_v2_block_forward.4} parent=11 // pred_fallthru
        _
      // Predicated region
      $region17: #{shuffle_v2_block_forward.4} parent=11 // pred_check
        %p159 = pneg %p92
      $region18: #{shuffle_v2_block_forward.4} parent=11 // pred_check_branch
        %161 = sbr.rel (%p159) target = $region20
      $region19: #{shuffle_v2_block_forward.4} parent=11 // pred_region
        _
      $region20: #{shuffle_v2_block_forward.4} parent=11 // pred_fallthru
        _
      // Predicated region
      $region21: #{shuffle_v2_block_forward.4} parent=11 // pred_check
        %p162 = pneg %p113
      $region22: #{shuffle_v2_block_forward.4} parent=11 // pred_check_branch
        %164 = sbr.rel (%p162) target = $region24
      $region23: #{shuffle_v2_block_forward.4} parent=11 // pred_region
        _
      $region24: #{shuffle_v2_block_forward.4} parent=11 // pred_fallthru
        _
    $region12: #{shuffle_v2_block_forward.4} parent=5 // pred_fallthru
      _
    %p165 = scmp.lt.s32.totalorder %s10, 2
    // Predicated region
    $region25: #{shuffle_v2_block_forward.4} parent=5 // pred_check
      %p166 = pneg %p165
    $region26: #{shuffle_v2_block_forward.4} parent=5 // pred_check_branch
      %168 = sbr.rel (%p166) target = $region28
    $region27: #{shuffle_v2_block_forward.4} parent=5 // pred_region
      // Predicated region
      $region29: #{shuffle_v2_block_forward.4} parent=27 // pred_check
        %p169 = pneg %p44
      $region30: #{shuffle_v2_block_forward.4} parent=27 // pred_check_branch
        %171 = sbr.rel (%p169) target = $region32
      $region31: #{shuffle_v2_block_forward.4} parent=27 // pred_region
        %s172 = smul.u32 32, %s18
        %p173 = scmp.lt.s32.totalorder %s17, 1
        %s174 = scalar_select %p173, %s17, 1
        %p175 = scmp.lt.s32.totalorder %s172, 31
        %s176 = scalar_select %p175, %s172, 31
        %s177 = smul.addr %s174, 32
        %s178 = sadd.s32 %s176, %s177
        %s179 = smul.addr %s178, 8
        %s180 = scalar_lea.vmem %s0, %s179
        %s181 = smul.u32 32, %s18
      $region32: #{shuffle_v2_block_forward.4} parent=27 // pred_fallthru
        _
    $region28: #{shuffle_v2_block_forward.4} parent=5 // pred_fallthru
      _
    %p182 = scmp.le.s32.totalorder 1, %s10
    %p183 = scmp.lt.s32.totalorder %s10, 3
    %p184 = pnand %p182, %p183
    %p185 = pneg %p184
    // Predicated region
    $region33: #{shuffle_v2_block_forward.4} parent=5 // pred_check
      _
    $region34: #{shuffle_v2_block_forward.4} parent=5 // pred_check_branch
      %187 = sbr.rel (%p184) target = $region36
    $region35: #{shuffle_v2_block_forward.4} parent=5 // pred_region
      %s188 = ssub.s32 %s10, 1
      %s189 = smul.u32 32, %s20
      %p190 = scmp.lt.s32.totalorder %s19, 1
      %s191 = scalar_select %p190, %s19, 1
      %p192 = scmp.lt.s32.totalorder %s189, 31
      %s193 = scalar_select %p192, %s189, 31
      %s194 = smul.addr %s191, 32
      %s195 = sadd.s32 %s193, %s194
      %s196 = smul.addr %s195, 8
      %s197 = scalar_lea.vmem %s0, %s196
      %p198 = pneg %p50
      %p199 = pneg %p47
      %p200 = pneg %p71
      %p201 = pneg %p68
      %p202 = pneg %p92
      %p203 = pneg %p89
      %p204 = pneg %p113
      %p205 = pneg %p110
      %p206 = pneg %p141
      %p207 = pneg %p138
      %s208 = smul.u32 32, %s20
      %p209 = scmp.lt.s32.totalorder %s19, 1
      %s210 = scalar_select %p209, %s19, 1
      %p211 = scmp.lt.s32.totalorder %s208, 31
      %s212 = scalar_select %p211, %s208, 31
      %s213 = smul.addr %s210, 32
      %s214 = sadd.s32 %s212, %s213
      %s215 = smul.addr %s214, 8
      %s216 = scalar_lea.vmem %s4, %s215
      %s217 = smul.u32 32, %s20
      %p218 = scmp.lt.s32.totalorder %s19, 1
      %s219 = scalar_select %p218, %s19, 1
      %p220 = scmp.lt.s32.totalorder %s217, 31
      %s221 = scalar_select %p220, %s217, 31
      %s222 = smul.addr %s219, 32
      %s223 = sadd.s32 %s221, %s222
      %s224 = smul.addr %s223, 8
      %s225 = scalar_lea.vmem %s0, %s224
      %s226 = smul.u32 32, %s20
      %s227 = smul.u32 32, %s20
      %p228 = scmp.lt.s32.totalorder %s19, 1
      %s229 = scalar_select %p228, %s19, 1
      %p230 = scmp.lt.s32.totalorder %s227, 31
      %s231 = scalar_select %p230, %s227, 31
      %s232 = smul.addr %s229, 32
      %s233 = sadd.s32 %s231, %s232
      %s234 = smul.addr %s233, 8
      %s235 = scalar_lea.vmem %s4, %s234
      %s236 = smul.u32 32, %s20
      %v237 = vld [vmem:[%s225] sm:$0xff]
      %v238 = vld [vmem:[%s225 + $0x8] sm:$0xff]
      %v239 = vld [vmem:[%s225 + $0x10] sm:$0xff]
      %v240 = vld [vmem:[%s225 + $0x18] sm:$0xff]
      %v241 = vld [vmem:[%s225 + $0x20] sm:$0xff]
      %v242 = vld [vmem:[%s225 + $0x28] sm:$0xff]
      %v243 = vld [vmem:[%s225 + $0x30] sm:$0xff]
      %v244 = vld [vmem:[%s225 + $0x38] sm:$0xff]
      %v245 = vld [vmem:[%s225 + $0x40] sm:$0xff]
      %v246 = vld [vmem:[%s225 + $0x48] sm:$0xff]
      %v247 = vld [vmem:[%s225 + $0x50] sm:$0xff]
      %v248 = vld [vmem:[%s225 + $0x58] sm:$0xff]
      %v249 = vld [vmem:[%s225 + $0x60] sm:$0xff]
      %v250 = vld [vmem:[%s225 + $0x68] sm:$0xff]
      %v251 = vld [vmem:[%s225 + $0x70] sm:$0xff]
      %v252 = vld [vmem:[%s225 + $0x78] sm:$0xff]
      %v253 = vld [vmem:[%s225 + $0x80] sm:$0xff]
      %v254 = vld [vmem:[%s225 + $0x88] sm:$0xff]
      %v255 = vld [vmem:[%s225 + $0x90] sm:$0xff]
      %v256 = vld [vmem:[%s225 + $0x98] sm:$0xff]
      %v257 = vld [vmem:[%s225 + $0xa0] sm:$0xff]
      %v258 = vld [vmem:[%s225 + $0xa8] sm:$0xff]
      %v259 = vld [vmem:[%s225 + $0xb0] sm:$0xff]
      %v260 = vld [vmem:[%s225 + $0xb8] sm:$0xff]
      %v261 = vld [vmem:[%s225 + $0xc0] sm:$0xff]
      %v262 = vld [vmem:[%s225 + $0xc8] sm:$0xff]
      %v263 = vld [vmem:[%s225 + $0xd0] sm:$0xff]
      %v264 = vld [vmem:[%s225 + $0xd8] sm:$0xff]
      %v265 = vld [vmem:[%s225 + $0xe0] sm:$0xff]
      %v266 = vld [vmem:[%s225 + $0xe8] sm:$0xff]
      %v267 = vld [vmem:[%s225 + $0xf0] sm:$0xff]
      %v268 = vld [vmem:[%s225 + $0xf8] sm:$0xff]
      %v269 = vld [vmem:[%s1] sm:$0xff]
      %vm270 = vcmask 64512
      %v272 = vsel %vm270, %v237, 0
      %v275 = vsel %vm270, %v238, 0
      %v278 = vsel %vm270, %v239, 0
      %v281 = vsel %vm270, %v240, 0
      %v284 = vsel %vm270, %v241, 0
      %v287 = vsel %vm270, %v242, 0
      %v290 = vsel %vm270, %v243, 0
      %v293 = vsel %vm270, %v244, 0
      %v296 = vsel %vm270, %v245, 0
      %v299 = vsel %vm270, %v246, 0
      %v302 = vsel %vm270, %v247, 0
      %v305 = vsel %vm270, %v248, 0
      %v308 = vsel %vm270, %v249, 0
      %v311 = vsel %vm270, %v250, 0
      %v314 = vsel %vm270, %v251, 0
      %v317 = vsel %vm270, %v252, 0
      %v320 = vsel %vm270, %v253, 0
      %v323 = vsel %vm270, %v254, 0
      %v326 = vsel %vm270, %v255, 0
      %v329 = vsel %vm270, %v256, 0
      %v332 = vsel %vm270, %v257, 0
      %v335 = vsel %vm270, %v258, 0
      %v338 = vsel %vm270, %v259, 0
      %v341 = vsel %vm270, %v260, 0
      %v344 = vsel %vm270, %v261, 0
      %v347 = vsel %vm270, %v262, 0
      %v350 = vsel %vm270, %v263, 0
      %v353 = vsel %vm270, %v264, 0
      %v356 = vsel %vm270, %v265, 0
      %v359 = vsel %vm270, %v266, 0
      %v362 = vsel %vm270, %v267, 0
      %v365 = vsel %vm270, %v268, 0
      %367 = vmatpush.msra.mxu0 0.0
      %368 = vmatpush.msra.mxu0 0.0
      %369 = vmatpush.msra.mxu0 0.0
      %370 = vmatpush.msra.mxu0 0.0
      %371 = vmatpush.msra.mxu0 0.0
      %372 = vmatpush.msra.mxu0 0.0
      %373 = vmatpush.msra.mxu0 0.0
      %374 = vmatpush.msra.mxu0 0.0
      %375 = vmatpush.msra.mxu0 0.0
      %376 = vmatpush.msra.mxu0 0.0
      %377 = vmatpush.msra.mxu0 0.0
      %378 = vmatpush.msra.mxu0 0.0
      %379 = vmatpush.msra.mxu0 0.0
      %380 = vmatpush.msra.mxu0 0.0
      %381 = vmatpush.msra.mxu0 0.0
      %382 = vmatpush.msra.mxu0 %v269
      %383 = vmatmul.f32.gmra.mxu0 %v272
      %v384 = vpop.f32.mrf.mxu0
      %v385 = vadd.f32 0.0, %v384
      %386 = vmatmul.f32.gmra.mxu0 %v275
      %v387 = vpop.f32.mrf.mxu0
      %v388 = vadd.f32 0.0, %v387
      %389 = vmatmul.f32.gmra.mxu0 %v278
      %v390 = vpop.f32.mrf.mxu0
      %v391 = vadd.f32 0.0, %v390
      %392 = vmatmul.f32.gmra.mxu0 %v281
      %v393 = vpop.f32.mrf.mxu0
      %v394 = vadd.f32 0.0, %v393
      %395 = vmatmul.f32.gmra.mxu0 %v284
      %v396 = vpop.f32.mrf.mxu0
      %v397 = vadd.f32 0.0, %v396
      %398 = vmatmul.f32.gmra.mxu0 %v287
      %v399 = vpop.f32.mrf.mxu0
      %v400 = vadd.f32 0.0, %v399
      %401 = vmatmul.f32.gmra.mxu0 %v290
      %v402 = vpop.f32.mrf.mxu0
      %v403 = vadd.f32 0.0, %v402
      %404 = vmatmul.f32.gmra.mxu0 %v293
      %v405 = vpop.f32.mrf.mxu0
      %v406 = vadd.f32 0.0, %v405
      %407 = vmatmul.f32.gmra.mxu0 %v296
      %v408 = vpop.f32.mrf.mxu0
      %v409 = vadd.f32 0.0, %v408
      %410 = vmatmul.f32.gmra.mxu0 %v299
      %v411 = vpop.f32.mrf.mxu0
      %v412 = vadd.f32 0.0, %v411
      %413 = vmatmul.f32.gmra.mxu0 %v302
      %v414 = vpop.f32.mrf.mxu0
      %v415 = vadd.f32 0.0, %v414
      %416 = vmatmul.f32.gmra.mxu0 %v305
      %v417 = vpop.f32.mrf.mxu0
      %v418 = vadd.f32 0.0, %v417
      %419 = vmatmul.f32.gmra.mxu0 %v308
      %v420 = vpop.f32.mrf.mxu0
      %v421 = vadd.f32 0.0, %v420
      %422 = vmatmul.f32.gmra.mxu0 %v311
      %v423 = vpop.f32.mrf.mxu0
      %v424 = vadd.f32 0.0, %v423
      %425 = vmatmul.f32.gmra.mxu0 %v314
      %v426 = vpop.f32.mrf.mxu0
      %v427 = vadd.f32 0.0, %v426
      %428 = vmatmul.f32.gmra.mxu0 %v317
      %v429 = vpop.f32.mrf.mxu0
      %v430 = vadd.f32 0.0, %v429
      %431 = vmatmul.f32.gmra.mxu0 %v320
      %v432 = vpop.f32.mrf.mxu0
      %v433 = vadd.f32 0.0, %v432
      %434 = vmatmul.f32.gmra.mxu0 %v323
      %v435 = vpop.f32.mrf.mxu0
      %v436 = vadd.f32 0.0, %v435
      %437 = vmatmul.f32.gmra.mxu0 %v326
      %v438 = vpop.f32.mrf.mxu0
      %v439 = vadd.f32 0.0, %v438
      %440 = vmatmul.f32.gmra.mxu0 %v329
      %v441 = vpop.f32.mrf.mxu0
      %v442 = vadd.f32 0.0, %v441
      %443 = vmatmul.f32.gmra.mxu0 %v332
      %v444 = vpop.f32.mrf.mxu0
      %v445 = vadd.f32 0.0, %v444
      %446 = vmatmul.f32.gmra.mxu0 %v335
      %v447 = vpop.f32.mrf.mxu0
      %v448 = vadd.f32 0.0, %v447
      %449 = vmatmul.f32.gmra.mxu0 %v338
      %v450 = vpop.f32.mrf.mxu0
      %v451 = vadd.f32 0.0, %v450
      %452 = vmatmul.f32.gmra.mxu0 %v341
      %v453 = vpop.f32.mrf.mxu0
      %v454 = vadd.f32 0.0, %v453
      %455 = vmatmul.f32.gmra.mxu0 %v344
      %v456 = vpop.f32.mrf.mxu0
      %v457 = vadd.f32 0.0, %v456
      %458 = vmatmul.f32.gmra.mxu0 %v347
      %v459 = vpop.f32.mrf.mxu0
      %v460 = vadd.f32 0.0, %v459
      %461 = vmatmul.f32.gmra.mxu0 %v350
      %v462 = vpop.f32.mrf.mxu0
      %v463 = vadd.f32 0.0, %v462
      %464 = vmatmul.f32.gmra.mxu0 %v353
      %v465 = vpop.f32.mrf.mxu0
      %v466 = vadd.f32 0.0, %v465
      %467 = vmatmul.f32.gmra.mxu0 %v356
      %v468 = vpop.f32.mrf.mxu0
      %v469 = vadd.f32 0.0, %v468
      %470 = vmatmul.f32.gmra.mxu0 %v359
      %v471 = vpop.f32.mrf.mxu0
      %v472 = vadd.f32 0.0, %v471
      %473 = vmatmul.f32.gmra.mxu0 %v362
      %v474 = vpop.f32.mrf.mxu0
      %v475 = vadd.f32 0.0, %v474
      %476 = vmatmul.f32.gmra.mxu0 %v365
      %v477 = vpop.f32.mrf.mxu0
      %v478 = vadd.f32 0.0, %v477
      %479 = vdwg.mxu0
      %v480 = vld [vmem:[%s2] sm:$0x1]
      %v482 = vperm.slane %v480, 0
      %v484 = vmul.f32 %v385, %v482
      %v485 = vmul.f32 %v388, %v482
      %v486 = vmul.f32 %v391, %v482
      %v487 = vmul.f32 %v394, %v482
      %v488 = vmul.f32 %v397, %v482
      %v489 = vmul.f32 %v400, %v482
      %v490 = vmul.f32 %v403, %v482
      %v491 = vmul.f32 %v406, %v482
      %v492 = vmul.f32 %v409, %v482
      %v493 = vmul.f32 %v412, %v482
      %v494 = vmul.f32 %v415, %v482
      %v495 = vmul.f32 %v418, %v482
      %v496 = vmul.f32 %v421, %v482
      %v497 = vmul.f32 %v424, %v482
      %v498 = vmul.f32 %v427, %v482
      %v499 = vmul.f32 %v430, %v482
      %v500 = vmul.f32 %v433, %v482
      %v501 = vmul.f32 %v436, %v482
      %v502 = vmul.f32 %v439, %v482
      %v503 = vmul.f32 %v442, %v482
      %v504 = vmul.f32 %v445, %v482
      %v505 = vmul.f32 %v448, %v482
      %v506 = vmul.f32 %v451, %v482
      %v507 = vmul.f32 %v454, %v482
      %v508 = vmul.f32 %v457, %v482
      %v509 = vmul.f32 %v460, %v482
      %v510 = vmul.f32 %v463, %v482
      %v511 = vmul.f32 %v466, %v482
      %v512 = vmul.f32 %v469, %v482
      %v513 = vmul.f32 %v472, %v482
      %v514 = vmul.f32 %v475, %v482
      %v515 = vmul.f32 %v478, %v482
      %v516 = vld [vmem:[%s3] sm:$0x1]
      %v518 = vperm.slane %v516, 0
      %v520 = vadd.f32 %v484, %v518
      %v521 = vadd.f32 %v485, %v518
      %v522 = vadd.f32 %v486, %v518
      %v523 = vadd.f32 %v487, %v518
      %v524 = vadd.f32 %v488, %v518
      %v525 = vadd.f32 %v489, %v518
      %v526 = vadd.f32 %v490, %v518
      %v527 = vadd.f32 %v491, %v518
      %v528 = vadd.f32 %v492, %v518
      %v529 = vadd.f32 %v493, %v518
      %v530 = vadd.f32 %v494, %v518
      %v531 = vadd.f32 %v495, %v518
      %v532 = vadd.f32 %v496, %v518
      %v533 = vadd.f32 %v497, %v518
      %v534 = vadd.f32 %v498, %v518
      %v535 = vadd.f32 %v499, %v518
      %v536 = vadd.f32 %v500, %v518
      %v537 = vadd.f32 %v501, %v518
      %v538 = vadd.f32 %v502, %v518
      %v539 = vadd.f32 %v503, %v518
      %v540 = vadd.f32 %v504, %v518
      %v541 = vadd.f32 %v505, %v518
      %v542 = vadd.f32 %v506, %v518
      %v543 = vadd.f32 %v507, %v518
      %v544 = vadd.f32 %v508, %v518
      %v545 = vadd.f32 %v509, %v518
      %v546 = vadd.f32 %v510, %v518
      %v547 = vadd.f32 %v511, %v518
      %v548 = vadd.f32 %v512, %v518
      %v549 = vadd.f32 %v513, %v518
      %v550 = vadd.f32 %v514, %v518
      %v551 = vadd.f32 %v515, %v518
      %v552 = vmax.f32 %v520, 0.0
      %v553 = vmax.f32 %v521, 0.0
      %v554 = vmax.f32 %v522, 0.0
      %v555 = vmax.f32 %v523, 0.0
      %v556 = vmax.f32 %v524, 0.0
      %v557 = vmax.f32 %v525, 0.0
      %v558 = vmax.f32 %v526, 0.0
      %v559 = vmax.f32 %v527, 0.0
      %v560 = vmax.f32 %v528, 0.0
      %v561 = vmax.f32 %v529, 0.0
      %v562 = vmax.f32 %v530, 0.0
      %v563 = vmax.f32 %v531, 0.0
      %v564 = vmax.f32 %v532, 0.0
      %v565 = vmax.f32 %v533, 0.0
      %v566 = vmax.f32 %v534, 0.0
      %v567 = vmax.f32 %v535, 0.0
      %v568 = vmax.f32 %v536, 0.0
      %v569 = vmax.f32 %v537, 0.0
      %v570 = vmax.f32 %v538, 0.0
      %v571 = vmax.f32 %v539, 0.0
      %v572 = vmax.f32 %v540, 0.0
      %v573 = vmax.f32 %v541, 0.0
      %v574 = vmax.f32 %v542, 0.0
      %v575 = vmax.f32 %v543, 0.0
      %v576 = vmax.f32 %v544, 0.0
      %v577 = vmax.f32 %v545, 0.0
      %v578 = vmax.f32 %v546, 0.0
      %v579 = vmax.f32 %v547, 0.0
      %v580 = vmax.f32 %v548, 0.0
      %v581 = vmax.f32 %v549, 0.0
      %v582 = vmax.f32 %v550, 0.0
      %v583 = vmax.f32 %v551, 0.0
      %584 = vst.msk [vmem:[%s235] sm:$0xff] %vm270, %v552
      %585 = vst.msk [vmem:[%s235 + $0x8] sm:$0xff] %vm270, %v553
      %586 = vst.msk [vmem:[%s235 + $0x10] sm:$0xff] %vm270, %v554
      %587 = vst.msk [vmem:[%s235 + $0x18] sm:$0xff] %vm270, %v555
      %588 = vst.msk [vmem:[%s235 + $0x20] sm:$0xff] %vm270, %v556
      %589 = vst.msk [vmem:[%s235 + $0x28] sm:$0xff] %vm270, %v557
      %590 = vst.msk [vmem:[%s235 + $0x30] sm:$0xff] %vm270, %v558
      %591 = vst.msk [vmem:[%s235 + $0x38] sm:$0xff] %vm270, %v559
      %592 = vst.msk [vmem:[%s235 + $0x40] sm:$0xff] %vm270, %v560
      %593 = vst.msk [vmem:[%s235 + $0x48] sm:$0xff] %vm270, %v561
      %594 = vst.msk [vmem:[%s235 + $0x50] sm:$0xff] %vm270, %v562
      %595 = vst.msk [vmem:[%s235 + $0x58] sm:$0xff] %vm270, %v563
      %596 = vst.msk [vmem:[%s235 + $0x60] sm:$0xff] %vm270, %v564
      %597 = vst.msk [vmem:[%s235 + $0x68] sm:$0xff] %vm270, %v565
      %598 = vst.msk [vmem:[%s235 + $0x70] sm:$0xff] %vm270, %v566
      %599 = vst.msk [vmem:[%s235 + $0x78] sm:$0xff] %vm270, %v567
      %600 = vst.msk [vmem:[%s235 + $0x80] sm:$0xff] %vm270, %v568
      %601 = vst.msk [vmem:[%s235 + $0x88] sm:$0xff] %vm270, %v569
      %602 = vst.msk [vmem:[%s235 + $0x90] sm:$0xff] %vm270, %v570
      %603 = vst.msk [vmem:[%s235 + $0x98] sm:$0xff] %vm270, %v571
      %604 = vst.msk [vmem:[%s235 + $0xa0] sm:$0xff] %vm270, %v572
      %605 = vst.msk [vmem:[%s235 + $0xa8] sm:$0xff] %vm270, %v573
      %606 = vst.msk [vmem:[%s235 + $0xb0] sm:$0xff] %vm270, %v574
      %607 = vst.msk [vmem:[%s235 + $0xb8] sm:$0xff] %vm270, %v575
      %608 = vst.msk [vmem:[%s235 + $0xc0] sm:$0xff] %vm270, %v576
      %609 = vst.msk [vmem:[%s235 + $0xc8] sm:$0xff] %vm270, %v577
      %610 = vst.msk [vmem:[%s235 + $0xd0] sm:$0xff] %vm270, %v578
      %611 = vst.msk [vmem:[%s235 + $0xd8] sm:$0xff] %vm270, %v579
      %612 = vst.msk [vmem:[%s235 + $0xe0] sm:$0xff] %vm270, %v580
      %613 = vst.msk [vmem:[%s235 + $0xe8] sm:$0xff] %vm270, %v581
      %614 = vst.msk [vmem:[%s235 + $0xf0] sm:$0xff] %vm270, %v582
      %615 = vst.msk [vmem:[%s235 + $0xf8] sm:$0xff] %vm270, %v583
      %s616 = smul.u32 32, %s20
      %p617 = scmp.lt.s32.totalorder %s19, 1
      %s618 = scalar_select %p617, %s19, 1
      %p619 = scmp.lt.s32.totalorder %s616, 31
      %s620 = scalar_select %p619, %s616, 31
      %s621 = smul.addr %s618, 32
      %s622 = sadd.s32 %s620, %s621
      %s623 = smul.addr %s622, 8
      %s624 = scalar_lea.vmem %s4, %s623
      // Predicated region
      $region37: #{shuffle_v2_block_forward.4} parent=35 // pred_check
        %p625 = pneg %p138
      $region38: #{shuffle_v2_block_forward.4} parent=35 // pred_check_branch
        %627 = sbr.rel (%p625) target = $region40
      $region39: #{shuffle_v2_block_forward.4} parent=35 // pred_region
        %s628 = smul.u32 32, %s20
      $region40: #{shuffle_v2_block_forward.4} parent=35 // pred_fallthru
        _
    $region36: #{shuffle_v2_block_forward.4} parent=5 // pred_fallthru
      _
    %p629 = scmp.le.s32.totalorder 2, %s10
    // Predicated region
    $region41: #{shuffle_v2_block_forward.4} parent=5 // pred_check
      %p630 = pneg %p629
    $region42: #{shuffle_v2_block_forward.4} parent=5 // pred_check_branch
      %632 = sbr.rel (%p630) target = $region44
    $region43: #{shuffle_v2_block_forward.4} parent=5 // pred_region
      %s633 = ssub.s32 %s10, 2
      // Predicated region
      $region45: #{shuffle_v2_block_forward.4} parent=43 // pred_check
        %p634 = pneg %p144
      $region46: #{shuffle_v2_block_forward.4} parent=43 // pred_check_branch
        %636 = sbr.rel (%p634) target = $region48
      $region47: #{shuffle_v2_block_forward.4} parent=43 // pred_region
        %s637 = smul.u32 32, %s22
        %p638 = scmp.lt.s32.totalorder %s21, 1
        %s639 = scalar_select %p638, %s21, 1
        %p640 = scmp.lt.s32.totalorder %s637, 31
        %s641 = scalar_select %p640, %s637, 31
        %s642 = smul.addr %s639, 32
        %s643 = sadd.s32 %s641, %s642
        %s644 = smul.addr %s643, 8
        %s645 = scalar_lea.vmem %s4, %s644
      $region48: #{shuffle_v2_block_forward.4} parent=43 // pred_fallthru
        _
    $region44: #{shuffle_v2_block_forward.4} parent=5 // pred_fallthru
      _
  $region6: #{shuffle_v2_block_forward.4} parent=0 // loop_footer
    %s14 = sadd.s32 1, %s10
  $region7: #{shuffle_v2_block_forward.4} parent=0 // loop_footer_branch
    %9 = sbr.rel target = $region3
  $region8: #{shuffle_v2_block_forward.4} parent=0 // loop_exit
    _

// kernel: shuffle_v2_block_forward.7
$region0: #{shuffle_v2_block_forward.7}
  #allocation0 [shape = 'u32[]', space=smem, size = 0x4, offset = 0x4, fixed_abs, tag = 'smem constant byte address 0x4 - core index']
  #allocation1 [shape = 'u32[72,128]{1,0:T(1,128)}', space=vmem, size = 0x9000, scoped, tag = 'internal scratch']
  %s0 = inlined_call_operand.vmem [shape: f32[2,256,8], index: 0, kind: input, shape index: {}]
  %s1 = inlined_call_operand.vmem [shape: f32[2,256,8], index: 1, kind: input, shape index: {}]
  %s2 = inlined_call_operand.vmem [shape: f32[2,256,8], index: 2, kind: input, shape index: {}]
  %s3 = inlined_call_operand.vmem [shape: f32[2,256,16], index: 3, kind: output, shape index: {}]
  %s4 = sld [smem:[#allocation0]]
  $region45: #{shuffle_v2_block_forward.7} parent=0
    _
  %s6 = ssub.s32 1, %s4
  %s7 = scalar_select 0, %s6, %s4
  loop: start=0, step=1, limit=4
  $region2: #{shuffle_v2_block_forward.7} parent=0 // loop_pre_header
    _
  $region3: #{shuffle_v2_block_forward.7} parent=0 // loop_header
    %s9 = sphi 0, %s13
    %p10 = scmp.ge.s32.totalorder %s9, 4
    %s16 = sphi 0, %s28
    %s17 = sphi 0, %s24
    %s18 = sphi 0, %s16
    %s19 = sphi 0, %s17
    %s20 = sphi 0, %s18
    %s21 = sphi 0, %s19
    %s33 = sphi 0, %s35
    %s36 = sphi 0, %s33
    %s37 = sphi 0, %s36
    %s53 = sphi 0, %s37
    %s61 = sphi 0, %s63
    %s64 = sphi 0, %s61
    %s65 = sphi 0, %s64
    %s81 = sphi 0, %s65
    %s89 = sphi 0, %s91
    %s92 = sphi 0, %s89
    %s93 = sphi 0, %s92
    %s109 = sphi 0, %s93
    %s117 = sphi 0, %s119
    %s120 = sphi 0, %s117
    %s121 = sphi 0, %s120
    %s137 = sphi 0, %s121
  $region4: #{shuffle_v2_block_forward.7} parent=0 // loop_header_branch
    %12 = sbr.rel (%p10) target = $region8
  $region5: #{shuffle_v2_block_forward.7} parent=0 // loop_body
    %s14 = ssub.s32 %s9, 1
    %s15 = ssub.s32 %s9, 2
    %s22 = sadd.s32 1, %s17
    %p23 = scmp.ge.s32.totalorder %s22, 1
    %s24 = scalar_select %p23, 0, %s22
    %s25 = sadd.s32 1, %s16
    %s26 = scalar_select %p23, %s25, %s16
    %p27 = scmp.ge.s32.totalorder %s26, 2
    %s28 = scalar_select %p27, 0, %s26
    %s29 = ssub.s32 %s16, %s28
    %s30 = ssub.s32 %s17, %s24
    %s31 = sor.u32 %s29, %s30
    %p32 = scmp.eq.s32.totalorder %s31, 0
    %s34 = sadd.s32 %s33, 1
    %s35 = scalar_select %p32, %s33, %s34
    %p38 = pneg %p32
    %p39 = scmp.eq.s32.totalorder %s9, 1
    %p40 = por %p38, %p39
    %p41 = scmp.ne.s32.totalorder %s33, %s36
    %p42 = scmp.eq.s32.totalorder %s9, 0
    %p43 = por %p41, %p42
    %p44 = scmp.ne.s32.totalorder %s33, %s36
    %p45 = scmp.eq.s32.totalorder %s14, 1
    %p46 = por %p44, %p45
    %p47 = scmp.ne.s32.totalorder %s36, %s37
    %p48 = scmp.eq.s32.totalorder %s14, 0
    %p49 = por %p47, %p48
    %p50 = scmp.ne.s32.totalorder %s36, %s37
    %p51 = scmp.eq.s32.totalorder %s15, 1
    %p52 = por %p50, %p51
    %p54 = scmp.ne.s32.totalorder %s37, %s53
    %p55 = scmp.eq.s32.totalorder %s15, 0
    %p56 = por %p54, %p55
    %s57 = ssub.s32 %s16, %s28
    %s58 = ssub.s32 %s17, %s24
    %s59 = sor.u32 %s57, %s58
    %p60 = scmp.eq.s32.totalorder %s59, 0
    %s62 = sadd.s32 %s61, 1
    %s63 = scalar_select %p60, %s61, %s62
    %p66 = pneg %p60
    %p67 = scmp.eq.s32.totalorder %s9, 1
    %p68 = por %p66, %p67
    %p69 = scmp.ne.s32.totalorder %s61, %s64
    %p70 = scmp.eq.s32.totalorder %s9, 0
    %p71 = por %p69, %p70
    %p72 = scmp.ne.s32.totalorder %s61, %s64
    %p73 = scmp.eq.s32.totalorder %s14, 1
    %p74 = por %p72, %p73
    %p75 = scmp.ne.s32.totalorder %s64, %s65
    %p76 = scmp.eq.s32.totalorder %s14, 0
    %p77 = por %p75, %p76
    %p78 = scmp.ne.s32.totalorder %s64, %s65
    %p79 = scmp.eq.s32.totalorder %s15, 1
    %p80 = por %p78, %p79
    %p82 = scmp.ne.s32.totalorder %s65, %s81
    %p83 = scmp.eq.s32.totalorder %s15, 0
    %p84 = por %p82, %p83
    %s85 = ssub.s32 %s16, %s28
    %s86 = ssub.s32 %s17, %s24
    %s87 = sor.u32 %s85, %s86
    %p88 = scmp.eq.s32.totalorder %s87, 0
    %s90 = sadd.s32 %s89, 1
    %s91 = scalar_select %p88, %s89, %s90
    %p94 = pneg %p88
    %p95 = scmp.eq.s32.totalorder %s9, 1
    %p96 = por %p94, %p95
    %p97 = scmp.ne.s32.totalorder %s89, %s92
    %p98 = scmp.eq.s32.totalorder %s9, 0
    %p99 = por %p97, %p98
    %p100 = scmp.ne.s32.totalorder %s89, %s92
    %p101 = scmp.eq.s32.totalorder %s14, 1
    %p102 = por %p100, %p101
    %p103 = scmp.ne.s32.totalorder %s92, %s93
    %p104 = scmp.eq.s32.totalorder %s14, 0
    %p105 = por %p103, %p104
    %p106 = scmp.ne.s32.totalorder %s92, %s93
    %p107 = scmp.eq.s32.totalorder %s15, 1
    %p108 = por %p106, %p107
    %p110 = scmp.ne.s32.totalorder %s93, %s109
    %p111 = scmp.eq.s32.totalorder %s15, 0
    %p112 = por %p110, %p111
    %s113 = ssub.s32 %s16, %s28
    %s114 = ssub.s32 %s17, %s24
    %s115 = sor.u32 %s113, %s114
    %p116 = scmp.eq.s32.totalorder %s115, 0
    %s118 = sadd.s32 %s117, 1
    %s119 = scalar_select %p116, %s117, %s118
    %p122 = pneg %p116
    %p123 = scmp.eq.s32.totalorder %s9, 1
    %p124 = por %p122, %p123
    %p125 = scmp.ne.s32.totalorder %s117, %s120
    %p126 = scmp.eq.s32.totalorder %s9, 0
    %p127 = por %p125, %p126
    %p128 = scmp.ne.s32.totalorder %s117, %s120
    %p129 = scmp.eq.s32.totalorder %s14, 1
    %p130 = por %p128, %p129
    %p131 = scmp.ne.s32.totalorder %s120, %s121
    %p132 = scmp.eq.s32.totalorder %s14, 0
    %p133 = por %p131, %p132
    %p134 = scmp.ne.s32.totalorder %s120, %s121
    %p135 = scmp.eq.s32.totalorder %s15, 1
    %p136 = por %p134, %p135
    %p138 = scmp.ne.s32.totalorder %s121, %s137
    %p139 = scmp.eq.s32.totalorder %s15, 0
    %p140 = por %p138, %p139
    %p141 = scmp.le.s32.totalorder 1, %s9
    %p142 = scmp.lt.s32.totalorder %s9, 3
    %p143 = pnand %p141, %p142
    %p144 = pneg %p143
    // Predicated region
    $region9: #{shuffle_v2_block_forward.7} parent=5 // pred_check
      _
    $region10: #{shuffle_v2_block_forward.7} parent=5 // pred_check_branch
      %146 = sbr.rel (%p143) target = $region12
    $region11: #{shuffle_v2_block_forward.7} parent=5 // pred_region
      %s147 = ssub.s32 %s9, 1
    $region12: #{shuffle_v2_block_forward.7} parent=5 // pred_fallthru
      _
    %p148 = scmp.lt.s32.totalorder %s9, 2
    // Predicated region
    $region13: #{shuffle_v2_block_forward.7} parent=5 // pred_check
      %p149 = pneg %p148
    $region14: #{shuffle_v2_block_forward.7} parent=5 // pred_check_branch
      %151 = sbr.rel (%p149) target = $region16
    $region15: #{shuffle_v2_block_forward.7} parent=5 // pred_region
      // Predicated region
      $region17: #{shuffle_v2_block_forward.7} parent=15 // pred_check
        %p152 = pneg %p43
      $region18: #{shuffle_v2_block_forward.7} parent=15 // pred_check_branch
        %154 = sbr.rel (%p152) target = $region20
      $region19: #{shuffle_v2_block_forward.7} parent=15 // pred_region
        %s155 = smul.u32 32, %s17
        %p156 = scmp.lt.s32.totalorder %s16, 1
        %s157 = scalar_select %p156, %s16, 1
        %p158 = scmp.lt.s32.totalorder %s155, 31
        %s159 = scalar_select %p158, %s155, 31
        %s160 = smul.addr %s157, 32
        %s161 = sadd.s32 %s159, %s160
        %s162 = smul.addr %s161, 8
        %s163 = scalar_lea.vmem %s0, %s162
        %s164 = smul.u32 32, %s17
      $region20: #{shuffle_v2_block_forward.7} parent=15 // pred_fallthru
        _
      // Predicated region
      $region21: #{shuffle_v2_block_forward.7} parent=15 // pred_check
        %p165 = pneg %p71
      $region22: #{shuffle_v2_block_forward.7} parent=15 // pred_check_branch
        %167 = sbr.rel (%p165) target = $region24
      $region23: #{shuffle_v2_block_forward.7} parent=15 // pred_region
        %s168 = smul.u32 32, %s17
        %p169 = scmp.lt.s32.totalorder %s16, 1
        %s170 = scalar_select %p169, %s16, 1
        %p171 = scmp.lt.s32.totalorder %s168, 31
        %s172 = scalar_select %p171, %s168, 31
        %s173 = smul.addr %s170, 32
        %s174 = sadd.s32 %s172, %s173
        %s175 = smul.addr %s174, 8
        %s176 = scalar_lea.vmem %s1, %s175
        %s177 = smul.u32 32, %s17
      $region24: #{shuffle_v2_block_forward.7} parent=15 // pred_fallthru
        _
      // Predicated region
      $region25: #{shuffle_v2_block_forward.7} parent=15 // pred_check
        %p178 = pneg %p99
      $region26: #{shuffle_v2_block_forward.7} parent=15 // pred_check_branch
        %180 = sbr.rel (%p178) target = $region28
      $region27: #{shuffle_v2_block_forward.7} parent=15 // pred_region
        %s181 = smul.u32 32, %s17
        %p182 = scmp.lt.s32.totalorder %s16, 1
        %s183 = scalar_select %p182, %s16, 1
        %p184 = scmp.lt.s32.totalorder %s181, 31
        %s185 = scalar_select %p184, %s181, 31
        %s186 = smul.addr %s183, 32
        %s187 = sadd.s32 %s185, %s186
        %s188 = smul.addr %s187, 8
        %s189 = scalar_lea.vmem %s2, %s188
        %s190 = smul.u32 32, %s17
      $region28: #{shuffle_v2_block_forward.7} parent=15 // pred_fallthru
        _
    $region16: #{shuffle_v2_block_forward.7} parent=5 // pred_fallthru
      _
    %p191 = scmp.le.s32.totalorder 1, %s9
    %p192 = scmp.lt.s32.totalorder %s9, 3
    %p193 = pnand %p191, %p192
    %p194 = pneg %p193
    // Predicated region
    $region29: #{shuffle_v2_block_forward.7} parent=5 // pred_check
      _
    $region30: #{shuffle_v2_block_forward.7} parent=5 // pred_check_branch
      %196 = sbr.rel (%p193) target = $region32
    $region31: #{shuffle_v2_block_forward.7} parent=5 // pred_region
      %s197 = ssub.s32 %s9, 1
      %s198 = smul.u32 32, %s19
      %p199 = scmp.lt.s32.totalorder %s18, 1
      %s200 = scalar_select %p199, %s18, 1
      %p201 = scmp.lt.s32.totalorder %s198, 31
      %s202 = scalar_select %p201, %s198, 31
      %s203 = smul.addr %s200, 32
      %s204 = sadd.s32 %s202, %s203
      %s205 = smul.addr %s204, 8
      %s206 = scalar_lea.vmem %s0, %s205
      %p207 = pneg %p49
      %p208 = pneg %p46
      %s209 = smul.u32 32, %s19
      %p210 = scmp.lt.s32.totalorder %s18, 1
      %s211 = scalar_select %p210, %s18, 1
      %p212 = scmp.lt.s32.totalorder %s209, 31
      %s213 = scalar_select %p212, %s209, 31
      %s214 = smul.addr %s211, 32
      %s215 = sadd.s32 %s213, %s214
      %s216 = smul.addr %s215, 8
      %s217 = scalar_lea.vmem %s1, %s216
      %p218 = pneg %p77
      %p219 = pneg %p74
      %s220 = smul.u32 32, %s19
      %p221 = scmp.lt.s32.totalorder %s18, 1
      %s222 = scalar_select %p221, %s18, 1
      %p223 = scmp.lt.s32.totalorder %s220, 31
      %s224 = scalar_select %p223, %s220, 31
      %s225 = smul.addr %s222, 32
      %s226 = sadd.s32 %s224, %s225
      %s227 = smul.addr %s226, 8
      %s228 = scalar_lea.vmem %s2, %s227
      %p229 = pneg %p105
      %p230 = pneg %p102
      %p231 = pneg %p133
      %p232 = pneg %p130
      %s233 = smul.u32 32, %s19
      %p234 = scmp.lt.s32.totalorder %s18, 1
      %s235 = scalar_select %p234, %s18, 1
      %p236 = scmp.lt.s32.totalorder %s233, 31
      %s237 = scalar_select %p236, %s233, 31
      %s238 = smul.addr %s235, 32
      %s239 = sadd.s32 %s237, %s238
      %s240 = smul.addr %s239, 8
      %s241 = scalar_lea.vmem %s3, %s240
      %s242 = smul.u32 32, %s19
      %p243 = scmp.lt.s32.totalorder %s18, 1
      %s244 = scalar_select %p243, %s18, 1
      %p245 = scmp.lt.s32.totalorder %s242, 31
      %s246 = scalar_select %p245, %s242, 31
      %s247 = smul.addr %s244, 32
      %s248 = sadd.s32 %s246, %s247
      %s249 = smul.addr %s248, 8
      %s250 = scalar_lea.vmem %s0, %s249
      %s251 = smul.u32 32, %s19
      %s252 = smul.u32 32, %s19
      %p253 = scmp.lt.s32.totalorder %s18, 1
      %s254 = scalar_select %p253, %s18, 1
      %p255 = scmp.lt.s32.totalorder %s252, 31
      %s256 = scalar_select %p255, %s252, 31
      %s257 = smul.addr %s254, 32
      %s258 = sadd.s32 %s256, %s257
      %s259 = smul.addr %s258, 8
      %s260 = scalar_lea.vmem %s1, %s259
      %s261 = smul.u32 32, %s19
      %s262 = smul.u32 32, %s19
      %p263 = scmp.lt.s32.totalorder %s18, 1
      %s264 = scalar_select %p263, %s18, 1
      %p265 = scmp.lt.s32.totalorder %s262, 31
      %s266 = scalar_select %p265, %s262, 31
      %s267 = smul.addr %s264, 32
      %s268 = sadd.s32 %s266, %s267
      %s269 = smul.addr %s268, 8
      %s270 = scalar_lea.vmem %s2, %s269
      %s271 = smul.u32 32, %s19
      %s272 = smul.u32 32, %s19
      %p273 = scmp.lt.s32.totalorder %s18, 1
      %s274 = scalar_select %p273, %s18, 1
      %p275 = scmp.lt.s32.totalorder %s272, 31
      %s276 = scalar_select %p275, %s272, 31
      %s277 = smul.addr %s274, 32
      %s278 = sadd.s32 %s276, %s277
      %s279 = smul.addr %s278, 8
      %s280 = scalar_lea.vmem %s3, %s279
      %s281 = smul.u32 32, %s19
      %v282 = vld [vmem:[%s250] sm:$0xff]
      %v283 = vld [vmem:[%s250 + $0x8] sm:$0xff]
      %v284 = vld [vmem:[%s250 + $0x10] sm:$0xff]
      %v285 = vld [vmem:[%s250 + $0x18] sm:$0xff]
      %v286 = vld [vmem:[%s250 + $0x20] sm:$0xff]
      %v287 = vld [vmem:[%s250 + $0x28] sm:$0xff]
      %v288 = vld [vmem:[%s250 + $0x30] sm:$0xff]
      %v289 = vld [vmem:[%s250 + $0x38] sm:$0xff]
      %v290 = vld [vmem:[%s250 + $0x40] sm:$0xff]
      %v291 = vld [vmem:[%s250 + $0x48] sm:$0xff]
      %v292 = vld [vmem:[%s250 + $0x50] sm:$0xff]
      %v293 = vld [vmem:[%s250 + $0x58] sm:$0xff]
      %v294 = vld [vmem:[%s250 + $0x60] sm:$0xff]
      %v295 = vld [vmem:[%s250 + $0x68] sm:$0xff]
      %v296 = vld [vmem:[%s250 + $0x70] sm:$0xff]
      %v297 = vld [vmem:[%s250 + $0x78] sm:$0xff]
      %v298 = vld [vmem:[%s250 + $0x80] sm:$0xff]
      %v299 = vld [vmem:[%s250 + $0x88] sm:$0xff]
      %v300 = vld [vmem:[%s250 + $0x90] sm:$0xff]
      %v301 = vld [vmem:[%s250 + $0x98] sm:$0xff]
      %v302 = vld [vmem:[%s250 + $0xa0] sm:$0xff]
      %v303 = vld [vmem:[%s250 + $0xa8] sm:$0xff]
      %v304 = vld [vmem:[%s250 + $0xb0] sm:$0xff]
      %v305 = vld [vmem:[%s250 + $0xb8] sm:$0xff]
      %v306 = vld [vmem:[%s250 + $0xc0] sm:$0xff]
      %v307 = vld [vmem:[%s250 + $0xc8] sm:$0xff]
      %v308 = vld [vmem:[%s250 + $0xd0] sm:$0xff]
      %v309 = vld [vmem:[%s250 + $0xd8] sm:$0xff]
      %v310 = vld [vmem:[%s250 + $0xe0] sm:$0xff]
      %v311 = vld [vmem:[%s250 + $0xe8] sm:$0xff]
      %v312 = vld [vmem:[%s250 + $0xf0] sm:$0xff]
      %v313 = vld [vmem:[%s250 + $0xf8] sm:$0xff]
      %v314 = vmax.f32 %v282, 0.0
      %v315 = vmax.f32 %v283, 0.0
      %v316 = vmax.f32 %v284, 0.0
      %v317 = vmax.f32 %v285, 0.0
      %v318 = vmax.f32 %v286, 0.0
      %v319 = vmax.f32 %v287, 0.0
      %v320 = vmax.f32 %v288, 0.0
      %v321 = vmax.f32 %v289, 0.0
      %v322 = vmax.f32 %v290, 0.0
      %v323 = vmax.f32 %v291, 0.0
      %v324 = vmax.f32 %v292, 0.0
      %v325 = vmax.f32 %v293, 0.0
      %v326 = vmax.f32 %v294, 0.0
      %v327 = vmax.f32 %v295, 0.0
      %v328 = vmax.f32 %v296, 0.0
      %v329 = vmax.f32 %v297, 0.0
      %v330 = vmax.f32 %v298, 0.0
      %v331 = vmax.f32 %v299, 0.0
      %v332 = vmax.f32 %v300, 0.0
      %v333 = vmax.f32 %v301, 0.0
      %v334 = vmax.f32 %v302, 0.0
      %v335 = vmax.f32 %v303, 0.0
      %v336 = vmax.f32 %v304, 0.0
      %v337 = vmax.f32 %v305, 0.0
      %v338 = vmax.f32 %v306, 0.0
      %v339 = vmax.f32 %v307, 0.0
      %v340 = vmax.f32 %v308, 0.0
      %v341 = vmax.f32 %v309, 0.0
      %v342 = vmax.f32 %v310, 0.0
      %v343 = vmax.f32 %v311, 0.0
      %v344 = vmax.f32 %v312, 0.0
      %v345 = vmax.f32 %v313, 0.0
      %v346 = vld [vmem:[%s260] sm:$0xff]
      %v347 = vld [vmem:[%s260 + $0x8] sm:$0xff]
      %v348 = vld [vmem:[%s260 + $0x10] sm:$0xff]
      %v349 = vld [vmem:[%s260 + $0x18] sm:$0xff]
      %v350 = vld [vmem:[%s260 + $0x20] sm:$0xff]
      %v351 = vld [vmem:[%s260 + $0x28] sm:$0xff]
      %v352 = vld [vmem:[%s260 + $0x30] sm:$0xff]
      %v353 = vld [vmem:[%s260 + $0x38] sm:$0xff]
      %v354 = vld [vmem:[%s260 + $0x40] sm:$0xff]
      %v355 = vld [vmem:[%s260 + $0x48] sm:$0xff]
      %v356 = vld [vmem:[%s260 + $0x50] sm:$0xff]
      %v357 = vld [vmem:[%s260 + $0x58] sm:$0xff]
      %v358 = vld [vmem:[%s260 + $0x60] sm:$0xff]
      %v359 = vld [vmem:[%s260 + $0x68] sm:$0xff]
      %v360 = vld [vmem:[%s260 + $0x70] sm:$0xff]
      %v361 = vld [vmem:[%s260 + $0x78] sm:$0xff]
      %v362 = vld [vmem:[%s260 + $0x80] sm:$0xff]
      %v363 = vld [vmem:[%s260 + $0x88] sm:$0xff]
      %v364 = vld [vmem:[%s260 + $0x90] sm:$0xff]
      %v365 = vld [vmem:[%s260 + $0x98] sm:$0xff]
      %v366 = vld [vmem:[%s260 + $0xa0] sm:$0xff]
      %v367 = vld [vmem:[%s260 + $0xa8] sm:$0xff]
      %v368 = vld [vmem:[%s260 + $0xb0] sm:$0xff]
      %v369 = vld [vmem:[%s260 + $0xb8] sm:$0xff]
      %v370 = vld [vmem:[%s260 + $0xc0] sm:$0xff]
      %v371 = vld [vmem:[%s260 + $0xc8] sm:$0xff]
      %v372 = vld [vmem:[%s260 + $0xd0] sm:$0xff]
      %v373 = vld [vmem:[%s260 + $0xd8] sm:$0xff]
      %v374 = vld [vmem:[%s260 + $0xe0] sm:$0xff]
      %v375 = vld [vmem:[%s260 + $0xe8] sm:$0xff]
      %v376 = vld [vmem:[%s260 + $0xf0] sm:$0xff]
      %v377 = vld [vmem:[%s260 + $0xf8] sm:$0xff]
      %v378 = vld [vmem:[%s270] sm:$0xff]
      %v379 = vld [vmem:[%s270 + $0x8] sm:$0xff]
      %v380 = vld [vmem:[%s270 + $0x10] sm:$0xff]
      %v381 = vld [vmem:[%s270 + $0x18] sm:$0xff]
      %v382 = vld [vmem:[%s270 + $0x20] sm:$0xff]
      %v383 = vld [vmem:[%s270 + $0x28] sm:$0xff]
      %v384 = vld [vmem:[%s270 + $0x30] sm:$0xff]
      %v385 = vld [vmem:[%s270 + $0x38] sm:$0xff]
      %v386 = vld [vmem:[%s270 + $0x40] sm:$0xff]
      %v387 = vld [vmem:[%s270 + $0x48] sm:$0xff]
      %v388 = vld [vmem:[%s270 + $0x50] sm:$0xff]
      %v389 = vld [vmem:[%s270 + $0x58] sm:$0xff]
      %v390 = vld [vmem:[%s270 + $0x60] sm:$0xff]
      %v391 = vld [vmem:[%s270 + $0x68] sm:$0xff]
      %v392 = vld [vmem:[%s270 + $0x70] sm:$0xff]
      %v393 = vld [vmem:[%s270 + $0x78] sm:$0xff]
      %v394 = vld [vmem:[%s270 + $0x80] sm:$0xff]
      %v395 = vld [vmem:[%s270 + $0x88] sm:$0xff]
      %v396 = vld [vmem:[%s270 + $0x90] sm:$0xff]
      %v397 = vld [vmem:[%s270 + $0x98] sm:$0xff]
      %v398 = vld [vmem:[%s270 + $0xa0] sm:$0xff]
      %v399 = vld [vmem:[%s270 + $0xa8] sm:$0xff]
      %v400 = vld [vmem:[%s270 + $0xb0] sm:$0xff]
      %v401 = vld [vmem:[%s270 + $0xb8] sm:$0xff]
      %v402 = vld [vmem:[%s270 + $0xc0] sm:$0xff]
      %v403 = vld [vmem:[%s270 + $0xc8] sm:$0xff]
      %v404 = vld [vmem:[%s270 + $0xd0] sm:$0xff]
      %v405 = vld [vmem:[%s270 + $0xd8] sm:$0xff]
      %v406 = vld [vmem:[%s270 + $0xe0] sm:$0xff]
      %v407 = vld [vmem:[%s270 + $0xe8] sm:$0xff]
      %v408 = vld [vmem:[%s270 + $0xf0] sm:$0xff]
      %v409 = vld [vmem:[%s270 + $0xf8] sm:$0xff]
      %v410 = vadd.f32 %v346, %v378
      %v411 = vadd.f32 %v347, %v379
      %v412 = vadd.f32 %v348, %v380
      %v413 = vadd.f32 %v349, %v381
      %v414 = vadd.f32 %v350, %v382
      %v415 = vadd.f32 %v351, %v383
      %v416 = vadd.f32 %v352, %v384
      %v417 = vadd.f32 %v353, %v385
      %v418 = vadd.f32 %v354, %v386
      %v419 = vadd.f32 %v355, %v387
      %v420 = vadd.f32 %v356, %v388
      %v421 = vadd.f32 %v357, %v389
      %v422 = vadd.f32 %v358, %v390
      %v423 = vadd.f32 %v359, %v391
      %v424 = vadd.f32 %v360, %v392
      %v425 = vadd.f32 %v361, %v393
      %v426 = vadd.f32 %v362, %v394
      %v427 = vadd.f32 %v363, %v395
      %v428 = vadd.f32 %v364, %v396
      %v429 = vadd.f32 %v365, %v397
      %v430 = vadd.f32 %v366, %v398
      %v431 = vadd.f32 %v367, %v399
      %v432 = vadd.f32 %v368, %v400
      %v433 = vadd.f32 %v369, %v401
      %v434 = vadd.f32 %v370, %v402
      %v435 = vadd.f32 %v371, %v403
      %v436 = vadd.f32 %v372, %v404
      %v437 = vadd.f32 %v373, %v405
      %v438 = vadd.f32 %v374, %v406
      %v439 = vadd.f32 %v375, %v407
      %v440 = vadd.f32 %v376, %v408
      %v441 = vadd.f32 %v377, %v409
      %v442 = vmax.f32 %v410, 0.0
      %v443 = vmax.f32 %v411, 0.0
      %v444 = vmax.f32 %v412, 0.0
      %v445 = vmax.f32 %v413, 0.0
      %v446 = vmax.f32 %v414, 0.0
      %v447 = vmax.f32 %v415, 0.0
      %v448 = vmax.f32 %v416, 0.0
      %v449 = vmax.f32 %v417, 0.0
      %v450 = vmax.f32 %v418, 0.0
      %v451 = vmax.f32 %v419, 0.0
      %v452 = vmax.f32 %v420, 0.0
      %v453 = vmax.f32 %v421, 0.0
      %v454 = vmax.f32 %v422, 0.0
      %v455 = vmax.f32 %v423, 0.0
      %v456 = vmax.f32 %v424, 0.0
      %v457 = vmax.f32 %v425, 0.0
      %v458 = vmax.f32 %v426, 0.0
      %v459 = vmax.f32 %v427, 0.0
      %v460 = vmax.f32 %v428, 0.0
      %v461 = vmax.f32 %v429, 0.0
      %v462 = vmax.f32 %v430, 0.0
      %v463 = vmax.f32 %v431, 0.0
      %v464 = vmax.f32 %v432, 0.0
      %v465 = vmax.f32 %v433, 0.0
      %v466 = vmax.f32 %v434, 0.0
      %v467 = vmax.f32 %v435, 0.0
      %v468 = vmax.f32 %v436, 0.0
      %v469 = vmax.f32 %v437, 0.0
      %v470 = vmax.f32 %v438, 0.0
      %v471 = vmax.f32 %v439, 0.0
      %v472 = vmax.f32 %v440, 0.0
      %v473 = vmax.f32 %v441, 0.0
      %506 = vrot.lane.b32.xlu0 %v442, 8
      %v507 = vpop.permute.xlu0 %506
      %508 = vrot.lane.b32.xlu0 %v443, 8
      %v509 = vpop.permute.xlu0 %508
      %510 = vrot.lane.b32.xlu0 %v444, 8
      %v511 = vpop.permute.xlu0 %510
      %512 = vrot.lane.b32.xlu0 %v445, 8
      %v513 = vpop.permute.xlu0 %512
      %514 = vrot.lane.b32.xlu0 %v446, 8
      %v515 = vpop.permute.xlu0 %514
      %516 = vrot.lane.b32.xlu0 %v447, 8
      %v517 = vpop.permute.xlu0 %516
      %518 = vrot.lane.b32.xlu0 %v448, 8
      %v519 = vpop.permute.xlu0 %518
      %520 = vrot.lane.b32.xlu0 %v449, 8
      %v521 = vpop.permute.xlu0 %520
      %522 = vrot.lane.b32.xlu0 %v450, 8
      %v523 = vpop.permute.xlu0 %522
      %524 = vrot.lane.b32.xlu0 %v451, 8
      %v525 = vpop.permute.xlu0 %524
      %526 = vrot.lane.b32.xlu0 %v452, 8
      %v527 = vpop.permute.xlu0 %526
      %528 = vrot.lane.b32.xlu0 %v453, 8
      %v529 = vpop.permute.xlu0 %528
      %530 = vrot.lane.b32.xlu0 %v454, 8
      %v531 = vpop.permute.xlu0 %530
      %532 = vrot.lane.b32.xlu0 %v455, 8
      %v533 = vpop.permute.xlu0 %532
      %534 = vrot.lane.b32.xlu0 %v456, 8
      %v535 = vpop.permute.xlu0 %534
      %536 = vrot.lane.b32.xlu0 %v457, 8
      %v537 = vpop.permute.xlu0 %536
      %538 = vrot.lane.b32.xlu0 %v458, 8
      %v539 = vpop.permute.xlu0 %538
      %540 = vrot.lane.b32.xlu0 %v459, 8
      %v541 = vpop.permute.xlu0 %540
      %542 = vrot.lane.b32.xlu0 %v460, 8
      %v543 = vpop.permute.xlu0 %542
      %544 = vrot.lane.b32.xlu0 %v461, 8
      %v545 = vpop.permute.xlu0 %544
      %546 = vrot.lane.b32.xlu0 %v462, 8
      %v547 = vpop.permute.xlu0 %546
      %548 = vrot.lane.b32.xlu0 %v463, 8
      %v549 = vpop.permute.xlu0 %548
      %550 = vrot.lane.b32.xlu0 %v464, 8
      %v551 = vpop.permute.xlu0 %550
      %552 = vrot.lane.b32.xlu0 %v465, 8
      %v553 = vpop.permute.xlu0 %552
      %554 = vrot.lane.b32.xlu0 %v466, 8
      %v555 = vpop.permute.xlu0 %554
      %556 = vrot.lane.b32.xlu0 %v467, 8
      %v557 = vpop.permute.xlu0 %556
      %558 = vrot.lane.b32.xlu0 %v468, 8
      %v559 = vpop.permute.xlu0 %558
      %560 = vrot.lane.b32.xlu0 %v469, 8
      %v561 = vpop.permute.xlu0 %560
      %562 = vrot.lane.b32.xlu0 %v470, 8
      %v563 = vpop.permute.xlu0 %562
      %564 = vrot.lane.b32.xlu0 %v471, 8
      %v565 = vpop.permute.xlu0 %564
      %566 = vrot.lane.b32.xlu0 %v472, 8
      %v567 = vpop.permute.xlu0 %566
      %568 = vrot.lane.b32.xlu0 %v473, 8
      %v569 = vpop.permute.xlu0 %568
      %vm602 = vcmask 64512
      %v603 = vsel %vm602, %v314, %v507
      %v604 = vsel %vm602, %v315, %v509
      %v605 = vsel %vm602, %v316, %v511
      %v606 = vsel %vm602, %v317, %v513
      %v607 = vsel %vm602, %v318, %v515
      %v608 = vsel %vm602, %v319, %v517
      %v609 = vsel %vm602, %v320, %v519
      %v610 = vsel %vm602, %v321, %v521
      %v611 = vsel %vm602, %v322, %v523
      %v612 = vsel %vm602, %v323, %v525
      %v613 = vsel %vm602, %v324, %v527
      %v614 = vsel %vm602, %v325, %v529
      %v615 = vsel %vm602, %v326, %v531
      %v616 = vsel %vm602, %v327, %v533
      %v617 = vsel %vm602, %v328, %v535
      %v618 = vsel %vm602, %v329, %v537
      %v619 = vsel %vm602, %v330, %v539
      %v620 = vsel %vm602, %v331, %v541
      %v621 = vsel %vm602, %v332, %v543
      %v622 = vsel %vm602, %v333, %v545
      %v623 = vsel %vm602, %v334, %v547
      %v624 = vsel %vm602, %v335, %v549
      %v625 = vsel %vm602, %v336, %v551
      %v626 = vsel %vm602, %v337, %v553
      %v627 = vsel %vm602, %v338, %v555
      %v628 = vsel %vm602, %v339, %v557
      %v629 = vsel %vm602, %v340, %v559
      %v630 = vsel %vm602, %v341, %v561
      %v631 = vsel %vm602, %v342, %v563
      %v632 = vsel %vm602, %v343, %v565
      %v633 = vsel %vm602, %v344, %v567
      %v634 = vsel %vm602, %v345, %v569
      %vm635 = vcmask 130048
      %636 = vst.msk [vmem:[%s280] sm:$0xff] %vm635, %v603
      %637 = vst.msk [vmem:[%s280 + $0x8] sm:$0xff] %vm635, %v604
      %638 = vst.msk [vmem:[%s280 + $0x10] sm:$0xff] %vm635, %v605
      %639 = vst.msk [vmem:[%s280 + $0x18] sm:$0xff] %vm635, %v606
      %640 = vst.msk [vmem:[%s280 + $0x20] sm:$0xff] %vm635, %v607
      %641 = vst.msk [vmem:[%s280 + $0x28] sm:$0xff] %vm635, %v608
      %642 = vst.msk [vmem:[%s280 + $0x30] sm:$0xff] %vm635, %v609
      %643 = vst.msk [vmem:[%s280 + $0x38] sm:$0xff] %vm635, %v610
      %644 = vst.msk [vmem:[%s280 + $0x40] sm:$0xff] %vm635, %v611
      %645 = vst.msk [vmem:[%s280 + $0x48] sm:$0xff] %vm635, %v612
      %646 = vst.msk [vmem:[%s280 + $0x50] sm:$0xff] %vm635, %v613
      %647 = vst.msk [vmem:[%s280 + $0x58] sm:$0xff] %vm635, %v614
      %648 = vst.msk [vmem:[%s280 + $0x60] sm:$0xff] %vm635, %v615
      %649 = vst.msk [vmem:[%s280 + $0x68] sm:$0xff] %vm635, %v616
      %650 = vst.msk [vmem:[%s280 + $0x70] sm:$0xff] %vm635, %v617
      %651 = vst.msk [vmem:[%s280 + $0x78] sm:$0xff] %vm635, %v618
      %652 = vst.msk [vmem:[%s280 + $0x80] sm:$0xff] %vm635, %v619
      %653 = vst.msk [vmem:[%s280 + $0x88] sm:$0xff] %vm635, %v620
      %654 = vst.msk [vmem:[%s280 + $0x90] sm:$0xff] %vm635, %v621
      %655 = vst.msk [vmem:[%s280 + $0x98] sm:$0xff] %vm635, %v622
      %656 = vst.msk [vmem:[%s280 + $0xa0] sm:$0xff] %vm635, %v623
      %657 = vst.msk [vmem:[%s280 + $0xa8] sm:$0xff] %vm635, %v624
      %658 = vst.msk [vmem:[%s280 + $0xb0] sm:$0xff] %vm635, %v625
      %659 = vst.msk [vmem:[%s280 + $0xb8] sm:$0xff] %vm635, %v626
      %660 = vst.msk [vmem:[%s280 + $0xc0] sm:$0xff] %vm635, %v627
      %661 = vst.msk [vmem:[%s280 + $0xc8] sm:$0xff] %vm635, %v628
      %662 = vst.msk [vmem:[%s280 + $0xd0] sm:$0xff] %vm635, %v629
      %663 = vst.msk [vmem:[%s280 + $0xd8] sm:$0xff] %vm635, %v630
      %664 = vst.msk [vmem:[%s280 + $0xe0] sm:$0xff] %vm635, %v631
      %665 = vst.msk [vmem:[%s280 + $0xe8] sm:$0xff] %vm635, %v632
      %666 = vst.msk [vmem:[%s280 + $0xf0] sm:$0xff] %vm635, %v633
      %667 = vst.msk [vmem:[%s280 + $0xf8] sm:$0xff] %vm635, %v634
      %s668 = smul.u32 32, %s19
      %p669 = scmp.lt.s32.totalorder %s18, 1
      %s670 = scalar_select %p669, %s18, 1
      %p671 = scmp.lt.s32.totalorder %s668, 31
      %s672 = scalar_select %p671, %s668, 31
      %s673 = smul.addr %s670, 32
      %s674 = sadd.s32 %s672, %s673
      %s675 = smul.addr %s674, 8
      %s676 = scalar_lea.vmem %s3, %s675
      // Predicated region
      $region33: #{shuffle_v2_block_forward.7} parent=31 // pred_check
        %p677 = pneg %p130
      $region34: #{shuffle_v2_block_forward.7} parent=31 // pred_check_branch
        %679 = sbr.rel (%p677) target = $region36
      $region35: #{shuffle_v2_block_forward.7} parent=31 // pred_region
        %s680 = smul.u32 32, %s19
      $region36: #{shuffle_v2_block_forward.7} parent=31 // pred_fallthru
        _
    $region32: #{shuffle_v2_block_forward.7} parent=5 // pred_fallthru
      _
    %p681 = scmp.le.s32.totalorder 2, %s9
    // Predicated region
    $region37: #{shuffle_v2_block_forward.7} parent=5 // pred_check
      %p682 = pneg %p681
    $region38: #{shuffle_v2_block_forward.7} parent=5 // pred_check_branch
      %684 = sbr.rel (%p682) target = $region40
    $region39: #{shuffle_v2_block_forward.7} parent=5 // pred_region
      %s685 = ssub.s32 %s9, 2
      // Predicated region
      $region41: #{shuffle_v2_block_forward.7} parent=39 // pred_check
        %p686 = pneg %p136
      $region42: #{shuffle_v2_block_forward.7} parent=39 // pred_check_branch
        %688 = sbr.rel (%p686) target = $region44
      $region43: #{shuffle_v2_block_forward.7} parent=39 // pred_region
        %s689 = smul.u32 32, %s21
        %p690 = scmp.lt.s32.totalorder %s20, 1
        %s691 = scalar_select %p690, %s20, 1
        %p692 = scmp.lt.s32.totalorder %s689, 31
        %s693 = scalar_select %p692, %s689, 31
        %s694 = smul.addr %s691, 32
        %s695 = sadd.s32 %s693, %s694
        %s696 = smul.addr %s695, 8
        %s697 = scalar_lea.vmem %s3, %s696
      $region44: #{shuffle_v2_block_forward.7} parent=39 // pred_fallthru
        _
    $region40: #{shuffle_v2_block_forward.7} parent=5 // pred_fallthru
      _
  $region6: #{shuffle_v2_block_forward.7} parent=0 // loop_footer
    %s13 = sadd.s32 1, %s9
  $region7: #{shuffle_v2_block_forward.7} parent=0 // loop_footer_branch
    %8 = sbr.rel target = $region3
  $region8: #{shuffle_v2_block_forward.7} parent=0 // loop_exit
    _

// kernel: shuffle_v2_block_forward.5
$region0: #{shuffle_v2_block_forward.5}
  #allocation0 [shape = 'u32[]', space=smem, size = 0x4, offset = 0x4, fixed_abs, tag = 'smem constant byte address 0x4 - core index']
  #allocation1 [shape = 'u32[72,128]{1,0:T(1,128)}', space=vmem, size = 0x9000, scoped, tag = 'internal scratch']
  %s0 = inlined_call_operand.vmem [shape: f32[2,18,18,8], index: 0, kind: input, shape index: {}]
  %s1 = inlined_call_operand.vmem [shape: f32[18,4,4], index: 1, kind: input, shape index: {}]
  %s2 = inlined_call_operand.vmem [shape: f32[1,8], index: 2, kind: input, shape index: {}]
  %s3 = inlined_call_operand.vmem [shape: f32[1,8], index: 3, kind: input, shape index: {}]
  %s4 = inlined_call_operand.vmem [shape: f32[2,256,8], index: 4, kind: output, shape index: {}]
  %s5 = sld [smem:[#allocation0]]
  $region49: #{shuffle_v2_block_forward.5} parent=0
    _
  %s7 = ssub.s32 1, %s5
  %s8 = scalar_select 0, %s7, %s5
  loop: start=0, step=1, limit=4
  $region2: #{shuffle_v2_block_forward.5} parent=0 // loop_pre_header
    _
  $region3: #{shuffle_v2_block_forward.5} parent=0 // loop_header
    %s10 = sphi 0, %s14
    %p11 = scmp.ge.s32.totalorder %s10, 4
    %s20 = sphi 0, %s22
    %s23 = sphi 0, %s20
    %s24 = sphi 0, %s23
    %s40 = sphi 0, %s24
    %s44 = sphi 0, %s44
    %s46 = sphi 0, %s44
    %s47 = sphi 0, %s46
    %s61 = sphi 0, %s47
    %s65 = sphi 0, %s65
    %s67 = sphi 0, %s65
    %s68 = sphi 0, %s67
    %s82 = sphi 0, %s68
    %s86 = sphi 0, %s86
    %s88 = sphi 0, %s86
    %s89 = sphi 0, %s88
    %s103 = sphi 0, %s89
    %s109 = sphi 0, %s111
    %s112 = sphi 0, %s109
    %s113 = sphi 0, %s112
    %s129 = sphi 0, %s113
  $region4: #{shuffle_v2_block_forward.5} parent=0 // loop_header_branch
    %13 = sbr.rel (%p11) target = $region8
  $region5: #{shuffle_v2_block_forward.5} parent=0 // loop_body
    %s15 = ssub.s32 %s10, 1
    %s16 = ssub.s32 %s10, 2
    %s17 = sadd.s32 %s10, 1
    %s18 = ssub.s32 %s10, %s17
    %p19 = scmp.eq.s32.totalorder %s18, 0
    %s21 = sadd.s32 %s20, 1
    %s22 = scalar_select %p19, %s20, %s21
    %p25 = pneg %p19
    %p26 = scmp.eq.s32.totalorder %s10, 1
    %p27 = por %p25, %p26
    %p28 = scmp.ne.s32.totalorder %s20, %s23
    %p29 = scmp.eq.s32.totalorder %s10, 0
    %p30 = por %p28, %p29
    %p31 = scmp.ne.s32.totalorder %s20, %s23
    %p32 = scmp.eq.s32.totalorder %s15, 1
    %p33 = por %p31, %p32
    %p34 = scmp.ne.s32.totalorder %s23, %s24
    %p35 = scmp.eq.s32.totalorder %s15, 0
    %p36 = por %p34, %p35
    %p37 = scmp.ne.s32.totalorder %s23, %s24
    %p38 = scmp.eq.s32.totalorder %s16, 1
    %p39 = por %p37, %p38
    %p41 = scmp.ne.s32.totalorder %s24, %s40
    %p42 = scmp.eq.s32.totalorder %s16, 0
    %p43 = por %p41, %p42
    %s45 = sadd.s32 %s44, 1
    %p48 = scmp.eq.s32.totalorder %s10, 1
    %p49 = scmp.ne.s32.totalorder %s44, %s46
    %p50 = scmp.eq.s32.totalorder %s10, 0
    %p51 = por %p49, %p50
    %p52 = scmp.ne.s32.totalorder %s44, %s46
    %p53 = scmp.eq.s32.totalorder %s15, 1
    %p54 = por %p52, %p53
    %p55 = scmp.ne.s32.totalorder %s46, %s47
    %p56 = scmp.eq.s32.totalorder %s15, 0
    %p57 = por %p55, %p56
    %p58 = scmp.ne.s32.totalorder %s46, %s47
    %p59 = scmp.eq.s32.totalorder %s16, 1
    %p60 = por %p58, %p59
    %p62 = scmp.ne.s32.totalorder %s47, %s61
    %p63 = scmp.eq.s32.totalorder %s16, 0
    %p64 = por %p62, %p63
    %s66 = sadd.s32 %s65, 1
    %p69 = scmp.eq.s32.totalorder %s10, 1
    %p70 = scmp.ne.s32.totalorder %s65, %s67
    %p71 = scmp.eq.s32.totalorder %s10, 0
    %p72 = por %p70, %p71
    %p73 = scmp.ne.s32.totalorder %s65, %s67
    %p74 = scmp.eq.s32.totalorder %s15, 1
    %p75 = por %p73, %p74
    %p76 = scmp.ne.s32.totalorder %s67, %s68
    %p77 = scmp.eq.s32.totalorder %s15, 0
    %p78 = por %p76, %p77
    %p79 = scmp.ne.s32.totalorder %s67, %s68
    %p80 = scmp.eq.s32.totalorder %s16, 1
    %p81 = por %p79, %p80
    %p83 = scmp.ne.s32.totalorder %s68, %s82
    %p84 = scmp.eq.s32.totalorder %s16, 0
    %p85 = por %p83, %p84
    %s87 = sadd.s32 %s86, 1
    %p90 = scmp.eq.s32.totalorder %s10, 1
    %p91 = scmp.ne.s32.totalorder %s86, %s88
    %p92 = scmp.eq.s32.totalorder %s10, 0
    %p93 = por %p91, %p92
    %p94 = scmp.ne.s32.totalorder %s86, %s88
    %p95 = scmp.eq.s32.totalorder %s15, 1
    %p96 = por %p94, %p95
    %p97 = scmp.ne.s32.totalorder %s88, %s89
    %p98 = scmp.eq.s32.totalorder %s15, 0
    %p99 = por %p97, %p98
    %p100 = scmp.ne.s32.totalorder %s88, %s89
    %p101 = scmp.eq.s32.totalorder %s16, 1
    %p102 = por %p100, %p101
    %p104 = scmp.ne.s32.totalorder %s89, %s103
    %p105 = scmp.eq.s32.totalorder %s16, 0
    %p106 = por %p104, %p105
    %s107 = ssub.s32 %s10, %s17
    %p108 = scmp.eq.s32.totalorder %s107, 0
    %s110 = sadd.s32 %s109, 1
    %s111 = scalar_select %p108, %s109, %s110
    %p114 = pneg %p108
    %p115 = scmp.eq.s32.totalorder %s10, 1
    %p116 = por %p114, %p115
    %p117 = scmp.ne.s32.totalorder %s109, %s112
    %p118 = scmp.eq.s32.totalorder %s10, 0
    %p119 = por %p117, %p118
    %p120 = scmp.ne.s32.totalorder %s109, %s112
    %p121 = scmp.eq.s32.totalorder %s15, 1
    %p122 = por %p120, %p121
    %p123 = scmp.ne.s32.totalorder %s112, %s113
    %p124 = scmp.eq.s32.totalorder %s15, 0
    %p125 = por %p123, %p124
    %p126 = scmp.ne.s32.totalorder %s112, %s113
    %p127 = scmp.eq.s32.totalorder %s16, 1
    %p128 = por %p126, %p127
    %p130 = scmp.ne.s32.totalorder %s113, %s129
    %p131 = scmp.eq.s32.totalorder %s16, 0
    %p132 = por %p130, %p131
    %p133 = scmp.le.s32.totalorder 1, %s10
    %p134 = scmp.lt.s32.totalorder %s10, 3
    %p135 = pnand %p133, %p134
    %p136 = pneg %p135
    // Predicated region
    $region9: #{shuffle_v2_block_forward.5} parent=5 // pred_check
      _
    $region10: #{shuffle_v2_block_forward.5} parent=5 // pred_check_branch
      %138 = sbr.rel (%p135) target = $region12
    $region11: #{shuffle_v2_block_forward.5} parent=5 // pred_region
      %s139 = ssub.s32 %s10, 1
      // Predicated region
      $region13: #{shuffle_v2_block_forward.5} parent=11 // pred_check
        %p140 = pneg %p57
      $region14: #{shuffle_v2_block_forward.5} parent=11 // pred_check_branch
        %142 = sbr.rel (%p140) target = $region16
      $region15: #{shuffle_v2_block_forward.5} parent=11 // pred_region
        _
      $region16: #{shuffle_v2_block_forward.5} parent=11 // pred_fallthru
        _
      // Predicated region
      $region17: #{shuffle_v2_block_forward.5} parent=11 // pred_check
        %p143 = pneg %p78
      $region18: #{shuffle_v2_block_forward.5} parent=11 // pred_check_branch
        %145 = sbr.rel (%p143) target = $region20
      $region19: #{shuffle_v2_block_forward.5} parent=11 // pred_region
        _
      $region20: #{shuffle_v2_block_forward.5} parent=11 // pred_fallthru
        _
      // Predicated region
      $region21: #{shuffle_v2_block_forward.5} parent=11 // pred_check
        %p146 = pneg %p99
      $region22: #{shuffle_v2_block_forward.5} parent=11 // pred_check_branch
        %148 = sbr.rel (%p146) target = $region24
      $region23: #{shuffle_v2_block_forward.5} parent=11 // pred_region
        _
      $region24: #{shuffle_v2_block_forward.5} parent=11 // pred_fallthru
        _
    $region12: #{shuffle_v2_block_forward.5} parent=5 // pred_fallthru
      _
    %p149 = scmp.lt.s32.totalorder %s10, 2
    // Predicated region
    $region25: #{shuffle_v2_block_forward.5} parent=5 // pred_check
      %p150 = pneg %p149
    $region26: #{shuffle_v2_block_forward.5} parent=5 // pred_check_branch
      %152 = sbr.rel (%p150) target = $region28
    $region27: #{shuffle_v2_block_forward.5} parent=5 // pred_region
      // Predicated region
      $region29: #{shuffle_v2_block_forward.5} parent=27 // pred_check
        %p153 = pneg %p30
      $region30: #{shuffle_v2_block_forward.5} parent=27 // pred_check_branch
        %155 = sbr.rel (%p153) target = $region32
      $region31: #{shuffle_v2_block_forward.5} parent=27 // pred_region
        %p156 = scmp.lt.s32.totalorder %s10, 1
        %s157 = scalar_select %p156, %s10, 1
        %s158 = smul.addr %s157, 54
        %s159 = smul.addr %s158, 8
        %s160 = scalar_lea.vmem %s0, %s159
      $region32: #{shuffle_v2_block_forward.5} parent=27 // pred_fallthru
        _
    $region28: #{shuffle_v2_block_forward.5} parent=5 // pred_fallthru
      _
    %p161 = scmp.le.s32.totalorder 1, %s10
    %p162 = scmp.lt.s32.totalorder %s10, 3
    %p163 = pnand %p161, %p162
    %p164 = pneg %p163
    // Predicated region
    $region33: #{shuffle_v2_block_forward.5} parent=5 // pred_check
      _
    $region34: #{shuffle_v2_block_forward.5} parent=5 // pred_check_branch
      %166 = sbr.rel (%p163) target = $region36
    $region35: #{shuffle_v2_block_forward.5} parent=5 // pred_region
      %s167 = ssub.s32 %s10, 1
      %p168 = scmp.lt.s32.totalorder %s15, 1
      %s169 = scalar_select %p168, %s15, 1
      %s170 = smul.addr %s169, 54
      %s171 = smul.addr %s170, 8
      %s172 = scalar_lea.vmem %s0, %s171
      %p173 = pneg %p36
      %p174 = pneg %p33
      %p175 = pneg %p57
      %p176 = pneg %p54
      %p177 = pneg %p78
      %p178 = pneg %p75
      %p179 = pneg %p99
      %p180 = pneg %p96
      %p181 = pneg %p125
      %p182 = pneg %p122
      %p183 = scmp.lt.s32.totalorder %s15, 1
      %s184 = scalar_select %p183, %s15, 1
      %s185 = smul.addr %s184, 32
      %s186 = smul.addr %s185, 8
      %s187 = scalar_lea.vmem %s4, %s186
      %p188 = scmp.lt.s32.totalorder %s15, 1
      %s189 = scalar_select %p188, %s15, 1
      %s190 = smul.addr %s189, 54
      %s191 = smul.addr %s190, 8
      %s192 = scalar_lea.vmem %s0, %s191
      %p193 = scmp.lt.s32.totalorder %s15, 1
      %s194 = scalar_select %p193, %s15, 1
      %s195 = smul.addr %s194, 32
      %s196 = smul.addr %s195, 8
      %s197 = scalar_lea.vmem %s4, %s196
      %v198 = vld [vmem:[%s192] sm:$0xff]
      %v199 = vld [vmem:[%s192 + $0x8] sm:$0xff]
      %v200 = vld [vmem:[%s192 + $0x18] sm:$0xff]
      %v201 = vld [vmem:[%s192 + $0x20] sm:$0xff]
      %v202 = vld [vmem:[%s192 + $0x30] sm:$0xff]
      %v203 = vld [vmem:[%s192 + $0x38] sm:$0xff]
      %v204 = vld [vmem:[%s192 + $0x48] sm:$0xff]
      %v205 = vld [vmem:[%s192 + $0x50] sm:$0xff]
      %v206 = vld [vmem:[%s192 + $0x60] sm:$0xff]
      %v207 = vld [vmem:[%s192 + $0x68] sm:$0xff]
      %v208 = vld [vmem:[%s192 + $0x78] sm:$0xff]
      %v209 = vld [vmem:[%s192 + $0x80] sm:$0xff]
      %v210 = vld [vmem:[%s192 + $0x90] sm:$0xff]
      %v211 = vld [vmem:[%s192 + $0x98] sm:$0xff]
      %v212 = vld [vmem:[%s192 + $0xa8] sm:$0xff]
      %v213 = vld [vmem:[%s192 + $0xb0] sm:$0xff]
      %v214 = vld [vmem:[%s192 + $0xc0] sm:$0xff]
      %v215 = vld [vmem:[%s192 + $0xc8] sm:$0xff]
      %v216 = vld [vmem:[%s192 + $0xd8] sm:$0xff]
      %v217 = vld [vmem:[%s192 + $0xe0] sm:$0xff]
      %v218 = vld [vmem:[%s192 + $0xf0] sm:$0xff]
      %v219 = vld [vmem:[%s192 + $0xf8] sm:$0xff]
      %v220 = vld [vmem:[%s192 + $0x108] sm:$0xff]
      %v221 = vld [vmem:[%s192 + $0x110] sm:$0xff]
      %v222 = vld [vmem:[%s192 + $0x120] sm:$0xff]
      %v223 = vld [vmem:[%s192 + $0x128] sm:$0xff]
      %v224 = vld [vmem:[%s192 + $0x138] sm:$0xff]
      %v225 = vld [vmem:[%s192 + $0x140] sm:$0xff]
      %v226 = vld [vmem:[%s192 + $0x150] sm:$0xff]
      %v227 = vld [vmem:[%s192 + $0x158] sm:$0xff]
      %v228 = vld [vmem:[%s192 + $0x168] sm:$0xff]
      %v229 = vld [vmem:[%s192 + $0x170] sm:$0xff]
      %v230 = vld [vmem:[%s1] sm:$0xf]
      %v231 = vld [vmem:[%s192 + $0x1] sm:$0xff]
      %v232 = vld [vmem:[%s192 + $0x9] sm:$0xff]
      %v233 = vld [vmem:[%s192 + $0x19] sm:$0xff]
      %v234 = vld [vmem:[%s192 + $0x21] sm:$0xff]
      %v235 = vld [vmem:[%s192 + $0x31] sm:$0xff]
      %v236 = vld [vmem:[%s192 + $0x39] sm:$0xff]
      %v237 = vld [vmem:[%s192 + $0x49] sm:$0xff]
      %v238 = vld [vmem:[%s192 + $0x51] sm:$0xff]
      %v239 = vld [vmem:[%s192 + $0x61] sm:$0xff]
      %v240 = vld [vmem:[%s192 + $0x69] sm:$0xff]
      %v241 = vld [vmem:[%s192 + $0x79] sm:$0xff]
      %v242 = vld [vmem:[%s192 + $0x81] sm:$0xff]
      %v243 = vld [vmem:[%s192 + $0x91] sm:$0xff]
      %v244 = vld [vmem:[%s192 + $0x99] sm:$0xff]
      %v245 = vld [vmem:[%s192 + $0xa9] sm:$0xff]
      %v246 = vld [vmem:[%s192 + $0xb1] sm:$0xff]
      %v247 = vld [vmem:[%s192 + $0xc1] sm:$0xff]
      %v248 = vld [vmem:[%s192 + $0xc9] sm:$0xff]
      %v249 = vld [vmem:[%s192 + $0xd9] sm:$0xff]
      %v250 = vld [vmem:[%s192 + $0xe1] sm:$0xff]
      %v251 = vld [vmem:[%s192 + $0xf1] sm:$0xff]
      %v252 = vld [vmem:[%s192 + $0xf9] sm:$0xff]
      %v253 = vld [vmem:[%s192 + $0x109] sm:$0xff]
      %v254 = vld [vmem:[%s192 + $0x111] sm:$0xff]
      %v255 = vld [vmem:[%s192 + $0x121] sm:$0xff]
      %v256 = vld [vmem:[%s192 + $0x129] sm:$0xff]
      %v257 = vld [vmem:[%s192 + $0x139] sm:$0xff]
      %v258 = vld [vmem:[%s192 + $0x141] sm:$0xff]
      %v259 = vld [vmem:[%s192 + $0x151] sm:$0xff]
      %v260 = vld [vmem:[%s192 + $0x159] sm:$0xff]
      %v261 = vld [vmem:[%s192 + $0x169] sm:$0xff]
      %v262 = vld [vmem:[%s192 + $0x171] sm:$0xff]
      %s263 = scalar_lea.vmem %s1, 8
      %v264 = vld [vmem:[%s263] sm:$0xf]
      %vm265 = vcmask 31744
      %v267 = vsel %vm265, %v231, 0
      %v270 = vsel %vm265, %v232, 0
      %v273 = vsel %vm265, %v233, 0
      %v276 = vsel %vm265, %v234, 0
      %v279 = vsel %vm265, %v235, 0
      %v282 = vsel %vm265, %v236, 0
      %v285 = vsel %vm265, %v237, 0
      %v288 = vsel %vm265, %v238, 0
      %v291 = vsel %vm265, %v239, 0
      %v294 = vsel %vm265, %v240, 0
      %v297 = vsel %vm265, %v241, 0
      %v300 = vsel %vm265, %v242, 0
      %v303 = vsel %vm265, %v243, 0
      %v306 = vsel %vm265, %v244, 0
      %v309 = vsel %vm265, %v245, 0
      %v312 = vsel %vm265, %v246, 0
      %v315 = vsel %vm265, %v247, 0
      %v318 = vsel %vm265, %v248, 0
      %v321 = vsel %vm265, %v249, 0
      %v324 = vsel %vm265, %v250, 0
      %v327 = vsel %vm265, %v251, 0
      %v330 = vsel %vm265, %v252, 0
      %v333 = vsel %vm265, %v253, 0
      %v336 = vsel %vm265, %v254, 0
      %v339 = vsel %vm265, %v255, 0
      %v342 = vsel %vm265, %v256, 0
      %v345 = vsel %vm265, %v257, 0
      %v348 = vsel %vm265, %v258, 0
      %v351 = vsel %vm265, %v259, 0
      %v354 = vsel %vm265, %v260, 0
      %v357 = vsel %vm265, %v261, 0
      %v360 = vsel %vm265, %v262, 0
      %vm362 = vcmask 1043456
      %v364 = vsel %vm362, %v264, 0
      %366 = vmatpush.msra.mxu0 0.0
      %367 = vmatpush.msra.mxu0 0.0
      %368 = vmatpush.msra.mxu0 0.0
      %369 = vmatpush.msra.mxu0 0.0
      %370 = vmatpush.msra.mxu0 0.0
      %371 = vmatpush.msra.mxu0 0.0
      %372 = vmatpush.msra.mxu0 0.0
      %373 = vmatpush.msra.mxu0 0.0
      %374 = vmatpush.msra.mxu0 0.0
      %375 = vmatpush.msra.mxu0 0.0
      %376 = vmatpush.msra.mxu0 0.0
      %377 = vmatpush.msra.mxu0 0.0
      %378 = vmatpush.msra.mxu0 0.0
      %379 = vmatpush.msra.mxu0 0.0
      %380 = vmatpush.msra.mxu0 0.0
      %381 = vmatpush.msra.mxu0 %v364
      %382 = vmatmul.f32.gmra.mxu0 %v267
      %v383 = vpop.f32.mrf.mxu0
      %v384 = vadd.f32 0.0, %v383
      %385 = vmatmul.f32.gmra.mxu0 %v270
      %v386 = vpop.f32.mrf.mxu0
      %v387 = vadd.f32 0.0, %v386
      %388 = vmatmul.f32.gmra.mxu0 %v273
      %v389 = vpop.f32.mrf.mxu0
      %v390 = vadd.f32 0.0, %v389
      %391 = vmatmul.f32.gmra.mxu0 %v276
      %v392 = vpop.f32.mrf.mxu0
      %v393 = vadd.f32 0.0, %v392
      %394 = vmatmul.f32.gmra.mxu0 %v279
      %v395 = vpop.f32.mrf.mxu0
      %v396 = vadd.f32 0.0, %v395
      %397 = vmatmul.f32.gmra.mxu0 %v282
      %v398 = vpop.f32.mrf.mxu0
      %v399 = vadd.f32 0.0, %v398
      %400 = vmatmul.f32.gmra.mxu0 %v285
      %v401 = vpop.f32.mrf.mxu0
      %v402 = vadd.f32 0.0, %v401
      %403 = vmatmul.f32.gmra.mxu0 %v288
      %v404 = vpop.f32.mrf.mxu0
      %v405 = vadd.f32 0.0, %v404
      %406 = vmatmul.f32.gmra.mxu0 %v291
      %v407 = vpop.f32.mrf.mxu0
      %v408 = vadd.f32 0.0, %v407
      %409 = vmatmul.f32.gmra.mxu0 %v294
      %v410 = vpop.f32.mrf.mxu0
      %v411 = vadd.f32 0.0, %v410
      %412 = vmatmul.f32.gmra.mxu0 %v297
      %v413 = vpop.f32.mrf.mxu0
      %v414 = vadd.f32 0.0, %v413
      %415 = vmatmul.f32.gmra.mxu0 %v300
      %v416 = vpop.f32.mrf.mxu0
      %v417 = vadd.f32 0.0, %v416
      %418 = vmatmul.f32.gmra.mxu0 %v303
      %v419 = vpop.f32.mrf.mxu0
      %v420 = vadd.f32 0.0, %v419
      %421 = vmatmul.f32.gmra.mxu0 %v306
      %v422 = vpop.f32.mrf.mxu0
      %v423 = vadd.f32 0.0, %v422
      %424 = vmatmul.f32.gmra.mxu0 %v309
      %v425 = vpop.f32.mrf.mxu0
      %v426 = vadd.f32 0.0, %v425
      %427 = vmatmul.f32.gmra.mxu0 %v312
      %v428 = vpop.f32.mrf.mxu0
      %v429 = vadd.f32 0.0, %v428
      %430 = vmatmul.f32.gmra.mxu0 %v315
      %v431 = vpop.f32.mrf.mxu0
      %v432 = vadd.f32 0.0, %v431
      %433 = vmatmul.f32.gmra.mxu0 %v318
      %v434 = vpop.f32.mrf.mxu0
      %v435 = vadd.f32 0.0, %v434
      %436 = vmatmul.f32.gmra.mxu0 %v321
      %v437 = vpop.f32.mrf.mxu0
      %v438 = vadd.f32 0.0, %v437
      %439 = vmatmul.f32.gmra.mxu0 %v324
      %v440 = vpop.f32.mrf.mxu0
      %v441 = vadd.f32 0.0, %v440
      %442 = vmatmul.f32.gmra.mxu0 %v327
      %v443 = vpop.f32.mrf.mxu0
      %v444 = vadd.f32 0.0, %v443
      %445 = vmatmul.f32.gmra.mxu0 %v330
      %v446 = vpop.f32.mrf.mxu0
      %v447 = vadd.f32 0.0, %v446
      %448 = vmatmul.f32.gmra.mxu0 %v333
      %v449 = vpop.f32.mrf.mxu0
      %v450 = vadd.f32 0.0, %v449
      %451 = vmatmul.f32.gmra.mxu0 %v336
      %v452 = vpop.f32.mrf.mxu0
      %v453 = vadd.f32 0.0, %v452
      %454 = vmatmul.f32.gmra.mxu0 %v339
      %v455 = vpop.f32.mrf.mxu0
      %v456 = vadd.f32 0.0, %v455
      %457 = vmatmul.f32.gmra.mxu0 %v342
      %v458 = vpop.f32.mrf.mxu0
      %v459 = vadd.f32 0.0, %v458
      %460 = vmatmul.f32.gmra.mxu0 %v345
      %v461 = vpop.f32.mrf.mxu0
      %v462 = vadd.f32 0.0, %v461
      %463 = vmatmul.f32.gmra.mxu0 %v348
      %v464 = vpop.f32.mrf.mxu0
      %v465 = vadd.f32 0.0, %v464
      %466 = vmatmul.f32.gmra.mxu0 %v351
      %v467 = vpop.f32.mrf.mxu0
      %v468 = vadd.f32 0.0, %v467
      %469 = vmatmul.f32.gmra.mxu0 %v354
      %v470 = vpop.f32.mrf.mxu0
      %v471 = vadd.f32 0.0, %v470
      %472 = vmatmul.f32.gmra.mxu0 %v357
      %v473 = vpop.f32.mrf.mxu0
      %v474 = vadd.f32 0.0, %v473
      %475 = vmatmul.f32.gmra.mxu0 %v360
      %v476 = vpop.f32.mrf.mxu0
      %v477 = vadd.f32 0.0, %v476
      %478 = vdwg.mxu0
      %v480 = vsel %vm265, %v198, 0
      %v483 = vsel %vm265, %v199, 0
      %v486 = vsel %vm265, %v200, 0
      %v489 = vsel %vm265, %v201, 0
      %v492 = vsel %vm265, %v202, 0
      %v495 = vsel %vm265, %v203, 0
      %v498 = vsel %vm265, %v204, 0
      %v501 = vsel %vm265, %v205, 0
      %v504 = vsel %vm265, %v206, 0
      %v507 = vsel %vm265, %v207, 0
      %v510 = vsel %vm265, %v208, 0
      %v513 = vsel %vm265, %v209, 0
      %v516 = vsel %vm265, %v210, 0
      %v519 = vsel %vm265, %v211, 0
      %v522 = vsel %vm265, %v212, 0
      %v525 = vsel %vm265, %v213, 0
      %v528 = vsel %vm265, %v214, 0
      %v531 = vsel %vm265, %v215, 0
      %v534 = vsel %vm265, %v216, 0
      %v537 = vsel %vm265, %v217, 0
      %v540 = vsel %vm265, %v218, 0
      %v543 = vsel %vm265, %v219, 0
      %v546 = vsel %vm265, %v220, 0
      %v549 = vsel %vm265, %v221, 0
      %v552 = vsel %vm265, %v222, 0
      %v555 = vsel %vm265, %v223, 0
      %v558 = vsel %vm265, %v224, 0
      %v561 = vsel %vm265, %v225, 0
      %v564 = vsel %vm265, %v226, 0
      %v567 = vsel %vm265, %v227, 0
      %v570 = vsel %vm265, %v228, 0
      %v573 = vsel %vm265, %v229, 0
      %v576 = vsel %vm362, %v230, 0
      %578 = vmatpush.msra.mxu0 0.0
      %579 = vmatpush.msra.mxu0 0.0
      %580 = vmatpush.msra.mxu0 0.0
      %581 = vmatpush.msra.mxu0 0.0
      %582 = vmatpush.msra.mxu0 0.0
      %583 = vmatpush.msra.mxu0 0.0
      %584 = vmatpush.msra.mxu0 0.0
      %585 = vmatpush.msra.mxu0 0.0
      %586 = vmatpush.msra.mxu0 0.0
      %587 = vmatpush.msra.mxu0 0.0
      %588 = vmatpush.msra.mxu0 0.0
      %589 = vmatpush.msra.mxu0 0.0
      %590 = vmatpush.msra.mxu0 0.0
      %591 = vmatpush.msra.mxu0 0.0
      %592 = vmatpush.msra.mxu0 0.0
      %593 = vmatpush.msra.mxu0 %v576
      %594 = vmatmul.f32.gmra.mxu0 %v480
      %v595 = vpop.f32.mrf.mxu0
      %v596 = vadd.f32 %v384, %v595
      %597 = vmatmul.f32.gmra.mxu0 %v483
      %v598 = vpop.f32.mrf.mxu0
      %v599 = vadd.f32 %v387, %v598
      %600 = vmatmul.f32.gmra.mxu0 %v486
      %v601 = vpop.f32.mrf.mxu0
      %v602 = vadd.f32 %v390, %v601
      %603 = vmatmul.f32.gmra.mxu0 %v489
      %v604 = vpop.f32.mrf.mxu0
      %v605 = vadd.f32 %v393, %v604
      %606 = vmatmul.f32.gmra.mxu0 %v492
      %v607 = vpop.f32.mrf.mxu0
      %v608 = vadd.f32 %v396, %v607
      %609 = vmatmul.f32.gmra.mxu0 %v495
      %v610 = vpop.f32.mrf.mxu0
      %v611 = vadd.f32 %v399, %v610
      %612 = vmatmul.f32.gmra.mxu0 %v498
      %v613 = vpop.f32.mrf.mxu0
      %v614 = vadd.f32 %v402, %v613
      %615 = vmatmul.f32.gmra.mxu0 %v501
      %v616 = vpop.f32.mrf.mxu0
      %v617 = vadd.f32 %v405, %v616
      %618 = vmatmul.f32.gmra.mxu0 %v504
      %v619 = vpop.f32.mrf.mxu0
      %v620 = vadd.f32 %v408, %v619
      %621 = vmatmul.f32.gmra.mxu0 %v507
      %v622 = vpop.f32.mrf.mxu0
      %v623 = vadd.f32 %v411, %v622
      %624 = vmatmul.f32.gmra.mxu0 %v510
      %v625 = vpop.f32.mrf.mxu0
      %v626 = vadd.f32 %v414, %v625
      %627 = vmatmul.f32.gmra.mxu0 %v513
      %v628 = vpop.f32.mrf.mxu0
      %v629 = vadd.f32 %v417, %v628
      %630 = vmatmul.f32.gmra.mxu0 %v516
      %v631 = vpop.f32.mrf.mxu0
      %v632 = vadd.f32 %v420, %v631
      %633 = vmatmul.f32.gmra.mxu0 %v519
      %v634 = vpop.f32.mrf.mxu0
      %v635 = vadd.f32 %v423, %v634
      %636 = vmatmul.f32.gmra.mxu0 %v522
      %v637 = vpop.f32.mrf.mxu0
      %v638 = vadd.f32 %v426, %v637
      %639 = vmatmul.f32.gmra.mxu0 %v525
      %v640 = vpop.f32.mrf.mxu0
      %v641 = vadd.f32 %v429, %v640
      %642 = vmatmul.f32.gmra.mxu0 %v528
      %v643 = vpop.f32.mrf.mxu0
      %v644 = vadd.f32 %v432, %v643
      %645 = vmatmul.f32.gmra.mxu0 %v531
      %v646 = vpop.f32.mrf.mxu0
      %v647 = vadd.f32 %v435, %v646
      %648 = vmatmul.f32.gmra.mxu0 %v534
      %v649 = vpop.f32.mrf.mxu0
      %v650 = vadd.f32 %v438, %v649
      %651 = vmatmul.f32.gmra.mxu0 %v537
      %v652 = vpop.f32.mrf.mxu0
      %v653 = vadd.f32 %v441, %v652
      %654 = vmatmul.f32.gmra.mxu0 %v540
      %v655 = vpop.f32.mrf.mxu0
      %v656 = vadd.f32 %v444, %v655
      %657 = vmatmul.f32.gmra.mxu0 %v543
      %v658 = vpop.f32.mrf.mxu0
      %v659 = vadd.f32 %v447, %v658
      %660 = vmatmul.f32.gmra.mxu0 %v546
      %v661 = vpop.f32.mrf.mxu0
      %v662 = vadd.f32 %v450, %v661
      %663 = vmatmul.f32.gmra.mxu0 %v549
      %v664 = vpop.f32.mrf.mxu0
      %v665 = vadd.f32 %v453, %v664
      %666 = vmatmul.f32.gmra.mxu0 %v552
      %v667 = vpop.f32.mrf.mxu0
      %v668 = vadd.f32 %v456, %v667
      %669 = vmatmul.f32.gmra.mxu0 %v555
      %v670 = vpop.f32.mrf.mxu0
      %v671 = vadd.f32 %v459, %v670
      %672 = vmatmul.f32.gmra.mxu0 %v558
      %v673 = vpop.f32.mrf.mxu0
      %v674 = vadd.f32 %v462, %v673
      %675 = vmatmul.f32.gmra.mxu0 %v561
      %v676 = vpop.f32.mrf.mxu0
      %v677 = vadd.f32 %v465, %v676
      %678 = vmatmul.f32.gmra.mxu0 %v564
      %v679 = vpop.f32.mrf.mxu0
      %v680 = vadd.f32 %v468, %v679
      %681 = vmatmul.f32.gmra.mxu0 %v567
      %v682 = vpop.f32.mrf.mxu0
      %v683 = vadd.f32 %v471, %v682
      %684 = vmatmul.f32.gmra.mxu0 %v570
      %v685 = vpop.f32.mrf.mxu0
      %v686 = vadd.f32 %v474, %v685
      %687 = vmatmul.f32.gmra.mxu0 %v573
      %v688 = vpop.f32.mrf.mxu0
      %v689 = vadd.f32 %v477, %v688
      %690 = vdwg.mxu0
      %v691 = vld [vmem:[%s192 + $0x2] sm:$0xff]
      %v692 = vld [vmem:[%s192 + $0xa] sm:$0xff]
      %v693 = vld [vmem:[%s192 + $0x1a] sm:$0xff]
      %v694 = vld [vmem:[%s192 + $0x22] sm:$0xff]
      %v695 = vld [vmem:[%s192 + $0x32] sm:$0xff]
      %v696 = vld [vmem:[%s192 + $0x3a] sm:$0xff]
      %v697 = vld [vmem:[%s192 + $0x4a] sm:$0xff]
      %v698 = vld [vmem:[%s192 + $0x52] sm:$0xff]
      %v699 = vld [vmem:[%s192 + $0x62] sm:$0xff]
      %v700 = vld [vmem:[%s192 + $0x6a] sm:$0xff]
      %v701 = vld [vmem:[%s192 + $0x7a] sm:$0xff]
      %v702 = vld [vmem:[%s192 + $0x82] sm:$0xff]
      %v703 = vld [vmem:[%s192 + $0x92] sm:$0xff]
      %v704 = vld [vmem:[%s192 + $0x9a] sm:$0xff]
      %v705 = vld [vmem:[%s192 + $0xaa] sm:$0xff]
      %v706 = vld [vmem:[%s192 + $0xb2] sm:$0xff]
      %v707 = vld [vmem:[%s192 + $0xc2] sm:$0xff]
      %v708 = vld [vmem:[%s192 + $0xca] sm:$0xff]
      %v709 = vld [vmem:[%s192 + $0xda] sm:$0xff]
      %v710 = vld [vmem:[%s192 + $0xe2] sm:$0xff]
      %v711 = vld [vmem:[%s192 + $0xf2] sm:$0xff]
      %v712 = vld [vmem:[%s192 + $0xfa] sm:$0xff]
      %v713 = vld [vmem:[%s192 + $0x10a] sm:$0xff]
      %v714 = vld [vmem:[%s192 + $0x112] sm:$0xff]
      %v715 = vld [vmem:[%s192 + $0x122] sm:$0xff]
      %v716 = vld [vmem:[%s192 + $0x12a] sm:$0xff]
      %v717 = vld [vmem:[%s192 + $0x13a] sm:$0xff]
      %v718 = vld [vmem:[%s192 + $0x142] sm:$0xff]
      %v719 = vld [vmem:[%s192 + $0x152] sm:$0xff]
      %v720 = vld [vmem:[%s192 + $0x15a] sm:$0xff]
      %v721 = vld [vmem:[%s192 + $0x16a] sm:$0xff]
      %v722 = vld [vmem:[%s192 + $0x172] sm:$0xff]
      %s723 = scalar_lea.vmem %s1, 16
      %v724 = vld [vmem:[%s723] sm:$0xf]
      %v726 = vsel %vm265, %v691, 0
      %v729 = vsel %vm265, %v692, 0
      %v732 = vsel %vm265, %v693, 0
      %v735 = vsel %vm265, %v694, 0
      %v738 = vsel %vm265, %v695, 0
      %v741 = vsel %vm265, %v696, 0
      %v744 = vsel %vm265, %v697, 0
      %v747 = vsel %vm265, %v698, 0
      %v750 = vsel %vm265, %v699, 0
      %v753 = vsel %vm265, %v700, 0
      %v756 = vsel %vm265, %v701, 0
      %v759 = vsel %vm265, %v702, 0
      %v762 = vsel %vm265, %v703, 0
      %v765 = vsel %vm265, %v704, 0
      %v768 = vsel %vm265, %v705, 0
      %v771 = vsel %vm265, %v706, 0
      %v774 = vsel %vm265, %v707, 0
      %v777 = vsel %vm265, %v708, 0
      %v780 = vsel %vm265, %v709, 0
      %v783 = vsel %vm265, %v710, 0
      %v786 = vsel %vm265, %v711, 0
      %v789 = vsel %vm265, %v712, 0
      %v792 = vsel %vm265, %v713, 0
      %v795 = vsel %vm265, %v714, 0
      %v798 = vsel %vm265, %v715, 0
      %v801 = vsel %vm265, %v716, 0
      %v804 = vsel %vm265, %v717, 0
      %v807 = vsel %vm265, %v718, 0
      %v810 = vsel %vm265, %v719, 0
      %v813 = vsel %vm265, %v720, 0
      %v816 = vsel %vm265, %v721, 0
      %v819 = vsel %vm265, %v722, 0
      %v822 = vsel %vm362, %v724, 0
      %824 = vmatpush.msra.mxu0 0.0
      %825 = vmatpush.msra.mxu0 0.0
      %826 = vmatpush.msra.mxu0 0.0
      %827 = vmatpush.msra.mxu0 0.0
      %828 = vmatpush.msra.mxu0 0.0
      %829 = vmatpush.msra.mxu0 0.0
      %830 = vmatpush.msra.mxu0 0.0
      %831 = vmatpush.msra.mxu0 0.0
      %832 = vmatpush.msra.mxu0 0.0
      %833 = vmatpush.msra.mxu0 0.0
      %834 = vmatpush.msra.mxu0 0.0
      %835 = vmatpush.msra.mxu0 0.0
      %836 = vmatpush.msra.mxu0 0.0
      %837 = vmatpush.msra.mxu0 0.0
      %838 = vmatpush.msra.mxu0 0.0
      %839 = vmatpush.msra.mxu0 %v822
      %840 = vmatmul.f32.gmra.mxu0 %v726
      %v841 = vpop.f32.mrf.mxu0
      %v842 = vadd.f32 0.0, %v841
      %843 = vmatmul.f32.gmra.mxu0 %v729
      %v844 = vpop.f32.mrf.mxu0
      %v845 = vadd.f32 0.0, %v844
      %846 = vmatmul.f32.gmra.mxu0 %v732
      %v847 = vpop.f32.mrf.mxu0
      %v848 = vadd.f32 0.0, %v847
      %849 = vmatmul.f32.gmra.mxu0 %v735
      %v850 = vpop.f32.mrf.mxu0
      %v851 = vadd.f32 0.0, %v850
      %852 = vmatmul.f32.gmra.mxu0 %v738
      %v853 = vpop.f32.mrf.mxu0
      %v854 = vadd.f32 0.0, %v853
      %855 = vmatmul.f32.gmra.mxu0 %v741
      %v856 = vpop.f32.mrf.mxu0
      %v857 = vadd.f32 0.0, %v856
      %858 = vmatmul.f32.gmra.mxu0 %v744
      %v859 = vpop.f32.mrf.mxu0
      %v860 = vadd.f32 0.0, %v859
      %861 = vmatmul.f32.gmra.mxu0 %v747
      %v862 = vpop.f32.mrf.mxu0
      %v863 = vadd.f32 0.0, %v862
      %864 = vmatmul.f32.gmra.mxu0 %v750
      %v865 = vpop.f32.mrf.mxu0
      %v866 = vadd.f32 0.0, %v865
      %867 = vmatmul.f32.gmra.mxu0 %v753
      %v868 = vpop.f32.mrf.mxu0
      %v869 = vadd.f32 0.0, %v868
      %870 = vmatmul.f32.gmra.mxu0 %v756
      %v871 = vpop.f32.mrf.mxu0
      %v872 = vadd.f32 0.0, %v871
      %873 = vmatmul.f32.gmra.mxu0 %v759
      %v874 = vpop.f32.mrf.mxu0
      %v875 = vadd.f32 0.0, %v874
      %876 = vmatmul.f32.gmra.mxu0 %v762
      %v877 = vpop.f32.mrf.mxu0
      %v878 = vadd.f32 0.0, %v877
      %879 = vmatmul.f32.gmra.mxu0 %v765
      %v880 = vpop.f32.mrf.mxu0
      %v881 = vadd.f32 0.0, %v880
      %882 = vmatmul.f32.gmra.mxu0 %v768
      %v883 = vpop.f32.mrf.mxu0
      %v884 = vadd.f32 0.0, %v883
      %885 = vmatmul.f32.gmra.mxu0 %v771
      %v886 = vpop.f32.mrf.mxu0
      %v887 = vadd.f32 0.0, %v886
      %888 = vmatmul.f32.gmra.mxu0 %v774
      %v889 = vpop.f32.mrf.mxu0
      %v890 = vadd.f32 0.0, %v889
      %891 = vmatmul.f32.gmra.mxu0 %v777
      %v892 = vpop.f32.mrf.mxu0
      %v893 = vadd.f32 0.0, %v892
      %894 = vmatmul.f32.gmra.mxu0 %v780
      %v895 = vpop.f32.mrf.mxu0
      %v896 = vadd.f32 0.0, %v895
      %897 = vmatmul.f32.gmra.mxu0 %v783
      %v898 = vpop.f32.mrf.mxu0
      %v899 = vadd.f32 0.0, %v898
      %900 = vmatmul.f32.gmra.mxu0 %v786
      %v901 = vpop.f32.mrf.mxu0
      %v902 = vadd.f32 0.0, %v901
      %903 = vmatmul.f32.gmra.mxu0 %v789
      %v904 = vpop.f32.mrf.mxu0
      %v905 = vadd.f32 0.0, %v904
      %906 = vmatmul.f32.gmra.mxu0 %v792
      %v907 = vpop.f32.mrf.mxu0
      %v908 = vadd.f32 0.0, %v907
      %909 = vmatmul.f32.gmra.mxu0 %v795
      %v910 = vpop.f32.mrf.mxu0
      %v911 = vadd.f32 0.0, %v910
      %912 = vmatmul.f32.gmra.mxu0 %v798
      %v913 = vpop.f32.mrf.mxu0
      %v914 = vadd.f32 0.0, %v913
      %915 = vmatmul.f32.gmra.mxu0 %v801
      %v916 = vpop.f32.mrf.mxu0
      %v917 = vadd.f32 0.0, %v916
      %918 = vmatmul.f32.gmra.mxu0 %v804
      %v919 = vpop.f32.mrf.mxu0
      %v920 = vadd.f32 0.0, %v919
      %921 = vmatmul.f32.gmra.mxu0 %v807
      %v922 = vpop.f32.mrf.mxu0
      %v923 = vadd.f32 0.0, %v922
      %924 = vmatmul.f32.gmra.mxu0 %v810
      %v925 = vpop.f32.mrf.mxu0
      %v926 = vadd.f32 0.0, %v925
      %927 = vmatmul.f32.gmra.mxu0 %v813
      %v928 = vpop.f32.mrf.mxu0
      %v929 = vadd.f32 0.0, %v928
      %930 = vmatmul.f32.gmra.mxu0 %v816
      %v931 = vpop.f32.mrf.mxu0
      %v932 = vadd.f32 0.0, %v931
      %933 = vmatmul.f32.gmra.mxu0 %v819
      %v934 = vpop.f32.mrf.mxu0
      %v935 = vadd.f32 0.0, %v934
      %936 = vdwg.mxu0
      %v937 = vadd.f32 %v596, %v842
      %v938 = vadd.f32 %v599, %v845
      %v939 = vadd.f32 %v602, %v848
      %v940 = vadd.f32 %v605, %v851
      %v941 = vadd.f32 %v608, %v854
      %v942 = vadd.f32 %v611, %v857
      %v943 = vadd.f32 %v614, %v860
      %v944 = vadd.f32 %v617, %v863
      %v945 = vadd.f32 %v620, %v866
      %v946 = vadd.f32 %v623, %v869
      %v947 = vadd.f32 %v626, %v872
      %v948 = vadd.f32 %v629, %v875
      %v949 = vadd.f32 %v632, %v878
      %v950 = vadd.f32 %v635, %v881
      %v951 = vadd.f32 %v638, %v884
      %v952 = vadd.f32 %v641, %v887
      %v953 = vadd.f32 %v644, %v890
      %v954 = vadd.f32 %v647, %v893
      %v955 = vadd.f32 %v650, %v896
      %v956 = vadd.f32 %v653, %v899
      %v957 = vadd.f32 %v656, %v902
      %v958 = vadd.f32 %v659, %v905
      %v959 = vadd.f32 %v662, %v908
      %v960 = vadd.f32 %v665, %v911
      %v961 = vadd.f32 %v668, %v914
      %v962 = vadd.f32 %v671, %v917
      %v963 = vadd.f32 %v674, %v920
      %v964 = vadd.f32 %v677, %v923
      %v965 = vadd.f32 %v680, %v926
      %v966 = vadd.f32 %v683, %v929
      %v967 = vadd.f32 %v686, %v932
      %v968 = vadd.f32 %v689, %v935
      %s969 = scalar_lea.vmem %s192, 24
      %v970 = vld [vmem:[%s969] sm:$0xff]
      %v971 = vld [vmem:[%s969 + $0x8] sm:$0xff]
      %v972 = vld [vmem:[%s969 + $0x18] sm:$0xff]
      %v973 = vld [vmem:[%s969 + $0x20] sm:$0xff]
      %v974 = vld [vmem:[%s969 + $0x30] sm:$0xff]
      %v975 = vld [vmem:[%s969 + $0x38] sm:$0xff]
      %v976 = vld [vmem:[%s969 + $0x48] sm:$0xff]
      %v977 = vld [vmem:[%s969 + $0x50] sm:$0xff]
      %v978 = vld [vmem:[%s969 + $0x60] sm:$0xff]
      %v979 = vld [vmem:[%s969 + $0x68] sm:$0xff]
      %v980 = vld [vmem:[%s969 + $0x78] sm:$0xff]
      %v981 = vld [vmem:[%s969 + $0x80] sm:$0xff]
      %v982 = vld [vmem:[%s969 + $0x90] sm:$0xff]
      %v983 = vld [vmem:[%s969 + $0x98] sm:$0xff]
      %v984 = vld [vmem:[%s969 + $0xa8] sm:$0xff]
      %v985 = vld [vmem:[%s969 + $0xb0] sm:$0xff]
      %v986 = vld [vmem:[%s969 + $0xc0] sm:$0xff]
      %v987 = vld [vmem:[%s969 + $0xc8] sm:$0xff]
      %v988 = vld [vmem:[%s969 + $0xd8] sm:$0xff]
      %v989 = vld [vmem:[%s969 + $0xe0] sm:$0xff]
      %v990 = vld [vmem:[%s969 + $0xf0] sm:$0xff]
      %v991 = vld [vmem:[%s969 + $0xf8] sm:$0xff]
      %v992 = vld [vmem:[%s969 + $0x108] sm:$0xff]
      %v993 = vld [vmem:[%s969 + $0x110] sm:$0xff]
      %v994 = vld [vmem:[%s969 + $0x120] sm:$0xff]
      %v995 = vld [vmem:[%s969 + $0x128] sm:$0xff]
      %v996 = vld [vmem:[%s969 + $0x138] sm:$0xff]
      %v997 = vld [vmem:[%s969 + $0x140] sm:$0xff]
      %v998 = vld [vmem:[%s969 + $0x150] sm:$0xff]
      %v999 = vld [vmem:[%s969 + $0x158] sm:$0xff]
      %v1000 = vld [vmem:[%s969 + $0x168] sm:$0xff]
      %v1001 = vld [vmem:[%s969 + $0x170] sm:$0xff]
      %s1002 = scalar_lea.vmem %s1, 24
      %v1003 = vld [vmem:[%s1002] sm:$0xf]
      %v1005 = vsel %vm265, %v970, 0
      %v1008 = vsel %vm265, %v971, 0
      %v1011 = vsel %vm265, %v972, 0
      %v1014 = vsel %vm265, %v973, 0
      %v1017 = vsel %vm265, %v974, 0
      %v1020 = vsel %vm265, %v975, 0
      %v1023 = vsel %vm265, %v976, 0
      %v1026 = vsel %vm265, %v977, 0
      %v1029 = vsel %vm265, %v978, 0
      %v1032 = vsel %vm265, %v979, 0
      %v1035 = vsel %vm265, %v980, 0
      %v1038 = vsel %vm265, %v981, 0
      %v1041 = vsel %vm265, %v982, 0
      %v1044 = vsel %vm265, %v983, 0
      %v1047 = vsel %vm265, %v984, 0
      %v1050 = vsel %vm265, %v985, 0
      %v1053 = vsel %vm265, %v986, 0
      %v1056 = vsel %vm265, %v987, 0
      %v1059 = vsel %vm265, %v988, 0
      %v1062 = vsel %vm265, %v989, 0
      %v1065 = vsel %vm265, %v990, 0
      %v1068 = vsel %vm265, %v991, 0
      %v1071 = vsel %vm265, %v992, 0
      %v1074 = vsel %vm265, %v993, 0
      %v1077 = vsel %vm265, %v994, 0
      %v1080 = vsel %vm265, %v995, 0
      %v1083 = vsel %vm265, %v996, 0
      %v1086 = vsel %vm265, %v997, 0
      %v1089 = vsel %vm265, %v998, 0
      %v1092 = vsel %vm265, %v999, 0
      %v1095 = vsel %vm265, %v1000, 0
      %v1098 = vsel %vm265, %v1001, 0
      %v1101 = vsel %vm362, %v1003, 0
      %1103 = vmatpush.msra.mxu0 0.0
      %1104 = vmatpush.msra.mxu0 0.0
      %1105 = vmatpush.msra.mxu0 0.0
      %1106 = vmatpush.msra.mxu0 0.0
      %1107 = vmatpush.msra.mxu0 0.0
      %1108 = vmatpush.msra.mxu0 0.0
      %1109 = vmatpush.msra.mxu0 0.0
      %1110 = vmatpush.msra.mxu0 0.0
      %1111 = vmatpush.msra.mxu0 0.0
      %1112 = vmatpush.msra.mxu0 0.0
      %1113 = vmatpush.msra.mxu0 0.0
      %1114 = vmatpush.msra.mxu0 0.0
      %1115 = vmatpush.msra.mxu0 0.0
      %1116 = vmatpush.msra.mxu0 0.0
      %1117 = vmatpush.msra.mxu0 0.0
      %1118 = vmatpush.msra.mxu0 %v1101
      %1119 = vmatmul.f32.gmra.mxu0 %v1005
      %v1120 = vpop.f32.mrf.mxu0
      %v1121 = vadd.f32 0.0, %v1120
      %1122 = vmatmul.f32.gmra.mxu0 %v1008
      %v1123 = vpop.f32.mrf.mxu0
      %v1124 = vadd.f32 0.0, %v1123
      %1125 = vmatmul.f32.gmra.mxu0 %v1011
      %v1126 = vpop.f32.mrf.mxu0
      %v1127 = vadd.f32 0.0, %v1126
      %1128 = vmatmul.f32.gmra.mxu0 %v1014
      %v1129 = vpop.f32.mrf.mxu0
      %v1130 = vadd.f32 0.0, %v1129
      %1131 = vmatmul.f32.gmra.mxu0 %v1017
      %v1132 = vpop.f32.mrf.mxu0
      %v1133 = vadd.f32 0.0, %v1132
      %1134 = vmatmul.f32.gmra.mxu0 %v1020
      %v1135 = vpop.f32.mrf.mxu0
      %v1136 = vadd.f32 0.0, %v1135
      %1137 = vmatmul.f32.gmra.mxu0 %v1023
      %v1138 = vpop.f32.mrf.mxu0
      %v1139 = vadd.f32 0.0, %v1138
      %1140 = vmatmul.f32.gmra.mxu0 %v1026
      %v1141 = vpop.f32.mrf.mxu0
      %v1142 = vadd.f32 0.0, %v1141
      %1143 = vmatmul.f32.gmra.mxu0 %v1029
      %v1144 = vpop.f32.mrf.mxu0
      %v1145 = vadd.f32 0.0, %v1144
      %1146 = vmatmul.f32.gmra.mxu0 %v1032
      %v1147 = vpop.f32.mrf.mxu0
      %v1148 = vadd.f32 0.0, %v1147
      %1149 = vmatmul.f32.gmra.mxu0 %v1035
      %v1150 = vpop.f32.mrf.mxu0
      %v1151 = vadd.f32 0.0, %v1150
      %1152 = vmatmul.f32.gmra.mxu0 %v1038
      %v1153 = vpop.f32.mrf.mxu0
      %v1154 = vadd.f32 0.0, %v1153
      %1155 = vmatmul.f32.gmra.mxu0 %v1041
      %v1156 = vpop.f32.mrf.mxu0
      %v1157 = vadd.f32 0.0, %v1156
      %1158 = vmatmul.f32.gmra.mxu0 %v1044
      %v1159 = vpop.f32.mrf.mxu0
      %v1160 = vadd.f32 0.0, %v1159
      %1161 = vmatmul.f32.gmra.mxu0 %v1047
      %v1162 = vpop.f32.mrf.mxu0
      %v1163 = vadd.f32 0.0, %v1162
      %1164 = vmatmul.f32.gmra.mxu0 %v1050
      %v1165 = vpop.f32.mrf.mxu0
      %v1166 = vadd.f32 0.0, %v1165
      %1167 = vmatmul.f32.gmra.mxu0 %v1053
      %v1168 = vpop.f32.mrf.mxu0
      %v1169 = vadd.f32 0.0, %v1168
      %1170 = vmatmul.f32.gmra.mxu0 %v1056
      %v1171 = vpop.f32.mrf.mxu0
      %v1172 = vadd.f32 0.0, %v1171
      %1173 = vmatmul.f32.gmra.mxu0 %v1059
      %v1174 = vpop.f32.mrf.mxu0
      %v1175 = vadd.f32 0.0, %v1174
      %1176 = vmatmul.f32.gmra.mxu0 %v1062
      %v1177 = vpop.f32.mrf.mxu0
      %v1178 = vadd.f32 0.0, %v1177
      %1179 = vmatmul.f32.gmra.mxu0 %v1065
      %v1180 = vpop.f32.mrf.mxu0
      %v1181 = vadd.f32 0.0, %v1180
      %1182 = vmatmul.f32.gmra.mxu0 %v1068
      %v1183 = vpop.f32.mrf.mxu0
      %v1184 = vadd.f32 0.0, %v1183
      %1185 = vmatmul.f32.gmra.mxu0 %v1071
      %v1186 = vpop.f32.mrf.mxu0
      %v1187 = vadd.f32 0.0, %v1186
      %1188 = vmatmul.f32.gmra.mxu0 %v1074
      %v1189 = vpop.f32.mrf.mxu0
      %v1190 = vadd.f32 0.0, %v1189
      %1191 = vmatmul.f32.gmra.mxu0 %v1077
      %v1192 = vpop.f32.mrf.mxu0
      %v1193 = vadd.f32 0.0, %v1192
      %1194 = vmatmul.f32.gmra.mxu0 %v1080
      %v1195 = vpop.f32.mrf.mxu0
      %v1196 = vadd.f32 0.0, %v1195
      %1197 = vmatmul.f32.gmra.mxu0 %v1083
      %v1198 = vpop.f32.mrf.mxu0
      %v1199 = vadd.f32 0.0, %v1198
      %1200 = vmatmul.f32.gmra.mxu0 %v1086
      %v1201 = vpop.f32.mrf.mxu0
      %v1202 = vadd.f32 0.0, %v1201
      %1203 = vmatmul.f32.gmra.mxu0 %v1089
      %v1204 = vpop.f32.mrf.mxu0
      %v1205 = vadd.f32 0.0, %v1204
      %1206 = vmatmul.f32.gmra.mxu0 %v1092
      %v1207 = vpop.f32.mrf.mxu0
      %v1208 = vadd.f32 0.0, %v1207
      %1209 = vmatmul.f32.gmra.mxu0 %v1095
      %v1210 = vpop.f32.mrf.mxu0
      %v1211 = vadd.f32 0.0, %v1210
      %1212 = vmatmul.f32.gmra.mxu0 %v1098
      %v1213 = vpop.f32.mrf.mxu0
      %v1214 = vadd.f32 0.0, %v1213
      %1215 = vdwg.mxu0
      %v1216 = vadd.f32 %v937, %v1121
      %v1217 = vadd.f32 %v938, %v1124
      %v1218 = vadd.f32 %v939, %v1127
      %v1219 = vadd.f32 %v940, %v1130
      %v1220 = vadd.f32 %v941, %v1133
      %v1221 = vadd.f32 %v942, %v1136
      %v1222 = vadd.f32 %v943, %v1139
      %v1223 = vadd.f32 %v944, %v1142
      %v1224 = vadd.f32 %v945, %v1145
      %v1225 = vadd.f32 %v946, %v1148
      %v1226 = vadd.f32 %v947, %v1151
      %v1227 = vadd.f32 %v948, %v1154
      %v1228 = vadd.f32 %v949, %v1157
      %v1229 = vadd.f32 %v950, %v1160
      %v1230 = vadd.f32 %v951, %v1163
      %v1231 = vadd.f32 %v952, %v1166
      %v1232 = vadd.f32 %v953, %v1169
      %v1233 = vadd.f32 %v954, %v1172
      %v1234 = vadd.f32 %v955, %v1175
      %v1235 = vadd.f32 %v956, %v1178
      %v1236 = vadd.f32 %v957, %v1181
      %v1237 = vadd.f32 %v958, %v1184
      %v1238 = vadd.f32 %v959, %v1187
      %v1239 = vadd.f32 %v960, %v1190
      %v1240 = vadd.f32 %v961, %v1193
      %v1241 = vadd.f32 %v962, %v1196
      %v1242 = vadd.f32 %v963, %v1199
      %v1243 = vadd.f32 %v964, %v1202
      %v1244 = vadd.f32 %v965, %v1205
      %v1245 = vadd.f32 %v966, %v1208
      %v1246 = vadd.f32 %v967, %v1211
      %v1247 = vadd.f32 %v968, %v1214
      %v1248 = vld [vmem:[%s969 + $0x1] sm:$0xff]
      %v1249 = vld [vmem:[%s969 + $0x9] sm:$0xff]
      %v1250 = vld [vmem:[%s969 + $0x19] sm:$0xff]
      %v1251 = vld [vmem:[%s969 + $0x21] sm:$0xff]
      %v1252 = vld [vmem:[%s969 + $0x31] sm:$0xff]
      %v1253 = vld [vmem:[%s969 + $0x39] sm:$0xff]
      %v1254 = vld [vmem:[%s969 + $0x49] sm:$0xff]
      %v1255 = vld [vmem:[%s969 + $0x51] sm:$0xff]
      %v1256 = vld [vmem:[%s969 + $0x61] sm:$0xff]
      %v1257 = vld [vmem:[%s969 + $0x69] sm:$0xff]
      %v1258 = vld [vmem:[%s969 + $0x79] sm:$0xff]
      %v1259 = vld [vmem:[%s969 + $0x81] sm:$0xff]
      %v1260 = vld [vmem:[%s969 + $0x91] sm:$0xff]
      %v1261 = vld [vmem:[%s969 + $0x99] sm:$0xff]
      %v1262 = vld [vmem:[%s969 + $0xa9] sm:$0xff]
      %v1263 = vld [vmem:[%s969 + $0xb1] sm:$0xff]
      %v1264 = vld [vmem:[%s969 + $0xc1] sm:$0xff]
      %v1265 = vld [vmem:[%s969 + $0xc9] sm:$0xff]
      %v1266 = vld [vmem:[%s969 + $0xd9] sm:$0xff]
      %v1267 = vld [vmem:[%s969 + $0xe1] sm:$0xff]
      %v1268 = vld [vmem:[%s969 + $0xf1] sm:$0xff]
      %v1269 = vld [vmem:[%s969 + $0xf9] sm:$0xff]
      %v1270 = vld [vmem:[%s969 + $0x109] sm:$0xff]
      %v1271 = vld [vmem:[%s969 + $0x111] sm:$0xff]
      %v1272 = vld [vmem:[%s969 + $0x121] sm:$0xff]
      %v1273 = vld [vmem:[%s969 + $0x129] sm:$0xff]
      %v1274 = vld [vmem:[%s969 + $0x139] sm:$0xff]
      %v1275 = vld [vmem:[%s969 + $0x141] sm:$0xff]
      %v1276 = vld [vmem:[%s969 + $0x151] sm:$0xff]
      %v1277 = vld [vmem:[%s969 + $0x159] sm:$0xff]
      %v1278 = vld [vmem:[%s969 + $0x169] sm:$0xff]
      %v1279 = vld [vmem:[%s969 + $0x171] sm:$0xff]
      %s1280 = scalar_lea.vmem %s1, 32
      %v1281 = vld [vmem:[%s1280] sm:$0xf]
      %v1283 = vsel %vm265, %v1248, 0
      %v1286 = vsel %vm265, %v1249, 0
      %v1289 = vsel %vm265, %v1250, 0
      %v1292 = vsel %vm265, %v1251, 0
      %v1295 = vsel %vm265, %v1252, 0
      %v1298 = vsel %vm265, %v1253, 0
      %v1301 = vsel %vm265, %v1254, 0
      %v1304 = vsel %vm265, %v1255, 0
      %v1307 = vsel %vm265, %v1256, 0
      %v1310 = vsel %vm265, %v1257, 0
      %v1313 = vsel %vm265, %v1258, 0
      %v1316 = vsel %vm265, %v1259, 0
      %v1319 = vsel %vm265, %v1260, 0
      %v1322 = vsel %vm265, %v1261, 0
      %v1325 = vsel %vm265, %v1262, 0
      %v1328 = vsel %vm265, %v1263, 0
      %v1331 = vsel %vm265, %v1264, 0
      %v1334 = vsel %vm265, %v1265, 0
      %v1337 = vsel %vm265, %v1266, 0
      %v1340 = vsel %vm265, %v1267, 0
      %v1343 = vsel %vm265, %v1268, 0
      %v1346 = vsel %vm265, %v1269, 0
      %v1349 = vsel %vm265, %v1270, 0
      %v1352 = vsel %vm265, %v1271, 0
      %v1355 = vsel %vm265, %v1272, 0
      %v1358 = vsel %vm265, %v1273, 0
      %v1361 = vsel %vm265, %v1274, 0
      %v1364 = vsel %vm265, %v1275, 0
      %v1367 = vsel %vm265, %v1276, 0
      %v1370 = vsel %vm265, %v1277, 0
      %v1373 = vsel %vm265, %v1278, 0
      %v1376 = vsel %vm265, %v1279, 0
      %v1379 = vsel %vm362, %v1281, 0
      %1381 = vmatpush.msra.mxu0 0.0
      %1382 = vmatpush.msra.mxu0 0.0
      %1383 = vmatpush.msra.mxu0 0.0
      %1384 = vmatpush.msra.mxu0 0.0
      %1385 = vmatpush.msra.mxu0 0.0
      %1386 = vmatpush.msra.mxu0 0.0
      %1387 = vmatpush.msra.mxu0 0.0
      %1388 = vmatpush.msra.mxu0 0.0
      %1389 = vmatpush.msra.mxu0 0.0
      %1390 = vmatpush.msra.mxu0 0.0
      %1391 = vmatpush.msra.mxu0 0.0
      %1392 = vmatpush.msra.mxu0 0.0
      %1393 = vmatpush.msra.mxu0 0.0
      %1394 = vmatpush.msra.mxu0 0.0
      %1395 = vmatpush.msra.mxu0 0.0
      %1396 = vmatpush.msra.mxu0 %v1379
      %1397 = vmatmul.f32.gmra.mxu0 %v1283
      %v1398 = vpop.f32.mrf.mxu0
      %v1399 = vadd.f32 0.0, %v1398
      %1400 = vmatmul.f32.gmra.mxu0 %v1286
      %v1401 = vpop.f32.mrf.mxu0
      %v1402 = vadd.f32 0.0, %v1401
      %1403 = vmatmul.f32.gmra.mxu0 %v1289
      %v1404 = vpop.f32.mrf.mxu0
      %v1405 = vadd.f32 0.0, %v1404
      %1406 = vmatmul.f32.gmra.mxu0 %v1292
      %v1407 = vpop.f32.mrf.mxu0
      %v1408 = vadd.f32 0.0, %v1407
      %1409 = vmatmul.f32.gmra.mxu0 %v1295
      %v1410 = vpop.f32.mrf.mxu0
      %v1411 = vadd.f32 0.0, %v1410
      %1412 = vmatmul.f32.gmra.mxu0 %v1298
      %v1413 = vpop.f32.mrf.mxu0
      %v1414 = vadd.f32 0.0, %v1413
      %1415 = vmatmul.f32.gmra.mxu0 %v1301
      %v1416 = vpop.f32.mrf.mxu0
      %v1417 = vadd.f32 0.0, %v1416
      %1418 = vmatmul.f32.gmra.mxu0 %v1304
      %v1419 = vpop.f32.mrf.mxu0
      %v1420 = vadd.f32 0.0, %v1419
      %1421 = vmatmul.f32.gmra.mxu0 %v1307
      %v1422 = vpop.f32.mrf.mxu0
      %v1423 = vadd.f32 0.0, %v1422
      %1424 = vmatmul.f32.gmra.mxu0 %v1310
      %v1425 = vpop.f32.mrf.mxu0
      %v1426 = vadd.f32 0.0, %v1425
      %1427 = vmatmul.f32.gmra.mxu0 %v1313
      %v1428 = vpop.f32.mrf.mxu0
      %v1429 = vadd.f32 0.0, %v1428
      %1430 = vmatmul.f32.gmra.mxu0 %v1316
      %v1431 = vpop.f32.mrf.mxu0
      %v1432 = vadd.f32 0.0, %v1431
      %1433 = vmatmul.f32.gmra.mxu0 %v1319
      %v1434 = vpop.f32.mrf.mxu0
      %v1435 = vadd.f32 0.0, %v1434
      %1436 = vmatmul.f32.gmra.mxu0 %v1322
      %v1437 = vpop.f32.mrf.mxu0
      %v1438 = vadd.f32 0.0, %v1437
      %1439 = vmatmul.f32.gmra.mxu0 %v1325
      %v1440 = vpop.f32.mrf.mxu0
      %v1441 = vadd.f32 0.0, %v1440
      %1442 = vmatmul.f32.gmra.mxu0 %v1328
      %v1443 = vpop.f32.mrf.mxu0
      %v1444 = vadd.f32 0.0, %v1443
      %1445 = vmatmul.f32.gmra.mxu0 %v1331
      %v1446 = vpop.f32.mrf.mxu0
      %v1447 = vadd.f32 0.0, %v1446
      %1448 = vmatmul.f32.gmra.mxu0 %v1334
      %v1449 = vpop.f32.mrf.mxu0
      %v1450 = vadd.f32 0.0, %v1449
      %1451 = vmatmul.f32.gmra.mxu0 %v1337
      %v1452 = vpop.f32.mrf.mxu0
      %v1453 = vadd.f32 0.0, %v1452
      %1454 = vmatmul.f32.gmra.mxu0 %v1340
      %v1455 = vpop.f32.mrf.mxu0
      %v1456 = vadd.f32 0.0, %v1455
      %1457 = vmatmul.f32.gmra.mxu0 %v1343
      %v1458 = vpop.f32.mrf.mxu0
      %v1459 = vadd.f32 0.0, %v1458
      %1460 = vmatmul.f32.gmra.mxu0 %v1346
      %v1461 = vpop.f32.mrf.mxu0
      %v1462 = vadd.f32 0.0, %v1461
      %1463 = vmatmul.f32.gmra.mxu0 %v1349
      %v1464 = vpop.f32.mrf.mxu0
      %v1465 = vadd.f32 0.0, %v1464
      %1466 = vmatmul.f32.gmra.mxu0 %v1352
      %v1467 = vpop.f32.mrf.mxu0
      %v1468 = vadd.f32 0.0, %v1467
      %1469 = vmatmul.f32.gmra.mxu0 %v1355
      %v1470 = vpop.f32.mrf.mxu0
      %v1471 = vadd.f32 0.0, %v1470
      %1472 = vmatmul.f32.gmra.mxu0 %v1358
      %v1473 = vpop.f32.mrf.mxu0
      %v1474 = vadd.f32 0.0, %v1473
      %1475 = vmatmul.f32.gmra.mxu0 %v1361
      %v1476 = vpop.f32.mrf.mxu0
      %v1477 = vadd.f32 0.0, %v1476
      %1478 = vmatmul.f32.gmra.mxu0 %v1364
      %v1479 = vpop.f32.mrf.mxu0
      %v1480 = vadd.f32 0.0, %v1479
      %1481 = vmatmul.f32.gmra.mxu0 %v1367
      %v1482 = vpop.f32.mrf.mxu0
      %v1483 = vadd.f32 0.0, %v1482
      %1484 = vmatmul.f32.gmra.mxu0 %v1370
      %v1485 = vpop.f32.mrf.mxu0
      %v1486 = vadd.f32 0.0, %v1485
      %1487 = vmatmul.f32.gmra.mxu0 %v1373
      %v1488 = vpop.f32.mrf.mxu0
      %v1489 = vadd.f32 0.0, %v1488
      %1490 = vmatmul.f32.gmra.mxu0 %v1376
      %v1491 = vpop.f32.mrf.mxu0
      %v1492 = vadd.f32 0.0, %v1491
      %1493 = vdwg.mxu0
      %v1494 = vadd.f32 %v1216, %v1399
      %v1495 = vadd.f32 %v1217, %v1402
      %v1496 = vadd.f32 %v1218, %v1405
      %v1497 = vadd.f32 %v1219, %v1408
      %v1498 = vadd.f32 %v1220, %v1411
      %v1499 = vadd.f32 %v1221, %v1414
      %v1500 = vadd.f32 %v1222, %v1417
      %v1501 = vadd.f32 %v1223, %v1420
      %v1502 = vadd.f32 %v1224, %v1423
      %v1503 = vadd.f32 %v1225, %v1426
      %v1504 = vadd.f32 %v1226, %v1429
      %v1505 = vadd.f32 %v1227, %v1432
      %v1506 = vadd.f32 %v1228, %v1435
      %v1507 = vadd.f32 %v1229, %v1438
      %v1508 = vadd.f32 %v1230, %v1441
      %v1509 = vadd.f32 %v1231, %v1444
      %v1510 = vadd.f32 %v1232, %v1447
      %v1511 = vadd.f32 %v1233, %v1450
      %v1512 = vadd.f32 %v1234, %v1453
      %v1513 = vadd.f32 %v1235, %v1456
      %v1514 = vadd.f32 %v1236, %v1459
      %v1515 = vadd.f32 %v1237, %v1462
      %v1516 = vadd.f32 %v1238, %v1465
      %v1517 = vadd.f32 %v1239, %v1468
      %v1518 = vadd.f32 %v1240, %v1471
      %v1519 = vadd.f32 %v1241, %v1474
      %v1520 = vadd.f32 %v1242, %v1477
      %v1521 = vadd.f32 %v1243, %v1480
      %v1522 = vadd.f32 %v1244, %v1483
      %v1523 = vadd.f32 %v1245, %v1486
      %v1524 = vadd.f32 %v1246, %v1489
      %v1525 = vadd.f32 %v1247, %v1492
      %v1526 = vld [vmem:[%s969 + $0x2] sm:$0xff]
      %v1527 = vld [vmem:[%s969 + $0xa] sm:$0xff]
      %v1528 = vld [vmem:[%s969 + $0x1a] sm:$0xff]
      %v1529 = vld [vmem:[%s969 + $0x22] sm:$0xff]
      %v1530 = vld [vmem:[%s969 + $0x32] sm:$0xff]
      %v1531 = vld [vmem:[%s969 + $0x3a] sm:$0xff]
      %v1532 = vld [vmem:[%s969 + $0x4a] sm:$0xff]
      %v1533 = vld [vmem:[%s969 + $0x52] sm:$0xff]
      %v1534 = vld [vmem:[%s969 + $0x62] sm:$0xff]
      %v1535 = vld [vmem:[%s969 + $0x6a] sm:$0xff]
      %v1536 = vld [vmem:[%s969 + $0x7a] sm:$0xff]
      %v1537 = vld [vmem:[%s969 + $0x82] sm:$0xff]
      %v1538 = vld [vmem:[%s969 + $0x92] sm:$0xff]
      %v1539 = vld [vmem:[%s969 + $0x9a] sm:$0xff]
      %v1540 = vld [vmem:[%s969 + $0xaa] sm:$0xff]
      %v1541 = vld [vmem:[%s969 + $0xb2] sm:$0xff]
      %v1542 = vld [vmem:[%s969 + $0xc2] sm:$0xff]
      %v1543 = vld [vmem:[%s969 + $0xca] sm:$0xff]
      %v1544 = vld [vmem:[%s969 + $0xda] sm:$0xff]
      %v1545 = vld [vmem:[%s969 + $0xe2] sm:$0xff]
      %v1546 = vld [vmem:[%s969 + $0xf2] sm:$0xff]
      %v1547 = vld [vmem:[%s969 + $0xfa] sm:$0xff]
      %v1548 = vld [vmem:[%s969 + $0x10a] sm:$0xff]
      %v1549 = vld [vmem:[%s969 + $0x112] sm:$0xff]
      %v1550 = vld [vmem:[%s969 + $0x122] sm:$0xff]
      %v1551 = vld [vmem:[%s969 + $0x12a] sm:$0xff]
      %v1552 = vld [vmem:[%s969 + $0x13a] sm:$0xff]
      %v1553 = vld [vmem:[%s969 + $0x142] sm:$0xff]
      %v1554 = vld [vmem:[%s969 + $0x152] sm:$0xff]
      %v1555 = vld [vmem:[%s969 + $0x15a] sm:$0xff]
      %v1556 = vld [vmem:[%s969 + $0x16a] sm:$0xff]
      %v1557 = vld [vmem:[%s969 + $0x172] sm:$0xff]
      %s1558 = scalar_lea.vmem %s1, 40
      %v1559 = vld [vmem:[%s1558] sm:$0xf]
      %v1561 = vsel %vm265, %v1526, 0
      %v1564 = vsel %vm265, %v1527, 0
      %v1567 = vsel %vm265, %v1528, 0
      %v1570 = vsel %vm265, %v1529, 0
      %v1573 = vsel %vm265, %v1530, 0
      %v1576 = vsel %vm265, %v1531, 0
      %v1579 = vsel %vm265, %v1532, 0
      %v1582 = vsel %vm265, %v1533, 0
      %v1585 = vsel %vm265, %v1534, 0
      %v1588 = vsel %vm265, %v1535, 0
      %v1591 = vsel %vm265, %v1536, 0
      %v1594 = vsel %vm265, %v1537, 0
      %v1597 = vsel %vm265, %v1538, 0
      %v1600 = vsel %vm265, %v1539, 0
      %v1603 = vsel %vm265, %v1540, 0
      %v1606 = vsel %vm265, %v1541, 0
      %v1609 = vsel %vm265, %v1542, 0
      %v1612 = vsel %vm265, %v1543, 0
      %v1615 = vsel %vm265, %v1544, 0
      %v1618 = vsel %vm265, %v1545, 0
      %v1621 = vsel %vm265, %v1546, 0
      %v1624 = vsel %vm265, %v1547, 0
      %v1627 = vsel %vm265, %v1548, 0
      %v1630 = vsel %vm265, %v1549, 0
      %v1633 = vsel %vm265, %v1550, 0
      %v1636 = vsel %vm265, %v1551, 0
      %v1639 = vsel %vm265, %v1552, 0
      %v1642 = vsel %vm265, %v1553, 0
      %v1645 = vsel %vm265, %v1554, 0
      %v1648 = vsel %vm265, %v1555, 0
      %v1651 = vsel %vm265, %v1556, 0
      %v1654 = vsel %vm265, %v1557, 0
      %v1657 = vsel %vm362, %v1559, 0
      %1659 = vmatpush.msra.mxu0 0.0
      %1660 = vmatpush.msra.mxu0 0.0
      %1661 = vmatpush.msra.mxu0 0.0
      %1662 = vmatpush.msra.mxu0 0.0
      %1663 = vmatpush.msra.mxu0 0.0
      %1664 = vmatpush.msra.mxu0 0.0
      %1665 = vmatpush.msra.mxu0 0.0
      %1666 = vmatpush.msra.mxu0 0.0
      %1667 = vmatpush.msra.mxu0 0.0
      %1668 = vmatpush.msra.mxu0 0.0
      %1669 = vmatpush.msra.mxu0 0.0
      %1670 = vmatpush.msra.mxu0 0.0
      %1671 = vmatpush.msra.mxu0 0.0
      %1672 = vmatpush.msra.mxu0 0.0
      %1673 = vmatpush.msra.mxu0 0.0
      %1674 = vmatpush.msra.mxu0 %v1657
      %1675 = vmatmul.f32.gmra.mxu0 %v1561
      %v1676 = vpop.f32.mrf.mxu0
      %v1677 = vadd.f32 0.0, %v1676
      %1678 = vmatmul.f32.gmra.mxu0 %v1564
      %v1679 = vpop.f32.mrf.mxu0
      %v1680 = vadd.f32 0.0, %v1679
      %1681 = vmatmul.f32.gmra.mxu0 %v1567
      %v1682 = vpop.f32.mrf.mxu0
      %v1683 = vadd.f32 0.0, %v1682
      %1684 = vmatmul.f32.gmra.mxu0 %v1570
      %v1685 = vpop.f32.mrf.mxu0
      %v1686 = vadd.f32 0.0, %v1685
      %1687 = vmatmul.f32.gmra.mxu0 %v1573
      %v1688 = vpop.f32.mrf.mxu0
      %v1689 = vadd.f32 0.0, %v1688
      %1690 = vmatmul.f32.gmra.mxu0 %v1576
      %v1691 = vpop.f32.mrf.mxu0
      %v1692 = vadd.f32 0.0, %v1691
      %1693 = vmatmul.f32.gmra.mxu0 %v1579
      %v1694 = vpop.f32.mrf.mxu0
      %v1695 = vadd.f32 0.0, %v1694
      %1696 = vmatmul.f32.gmra.mxu0 %v1582
      %v1697 = vpop.f32.mrf.mxu0
      %v1698 = vadd.f32 0.0, %v1697
      %1699 = vmatmul.f32.gmra.mxu0 %v1585
      %v1700 = vpop.f32.mrf.mxu0
      %v1701 = vadd.f32 0.0, %v1700
      %1702 = vmatmul.f32.gmra.mxu0 %v1588
      %v1703 = vpop.f32.mrf.mxu0
      %v1704 = vadd.f32 0.0, %v1703
      %1705 = vmatmul.f32.gmra.mxu0 %v1591
      %v1706 = vpop.f32.mrf.mxu0
      %v1707 = vadd.f32 0.0, %v1706
      %1708 = vmatmul.f32.gmra.mxu0 %v1594
      %v1709 = vpop.f32.mrf.mxu0
      %v1710 = vadd.f32 0.0, %v1709
      %1711 = vmatmul.f32.gmra.mxu0 %v1597
      %v1712 = vpop.f32.mrf.mxu0
      %v1713 = vadd.f32 0.0, %v1712
      %1714 = vmatmul.f32.gmra.mxu0 %v1600
      %v1715 = vpop.f32.mrf.mxu0
      %v1716 = vadd.f32 0.0, %v1715
      %1717 = vmatmul.f32.gmra.mxu0 %v1603
      %v1718 = vpop.f32.mrf.mxu0
      %v1719 = vadd.f32 0.0, %v1718
      %1720 = vmatmul.f32.gmra.mxu0 %v1606
      %v1721 = vpop.f32.mrf.mxu0
      %v1722 = vadd.f32 0.0, %v1721
      %1723 = vmatmul.f32.gmra.mxu0 %v1609
      %v1724 = vpop.f32.mrf.mxu0
      %v1725 = vadd.f32 0.0, %v1724
      %1726 = vmatmul.f32.gmra.mxu0 %v1612
      %v1727 = vpop.f32.mrf.mxu0
      %v1728 = vadd.f32 0.0, %v1727
      %1729 = vmatmul.f32.gmra.mxu0 %v1615
      %v1730 = vpop.f32.mrf.mxu0
      %v1731 = vadd.f32 0.0, %v1730
      %1732 = vmatmul.f32.gmra.mxu0 %v1618
      %v1733 = vpop.f32.mrf.mxu0
      %v1734 = vadd.f32 0.0, %v1733
      %1735 = vmatmul.f32.gmra.mxu0 %v1621
      %v1736 = vpop.f32.mrf.mxu0
      %v1737 = vadd.f32 0.0, %v1736
      %1738 = vmatmul.f32.gmra.mxu0 %v1624
      %v1739 = vpop.f32.mrf.mxu0
      %v1740 = vadd.f32 0.0, %v1739
      %1741 = vmatmul.f32.gmra.mxu0 %v1627
      %v1742 = vpop.f32.mrf.mxu0
      %v1743 = vadd.f32 0.0, %v1742
      %1744 = vmatmul.f32.gmra.mxu0 %v1630
      %v1745 = vpop.f32.mrf.mxu0
      %v1746 = vadd.f32 0.0, %v1745
      %1747 = vmatmul.f32.gmra.mxu0 %v1633
      %v1748 = vpop.f32.mrf.mxu0
      %v1749 = vadd.f32 0.0, %v1748
      %1750 = vmatmul.f32.gmra.mxu0 %v1636
      %v1751 = vpop.f32.mrf.mxu0
      %v1752 = vadd.f32 0.0, %v1751
      %1753 = vmatmul.f32.gmra.mxu0 %v1639
      %v1754 = vpop.f32.mrf.mxu0
      %v1755 = vadd.f32 0.0, %v1754
      %1756 = vmatmul.f32.gmra.mxu0 %v1642
      %v1757 = vpop.f32.mrf.mxu0
      %v1758 = vadd.f32 0.0, %v1757
      %1759 = vmatmul.f32.gmra.mxu0 %v1645
      %v1760 = vpop.f32.mrf.mxu0
      %v1761 = vadd.f32 0.0, %v1760
      %1762 = vmatmul.f32.gmra.mxu0 %v1648
      %v1763 = vpop.f32.mrf.mxu0
      %v1764 = vadd.f32 0.0, %v1763
      %1765 = vmatmul.f32.gmra.mxu0 %v1651
      %v1766 = vpop.f32.mrf.mxu0
      %v1767 = vadd.f32 0.0, %v1766
      %1768 = vmatmul.f32.gmra.mxu0 %v1654
      %v1769 = vpop.f32.mrf.mxu0
      %v1770 = vadd.f32 0.0, %v1769
      %1771 = vdwg.mxu0
      %v1772 = vadd.f32 %v1494, %v1677
      %v1773 = vadd.f32 %v1495, %v1680
      %v1774 = vadd.f32 %v1496, %v1683
      %v1775 = vadd.f32 %v1497, %v1686
      %v1776 = vadd.f32 %v1498, %v1689
      %v1777 = vadd.f32 %v1499, %v1692
      %v1778 = vadd.f32 %v1500, %v1695
      %v1779 = vadd.f32 %v1501, %v1698
      %v1780 = vadd.f32 %v1502, %v1701
      %v1781 = vadd.f32 %v1503, %v1704
      %v1782 = vadd.f32 %v1504, %v1707
      %v1783 = vadd.f32 %v1505, %v1710
      %v1784 = vadd.f32 %v1506, %v1713
      %v1785 = vadd.f32 %v1507, %v1716
      %v1786 = vadd.f32 %v1508, %v1719
      %v1787 = vadd.f32 %v1509, %v1722
      %v1788 = vadd.f32 %v1510, %v1725
      %v1789 = vadd.f32 %v1511, %v1728
      %v1790 = vadd.f32 %v1512, %v1731
      %v1791 = vadd.f32 %v1513, %v1734
      %v1792 = vadd.f32 %v1514, %v1737
      %v1793 = vadd.f32 %v1515, %v1740
      %v1794 = vadd.f32 %v1516, %v1743
      %v1795 = vadd.f32 %v1517, %v1746
      %v1796 = vadd.f32 %v1518, %v1749
      %v1797 = vadd.f32 %v1519, %v1752
      %v1798 = vadd.f32 %v1520, %v1755
      %v1799 = vadd.f32 %v1521, %v1758
      %v1800 = vadd.f32 %v1522, %v1761
      %v1801 = vadd.f32 %v1523, %v1764
      %v1802 = vadd.f32 %v1524, %v1767
      %v1803 = vadd.f32 %v1525, %v1770
      %s1804 = scalar_lea.vmem %s192, 48
      %v1805 = vld [vmem:[%s1804] sm:$0xff]
      %v1806 = vld [vmem:[%s1804 + $0x8] sm:$0xff]
      %v1807 = vld [vmem:[%s1804 + $0x18] sm:$0xff]
      %v1808 = vld [vmem:[%s1804 + $0x20] sm:$0xff]
      %v1809 = vld [vmem:[%s1804 + $0x30] sm:$0xff]
      %v1810 = vld [vmem:[%s1804 + $0x38] sm:$0xff]
      %v1811 = vld [vmem:[%s1804 + $0x48] sm:$0xff]
      %v1812 = vld [vmem:[%s1804 + $0x50] sm:$0xff]
      %v1813 = vld [vmem:[%s1804 + $0x60] sm:$0xff]
      %v1814 = vld [vmem:[%s1804 + $0x68] sm:$0xff]
      %v1815 = vld [vmem:[%s1804 + $0x78] sm:$0xff]
      %v1816 = vld [vmem:[%s1804 + $0x80] sm:$0xff]
      %v1817 = vld [vmem:[%s1804 + $0x90] sm:$0xff]
      %v1818 = vld [vmem:[%s1804 + $0x98] sm:$0xff]
      %v1819 = vld [vmem:[%s1804 + $0xa8] sm:$0xff]
      %v1820 = vld [vmem:[%s1804 + $0xb0] sm:$0xff]
      %v1821 = vld [vmem:[%s1804 + $0xc0] sm:$0xff]
      %v1822 = vld [vmem:[%s1804 + $0xc8] sm:$0xff]
      %v1823 = vld [vmem:[%s1804 + $0xd8] sm:$0xff]
      %v1824 = vld [vmem:[%s1804 + $0xe0] sm:$0xff]
      %v1825 = vld [vmem:[%s1804 + $0xf0] sm:$0xff]
      %v1826 = vld [vmem:[%s1804 + $0xf8] sm:$0xff]
      %v1827 = vld [vmem:[%s1804 + $0x108] sm:$0xff]
      %v1828 = vld [vmem:[%s1804 + $0x110] sm:$0xff]
      %v1829 = vld [vmem:[%s1804 + $0x120] sm:$0xff]
      %v1830 = vld [vmem:[%s1804 + $0x128] sm:$0xff]
      %v1831 = vld [vmem:[%s1804 + $0x138] sm:$0xff]
      %v1832 = vld [vmem:[%s1804 + $0x140] sm:$0xff]
      %v1833 = vld [vmem:[%s1804 + $0x150] sm:$0xff]
      %v1834 = vld [vmem:[%s1804 + $0x158] sm:$0xff]
      %v1835 = vld [vmem:[%s1804 + $0x168] sm:$0xff]
      %v1836 = vld [vmem:[%s1804 + $0x170] sm:$0xff]
      %s1837 = scalar_lea.vmem %s1, 48
      %v1838 = vld [vmem:[%s1837] sm:$0xf]
      %v1840 = vsel %vm265, %v1805, 0
      %v1843 = vsel %vm265, %v1806, 0
      %v1846 = vsel %vm265, %v1807, 0
      %v1849 = vsel %vm265, %v1808, 0
      %v1852 = vsel %vm265, %v1809, 0
      %v1855 = vsel %vm265, %v1810, 0
      %v1858 = vsel %vm265, %v1811, 0
      %v1861 = vsel %vm265, %v1812, 0
      %v1864 = vsel %vm265, %v1813, 0
      %v1867 = vsel %vm265, %v1814, 0
      %v1870 = vsel %vm265, %v1815, 0
      %v1873 = vsel %vm265, %v1816, 0
      %v1876 = vsel %vm265, %v1817, 0
      %v1879 = vsel %vm265, %v1818, 0
      %v1882 = vsel %vm265, %v1819, 0
      %v1885 = vsel %vm265, %v1820, 0
      %v1888 = vsel %vm265, %v1821, 0
      %v1891 = vsel %vm265, %v1822, 0
      %v1894 = vsel %vm265, %v1823, 0
      %v1897 = vsel %vm265, %v1824, 0
      %v1900 = vsel %vm265, %v1825, 0
      %v1903 = vsel %vm265, %v1826, 0
      %v1906 = vsel %vm265, %v1827, 0
      %v1909 = vsel %vm265, %v1828, 0
      %v1912 = vsel %vm265, %v1829, 0
      %v1915 = vsel %vm265, %v1830, 0
      %v1918 = vsel %vm265, %v1831, 0
      %v1921 = vsel %vm265, %v1832, 0
      %v1924 = vsel %vm265, %v1833, 0
      %v1927 = vsel %vm265, %v1834, 0
      %v1930 = vsel %vm265, %v1835, 0
      %v1933 = vsel %vm265, %v1836, 0
      %v1936 = vsel %vm362, %v1838, 0
      %1938 = vmatpush.msra.mxu0 0.0
      %1939 = vmatpush.msra.mxu0 0.0
      %1940 = vmatpush.msra.mxu0 0.0
      %1941 = vmatpush.msra.mxu0 0.0
      %1942 = vmatpush.msra.mxu0 0.0
      %1943 = vmatpush.msra.mxu0 0.0
      %1944 = vmatpush.msra.mxu0 0.0
      %1945 = vmatpush.msra.mxu0 0.0
      %1946 = vmatpush.msra.mxu0 0.0
      %1947 = vmatpush.msra.mxu0 0.0
      %1948 = vmatpush.msra.mxu0 0.0
      %1949 = vmatpush.msra.mxu0 0.0
      %1950 = vmatpush.msra.mxu0 0.0
      %1951 = vmatpush.msra.mxu0 0.0
      %1952 = vmatpush.msra.mxu0 0.0
      %1953 = vmatpush.msra.mxu0 %v1936
      %1954 = vmatmul.f32.gmra.mxu0 %v1840
      %v1955 = vpop.f32.mrf.mxu0
      %v1956 = vadd.f32 0.0, %v1955
      %1957 = vmatmul.f32.gmra.mxu0 %v1843
      %v1958 = vpop.f32.mrf.mxu0
      %v1959 = vadd.f32 0.0, %v1958
      %1960 = vmatmul.f32.gmra.mxu0 %v1846
      %v1961 = vpop.f32.mrf.mxu0
      %v1962 = vadd.f32 0.0, %v1961
      %1963 = vmatmul.f32.gmra.mxu0 %v1849
      %v1964 = vpop.f32.mrf.mxu0
      %v1965 = vadd.f32 0.0, %v1964
      %1966 = vmatmul.f32.gmra.mxu0 %v1852
      %v1967 = vpop.f32.mrf.mxu0
      %v1968 = vadd.f32 0.0, %v1967
      %1969 = vmatmul.f32.gmra.mxu0 %v1855
      %v1970 = vpop.f32.mrf.mxu0
      %v1971 = vadd.f32 0.0, %v1970
      %1972 = vmatmul.f32.gmra.mxu0 %v1858
      %v1973 = vpop.f32.mrf.mxu0
      %v1974 = vadd.f32 0.0, %v1973
      %1975 = vmatmul.f32.gmra.mxu0 %v1861
      %v1976 = vpop.f32.mrf.mxu0
      %v1977 = vadd.f32 0.0, %v1976
      %1978 = vmatmul.f32.gmra.mxu0 %v1864
      %v1979 = vpop.f32.mrf.mxu0
      %v1980 = vadd.f32 0.0, %v1979
      %1981 = vmatmul.f32.gmra.mxu0 %v1867
      %v1982 = vpop.f32.mrf.mxu0
      %v1983 = vadd.f32 0.0, %v1982
      %1984 = vmatmul.f32.gmra.mxu0 %v1870
      %v1985 = vpop.f32.mrf.mxu0
      %v1986 = vadd.f32 0.0, %v1985
      %1987 = vmatmul.f32.gmra.mxu0 %v1873
      %v1988 = vpop.f32.mrf.mxu0
      %v1989 = vadd.f32 0.0, %v1988
      %1990 = vmatmul.f32.gmra.mxu0 %v1876
      %v1991 = vpop.f32.mrf.mxu0
      %v1992 = vadd.f32 0.0, %v1991
      %1993 = vmatmul.f32.gmra.mxu0 %v1879
      %v1994 = vpop.f32.mrf.mxu0
      %v1995 = vadd.f32 0.0, %v1994
      %1996 = vmatmul.f32.gmra.mxu0 %v1882
      %v1997 = vpop.f32.mrf.mxu0
      %v1998 = vadd.f32 0.0, %v1997
      %1999 = vmatmul.f32.gmra.mxu0 %v1885
      %v2000 = vpop.f32.mrf.mxu0
      %v2001 = vadd.f32 0.0, %v2000
      %2002 = vmatmul.f32.gmra.mxu0 %v1888
      %v2003 = vpop.f32.mrf.mxu0
      %v2004 = vadd.f32 0.0, %v2003
      %2005 = vmatmul.f32.gmra.mxu0 %v1891
      %v2006 = vpop.f32.mrf.mxu0
      %v2007 = vadd.f32 0.0, %v2006
      %2008 = vmatmul.f32.gmra.mxu0 %v1894
      %v2009 = vpop.f32.mrf.mxu0
      %v2010 = vadd.f32 0.0, %v2009
      %2011 = vmatmul.f32.gmra.mxu0 %v1897
      %v2012 = vpop.f32.mrf.mxu0
      %v2013 = vadd.f32 0.0, %v2012
      %2014 = vmatmul.f32.gmra.mxu0 %v1900
      %v2015 = vpop.f32.mrf.mxu0
      %v2016 = vadd.f32 0.0, %v2015
      %2017 = vmatmul.f32.gmra.mxu0 %v1903
      %v2018 = vpop.f32.mrf.mxu0
      %v2019 = vadd.f32 0.0, %v2018
      %2020 = vmatmul.f32.gmra.mxu0 %v1906
      %v2021 = vpop.f32.mrf.mxu0
      %v2022 = vadd.f32 0.0, %v2021
      %2023 = vmatmul.f32.gmra.mxu0 %v1909
      %v2024 = vpop.f32.mrf.mxu0
      %v2025 = vadd.f32 0.0, %v2024
      %2026 = vmatmul.f32.gmra.mxu0 %v1912
      %v2027 = vpop.f32.mrf.mxu0
      %v2028 = vadd.f32 0.0, %v2027
      %2029 = vmatmul.f32.gmra.mxu0 %v1915
      %v2030 = vpop.f32.mrf.mxu0
      %v2031 = vadd.f32 0.0, %v2030
      %2032 = vmatmul.f32.gmra.mxu0 %v1918
      %v2033 = vpop.f32.mrf.mxu0
      %v2034 = vadd.f32 0.0, %v2033
      %2035 = vmatmul.f32.gmra.mxu0 %v1921
      %v2036 = vpop.f32.mrf.mxu0
      %v2037 = vadd.f32 0.0, %v2036
      %2038 = vmatmul.f32.gmra.mxu0 %v1924
      %v2039 = vpop.f32.mrf.mxu0
      %v2040 = vadd.f32 0.0, %v2039
      %2041 = vmatmul.f32.gmra.mxu0 %v1927
      %v2042 = vpop.f32.mrf.mxu0
      %v2043 = vadd.f32 0.0, %v2042
      %2044 = vmatmul.f32.gmra.mxu0 %v1930
      %v2045 = vpop.f32.mrf.mxu0
      %v2046 = vadd.f32 0.0, %v2045
      %2047 = vmatmul.f32.gmra.mxu0 %v1933
      %v2048 = vpop.f32.mrf.mxu0
      %v2049 = vadd.f32 0.0, %v2048
      %2050 = vdwg.mxu0
      %v2051 = vadd.f32 %v1772, %v1956
      %v2052 = vadd.f32 %v1773, %v1959
      %v2053 = vadd.f32 %v1774, %v1962
      %v2054 = vadd.f32 %v1775, %v1965
      %v2055 = vadd.f32 %v1776, %v1968
      %v2056 = vadd.f32 %v1777, %v1971
      %v2057 = vadd.f32 %v1778, %v1974
      %v2058 = vadd.f32 %v1779, %v1977
      %v2059 = vadd.f32 %v1780, %v1980
      %v2060 = vadd.f32 %v1781, %v1983
      %v2061 = vadd.f32 %v1782, %v1986
      %v2062 = vadd.f32 %v1783, %v1989
      %v2063 = vadd.f32 %v1784, %v1992
      %v2064 = vadd.f32 %v1785, %v1995
      %v2065 = vadd.f32 %v1786, %v1998
      %v2066 = vadd.f32 %v1787, %v2001
      %v2067 = vadd.f32 %v1788, %v2004
      %v2068 = vadd.f32 %v1789, %v2007
      %v2069 = vadd.f32 %v1790, %v2010
      %v2070 = vadd.f32 %v1791, %v2013
      %v2071 = vadd.f32 %v1792, %v2016
      %v2072 = vadd.f32 %v1793, %v2019
      %v2073 = vadd.f32 %v1794, %v2022
      %v2074 = vadd.f32 %v1795, %v2025
      %v2075 = vadd.f32 %v1796, %v2028
      %v2076 = vadd.f32 %v1797, %v2031
      %v2077 = vadd.f32 %v1798, %v2034
      %v2078 = vadd.f32 %v1799, %v2037
      %v2079 = vadd.f32 %v1800, %v2040
      %v2080 = vadd.f32 %v1801, %v2043
      %v2081 = vadd.f32 %v1802, %v2046
      %v2082 = vadd.f32 %v1803, %v2049
      %v2083 = vld [vmem:[%s1804 + $0x1] sm:$0xff]
      %v2084 = vld [vmem:[%s1804 + $0x9] sm:$0xff]
      %v2085 = vld [vmem:[%s1804 + $0x19] sm:$0xff]
      %v2086 = vld [vmem:[%s1804 + $0x21] sm:$0xff]
      %v2087 = vld [vmem:[%s1804 + $0x31] sm:$0xff]
      %v2088 = vld [vmem:[%s1804 + $0x39] sm:$0xff]
      %v2089 = vld [vmem:[%s1804 + $0x49] sm:$0xff]
      %v2090 = vld [vmem:[%s1804 + $0x51] sm:$0xff]
      %v2091 = vld [vmem:[%s1804 + $0x61] sm:$0xff]
      %v2092 = vld [vmem:[%s1804 + $0x69] sm:$0xff]
      %v2093 = vld [vmem:[%s1804 + $0x79] sm:$0xff]
      %v2094 = vld [vmem:[%s1804 + $0x81] sm:$0xff]
      %v2095 = vld [vmem:[%s1804 + $0x91] sm:$0xff]
      %v2096 = vld [vmem:[%s1804 + $0x99] sm:$0xff]
      %v2097 = vld [vmem:[%s1804 + $0xa9] sm:$0xff]
      %v2098 = vld [vmem:[%s1804 + $0xb1] sm:$0xff]
      %v2099 = vld [vmem:[%s1804 + $0xc1] sm:$0xff]
      %v2100 = vld [vmem:[%s1804 + $0xc9] sm:$0xff]
      %v2101 = vld [vmem:[%s1804 + $0xd9] sm:$0xff]
      %v2102 = vld [vmem:[%s1804 + $0xe1] sm:$0xff]
      %v2103 = vld [vmem:[%s1804 + $0xf1] sm:$0xff]
      %v2104 = vld [vmem:[%s1804 + $0xf9] sm:$0xff]
      %v2105 = vld [vmem:[%s1804 + $0x109] sm:$0xff]
      %v2106 = vld [vmem:[%s1804 + $0x111] sm:$0xff]
      %v2107 = vld [vmem:[%s1804 + $0x121] sm:$0xff]
      %v2108 = vld [vmem:[%s1804 + $0x129] sm:$0xff]
      %v2109 = vld [vmem:[%s1804 + $0x139] sm:$0xff]
      %v2110 = vld [vmem:[%s1804 + $0x141] sm:$0xff]
      %v2111 = vld [vmem:[%s1804 + $0x151] sm:$0xff]
      %v2112 = vld [vmem:[%s1804 + $0x159] sm:$0xff]
      %v2113 = vld [vmem:[%s1804 + $0x169] sm:$0xff]
      %v2114 = vld [vmem:[%s1804 + $0x171] sm:$0xff]
      %s2115 = scalar_lea.vmem %s1, 56
      %v2116 = vld [vmem:[%s2115] sm:$0xf]
      %v2118 = vsel %vm265, %v2083, 0
      %v2121 = vsel %vm265, %v2084, 0
      %v2124 = vsel %vm265, %v2085, 0
      %v2127 = vsel %vm265, %v2086, 0
      %v2130 = vsel %vm265, %v2087, 0
      %v2133 = vsel %vm265, %v2088, 0
      %v2136 = vsel %vm265, %v2089, 0
      %v2139 = vsel %vm265, %v2090, 0
      %v2142 = vsel %vm265, %v2091, 0
      %v2145 = vsel %vm265, %v2092, 0
      %v2148 = vsel %vm265, %v2093, 0
      %v2151 = vsel %vm265, %v2094, 0
      %v2154 = vsel %vm265, %v2095, 0
      %v2157 = vsel %vm265, %v2096, 0
      %v2160 = vsel %vm265, %v2097, 0
      %v2163 = vsel %vm265, %v2098, 0
      %v2166 = vsel %vm265, %v2099, 0
      %v2169 = vsel %vm265, %v2100, 0
      %v2172 = vsel %vm265, %v2101, 0
      %v2175 = vsel %vm265, %v2102, 0
      %v2178 = vsel %vm265, %v2103, 0
      %v2181 = vsel %vm265, %v2104, 0
      %v2184 = vsel %vm265, %v2105, 0
      %v2187 = vsel %vm265, %v2106, 0
      %v2190 = vsel %vm265, %v2107, 0
      %v2193 = vsel %vm265, %v2108, 0
      %v2196 = vsel %vm265, %v2109, 0
      %v2199 = vsel %vm265, %v2110, 0
      %v2202 = vsel %vm265, %v2111, 0
      %v2205 = vsel %vm265, %v2112, 0
      %v2208 = vsel %vm265, %v2113, 0
      %v2211 = vsel %vm265, %v2114, 0
      %v2214 = vsel %vm362, %v2116, 0
      %2216 = vmatpush.msra.mxu0 0.0
      %2217 = vmatpush.msra.mxu0 0.0
      %2218 = vmatpush.msra.mxu0 0.0
      %2219 = vmatpush.msra.mxu0 0.0
      %2220 = vmatpush.msra.mxu0 0.0
      %2221 = vmatpush.msra.mxu0 0.0
      %2222 = vmatpush.msra.mxu0 0.0
      %2223 = vmatpush.msra.mxu0 0.0
      %2224 = vmatpush.msra.mxu0 0.0
      %2225 = vmatpush.msra.mxu0 0.0
      %2226 = vmatpush.msra.mxu0 0.0
      %2227 = vmatpush.msra.mxu0 0.0
      %2228 = vmatpush.msra.mxu0 0.0
      %2229 = vmatpush.msra.mxu0 0.0
      %2230 = vmatpush.msra.mxu0 0.0
      %2231 = vmatpush.msra.mxu0 %v2214
      %2232 = vmatmul.f32.gmra.mxu0 %v2118
      %v2233 = vpop.f32.mrf.mxu0
      %v2234 = vadd.f32 0.0, %v2233
      %2235 = vmatmul.f32.gmra.mxu0 %v2121
      %v2236 = vpop.f32.mrf.mxu0
      %v2237 = vadd.f32 0.0, %v2236
      %2238 = vmatmul.f32.gmra.mxu0 %v2124
      %v2239 = vpop.f32.mrf.mxu0
      %v2240 = vadd.f32 0.0, %v2239
      %2241 = vmatmul.f32.gmra.mxu0 %v2127
      %v2242 = vpop.f32.mrf.mxu0
      %v2243 = vadd.f32 0.0, %v2242
      %2244 = vmatmul.f32.gmra.mxu0 %v2130
      %v2245 = vpop.f32.mrf.mxu0
      %v2246 = vadd.f32 0.0, %v2245
      %2247 = vmatmul.f32.gmra.mxu0 %v2133
      %v2248 = vpop.f32.mrf.mxu0
      %v2249 = vadd.f32 0.0, %v2248
      %2250 = vmatmul.f32.gmra.mxu0 %v2136
      %v2251 = vpop.f32.mrf.mxu0
      %v2252 = vadd.f32 0.0, %v2251
      %2253 = vmatmul.f32.gmra.mxu0 %v2139
      %v2254 = vpop.f32.mrf.mxu0
      %v2255 = vadd.f32 0.0, %v2254
      %2256 = vmatmul.f32.gmra.mxu0 %v2142
      %v2257 = vpop.f32.mrf.mxu0
      %v2258 = vadd.f32 0.0, %v2257
      %2259 = vmatmul.f32.gmra.mxu0 %v2145
      %v2260 = vpop.f32.mrf.mxu0
      %v2261 = vadd.f32 0.0, %v2260
      %2262 = vmatmul.f32.gmra.mxu0 %v2148
      %v2263 = vpop.f32.mrf.mxu0
      %v2264 = vadd.f32 0.0, %v2263
      %2265 = vmatmul.f32.gmra.mxu0 %v2151
      %v2266 = vpop.f32.mrf.mxu0
      %v2267 = vadd.f32 0.0, %v2266
      %2268 = vmatmul.f32.gmra.mxu0 %v2154
      %v2269 = vpop.f32.mrf.mxu0
      %v2270 = vadd.f32 0.0, %v2269
      %2271 = vmatmul.f32.gmra.mxu0 %v2157
      %v2272 = vpop.f32.mrf.mxu0
      %v2273 = vadd.f32 0.0, %v2272
      %2274 = vmatmul.f32.gmra.mxu0 %v2160
      %v2275 = vpop.f32.mrf.mxu0
      %v2276 = vadd.f32 0.0, %v2275
      %2277 = vmatmul.f32.gmra.mxu0 %v2163
      %v2278 = vpop.f32.mrf.mxu0
      %v2279 = vadd.f32 0.0, %v2278
      %2280 = vmatmul.f32.gmra.mxu0 %v2166
      %v2281 = vpop.f32.mrf.mxu0
      %v2282 = vadd.f32 0.0, %v2281
      %2283 = vmatmul.f32.gmra.mxu0 %v2169
      %v2284 = vpop.f32.mrf.mxu0
      %v2285 = vadd.f32 0.0, %v2284
      %2286 = vmatmul.f32.gmra.mxu0 %v2172
      %v2287 = vpop.f32.mrf.mxu0
      %v2288 = vadd.f32 0.0, %v2287
      %2289 = vmatmul.f32.gmra.mxu0 %v2175
      %v2290 = vpop.f32.mrf.mxu0
      %v2291 = vadd.f32 0.0, %v2290
      %2292 = vmatmul.f32.gmra.mxu0 %v2178
      %v2293 = vpop.f32.mrf.mxu0
      %v2294 = vadd.f32 0.0, %v2293
      %2295 = vmatmul.f32.gmra.mxu0 %v2181
      %v2296 = vpop.f32.mrf.mxu0
      %v2297 = vadd.f32 0.0, %v2296
      %2298 = vmatmul.f32.gmra.mxu0 %v2184
      %v2299 = vpop.f32.mrf.mxu0
      %v2300 = vadd.f32 0.0, %v2299
      %2301 = vmatmul.f32.gmra.mxu0 %v2187
      %v2302 = vpop.f32.mrf.mxu0
      %v2303 = vadd.f32 0.0, %v2302
      %2304 = vmatmul.f32.gmra.mxu0 %v2190
      %v2305 = vpop.f32.mrf.mxu0
      %v2306 = vadd.f32 0.0, %v2305
      %2307 = vmatmul.f32.gmra.mxu0 %v2193
      %v2308 = vpop.f32.mrf.mxu0
      %v2309 = vadd.f32 0.0, %v2308
      %2310 = vmatmul.f32.gmra.mxu0 %v2196
      %v2311 = vpop.f32.mrf.mxu0
      %v2312 = vadd.f32 0.0, %v2311
      %2313 = vmatmul.f32.gmra.mxu0 %v2199
      %v2314 = vpop.f32.mrf.mxu0
      %v2315 = vadd.f32 0.0, %v2314
      %2316 = vmatmul.f32.gmra.mxu0 %v2202
      %v2317 = vpop.f32.mrf.mxu0
      %v2318 = vadd.f32 0.0, %v2317
      %2319 = vmatmul.f32.gmra.mxu0 %v2205
      %v2320 = vpop.f32.mrf.mxu0
      %v2321 = vadd.f32 0.0, %v2320
      %2322 = vmatmul.f32.gmra.mxu0 %v2208
      %v2323 = vpop.f32.mrf.mxu0
      %v2324 = vadd.f32 0.0, %v2323
      %2325 = vmatmul.f32.gmra.mxu0 %v2211
      %v2326 = vpop.f32.mrf.mxu0
      %v2327 = vadd.f32 0.0, %v2326
      %2328 = vdwg.mxu0
      %v2329 = vadd.f32 %v2051, %v2234
      %v2330 = vadd.f32 %v2052, %v2237
      %v2331 = vadd.f32 %v2053, %v2240
      %v2332 = vadd.f32 %v2054, %v2243
      %v2333 = vadd.f32 %v2055, %v2246
      %v2334 = vadd.f32 %v2056, %v2249
      %v2335 = vadd.f32 %v2057, %v2252
      %v2336 = vadd.f32 %v2058, %v2255
      %v2337 = vadd.f32 %v2059, %v2258
      %v2338 = vadd.f32 %v2060, %v2261
      %v2339 = vadd.f32 %v2061, %v2264
      %v2340 = vadd.f32 %v2062, %v2267
      %v2341 = vadd.f32 %v2063, %v2270
      %v2342 = vadd.f32 %v2064, %v2273
      %v2343 = vadd.f32 %v2065, %v2276
      %v2344 = vadd.f32 %v2066, %v2279
      %v2345 = vadd.f32 %v2067, %v2282
      %v2346 = vadd.f32 %v2068, %v2285
      %v2347 = vadd.f32 %v2069, %v2288
      %v2348 = vadd.f32 %v2070, %v2291
      %v2349 = vadd.f32 %v2071, %v2294
      %v2350 = vadd.f32 %v2072, %v2297
      %v2351 = vadd.f32 %v2073, %v2300
      %v2352 = vadd.f32 %v2074, %v2303
      %v2353 = vadd.f32 %v2075, %v2306
      %v2354 = vadd.f32 %v2076, %v2309
      %v2355 = vadd.f32 %v2077, %v2312
      %v2356 = vadd.f32 %v2078, %v2315
      %v2357 = vadd.f32 %v2079, %v2318
      %v2358 = vadd.f32 %v2080, %v2321
      %v2359 = vadd.f32 %v2081, %v2324
      %v2360 = vadd.f32 %v2082, %v2327
      %v2361 = vld [vmem:[%s1804 + $0x2] sm:$0xff]
      %v2362 = vld [vmem:[%s1804 + $0xa] sm:$0xff]
      %v2363 = vld [vmem:[%s1804 + $0x1a] sm:$0xff]
      %v2364 = vld [vmem:[%s1804 + $0x22] sm:$0xff]
      %v2365 = vld [vmem:[%s1804 + $0x32] sm:$0xff]
      %v2366 = vld [vmem:[%s1804 + $0x3a] sm:$0xff]
      %v2367 = vld [vmem:[%s1804 + $0x4a] sm:$0xff]
      %v2368 = vld [vmem:[%s1804 + $0x52] sm:$0xff]
      %v2369 = vld [vmem:[%s1804 + $0x62] sm:$0xff]
      %v2370 = vld [vmem:[%s1804 + $0x6a] sm:$0xff]
      %v2371 = vld [vmem:[%s1804 + $0x7a] sm:$0xff]
      %v2372 = vld [vmem:[%s1804 + $0x82] sm:$0xff]
      %v2373 = vld [vmem:[%s1804 + $0x92] sm:$0xff]
      %v2374 = vld [vmem:[%s1804 + $0x9a] sm:$0xff]
      %v2375 = vld [vmem:[%s1804 + $0xaa] sm:$0xff]
      %v2376 = vld [vmem:[%s1804 + $0xb2] sm:$0xff]
      %v2377 = vld [vmem:[%s1804 + $0xc2] sm:$0xff]
      %v2378 = vld [vmem:[%s1804 + $0xca] sm:$0xff]
      %v2379 = vld [vmem:[%s1804 + $0xda] sm:$0xff]
      %v2380 = vld [vmem:[%s1804 + $0xe2] sm:$0xff]
      %v2381 = vld [vmem:[%s1804 + $0xf2] sm:$0xff]
      %v2382 = vld [vmem:[%s1804 + $0xfa] sm:$0xff]
      %v2383 = vld [vmem:[%s1804 + $0x10a] sm:$0xff]
      %v2384 = vld [vmem:[%s1804 + $0x112] sm:$0xff]
      %v2385 = vld [vmem:[%s1804 + $0x122] sm:$0xff]
      %v2386 = vld [vmem:[%s1804 + $0x12a] sm:$0xff]
      %v2387 = vld [vmem:[%s1804 + $0x13a] sm:$0xff]
      %v2388 = vld [vmem:[%s1804 + $0x142] sm:$0xff]
      %v2389 = vld [vmem:[%s1804 + $0x152] sm:$0xff]
      %v2390 = vld [vmem:[%s1804 + $0x15a] sm:$0xff]
      %v2391 = vld [vmem:[%s1804 + $0x16a] sm:$0xff]
      %v2392 = vld [vmem:[%s1804 + $0x172] sm:$0xff]
      %s2393 = scalar_lea.vmem %s1, 64
      %v2394 = vld [vmem:[%s2393] sm:$0xf]
      %v2396 = vsel %vm265, %v2361, 0
      %v2399 = vsel %vm265, %v2362, 0
      %v2402 = vsel %vm265, %v2363, 0
      %v2405 = vsel %vm265, %v2364, 0
      %v2408 = vsel %vm265, %v2365, 0
      %v2411 = vsel %vm265, %v2366, 0
      %v2414 = vsel %vm265, %v2367, 0
      %v2417 = vsel %vm265, %v2368, 0
      %v2420 = vsel %vm265, %v2369, 0
      %v2423 = vsel %vm265, %v2370, 0
      %v2426 = vsel %vm265, %v2371, 0
      %v2429 = vsel %vm265, %v2372, 0
      %v2432 = vsel %vm265, %v2373, 0
      %v2435 = vsel %vm265, %v2374, 0
      %v2438 = vsel %vm265, %v2375, 0
      %v2441 = vsel %vm265, %v2376, 0
      %v2444 = vsel %vm265, %v2377, 0
      %v2447 = vsel %vm265, %v2378, 0
      %v2450 = vsel %vm265, %v2379, 0
      %v2453 = vsel %vm265, %v2380, 0
      %v2456 = vsel %vm265, %v2381, 0
      %v2459 = vsel %vm265, %v2382, 0
      %v2462 = vsel %vm265, %v2383, 0
      %v2465 = vsel %vm265, %v2384, 0
      %v2468 = vsel %vm265, %v2385, 0
      %v2471 = vsel %vm265, %v2386, 0
      %v2474 = vsel %vm265, %v2387, 0
      %v2477 = vsel %vm265, %v2388, 0
      %v2480 = vsel %vm265, %v2389, 0
      %v2483 = vsel %vm265, %v2390, 0
      %v2486 = vsel %vm265, %v2391, 0
      %v2489 = vsel %vm265, %v2392, 0
      %v2492 = vsel %vm362, %v2394, 0
      %2494 = vmatpush.msra.mxu0 0.0
      %2495 = vmatpush.msra.mxu0 0.0
      %2496 = vmatpush.msra.mxu0 0.0
      %2497 = vmatpush.msra.mxu0 0.0
      %2498 = vmatpush.msra.mxu0 0.0
      %2499 = vmatpush.msra.mxu0 0.0
      %2500 = vmatpush.msra.mxu0 0.0
      %2501 = vmatpush.msra.mxu0 0.0
      %2502 = vmatpush.msra.mxu0 0.0
      %2503 = vmatpush.msra.mxu0 0.0
      %2504 = vmatpush.msra.mxu0 0.0
      %2505 = vmatpush.msra.mxu0 0.0
      %2506 = vmatpush.msra.mxu0 0.0
      %2507 = vmatpush.msra.mxu0 0.0
      %2508 = vmatpush.msra.mxu0 0.0
      %2509 = vmatpush.msra.mxu0 %v2492
      %2510 = vmatmul.f32.gmra.mxu0 %v2396
      %v2511 = vpop.f32.mrf.mxu0
      %v2512 = vadd.f32 0.0, %v2511
      %2513 = vmatmul.f32.gmra.mxu0 %v2399
      %v2514 = vpop.f32.mrf.mxu0
      %v2515 = vadd.f32 0.0, %v2514
      %2516 = vmatmul.f32.gmra.mxu0 %v2402
      %v2517 = vpop.f32.mrf.mxu0
      %v2518 = vadd.f32 0.0, %v2517
      %2519 = vmatmul.f32.gmra.mxu0 %v2405
      %v2520 = vpop.f32.mrf.mxu0
      %v2521 = vadd.f32 0.0, %v2520
      %2522 = vmatmul.f32.gmra.mxu0 %v2408
      %v2523 = vpop.f32.mrf.mxu0
      %v2524 = vadd.f32 0.0, %v2523
      %2525 = vmatmul.f32.gmra.mxu0 %v2411
      %v2526 = vpop.f32.mrf.mxu0
      %v2527 = vadd.f32 0.0, %v2526
      %2528 = vmatmul.f32.gmra.mxu0 %v2414
      %v2529 = vpop.f32.mrf.mxu0
      %v2530 = vadd.f32 0.0, %v2529
      %2531 = vmatmul.f32.gmra.mxu0 %v2417
      %v2532 = vpop.f32.mrf.mxu0
      %v2533 = vadd.f32 0.0, %v2532
      %2534 = vmatmul.f32.gmra.mxu0 %v2420
      %v2535 = vpop.f32.mrf.mxu0
      %v2536 = vadd.f32 0.0, %v2535
      %2537 = vmatmul.f32.gmra.mxu0 %v2423
      %v2538 = vpop.f32.mrf.mxu0
      %v2539 = vadd.f32 0.0, %v2538
      %2540 = vmatmul.f32.gmra.mxu0 %v2426
      %v2541 = vpop.f32.mrf.mxu0
      %v2542 = vadd.f32 0.0, %v2541
      %2543 = vmatmul.f32.gmra.mxu0 %v2429
      %v2544 = vpop.f32.mrf.mxu0
      %v2545 = vadd.f32 0.0, %v2544
      %2546 = vmatmul.f32.gmra.mxu0 %v2432
      %v2547 = vpop.f32.mrf.mxu0
      %v2548 = vadd.f32 0.0, %v2547
      %2549 = vmatmul.f32.gmra.mxu0 %v2435
      %v2550 = vpop.f32.mrf.mxu0
      %v2551 = vadd.f32 0.0, %v2550
      %2552 = vmatmul.f32.gmra.mxu0 %v2438
      %v2553 = vpop.f32.mrf.mxu0
      %v2554 = vadd.f32 0.0, %v2553
      %2555 = vmatmul.f32.gmra.mxu0 %v2441
      %v2556 = vpop.f32.mrf.mxu0
      %v2557 = vadd.f32 0.0, %v2556
      %2558 = vmatmul.f32.gmra.mxu0 %v2444
      %v2559 = vpop.f32.mrf.mxu0
      %v2560 = vadd.f32 0.0, %v2559
      %2561 = vmatmul.f32.gmra.mxu0 %v2447
      %v2562 = vpop.f32.mrf.mxu0
      %v2563 = vadd.f32 0.0, %v2562
      %2564 = vmatmul.f32.gmra.mxu0 %v2450
      %v2565 = vpop.f32.mrf.mxu0
      %v2566 = vadd.f32 0.0, %v2565
      %2567 = vmatmul.f32.gmra.mxu0 %v2453
      %v2568 = vpop.f32.mrf.mxu0
      %v2569 = vadd.f32 0.0, %v2568
      %2570 = vmatmul.f32.gmra.mxu0 %v2456
      %v2571 = vpop.f32.mrf.mxu0
      %v2572 = vadd.f32 0.0, %v2571
      %2573 = vmatmul.f32.gmra.mxu0 %v2459
      %v2574 = vpop.f32.mrf.mxu0
      %v2575 = vadd.f32 0.0, %v2574
      %2576 = vmatmul.f32.gmra.mxu0 %v2462
      %v2577 = vpop.f32.mrf.mxu0
      %v2578 = vadd.f32 0.0, %v2577
      %2579 = vmatmul.f32.gmra.mxu0 %v2465
      %v2580 = vpop.f32.mrf.mxu0
      %v2581 = vadd.f32 0.0, %v2580
      %2582 = vmatmul.f32.gmra.mxu0 %v2468
      %v2583 = vpop.f32.mrf.mxu0
      %v2584 = vadd.f32 0.0, %v2583
      %2585 = vmatmul.f32.gmra.mxu0 %v2471
      %v2586 = vpop.f32.mrf.mxu0
      %v2587 = vadd.f32 0.0, %v2586
      %2588 = vmatmul.f32.gmra.mxu0 %v2474
      %v2589 = vpop.f32.mrf.mxu0
      %v2590 = vadd.f32 0.0, %v2589
      %2591 = vmatmul.f32.gmra.mxu0 %v2477
      %v2592 = vpop.f32.mrf.mxu0
      %v2593 = vadd.f32 0.0, %v2592
      %2594 = vmatmul.f32.gmra.mxu0 %v2480
      %v2595 = vpop.f32.mrf.mxu0
      %v2596 = vadd.f32 0.0, %v2595
      %2597 = vmatmul.f32.gmra.mxu0 %v2483
      %v2598 = vpop.f32.mrf.mxu0
      %v2599 = vadd.f32 0.0, %v2598
      %2600 = vmatmul.f32.gmra.mxu0 %v2486
      %v2601 = vpop.f32.mrf.mxu0
      %v2602 = vadd.f32 0.0, %v2601
      %2603 = vmatmul.f32.gmra.mxu0 %v2489
      %v2604 = vpop.f32.mrf.mxu0
      %v2605 = vadd.f32 0.0, %v2604
      %2606 = vdwg.mxu0
      %v2607 = vadd.f32 %v2329, %v2512
      %v2608 = vadd.f32 %v2330, %v2515
      %v2609 = vadd.f32 %v2331, %v2518
      %v2610 = vadd.f32 %v2332, %v2521
      %v2611 = vadd.f32 %v2333, %v2524
      %v2612 = vadd.f32 %v2334, %v2527
      %v2613 = vadd.f32 %v2335, %v2530
      %v2614 = vadd.f32 %v2336, %v2533
      %v2615 = vadd.f32 %v2337, %v2536
      %v2616 = vadd.f32 %v2338, %v2539
      %v2617 = vadd.f32 %v2339, %v2542
      %v2618 = vadd.f32 %v2340, %v2545
      %v2619 = vadd.f32 %v2341, %v2548
      %v2620 = vadd.f32 %v2342, %v2551
      %v2621 = vadd.f32 %v2343, %v2554
      %v2622 = vadd.f32 %v2344, %v2557
      %v2623 = vadd.f32 %v2345, %v2560
      %v2624 = vadd.f32 %v2346, %v2563
      %v2625 = vadd.f32 %v2347, %v2566
      %v2626 = vadd.f32 %v2348, %v2569
      %v2627 = vadd.f32 %v2349, %v2572
      %v2628 = vadd.f32 %v2350, %v2575
      %v2629 = vadd.f32 %v2351, %v2578
      %v2630 = vadd.f32 %v2352, %v2581
      %v2631 = vadd.f32 %v2353, %v2584
      %v2632 = vadd.f32 %v2354, %v2587
      %v2633 = vadd.f32 %v2355, %v2590
      %v2634 = vadd.f32 %v2356, %v2593
      %v2635 = vadd.f32 %v2357, %v2596
      %v2636 = vadd.f32 %v2358, %v2599
      %v2637 = vadd.f32 %v2359, %v2602
      %v2638 = vadd.f32 %v2360, %v2605
      %s2639 = scalar_lea.vmem %s1, 4
      %v2640 = vld [vmem:[%s2639] sm:$0xf]
      %s2641 = scalar_lea.vmem %s1, 12
      %v2642 = vld [vmem:[%s2641] sm:$0xf]
      %2643 = vrot.lane.b32.xlu0 %v231, 124
      %v2644 = vpop.permute.xlu0 %2643
      %2645 = vrot.lane.b32.xlu0 %v232, 124
      %v2646 = vpop.permute.xlu0 %2645
      %2647 = vrot.lane.b32.xlu0 %v233, 124
      %v2648 = vpop.permute.xlu0 %2647
      %2649 = vrot.lane.b32.xlu0 %v234, 124
      %v2650 = vpop.permute.xlu0 %2649
      %2651 = vrot.lane.b32.xlu0 %v235, 124
      %v2652 = vpop.permute.xlu0 %2651
      %2653 = vrot.lane.b32.xlu0 %v236, 124
      %v2654 = vpop.permute.xlu0 %2653
      %2655 = vrot.lane.b32.xlu0 %v237, 124
      %v2656 = vpop.permute.xlu0 %2655
      %2657 = vrot.lane.b32.xlu0 %v238, 124
      %v2658 = vpop.permute.xlu0 %2657
      %2659 = vrot.lane.b32.xlu0 %v239, 124
      %v2660 = vpop.permute.xlu0 %2659
      %2661 = vrot.lane.b32.xlu0 %v240, 124
      %v2662 = vpop.permute.xlu0 %2661
      %2663 = vrot.lane.b32.xlu0 %v241, 124
      %v2664 = vpop.permute.xlu0 %2663
      %2665 = vrot.lane.b32.xlu0 %v242, 124
      %v2666 = vpop.permute.xlu0 %2665
      %2667 = vrot.lane.b32.xlu0 %v243, 124
      %v2668 = vpop.permute.xlu0 %2667
      %2669 = vrot.lane.b32.xlu0 %v244, 124
      %v2670 = vpop.permute.xlu0 %2669
      %2671 = vrot.lane.b32.xlu0 %v245, 124
      %v2672 = vpop.permute.xlu0 %2671
      %2673 = vrot.lane.b32.xlu0 %v246, 124
      %v2674 = vpop.permute.xlu0 %2673
      %2675 = vrot.lane.b32.xlu0 %v247, 124
      %v2676 = vpop.permute.xlu0 %2675
      %2677 = vrot.lane.b32.xlu0 %v248, 124
      %v2678 = vpop.permute.xlu0 %2677
      %2679 = vrot.lane.b32.xlu0 %v249, 124
      %v2680 = vpop.permute.xlu0 %2679
      %2681 = vrot.lane.b32.xlu0 %v250, 124
      %v2682 = vpop.permute.xlu0 %2681
      %2683 = vrot.lane.b32.xlu0 %v251, 124
      %v2684 = vpop.permute.xlu0 %2683
      %2685 = vrot.lane.b32.xlu0 %v252, 124
      %v2686 = vpop.permute.xlu0 %2685
      %2687 = vrot.lane.b32.xlu0 %v253, 124
      %v2688 = vpop.permute.xlu0 %2687
      %2689 = vrot.lane.b32.xlu0 %v254, 124
      %v2690 = vpop.permute.xlu0 %2689
      %2691 = vrot.lane.b32.xlu0 %v255, 124
      %v2692 = vpop.permute.xlu0 %2691
      %2693 = vrot.lane.b32.xlu0 %v256, 124
      %v2694 = vpop.permute.xlu0 %2693
      %2695 = vrot.lane.b32.xlu0 %v257, 124
      %v2696 = vpop.permute.xlu0 %2695
      %2697 = vrot.lane.b32.xlu0 %v258, 124
      %v2698 = vpop.permute.xlu0 %2697
      %2699 = vrot.lane.b32.xlu0 %v259, 124
      %v2700 = vpop.permute.xlu0 %2699
      %2701 = vrot.lane.b32.xlu0 %v260, 124
      %v2702 = vpop.permute.xlu0 %2701
      %2703 = vrot.lane.b32.xlu0 %v261, 124
      %v2704 = vpop.permute.xlu0 %2703
      %2705 = vrot.lane.b32.xlu0 %v262, 124
      %v2706 = vpop.permute.xlu0 %2705
      %v2707 = vsel %vm265, %v2644, 0
      %v2709 = vsel %vm265, %v2646, 0
      %v2711 = vsel %vm265, %v2648, 0
      %v2713 = vsel %vm265, %v2650, 0
      %v2715 = vsel %vm265, %v2652, 0
      %v2717 = vsel %vm265, %v2654, 0
      %v2719 = vsel %vm265, %v2656, 0
      %v2721 = vsel %vm265, %v2658, 0
      %v2723 = vsel %vm265, %v2660, 0
      %v2725 = vsel %vm265, %v2662, 0
      %v2727 = vsel %vm265, %v2664, 0
      %v2729 = vsel %vm265, %v2666, 0
      %v2731 = vsel %vm265, %v2668, 0
      %v2733 = vsel %vm265, %v2670, 0
      %v2735 = vsel %vm265, %v2672, 0
      %v2737 = vsel %vm265, %v2674, 0
      %v2739 = vsel %vm265, %v2676, 0
      %v2741 = vsel %vm265, %v2678, 0
      %v2743 = vsel %vm265, %v2680, 0
      %v2745 = vsel %vm265, %v2682, 0
      %v2747 = vsel %vm265, %v2684, 0
      %v2749 = vsel %vm265, %v2686, 0
      %v2751 = vsel %vm265, %v2688, 0
      %v2753 = vsel %vm265, %v2690, 0
      %v2755 = vsel %vm265, %v2692, 0
      %v2757 = vsel %vm265, %v2694, 0
      %v2759 = vsel %vm265, %v2696, 0
      %v2761 = vsel %vm265, %v2698, 0
      %v2763 = vsel %vm265, %v2700, 0
      %v2765 = vsel %vm265, %v2702, 0
      %v2767 = vsel %vm265, %v2704, 0
      %v2769 = vsel %vm265, %v2706, 0
      %v2772 = vsel %vm362, %v2642, 0
      %2774 = vmatpush.msra.mxu0 0.0
      %2775 = vmatpush.msra.mxu0 0.0
      %2776 = vmatpush.msra.mxu0 0.0
      %2777 = vmatpush.msra.mxu0 0.0
      %2778 = vmatpush.msra.mxu0 0.0
      %2779 = vmatpush.msra.mxu0 0.0
      %2780 = vmatpush.msra.mxu0 0.0
      %2781 = vmatpush.msra.mxu0 0.0
      %2782 = vmatpush.msra.mxu0 0.0
      %2783 = vmatpush.msra.mxu0 0.0
      %2784 = vmatpush.msra.mxu0 0.0
      %2785 = vmatpush.msra.mxu0 0.0
      %2786 = vmatpush.msra.mxu0 0.0
      %2787 = vmatpush.msra.mxu0 0.0
      %2788 = vmatpush.msra.mxu0 0.0
      %2789 = vmatpush.msra.mxu0 %v2772
      %2790 = vmatmul.f32.gmra.mxu0 %v2707
      %v2791 = vpop.f32.mrf.mxu0
      %v2792 = vadd.f32 0.0, %v2791
      %2793 = vmatmul.f32.gmra.mxu0 %v2709
      %v2794 = vpop.f32.mrf.mxu0
      %v2795 = vadd.f32 0.0, %v2794
      %2796 = vmatmul.f32.gmra.mxu0 %v2711
      %v2797 = vpop.f32.mrf.mxu0
      %v2798 = vadd.f32 0.0, %v2797
      %2799 = vmatmul.f32.gmra.mxu0 %v2713
      %v2800 = vpop.f32.mrf.mxu0
      %v2801 = vadd.f32 0.0, %v2800
      %2802 = vmatmul.f32.gmra.mxu0 %v2715
      %v2803 = vpop.f32.mrf.mxu0
      %v2804 = vadd.f32 0.0, %v2803
      %2805 = vmatmul.f32.gmra.mxu0 %v2717
      %v2806 = vpop.f32.mrf.mxu0
      %v2807 = vadd.f32 0.0, %v2806
      %2808 = vmatmul.f32.gmra.mxu0 %v2719
      %v2809 = vpop.f32.mrf.mxu0
      %v2810 = vadd.f32 0.0, %v2809
      %2811 = vmatmul.f32.gmra.mxu0 %v2721
      %v2812 = vpop.f32.mrf.mxu0
      %v2813 = vadd.f32 0.0, %v2812
      %2814 = vmatmul.f32.gmra.mxu0 %v2723
      %v2815 = vpop.f32.mrf.mxu0
      %v2816 = vadd.f32 0.0, %v2815
      %2817 = vmatmul.f32.gmra.mxu0 %v2725
      %v2818 = vpop.f32.mrf.mxu0
      %v2819 = vadd.f32 0.0, %v2818
      %2820 = vmatmul.f32.gmra.mxu0 %v2727
      %v2821 = vpop.f32.mrf.mxu0
      %v2822 = vadd.f32 0.0, %v2821
      %2823 = vmatmul.f32.gmra.mxu0 %v2729
      %v2824 = vpop.f32.mrf.mxu0
      %v2825 = vadd.f32 0.0, %v2824
      %2826 = vmatmul.f32.gmra.mxu0 %v2731
      %v2827 = vpop.f32.mrf.mxu0
      %v2828 = vadd.f32 0.0, %v2827
      %2829 = vmatmul.f32.gmra.mxu0 %v2733
      %v2830 = vpop.f32.mrf.mxu0
      %v2831 = vadd.f32 0.0, %v2830
      %2832 = vmatmul.f32.gmra.mxu0 %v2735
      %v2833 = vpop.f32.mrf.mxu0
      %v2834 = vadd.f32 0.0, %v2833
      %2835 = vmatmul.f32.gmra.mxu0 %v2737
      %v2836 = vpop.f32.mrf.mxu0
      %v2837 = vadd.f32 0.0, %v2836
      %2838 = vmatmul.f32.gmra.mxu0 %v2739
      %v2839 = vpop.f32.mrf.mxu0
      %v2840 = vadd.f32 0.0, %v2839
      %2841 = vmatmul.f32.gmra.mxu0 %v2741
      %v2842 = vpop.f32.mrf.mxu0
      %v2843 = vadd.f32 0.0, %v2842
      %2844 = vmatmul.f32.gmra.mxu0 %v2743
      %v2845 = vpop.f32.mrf.mxu0
      %v2846 = vadd.f32 0.0, %v2845
      %2847 = vmatmul.f32.gmra.mxu0 %v2745
      %v2848 = vpop.f32.mrf.mxu0
      %v2849 = vadd.f32 0.0, %v2848
      %2850 = vmatmul.f32.gmra.mxu0 %v2747
      %v2851 = vpop.f32.mrf.mxu0
      %v2852 = vadd.f32 0.0, %v2851
      %2853 = vmatmul.f32.gmra.mxu0 %v2749
      %v2854 = vpop.f32.mrf.mxu0
      %v2855 = vadd.f32 0.0, %v2854
      %2856 = vmatmul.f32.gmra.mxu0 %v2751
      %v2857 = vpop.f32.mrf.mxu0
      %v2858 = vadd.f32 0.0, %v2857
      %2859 = vmatmul.f32.gmra.mxu0 %v2753
      %v2860 = vpop.f32.mrf.mxu0
      %v2861 = vadd.f32 0.0, %v2860
      %2862 = vmatmul.f32.gmra.mxu0 %v2755
      %v2863 = vpop.f32.mrf.mxu0
      %v2864 = vadd.f32 0.0, %v2863
      %2865 = vmatmul.f32.gmra.mxu0 %v2757
      %v2866 = vpop.f32.mrf.mxu0
      %v2867 = vadd.f32 0.0, %v2866
      %2868 = vmatmul.f32.gmra.mxu0 %v2759
      %v2869 = vpop.f32.mrf.mxu0
      %v2870 = vadd.f32 0.0, %v2869
      %2871 = vmatmul.f32.gmra.mxu0 %v2761
      %v2872 = vpop.f32.mrf.mxu0
      %v2873 = vadd.f32 0.0, %v2872
      %2874 = vmatmul.f32.gmra.mxu0 %v2763
      %v2875 = vpop.f32.mrf.mxu0
      %v2876 = vadd.f32 0.0, %v2875
      %2877 = vmatmul.f32.gmra.mxu0 %v2765
      %v2878 = vpop.f32.mrf.mxu0
      %v2879 = vadd.f32 0.0, %v2878
      %2880 = vmatmul.f32.gmra.mxu0 %v2767
      %v2881 = vpop.f32.mrf.mxu0
      %v2882 = vadd.f32 0.0, %v2881
      %2883 = vmatmul.f32.gmra.mxu0 %v2769
      %v2884 = vpop.f32.mrf.mxu0
      %v2885 = vadd.f32 0.0, %v2884
      %2886 = vdwg.mxu0
      %2887 = vrot.lane.b32.xlu0 %v198, 124
      %v2888 = vpop.permute.xlu0 %2887
      %2889 = vrot.lane.b32.xlu0 %v199, 124
      %v2890 = vpop.permute.xlu0 %2889
      %2891 = vrot.lane.b32.xlu0 %v200, 124
      %v2892 = vpop.permute.xlu0 %2891
      %2893 = vrot.lane.b32.xlu0 %v201, 124
      %v2894 = vpop.permute.xlu0 %2893
      %2895 = vrot.lane.b32.xlu0 %v202, 124
      %v2896 = vpop.permute.xlu0 %2895
      %2897 = vrot.lane.b32.xlu0 %v203, 124
      %v2898 = vpop.permute.xlu0 %2897
      %2899 = vrot.lane.b32.xlu0 %v204, 124
      %v2900 = vpop.permute.xlu0 %2899
      %2901 = vrot.lane.b32.xlu0 %v205, 124
      %v2902 = vpop.permute.xlu0 %2901
      %2903 = vrot.lane.b32.xlu0 %v206, 124
      %v2904 = vpop.permute.xlu0 %2903
      %2905 = vrot.lane.b32.xlu0 %v207, 124
      %v2906 = vpop.permute.xlu0 %2905
      %2907 = vrot.lane.b32.xlu0 %v208, 124
      %v2908 = vpop.permute.xlu0 %2907
      %2909 = vrot.lane.b32.xlu0 %v209, 124
      %v2910 = vpop.permute.xlu0 %2909
      %2911 = vrot.lane.b32.xlu0 %v210, 124
      %v2912 = vpop.permute.xlu0 %2911
      %2913 = vrot.lane.b32.xlu0 %v211, 124
      %v2914 = vpop.permute.xlu0 %2913
      %2915 = vrot.lane.b32.xlu0 %v212, 124
      %v2916 = vpop.permute.xlu0 %2915
      %2917 = vrot.lane.b32.xlu0 %v213, 124
      %v2918 = vpop.permute.xlu0 %2917
      %2919 = vrot.lane.b32.xlu0 %v214, 124
      %v2920 = vpop.permute.xlu0 %2919
      %2921 = vrot.lane.b32.xlu0 %v215, 124
      %v2922 = vpop.permute.xlu0 %2921
      %2923 = vrot.lane.b32.xlu0 %v216, 124
      %v2924 = vpop.permute.xlu0 %2923
      %2925 = vrot.lane.b32.xlu0 %v217, 124
      %v2926 = vpop.permute.xlu0 %2925
      %2927 = vrot.lane.b32.xlu0 %v218, 124
      %v2928 = vpop.permute.xlu0 %2927
      %2929 = vrot.lane.b32.xlu0 %v219, 124
      %v2930 = vpop.permute.xlu0 %2929
      %2931 = vrot.lane.b32.xlu0 %v220, 124
      %v2932 = vpop.permute.xlu0 %2931
      %2933 = vrot.lane.b32.xlu0 %v221, 124
      %v2934 = vpop.permute.xlu0 %2933
      %2935 = vrot.lane.b32.xlu0 %v222, 124
      %v2936 = vpop.permute.xlu0 %2935
      %2937 = vrot.lane.b32.xlu0 %v223, 124
      %v2938 = vpop.permute.xlu0 %2937
      %2939 = vrot.lane.b32.xlu0 %v224, 124
      %v2940 = vpop.permute.xlu0 %2939
      %2941 = vrot.lane.b32.xlu0 %v225, 124
      %v2942 = vpop.permute.xlu0 %2941
      %2943 = vrot.lane.b32.xlu0 %v226, 124
      %v2944 = vpop.permute.xlu0 %2943
      %2945 = vrot.lane.b32.xlu0 %v227, 124
      %v2946 = vpop.permute.xlu0 %2945
      %2947 = vrot.lane.b32.xlu0 %v228, 124
      %v2948 = vpop.permute.xlu0 %2947
      %2949 = vrot.lane.b32.xlu0 %v229, 124
      %v2950 = vpop.permute.xlu0 %2949
      %v2951 = vsel %vm265, %v2888, 0
      %v2953 = vsel %vm265, %v2890, 0
      %v2955 = vsel %vm265, %v2892, 0
      %v2957 = vsel %vm265, %v2894, 0
      %v2959 = vsel %vm265, %v2896, 0
      %v2961 = vsel %vm265, %v2898, 0
      %v2963 = vsel %vm265, %v2900, 0
      %v2965 = vsel %vm265, %v2902, 0
      %v2967 = vsel %vm265, %v2904, 0
      %v2969 = vsel %vm265, %v2906, 0
      %v2971 = vsel %vm265, %v2908, 0
      %v2973 = vsel %vm265, %v2910, 0
      %v2975 = vsel %vm265, %v2912, 0
      %v2977 = vsel %vm265, %v2914, 0
      %v2979 = vsel %vm265, %v2916, 0
      %v2981 = vsel %vm265, %v2918, 0
      %v2983 = vsel %vm265, %v2920, 0
      %v2985 = vsel %vm265, %v2922, 0
      %v2987 = vsel %vm265, %v2924, 0
      %v2989 = vsel %vm265, %v2926, 0
      %v2991 = vsel %vm265, %v2928, 0
      %v2993 = vsel %vm265, %v2930, 0
      %v2995 = vsel %vm265, %v2932, 0
      %v2997 = vsel %vm265, %v2934, 0
      %v2999 = vsel %vm265, %v2936, 0
      %v3001 = vsel %vm265, %v2938, 0
      %v3003 = vsel %vm265, %v2940, 0
      %v3005 = vsel %vm265, %v2942, 0
      %v3007 = vsel %vm265, %v2944, 0
      %v3009 = vsel %vm265, %v2946, 0
      %v3011 = vsel %vm265, %v2948, 0
      %v3013 = vsel %vm265, %v2950, 0
      %v3016 = vsel %vm362, %v2640, 0
      %3018 = vmatpush.msra.mxu0 0.0
      %3019 = vmatpush.msra.mxu0 0.0
      %3020 = vmatpush.msra.mxu0 0.0
      %3021 = vmatpush.msra.mxu0 0.0
      %3022 = vmatpush.msra.mxu0 0.0
      %3023 = vmatpush.msra.mxu0 0.0
      %3024 = vmatpush.msra.mxu0 0.0
      %3025 = vmatpush.msra.mxu0 0.0
      %3026 = vmatpush.msra.mxu0 0.0
      %3027 = vmatpush.msra.mxu0 0.0
      %3028 = vmatpush.msra.mxu0 0.0
      %3029 = vmatpush.msra.mxu0 0.0
      %3030 = vmatpush.msra.mxu0 0.0
      %3031 = vmatpush.msra.mxu0 0.0
      %3032 = vmatpush.msra.mxu0 0.0
      %3033 = vmatpush.msra.mxu0 %v3016
      %3034 = vmatmul.f32.gmra.mxu0 %v2951
      %v3035 = vpop.f32.mrf.mxu0
      %v3036 = vadd.f32 %v2792, %v3035
      %3037 = vmatmul.f32.gmra.mxu0 %v2953
      %v3038 = vpop.f32.mrf.mxu0
      %v3039 = vadd.f32 %v2795, %v3038
      %3040 = vmatmul.f32.gmra.mxu0 %v2955
      %v3041 = vpop.f32.mrf.mxu0
      %v3042 = vadd.f32 %v2798, %v3041
      %3043 = vmatmul.f32.gmra.mxu0 %v2957
      %v3044 = vpop.f32.mrf.mxu0
      %v3045 = vadd.f32 %v2801, %v3044
      %3046 = vmatmul.f32.gmra.mxu0 %v2959
      %v3047 = vpop.f32.mrf.mxu0
      %v3048 = vadd.f32 %v2804, %v3047
      %3049 = vmatmul.f32.gmra.mxu0 %v2961
      %v3050 = vpop.f32.mrf.mxu0
      %v3051 = vadd.f32 %v2807, %v3050
      %3052 = vmatmul.f32.gmra.mxu0 %v2963
      %v3053 = vpop.f32.mrf.mxu0
      %v3054 = vadd.f32 %v2810, %v3053
      %3055 = vmatmul.f32.gmra.mxu0 %v2965
      %v3056 = vpop.f32.mrf.mxu0
      %v3057 = vadd.f32 %v2813, %v3056
      %3058 = vmatmul.f32.gmra.mxu0 %v2967
      %v3059 = vpop.f32.mrf.mxu0
      %v3060 = vadd.f32 %v2816, %v3059
      %3061 = vmatmul.f32.gmra.mxu0 %v2969
      %v3062 = vpop.f32.mrf.mxu0
      %v3063 = vadd.f32 %v2819, %v3062
      %3064 = vmatmul.f32.gmra.mxu0 %v2971
      %v3065 = vpop.f32.mrf.mxu0
      %v3066 = vadd.f32 %v2822, %v3065
      %3067 = vmatmul.f32.gmra.mxu0 %v2973
      %v3068 = vpop.f32.mrf.mxu0
      %v3069 = vadd.f32 %v2825, %v3068
      %3070 = vmatmul.f32.gmra.mxu0 %v2975
      %v3071 = vpop.f32.mrf.mxu0
      %v3072 = vadd.f32 %v2828, %v3071
      %3073 = vmatmul.f32.gmra.mxu0 %v2977
      %v3074 = vpop.f32.mrf.mxu0
      %v3075 = vadd.f32 %v2831, %v3074
      %3076 = vmatmul.f32.gmra.mxu0 %v2979
      %v3077 = vpop.f32.mrf.mxu0
      %v3078 = vadd.f32 %v2834, %v3077
      %3079 = vmatmul.f32.gmra.mxu0 %v2981
      %v3080 = vpop.f32.mrf.mxu0
      %v3081 = vadd.f32 %v2837, %v3080
      %3082 = vmatmul.f32.gmra.mxu0 %v2983
      %v3083 = vpop.f32.mrf.mxu0
      %v3084 = vadd.f32 %v2840, %v3083
      %3085 = vmatmul.f32.gmra.mxu0 %v2985
      %v3086 = vpop.f32.mrf.mxu0
      %v3087 = vadd.f32 %v2843, %v3086
      %3088 = vmatmul.f32.gmra.mxu0 %v2987
      %v3089 = vpop.f32.mrf.mxu0
      %v3090 = vadd.f32 %v2846, %v3089
      %3091 = vmatmul.f32.gmra.mxu0 %v2989
      %v3092 = vpop.f32.mrf.mxu0
      %v3093 = vadd.f32 %v2849, %v3092
      %3094 = vmatmul.f32.gmra.mxu0 %v2991
      %v3095 = vpop.f32.mrf.mxu0
      %v3096 = vadd.f32 %v2852, %v3095
      %3097 = vmatmul.f32.gmra.mxu0 %v2993
      %v3098 = vpop.f32.mrf.mxu0
      %v3099 = vadd.f32 %v2855, %v3098
      %3100 = vmatmul.f32.gmra.mxu0 %v2995
      %v3101 = vpop.f32.mrf.mxu0
      %v3102 = vadd.f32 %v2858, %v3101
      %3103 = vmatmul.f32.gmra.mxu0 %v2997
      %v3104 = vpop.f32.mrf.mxu0
      %v3105 = vadd.f32 %v2861, %v3104
      %3106 = vmatmul.f32.gmra.mxu0 %v2999
      %v3107 = vpop.f32.mrf.mxu0
      %v3108 = vadd.f32 %v2864, %v3107
      %3109 = vmatmul.f32.gmra.mxu0 %v3001
      %v3110 = vpop.f32.mrf.mxu0
      %v3111 = vadd.f32 %v2867, %v3110
      %3112 = vmatmul.f32.gmra.mxu0 %v3003
      %v3113 = vpop.f32.mrf.mxu0
      %v3114 = vadd.f32 %v2870, %v3113
      %3115 = vmatmul.f32.gmra.mxu0 %v3005
      %v3116 = vpop.f32.mrf.mxu0
      %v3117 = vadd.f32 %v2873, %v3116
      %3118 = vmatmul.f32.gmra.mxu0 %v3007
      %v3119 = vpop.f32.mrf.mxu0
      %v3120 = vadd.f32 %v2876, %v3119
      %3121 = vmatmul.f32.gmra.mxu0 %v3009
      %v3122 = vpop.f32.mrf.mxu0
      %v3123 = vadd.f32 %v2879, %v3122
      %3124 = vmatmul.f32.gmra.mxu0 %v3011
      %v3125 = vpop.f32.mrf.mxu0
      %v3126 = vadd.f32 %v2882, %v3125
      %3127 = vmatmul.f32.gmra.mxu0 %v3013
      %v3128 = vpop.f32.mrf.mxu0
      %v3129 = vadd.f32 %v2885, %v3128
      %3130 = vdwg.mxu0
      %s3131 = scalar_lea.vmem %s1, 20
      %v3132 = vld [vmem:[%s3131] sm:$0xf]
      %3133 = vrot.lane.b32.xlu0 %v691, 124
      %v3134 = vpop.permute.xlu0 %3133
      %3135 = vrot.lane.b32.xlu0 %v692, 124
      %v3136 = vpop.permute.xlu0 %3135
      %3137 = vrot.lane.b32.xlu0 %v693, 124
      %v3138 = vpop.permute.xlu0 %3137
      %3139 = vrot.lane.b32.xlu0 %v694, 124
      %v3140 = vpop.permute.xlu0 %3139
      %3141 = vrot.lane.b32.xlu0 %v695, 124
      %v3142 = vpop.permute.xlu0 %3141
      %3143 = vrot.lane.b32.xlu0 %v696, 124
      %v3144 = vpop.permute.xlu0 %3143
      %3145 = vrot.lane.b32.xlu0 %v697, 124
      %v3146 = vpop.permute.xlu0 %3145
      %3147 = vrot.lane.b32.xlu0 %v698, 124
      %v3148 = vpop.permute.xlu0 %3147
      %3149 = vrot.lane.b32.xlu0 %v699, 124
      %v3150 = vpop.permute.xlu0 %3149
      %3151 = vrot.lane.b32.xlu0 %v700, 124
      %v3152 = vpop.permute.xlu0 %3151
      %3153 = vrot.lane.b32.xlu0 %v701, 124
      %v3154 = vpop.permute.xlu0 %3153
      %3155 = vrot.lane.b32.xlu0 %v702, 124
      %v3156 = vpop.permute.xlu0 %3155
      %3157 = vrot.lane.b32.xlu0 %v703, 124
      %v3158 = vpop.permute.xlu0 %3157
      %3159 = vrot.lane.b32.xlu0 %v704, 124
      %v3160 = vpop.permute.xlu0 %3159
      %3161 = vrot.lane.b32.xlu0 %v705, 124
      %v3162 = vpop.permute.xlu0 %3161
      %3163 = vrot.lane.b32.xlu0 %v706, 124
      %v3164 = vpop.permute.xlu0 %3163
      %3165 = vrot.lane.b32.xlu0 %v707, 124
      %v3166 = vpop.permute.xlu0 %3165
      %3167 = vrot.lane.b32.xlu0 %v708, 124
      %v3168 = vpop.permute.xlu0 %3167
      %3169 = vrot.lane.b32.xlu0 %v709, 124
      %v3170 = vpop.permute.xlu0 %3169
      %3171 = vrot.lane.b32.xlu0 %v710, 124
      %v3172 = vpop.permute.xlu0 %3171
      %3173 = vrot.lane.b32.xlu0 %v711, 124
      %v3174 = vpop.permute.xlu0 %3173
      %3175 = vrot.lane.b32.xlu0 %v712, 124
      %v3176 = vpop.permute.xlu0 %3175
      %3177 = vrot.lane.b32.xlu0 %v713, 124
      %v3178 = vpop.permute.xlu0 %3177
      %3179 = vrot.lane.b32.xlu0 %v714, 124
      %v3180 = vpop.permute.xlu0 %3179
      %3181 = vrot.lane.b32.xlu0 %v715, 124
      %v3182 = vpop.permute.xlu0 %3181
      %3183 = vrot.lane.b32.xlu0 %v716, 124
      %v3184 = vpop.permute.xlu0 %3183
      %3185 = vrot.lane.b32.xlu0 %v717, 124
      %v3186 = vpop.permute.xlu0 %3185
      %3187 = vrot.lane.b32.xlu0 %v718, 124
      %v3188 = vpop.permute.xlu0 %3187
      %3189 = vrot.lane.b32.xlu0 %v719, 124
      %v3190 = vpop.permute.xlu0 %3189
      %3191 = vrot.lane.b32.xlu0 %v720, 124
      %v3192 = vpop.permute.xlu0 %3191
      %3193 = vrot.lane.b32.xlu0 %v721, 124
      %v3194 = vpop.permute.xlu0 %3193
      %3195 = vrot.lane.b32.xlu0 %v722, 124
      %v3196 = vpop.permute.xlu0 %3195
      %v3197 = vsel %vm265, %v3134, 0
      %v3199 = vsel %vm265, %v3136, 0
      %v3201 = vsel %vm265, %v3138, 0
      %v3203 = vsel %vm265, %v3140, 0
      %v3205 = vsel %vm265, %v3142, 0
      %v3207 = vsel %vm265, %v3144, 0
      %v3209 = vsel %vm265, %v3146, 0
      %v3211 = vsel %vm265, %v3148, 0
      %v3213 = vsel %vm265, %v3150, 0
      %v3215 = vsel %vm265, %v3152, 0
      %v3217 = vsel %vm265, %v3154, 0
      %v3219 = vsel %vm265, %v3156, 0
      %v3221 = vsel %vm265, %v3158, 0
      %v3223 = vsel %vm265, %v3160, 0
      %v3225 = vsel %vm265, %v3162, 0
      %v3227 = vsel %vm265, %v3164, 0
      %v3229 = vsel %vm265, %v3166, 0
      %v3231 = vsel %vm265, %v3168, 0
      %v3233 = vsel %vm265, %v3170, 0
      %v3235 = vsel %vm265, %v3172, 0
      %v3237 = vsel %vm265, %v3174, 0
      %v3239 = vsel %vm265, %v3176, 0
      %v3241 = vsel %vm265, %v3178, 0
      %v3243 = vsel %vm265, %v3180, 0
      %v3245 = vsel %vm265, %v3182, 0
      %v3247 = vsel %vm265, %v3184, 0
      %v3249 = vsel %vm265, %v3186, 0
      %v3251 = vsel %vm265, %v3188, 0
      %v3253 = vsel %vm265, %v3190, 0
      %v3255 = vsel %vm265, %v3192, 0
      %v3257 = vsel %vm265, %v3194, 0
      %v3259 = vsel %vm265, %v3196, 0
      %v3262 = vsel %vm362, %v3132, 0
      %3264 = vmatpush.msra.mxu0 0.0
      %3265 = vmatpush.msra.mxu0 0.0
      %3266 = vmatpush.msra.mxu0 0.0
      %3267 = vmatpush.msra.mxu0 0.0
      %3268 = vmatpush.msra.mxu0 0.0
      %3269 = vmatpush.msra.mxu0 0.0
      %3270 = vmatpush.msra.mxu0 0.0
      %3271 = vmatpush.msra.mxu0 0.0
      %3272 = vmatpush.msra.mxu0 0.0
      %3273 = vmatpush.msra.mxu0 0.0
      %3274 = vmatpush.msra.mxu0 0.0
      %3275 = vmatpush.msra.mxu0 0.0
      %3276 = vmatpush.msra.mxu0 0.0
      %3277 = vmatpush.msra.mxu0 0.0
      %3278 = vmatpush.msra.mxu0 0.0
      %3279 = vmatpush.msra.mxu0 %v3262
      %3280 = vmatmul.f32.gmra.mxu0 %v3197
      %v3281 = vpop.f32.mrf.mxu0
      %v3282 = vadd.f32 0.0, %v3281
      %3283 = vmatmul.f32.gmra.mxu0 %v3199
      %v3284 = vpop.f32.mrf.mxu0
      %v3285 = vadd.f32 0.0, %v3284
      %3286 = vmatmul.f32.gmra.mxu0 %v3201
      %v3287 = vpop.f32.mrf.mxu0
      %v3288 = vadd.f32 0.0, %v3287
      %3289 = vmatmul.f32.gmra.mxu0 %v3203
      %v3290 = vpop.f32.mrf.mxu0
      %v3291 = vadd.f32 0.0, %v3290
      %3292 = vmatmul.f32.gmra.mxu0 %v3205
      %v3293 = vpop.f32.mrf.mxu0
      %v3294 = vadd.f32 0.0, %v3293
      %3295 = vmatmul.f32.gmra.mxu0 %v3207
      %v3296 = vpop.f32.mrf.mxu0
      %v3297 = vadd.f32 0.0, %v3296
      %3298 = vmatmul.f32.gmra.mxu0 %v3209
      %v3299 = vpop.f32.mrf.mxu0
      %v3300 = vadd.f32 0.0, %v3299
      %3301 = vmatmul.f32.gmra.mxu0 %v3211
      %v3302 = vpop.f32.mrf.mxu0
      %v3303 = vadd.f32 0.0, %v3302
      %3304 = vmatmul.f32.gmra.mxu0 %v3213
      %v3305 = vpop.f32.mrf.mxu0
      %v3306 = vadd.f32 0.0, %v3305
      %3307 = vmatmul.f32.gmra.mxu0 %v3215
      %v3308 = vpop.f32.mrf.mxu0
      %v3309 = vadd.f32 0.0, %v3308
      %3310 = vmatmul.f32.gmra.mxu0 %v3217
      %v3311 = vpop.f32.mrf.mxu0
      %v3312 = vadd.f32 0.0, %v3311
      %3313 = vmatmul.f32.gmra.mxu0 %v3219
      %v3314 = vpop.f32.mrf.mxu0
      %v3315 = vadd.f32 0.0, %v3314
      %3316 = vmatmul.f32.gmra.mxu0 %v3221
      %v3317 = vpop.f32.mrf.mxu0
      %v3318 = vadd.f32 0.0, %v3317
      %3319 = vmatmul.f32.gmra.mxu0 %v3223
      %v3320 = vpop.f32.mrf.mxu0
      %v3321 = vadd.f32 0.0, %v3320
      %3322 = vmatmul.f32.gmra.mxu0 %v3225
      %v3323 = vpop.f32.mrf.mxu0
      %v3324 = vadd.f32 0.0, %v3323
      %3325 = vmatmul.f32.gmra.mxu0 %v3227
      %v3326 = vpop.f32.mrf.mxu0
      %v3327 = vadd.f32 0.0, %v3326
      %3328 = vmatmul.f32.gmra.mxu0 %v3229
      %v3329 = vpop.f32.mrf.mxu0
      %v3330 = vadd.f32 0.0, %v3329
      %3331 = vmatmul.f32.gmra.mxu0 %v3231
      %v3332 = vpop.f32.mrf.mxu0
      %v3333 = vadd.f32 0.0, %v3332
      %3334 = vmatmul.f32.gmra.mxu0 %v3233
      %v3335 = vpop.f32.mrf.mxu0
      %v3336 = vadd.f32 0.0, %v3335
      %3337 = vmatmul.f32.gmra.mxu0 %v3235
      %v3338 = vpop.f32.mrf.mxu0
      %v3339 = vadd.f32 0.0, %v3338
      %3340 = vmatmul.f32.gmra.mxu0 %v3237
      %v3341 = vpop.f32.mrf.mxu0
      %v3342 = vadd.f32 0.0, %v3341
      %3343 = vmatmul.f32.gmra.mxu0 %v3239
      %v3344 = vpop.f32.mrf.mxu0
      %v3345 = vadd.f32 0.0, %v3344
      %3346 = vmatmul.f32.gmra.mxu0 %v3241
      %v3347 = vpop.f32.mrf.mxu0
      %v3348 = vadd.f32 0.0, %v3347
      %3349 = vmatmul.f32.gmra.mxu0 %v3243
      %v3350 = vpop.f32.mrf.mxu0
      %v3351 = vadd.f32 0.0, %v3350
      %3352 = vmatmul.f32.gmra.mxu0 %v3245
      %v3353 = vpop.f32.mrf.mxu0
      %v3354 = vadd.f32 0.0, %v3353
      %3355 = vmatmul.f32.gmra.mxu0 %v3247
      %v3356 = vpop.f32.mrf.mxu0
      %v3357 = vadd.f32 0.0, %v3356
      %3358 = vmatmul.f32.gmra.mxu0 %v3249
      %v3359 = vpop.f32.mrf.mxu0
      %v3360 = vadd.f32 0.0, %v3359
      %3361 = vmatmul.f32.gmra.mxu0 %v3251
      %v3362 = vpop.f32.mrf.mxu0
      %v3363 = vadd.f32 0.0, %v3362
      %3364 = vmatmul.f32.gmra.mxu0 %v3253
      %v3365 = vpop.f32.mrf.mxu0
      %v3366 = vadd.f32 0.0, %v3365
      %3367 = vmatmul.f32.gmra.mxu0 %v3255
      %v3368 = vpop.f32.mrf.mxu0
      %v3369 = vadd.f32 0.0, %v3368
      %3370 = vmatmul.f32.gmra.mxu0 %v3257
      %v3371 = vpop.f32.mrf.mxu0
      %v3372 = vadd.f32 0.0, %v3371
      %3373 = vmatmul.f32.gmra.mxu0 %v3259
      %v3374 = vpop.f32.mrf.mxu0
      %v3375 = vadd.f32 0.0, %v3374
      %3376 = vdwg.mxu0
      %v3377 = vadd.f32 %v3036, %v3282
      %v3378 = vadd.f32 %v3039, %v3285
      %v3379 = vadd.f32 %v3042, %v3288
      %v3380 = vadd.f32 %v3045, %v3291
      %v3381 = vadd.f32 %v3048, %v3294
      %v3382 = vadd.f32 %v3051, %v3297
      %v3383 = vadd.f32 %v3054, %v3300
      %v3384 = vadd.f32 %v3057, %v3303
      %v3385 = vadd.f32 %v3060, %v3306
      %v3386 = vadd.f32 %v3063, %v3309
      %v3387 = vadd.f32 %v3066, %v3312
      %v3388 = vadd.f32 %v3069, %v3315
      %v3389 = vadd.f32 %v3072, %v3318
      %v3390 = vadd.f32 %v3075, %v3321
      %v3391 = vadd.f32 %v3078, %v3324
      %v3392 = vadd.f32 %v3081, %v3327
      %v3393 = vadd.f32 %v3084, %v3330
      %v3394 = vadd.f32 %v3087, %v3333
      %v3395 = vadd.f32 %v3090, %v3336
      %v3396 = vadd.f32 %v3093, %v3339
      %v3397 = vadd.f32 %v3096, %v3342
      %v3398 = vadd.f32 %v3099, %v3345
      %v3399 = vadd.f32 %v3102, %v3348
      %v3400 = vadd.f32 %v3105, %v3351
      %v3401 = vadd.f32 %v3108, %v3354
      %v3402 = vadd.f32 %v3111, %v3357
      %v3403 = vadd.f32 %v3114, %v3360
      %v3404 = vadd.f32 %v3117, %v3363
      %v3405 = vadd.f32 %v3120, %v3366
      %v3406 = vadd.f32 %v3123, %v3369
      %v3407 = vadd.f32 %v3126, %v3372
      %v3408 = vadd.f32 %v3129, %v3375
      %s3409 = scalar_lea.vmem %s1, 28
      %v3410 = vld [vmem:[%s3409] sm:$0xf]
      %3411 = vrot.lane.b32.xlu0 %v970, 124
      %v3412 = vpop.permute.xlu0 %3411
      %3413 = vrot.lane.b32.xlu0 %v971, 124
      %v3414 = vpop.permute.xlu0 %3413
      %3415 = vrot.lane.b32.xlu0 %v972, 124
      %v3416 = vpop.permute.xlu0 %3415
      %3417 = vrot.lane.b32.xlu0 %v973, 124
      %v3418 = vpop.permute.xlu0 %3417
      %3419 = vrot.lane.b32.xlu0 %v974, 124
      %v3420 = vpop.permute.xlu0 %3419
      %3421 = vrot.lane.b32.xlu0 %v975, 124
      %v3422 = vpop.permute.xlu0 %3421
      %3423 = vrot.lane.b32.xlu0 %v976, 124
      %v3424 = vpop.permute.xlu0 %3423
      %3425 = vrot.lane.b32.xlu0 %v977, 124
      %v3426 = vpop.permute.xlu0 %3425
      %3427 = vrot.lane.b32.xlu0 %v978, 124
      %v3428 = vpop.permute.xlu0 %3427
      %3429 = vrot.lane.b32.xlu0 %v979, 124
      %v3430 = vpop.permute.xlu0 %3429
      %3431 = vrot.lane.b32.xlu0 %v980, 124
      %v3432 = vpop.permute.xlu0 %3431
      %3433 = vrot.lane.b32.xlu0 %v981, 124
      %v3434 = vpop.permute.xlu0 %3433
      %3435 = vrot.lane.b32.xlu0 %v982, 124
      %v3436 = vpop.permute.xlu0 %3435
      %3437 = vrot.lane.b32.xlu0 %v983, 124
      %v3438 = vpop.permute.xlu0 %3437
      %3439 = vrot.lane.b32.xlu0 %v984, 124
      %v3440 = vpop.permute.xlu0 %3439
      %3441 = vrot.lane.b32.xlu0 %v985, 124
      %v3442 = vpop.permute.xlu0 %3441
      %3443 = vrot.lane.b32.xlu0 %v986, 124
      %v3444 = vpop.permute.xlu0 %3443
      %3445 = vrot.lane.b32.xlu0 %v987, 124
      %v3446 = vpop.permute.xlu0 %3445
      %3447 = vrot.lane.b32.xlu0 %v988, 124
      %v3448 = vpop.permute.xlu0 %3447
      %3449 = vrot.lane.b32.xlu0 %v989, 124
      %v3450 = vpop.permute.xlu0 %3449
      %3451 = vrot.lane.b32.xlu0 %v990, 124
      %v3452 = vpop.permute.xlu0 %3451
      %3453 = vrot.lane.b32.xlu0 %v991, 124
      %v3454 = vpop.permute.xlu0 %3453
      %3455 = vrot.lane.b32.xlu0 %v992, 124
      %v3456 = vpop.permute.xlu0 %3455
      %3457 = vrot.lane.b32.xlu0 %v993, 124
      %v3458 = vpop.permute.xlu0 %3457
      %3459 = vrot.lane.b32.xlu0 %v994, 124
      %v3460 = vpop.permute.xlu0 %3459
      %3461 = vrot.lane.b32.xlu0 %v995, 124
      %v3462 = vpop.permute.xlu0 %3461
      %3463 = vrot.lane.b32.xlu0 %v996, 124
      %v3464 = vpop.permute.xlu0 %3463
      %3465 = vrot.lane.b32.xlu0 %v997, 124
      %v3466 = vpop.permute.xlu0 %3465
      %3467 = vrot.lane.b32.xlu0 %v998, 124
      %v3468 = vpop.permute.xlu0 %3467
      %3469 = vrot.lane.b32.xlu0 %v999, 124
      %v3470 = vpop.permute.xlu0 %3469
      %3471 = vrot.lane.b32.xlu0 %v1000, 124
      %v3472 = vpop.permute.xlu0 %3471
      %3473 = vrot.lane.b32.xlu0 %v1001, 124
      %v3474 = vpop.permute.xlu0 %3473
      %v3475 = vsel %vm265, %v3412, 0
      %v3477 = vsel %vm265, %v3414, 0
      %v3479 = vsel %vm265, %v3416, 0
      %v3481 = vsel %vm265, %v3418, 0
      %v3483 = vsel %vm265, %v3420, 0
      %v3485 = vsel %vm265, %v3422, 0
      %v3487 = vsel %vm265, %v3424, 0
      %v3489 = vsel %vm265, %v3426, 0
      %v3491 = vsel %vm265, %v3428, 0
      %v3493 = vsel %vm265, %v3430, 0
      %v3495 = vsel %vm265, %v3432, 0
      %v3497 = vsel %vm265, %v3434, 0
      %v3499 = vsel %vm265, %v3436, 0
      %v3501 = vsel %vm265, %v3438, 0
      %v3503 = vsel %vm265, %v3440, 0
      %v3505 = vsel %vm265, %v3442, 0
      %v3507 = vsel %vm265, %v3444, 0
      %v3509 = vsel %vm265, %v3446, 0
      %v3511 = vsel %vm265, %v3448, 0
      %v3513 = vsel %vm265, %v3450, 0
      %v3515 = vsel %vm265, %v3452, 0
      %v3517 = vsel %vm265, %v3454, 0
      %v3519 = vsel %vm265, %v3456, 0
      %v3521 = vsel %vm265, %v3458, 0
      %v3523 = vsel %vm265, %v3460, 0
      %v3525 = vsel %vm265, %v3462, 0
      %v3527 = vsel %vm265, %v3464, 0
      %v3529 = vsel %vm265, %v3466, 0
      %v3531 = vsel %vm265, %v3468, 0
      %v3533 = vsel %vm265, %v3470, 0
      %v3535 = vsel %vm265, %v3472, 0
      %v3537 = vsel %vm265, %v3474, 0
      %v3540 = vsel %vm362, %v3410, 0
      %3542 = vmatpush.msra.mxu0 0.0
      %3543 = vmatpush.msra.mxu0 0.0
      %3544 = vmatpush.msra.mxu0 0.0
      %3545 = vmatpush.msra.mxu0 0.0
      %3546 = vmatpush.msra.mxu0 0.0
      %3547 = vmatpush.msra.mxu0 0.0
      %3548 = vmatpush.msra.mxu0 0.0
      %3549 = vmatpush.msra.mxu0 0.0
      %3550 = vmatpush.msra.mxu0 0.0
      %3551 = vmatpush.msra.mxu0 0.0
      %3552 = vmatpush.msra.mxu0 0.0
      %3553 = vmatpush.msra.mxu0 0.0
      %3554 = vmatpush.msra.mxu0 0.0
      %3555 = vmatpush.msra.mxu0 0.0
      %3556 = vmatpush.msra.mxu0 0.0
      %3557 = vmatpush.msra.mxu0 %v3540
      %3558 = vmatmul.f32.gmra.mxu0 %v3475
      %v3559 = vpop.f32.mrf.mxu0
      %v3560 = vadd.f32 0.0, %v3559
      %3561 = vmatmul.f32.gmra.mxu0 %v3477
      %v3562 = vpop.f32.mrf.mxu0
      %v3563 = vadd.f32 0.0, %v3562
      %3564 = vmatmul.f32.gmra.mxu0 %v3479
      %v3565 = vpop.f32.mrf.mxu0
      %v3566 = vadd.f32 0.0, %v3565
      %3567 = vmatmul.f32.gmra.mxu0 %v3481
      %v3568 = vpop.f32.mrf.mxu0
      %v3569 = vadd.f32 0.0, %v3568
      %3570 = vmatmul.f32.gmra.mxu0 %v3483
      %v3571 = vpop.f32.mrf.mxu0
      %v3572 = vadd.f32 0.0, %v3571
      %3573 = vmatmul.f32.gmra.mxu0 %v3485
      %v3574 = vpop.f32.mrf.mxu0
      %v3575 = vadd.f32 0.0, %v3574
      %3576 = vmatmul.f32.gmra.mxu0 %v3487
      %v3577 = vpop.f32.mrf.mxu0
      %v3578 = vadd.f32 0.0, %v3577
      %3579 = vmatmul.f32.gmra.mxu0 %v3489
      %v3580 = vpop.f32.mrf.mxu0
      %v3581 = vadd.f32 0.0, %v3580
      %3582 = vmatmul.f32.gmra.mxu0 %v3491
      %v3583 = vpop.f32.mrf.mxu0
      %v3584 = vadd.f32 0.0, %v3583
      %3585 = vmatmul.f32.gmra.mxu0 %v3493
      %v3586 = vpop.f32.mrf.mxu0
      %v3587 = vadd.f32 0.0, %v3586
      %3588 = vmatmul.f32.gmra.mxu0 %v3495
      %v3589 = vpop.f32.mrf.mxu0
      %v3590 = vadd.f32 0.0, %v3589
      %3591 = vmatmul.f32.gmra.mxu0 %v3497
      %v3592 = vpop.f32.mrf.mxu0
      %v3593 = vadd.f32 0.0, %v3592
      %3594 = vmatmul.f32.gmra.mxu0 %v3499
      %v3595 = vpop.f32.mrf.mxu0
      %v3596 = vadd.f32 0.0, %v3595
      %3597 = vmatmul.f32.gmra.mxu0 %v3501
      %v3598 = vpop.f32.mrf.mxu0
      %v3599 = vadd.f32 0.0, %v3598
      %3600 = vmatmul.f32.gmra.mxu0 %v3503
      %v3601 = vpop.f32.mrf.mxu0
      %v3602 = vadd.f32 0.0, %v3601
      %3603 = vmatmul.f32.gmra.mxu0 %v3505
      %v3604 = vpop.f32.mrf.mxu0
      %v3605 = vadd.f32 0.0, %v3604
      %3606 = vmatmul.f32.gmra.mxu0 %v3507
      %v3607 = vpop.f32.mrf.mxu0
      %v3608 = vadd.f32 0.0, %v3607
      %3609 = vmatmul.f32.gmra.mxu0 %v3509
      %v3610 = vpop.f32.mrf.mxu0
      %v3611 = vadd.f32 0.0, %v3610
      %3612 = vmatmul.f32.gmra.mxu0 %v3511
      %v3613 = vpop.f32.mrf.mxu0
      %v3614 = vadd.f32 0.0, %v3613
      %3615 = vmatmul.f32.gmra.mxu0 %v3513
      %v3616 = vpop.f32.mrf.mxu0
      %v3617 = vadd.f32 0.0, %v3616
      %3618 = vmatmul.f32.gmra.mxu0 %v3515
      %v3619 = vpop.f32.mrf.mxu0
      %v3620 = vadd.f32 0.0, %v3619
      %3621 = vmatmul.f32.gmra.mxu0 %v3517
      %v3622 = vpop.f32.mrf.mxu0
      %v3623 = vadd.f32 0.0, %v3622
      %3624 = vmatmul.f32.gmra.mxu0 %v3519
      %v3625 = vpop.f32.mrf.mxu0
      %v3626 = vadd.f32 0.0, %v3625
      %3627 = vmatmul.f32.gmra.mxu0 %v3521
      %v3628 = vpop.f32.mrf.mxu0
      %v3629 = vadd.f32 0.0, %v3628
      %3630 = vmatmul.f32.gmra.mxu0 %v3523
      %v3631 = vpop.f32.mrf.mxu0
      %v3632 = vadd.f32 0.0, %v3631
      %3633 = vmatmul.f32.gmra.mxu0 %v3525
      %v3634 = vpop.f32.mrf.mxu0
      %v3635 = vadd.f32 0.0, %v3634
      %3636 = vmatmul.f32.gmra.mxu0 %v3527
      %v3637 = vpop.f32.mrf.mxu0
      %v3638 = vadd.f32 0.0, %v3637
      %3639 = vmatmul.f32.gmra.mxu0 %v3529
      %v3640 = vpop.f32.mrf.mxu0
      %v3641 = vadd.f32 0.0, %v3640
      %3642 = vmatmul.f32.gmra.mxu0 %v3531
      %v3643 = vpop.f32.mrf.mxu0
      %v3644 = vadd.f32 0.0, %v3643
      %3645 = vmatmul.f32.gmra.mxu0 %v3533
      %v3646 = vpop.f32.mrf.mxu0
      %v3647 = vadd.f32 0.0, %v3646
      %3648 = vmatmul.f32.gmra.mxu0 %v3535
      %v3649 = vpop.f32.mrf.mxu0
      %v3650 = vadd.f32 0.0, %v3649
      %3651 = vmatmul.f32.gmra.mxu0 %v3537
      %v3652 = vpop.f32.mrf.mxu0
      %v3653 = vadd.f32 0.0, %v3652
      %3654 = vdwg.mxu0
      %v3655 = vadd.f32 %v3377, %v3560
      %v3656 = vadd.f32 %v3378, %v3563
      %v3657 = vadd.f32 %v3379, %v3566
      %v3658 = vadd.f32 %v3380, %v3569
      %v3659 = vadd.f32 %v3381, %v3572
      %v3660 = vadd.f32 %v3382, %v3575
      %v3661 = vadd.f32 %v3383, %v3578
      %v3662 = vadd.f32 %v3384, %v3581
      %v3663 = vadd.f32 %v3385, %v3584
      %v3664 = vadd.f32 %v3386, %v3587
      %v3665 = vadd.f32 %v3387, %v3590
      %v3666 = vadd.f32 %v3388, %v3593
      %v3667 = vadd.f32 %v3389, %v3596
      %v3668 = vadd.f32 %v3390, %v3599
      %v3669 = vadd.f32 %v3391, %v3602
      %v3670 = vadd.f32 %v3392, %v3605
      %v3671 = vadd.f32 %v3393, %v3608
      %v3672 = vadd.f32 %v3394, %v3611
      %v3673 = vadd.f32 %v3395, %v3614
      %v3674 = vadd.f32 %v3396, %v3617
      %v3675 = vadd.f32 %v3397, %v3620
      %v3676 = vadd.f32 %v3398, %v3623
      %v3677 = vadd.f32 %v3399, %v3626
      %v3678 = vadd.f32 %v3400, %v3629
      %v3679 = vadd.f32 %v3401, %v3632
      %v3680 = vadd.f32 %v3402, %v3635
      %v3681 = vadd.f32 %v3403, %v3638
      %v3682 = vadd.f32 %v3404, %v3641
      %v3683 = vadd.f32 %v3405, %v3644
      %v3684 = vadd.f32 %v3406, %v3647
      %v3685 = vadd.f32 %v3407, %v3650
      %v3686 = vadd.f32 %v3408, %v3653
      %s3687 = scalar_lea.vmem %s1, 36
      %v3688 = vld [vmem:[%s3687] sm:$0xf]
      %3689 = vrot.lane.b32.xlu0 %v1248, 124
      %v3690 = vpop.permute.xlu0 %3689
      %3691 = vrot.lane.b32.xlu0 %v1249, 124
      %v3692 = vpop.permute.xlu0 %3691
      %3693 = vrot.lane.b32.xlu0 %v1250, 124
      %v3694 = vpop.permute.xlu0 %3693
      %3695 = vrot.lane.b32.xlu0 %v1251, 124
      %v3696 = vpop.permute.xlu0 %3695
      %3697 = vrot.lane.b32.xlu0 %v1252, 124
      %v3698 = vpop.permute.xlu0 %3697
      %3699 = vrot.lane.b32.xlu0 %v1253, 124
      %v3700 = vpop.permute.xlu0 %3699
      %3701 = vrot.lane.b32.xlu0 %v1254, 124
      %v3702 = vpop.permute.xlu0 %3701
      %3703 = vrot.lane.b32.xlu0 %v1255, 124
      %v3704 = vpop.permute.xlu0 %3703
      %3705 = vrot.lane.b32.xlu0 %v1256, 124
      %v3706 = vpop.permute.xlu0 %3705
      %3707 = vrot.lane.b32.xlu0 %v1257, 124
      %v3708 = vpop.permute.xlu0 %3707
      %3709 = vrot.lane.b32.xlu0 %v1258, 124
      %v3710 = vpop.permute.xlu0 %3709
      %3711 = vrot.lane.b32.xlu0 %v1259, 124
      %v3712 = vpop.permute.xlu0 %3711
      %3713 = vrot.lane.b32.xlu0 %v1260, 124
      %v3714 = vpop.permute.xlu0 %3713
      %3715 = vrot.lane.b32.xlu0 %v1261, 124
      %v3716 = vpop.permute.xlu0 %3715
      %3717 = vrot.lane.b32.xlu0 %v1262, 124
      %v3718 = vpop.permute.xlu0 %3717
      %3719 = vrot.lane.b32.xlu0 %v1263, 124
      %v3720 = vpop.permute.xlu0 %3719
      %3721 = vrot.lane.b32.xlu0 %v1264, 124
      %v3722 = vpop.permute.xlu0 %3721
      %3723 = vrot.lane.b32.xlu0 %v1265, 124
      %v3724 = vpop.permute.xlu0 %3723
      %3725 = vrot.lane.b32.xlu0 %v1266, 124
      %v3726 = vpop.permute.xlu0 %3725
      %3727 = vrot.lane.b32.xlu0 %v1267, 124
      %v3728 = vpop.permute.xlu0 %3727
      %3729 = vrot.lane.b32.xlu0 %v1268, 124
      %v3730 = vpop.permute.xlu0 %3729
      %3731 = vrot.lane.b32.xlu0 %v1269, 124
      %v3732 = vpop.permute.xlu0 %3731
      %3733 = vrot.lane.b32.xlu0 %v1270, 124
      %v3734 = vpop.permute.xlu0 %3733
      %3735 = vrot.lane.b32.xlu0 %v1271, 124
      %v3736 = vpop.permute.xlu0 %3735
      %3737 = vrot.lane.b32.xlu0 %v1272, 124
      %v3738 = vpop.permute.xlu0 %3737
      %3739 = vrot.lane.b32.xlu0 %v1273, 124
      %v3740 = vpop.permute.xlu0 %3739
      %3741 = vrot.lane.b32.xlu0 %v1274, 124
      %v3742 = vpop.permute.xlu0 %3741
      %3743 = vrot.lane.b32.xlu0 %v1275, 124
      %v3744 = vpop.permute.xlu0 %3743
      %3745 = vrot.lane.b32.xlu0 %v1276, 124
      %v3746 = vpop.permute.xlu0 %3745
      %3747 = vrot.lane.b32.xlu0 %v1277, 124
      %v3748 = vpop.permute.xlu0 %3747
      %3749 = vrot.lane.b32.xlu0 %v1278, 124
      %v3750 = vpop.permute.xlu0 %3749
      %3751 = vrot.lane.b32.xlu0 %v1279, 124
      %v3752 = vpop.permute.xlu0 %3751
      %v3753 = vsel %vm265, %v3690, 0
      %v3755 = vsel %vm265, %v3692, 0
      %v3757 = vsel %vm265, %v3694, 0
      %v3759 = vsel %vm265, %v3696, 0
      %v3761 = vsel %vm265, %v3698, 0
      %v3763 = vsel %vm265, %v3700, 0
      %v3765 = vsel %vm265, %v3702, 0
      %v3767 = vsel %vm265, %v3704, 0
      %v3769 = vsel %vm265, %v3706, 0
      %v3771 = vsel %vm265, %v3708, 0
      %v3773 = vsel %vm265, %v3710, 0
      %v3775 = vsel %vm265, %v3712, 0
      %v3777 = vsel %vm265, %v3714, 0
      %v3779 = vsel %vm265, %v3716, 0
      %v3781 = vsel %vm265, %v3718, 0
      %v3783 = vsel %vm265, %v3720, 0
      %v3785 = vsel %vm265, %v3722, 0
      %v3787 = vsel %vm265, %v3724, 0
      %v3789 = vsel %vm265, %v3726, 0
      %v3791 = vsel %vm265, %v3728, 0
      %v3793 = vsel %vm265, %v3730, 0
      %v3795 = vsel %vm265, %v3732, 0
      %v3797 = vsel %vm265, %v3734, 0
      %v3799 = vsel %vm265, %v3736, 0
      %v3801 = vsel %vm265, %v3738, 0
      %v3803 = vsel %vm265, %v3740, 0
      %v3805 = vsel %vm265, %v3742, 0
      %v3807 = vsel %vm265, %v3744, 0
      %v3809 = vsel %vm265, %v3746, 0
      %v3811 = vsel %vm265, %v3748, 0
      %v3813 = vsel %vm265, %v3750, 0
      %v3815 = vsel %vm265, %v3752, 0
      %v3818 = vsel %vm362, %v3688, 0
      %3820 = vmatpush.msra.mxu0 0.0
      %3821 = vmatpush.msra.mxu0 0.0
      %3822 = vmatpush.msra.mxu0 0.0
      %3823 = vmatpush.msra.mxu0 0.0
      %3824 = vmatpush.msra.mxu0 0.0
      %3825 = vmatpush.msra.mxu0 0.0
      %3826 = vmatpush.msra.mxu0 0.0
      %3827 = vmatpush.msra.mxu0 0.0
      %3828 = vmatpush.msra.mxu0 0.0
      %3829 = vmatpush.msra.mxu0 0.0
      %3830 = vmatpush.msra.mxu0 0.0
      %3831 = vmatpush.msra.mxu0 0.0
      %3832 = vmatpush.msra.mxu0 0.0
      %3833 = vmatpush.msra.mxu0 0.0
      %3834 = vmatpush.msra.mxu0 0.0
      %3835 = vmatpush.msra.mxu0 %v3818
      %3836 = vmatmul.f32.gmra.mxu0 %v3753
      %v3837 = vpop.f32.mrf.mxu0
      %v3838 = vadd.f32 0.0, %v3837
      %3839 = vmatmul.f32.gmra.mxu0 %v3755
      %v3840 = vpop.f32.mrf.mxu0
      %v3841 = vadd.f32 0.0, %v3840
      %3842 = vmatmul.f32.gmra.mxu0 %v3757
      %v3843 = vpop.f32.mrf.mxu0
      %v3844 = vadd.f32 0.0, %v3843
      %3845 = vmatmul.f32.gmra.mxu0 %v3759
      %v3846 = vpop.f32.mrf.mxu0
      %v3847 = vadd.f32 0.0, %v3846
      %3848 = vmatmul.f32.gmra.mxu0 %v3761
      %v3849 = vpop.f32.mrf.mxu0
      %v3850 = vadd.f32 0.0, %v3849
      %3851 = vmatmul.f32.gmra.mxu0 %v3763
      %v3852 = vpop.f32.mrf.mxu0
      %v3853 = vadd.f32 0.0, %v3852
      %3854 = vmatmul.f32.gmra.mxu0 %v3765
      %v3855 = vpop.f32.mrf.mxu0
      %v3856 = vadd.f32 0.0, %v3855
      %3857 = vmatmul.f32.gmra.mxu0 %v3767
      %v3858 = vpop.f32.mrf.mxu0
      %v3859 = vadd.f32 0.0, %v3858
      %3860 = vmatmul.f32.gmra.mxu0 %v3769
      %v3861 = vpop.f32.mrf.mxu0
      %v3862 = vadd.f32 0.0, %v3861
      %3863 = vmatmul.f32.gmra.mxu0 %v3771
      %v3864 = vpop.f32.mrf.mxu0
      %v3865 = vadd.f32 0.0, %v3864
      %3866 = vmatmul.f32.gmra.mxu0 %v3773
      %v3867 = vpop.f32.mrf.mxu0
      %v3868 = vadd.f32 0.0, %v3867
      %3869 = vmatmul.f32.gmra.mxu0 %v3775
      %v3870 = vpop.f32.mrf.mxu0
      %v3871 = vadd.f32 0.0, %v3870
      %3872 = vmatmul.f32.gmra.mxu0 %v3777
      %v3873 = vpop.f32.mrf.mxu0
      %v3874 = vadd.f32 0.0, %v3873
      %3875 = vmatmul.f32.gmra.mxu0 %v3779
      %v3876 = vpop.f32.mrf.mxu0
      %v3877 = vadd.f32 0.0, %v3876
      %3878 = vmatmul.f32.gmra.mxu0 %v3781
      %v3879 = vpop.f32.mrf.mxu0
      %v3880 = vadd.f32 0.0, %v3879
      %3881 = vmatmul.f32.gmra.mxu0 %v3783
      %v3882 = vpop.f32.mrf.mxu0
      %v3883 = vadd.f32 0.0, %v3882
      %3884 = vmatmul.f32.gmra.mxu0 %v3785
      %v3885 = vpop.f32.mrf.mxu0
      %v3886 = vadd.f32 0.0, %v3885
      %3887 = vmatmul.f32.gmra.mxu0 %v3787
      %v3888 = vpop.f32.mrf.mxu0
      %v3889 = vadd.f32 0.0, %v3888
      %3890 = vmatmul.f32.gmra.mxu0 %v3789
      %v3891 = vpop.f32.mrf.mxu0
      %v3892 = vadd.f32 0.0, %v3891
      %3893 = vmatmul.f32.gmra.mxu0 %v3791
      %v3894 = vpop.f32.mrf.mxu0
      %v3895 = vadd.f32 0.0, %v3894
      %3896 = vmatmul.f32.gmra.mxu0 %v3793
      %v3897 = vpop.f32.mrf.mxu0
      %v3898 = vadd.f32 0.0, %v3897
      %3899 = vmatmul.f32.gmra.mxu0 %v3795
      %v3900 = vpop.f32.mrf.mxu0
      %v3901 = vadd.f32 0.0, %v3900
      %3902 = vmatmul.f32.gmra.mxu0 %v3797
      %v3903 = vpop.f32.mrf.mxu0
      %v3904 = vadd.f32 0.0, %v3903
      %3905 = vmatmul.f32.gmra.mxu0 %v3799
      %v3906 = vpop.f32.mrf.mxu0
      %v3907 = vadd.f32 0.0, %v3906
      %3908 = vmatmul.f32.gmra.mxu0 %v3801
      %v3909 = vpop.f32.mrf.mxu0
      %v3910 = vadd.f32 0.0, %v3909
      %3911 = vmatmul.f32.gmra.mxu0 %v3803
      %v3912 = vpop.f32.mrf.mxu0
      %v3913 = vadd.f32 0.0, %v3912
      %3914 = vmatmul.f32.gmra.mxu0 %v3805
      %v3915 = vpop.f32.mrf.mxu0
      %v3916 = vadd.f32 0.0, %v3915
      %3917 = vmatmul.f32.gmra.mxu0 %v3807
      %v3918 = vpop.f32.mrf.mxu0
      %v3919 = vadd.f32 0.0, %v3918
      %3920 = vmatmul.f32.gmra.mxu0 %v3809
      %v3921 = vpop.f32.mrf.mxu0
      %v3922 = vadd.f32 0.0, %v3921
      %3923 = vmatmul.f32.gmra.mxu0 %v3811
      %v3924 = vpop.f32.mrf.mxu0
      %v3925 = vadd.f32 0.0, %v3924
      %3926 = vmatmul.f32.gmra.mxu0 %v3813
      %v3927 = vpop.f32.mrf.mxu0
      %v3928 = vadd.f32 0.0, %v3927
      %3929 = vmatmul.f32.gmra.mxu0 %v3815
      %v3930 = vpop.f32.mrf.mxu0
      %v3931 = vadd.f32 0.0, %v3930
      %3932 = vdwg.mxu0
      %v3933 = vadd.f32 %v3655, %v3838
      %v3934 = vadd.f32 %v3656, %v3841
      %v3935 = vadd.f32 %v3657, %v3844
      %v3936 = vadd.f32 %v3658, %v3847
      %v3937 = vadd.f32 %v3659, %v3850
      %v3938 = vadd.f32 %v3660, %v3853
      %v3939 = vadd.f32 %v3661, %v3856
      %v3940 = vadd.f32 %v3662, %v3859
      %v3941 = vadd.f32 %v3663, %v3862
      %v3942 = vadd.f32 %v3664, %v3865
      %v3943 = vadd.f32 %v3665, %v3868
      %v3944 = vadd.f32 %v3666, %v3871
      %v3945 = vadd.f32 %v3667, %v3874
      %v3946 = vadd.f32 %v3668, %v3877
      %v3947 = vadd.f32 %v3669, %v3880
      %v3948 = vadd.f32 %v3670, %v3883
      %v3949 = vadd.f32 %v3671, %v3886
      %v3950 = vadd.f32 %v3672, %v3889
      %v3951 = vadd.f32 %v3673, %v3892
      %v3952 = vadd.f32 %v3674, %v3895
      %v3953 = vadd.f32 %v3675, %v3898
      %v3954 = vadd.f32 %v3676, %v3901
      %v3955 = vadd.f32 %v3677, %v3904
      %v3956 = vadd.f32 %v3678, %v3907
      %v3957 = vadd.f32 %v3679, %v3910
      %v3958 = vadd.f32 %v3680, %v3913
      %v3959 = vadd.f32 %v3681, %v3916
      %v3960 = vadd.f32 %v3682, %v3919
      %v3961 = vadd.f32 %v3683, %v3922
      %v3962 = vadd.f32 %v3684, %v3925
      %v3963 = vadd.f32 %v3685, %v3928
      %v3964 = vadd.f32 %v3686, %v3931
      %s3965 = scalar_lea.vmem %s1, 44
      %v3966 = vld [vmem:[%s3965] sm:$0xf]
      %3967 = vrot.lane.b32.xlu0 %v1526, 124
      %v3968 = vpop.permute.xlu0 %3967
      %3969 = vrot.lane.b32.xlu0 %v1527, 124
      %v3970 = vpop.permute.xlu0 %3969
      %3971 = vrot.lane.b32.xlu0 %v1528, 124
      %v3972 = vpop.permute.xlu0 %3971
      %3973 = vrot.lane.b32.xlu0 %v1529, 124
      %v3974 = vpop.permute.xlu0 %3973
      %3975 = vrot.lane.b32.xlu0 %v1530, 124
      %v3976 = vpop.permute.xlu0 %3975
      %3977 = vrot.lane.b32.xlu0 %v1531, 124
      %v3978 = vpop.permute.xlu0 %3977
      %3979 = vrot.lane.b32.xlu0 %v1532, 124
      %v3980 = vpop.permute.xlu0 %3979
      %3981 = vrot.lane.b32.xlu0 %v1533, 124
      %v3982 = vpop.permute.xlu0 %3981
      %3983 = vrot.lane.b32.xlu0 %v1534, 124
      %v3984 = vpop.permute.xlu0 %3983
      %3985 = vrot.lane.b32.xlu0 %v1535, 124
      %v3986 = vpop.permute.xlu0 %3985
      %3987 = vrot.lane.b32.xlu0 %v1536, 124
      %v3988 = vpop.permute.xlu0 %3987
      %3989 = vrot.lane.b32.xlu0 %v1537, 124
      %v3990 = vpop.permute.xlu0 %3989
      %3991 = vrot.lane.b32.xlu0 %v1538, 124
      %v3992 = vpop.permute.xlu0 %3991
      %3993 = vrot.lane.b32.xlu0 %v1539, 124
      %v3994 = vpop.permute.xlu0 %3993
      %3995 = vrot.lane.b32.xlu0 %v1540, 124
      %v3996 = vpop.permute.xlu0 %3995
      %3997 = vrot.lane.b32.xlu0 %v1541, 124
      %v3998 = vpop.permute.xlu0 %3997
      %3999 = vrot.lane.b32.xlu0 %v1542, 124
      %v4000 = vpop.permute.xlu0 %3999
      %4001 = vrot.lane.b32.xlu0 %v1543, 124
      %v4002 = vpop.permute.xlu0 %4001
      %4003 = vrot.lane.b32.xlu0 %v1544, 124
      %v4004 = vpop.permute.xlu0 %4003
      %4005 = vrot.lane.b32.xlu0 %v1545, 124
      %v4006 = vpop.permute.xlu0 %4005
      %4007 = vrot.lane.b32.xlu0 %v1546, 124
      %v4008 = vpop.permute.xlu0 %4007
      %4009 = vrot.lane.b32.xlu0 %v1547, 124
      %v4010 = vpop.permute.xlu0 %4009
      %4011 = vrot.lane.b32.xlu0 %v1548, 124
      %v4012 = vpop.permute.xlu0 %4011
      %4013 = vrot.lane.b32.xlu0 %v1549, 124
      %v4014 = vpop.permute.xlu0 %4013
      %4015 = vrot.lane.b32.xlu0 %v1550, 124
      %v4016 = vpop.permute.xlu0 %4015
      %4017 = vrot.lane.b32.xlu0 %v1551, 124
      %v4018 = vpop.permute.xlu0 %4017
      %4019 = vrot.lane.b32.xlu0 %v1552, 124
      %v4020 = vpop.permute.xlu0 %4019
      %4021 = vrot.lane.b32.xlu0 %v1553, 124
      %v4022 = vpop.permute.xlu0 %4021
      %4023 = vrot.lane.b32.xlu0 %v1554, 124
      %v4024 = vpop.permute.xlu0 %4023
      %4025 = vrot.lane.b32.xlu0 %v1555, 124
      %v4026 = vpop.permute.xlu0 %4025
      %4027 = vrot.lane.b32.xlu0 %v1556, 124
      %v4028 = vpop.permute.xlu0 %4027
      %4029 = vrot.lane.b32.xlu0 %v1557, 124
      %v4030 = vpop.permute.xlu0 %4029
      %v4031 = vsel %vm265, %v3968, 0
      %v4033 = vsel %vm265, %v3970, 0
      %v4035 = vsel %vm265, %v3972, 0
      %v4037 = vsel %vm265, %v3974, 0
      %v4039 = vsel %vm265, %v3976, 0
      %v4041 = vsel %vm265, %v3978, 0
      %v4043 = vsel %vm265, %v3980, 0
      %v4045 = vsel %vm265, %v3982, 0
      %v4047 = vsel %vm265, %v3984, 0
      %v4049 = vsel %vm265, %v3986, 0
      %v4051 = vsel %vm265, %v3988, 0
      %v4053 = vsel %vm265, %v3990, 0
      %v4055 = vsel %vm265, %v3992, 0
      %v4057 = vsel %vm265, %v3994, 0
      %v4059 = vsel %vm265, %v3996, 0
      %v4061 = vsel %vm265, %v3998, 0
      %v4063 = vsel %vm265, %v4000, 0
      %v4065 = vsel %vm265, %v4002, 0
      %v4067 = vsel %vm265, %v4004, 0
      %v4069 = vsel %vm265, %v4006, 0
      %v4071 = vsel %vm265, %v4008, 0
      %v4073 = vsel %vm265, %v4010, 0
      %v4075 = vsel %vm265, %v4012, 0
      %v4077 = vsel %vm265, %v4014, 0
      %v4079 = vsel %vm265, %v4016, 0
      %v4081 = vsel %vm265, %v4018, 0
      %v4083 = vsel %vm265, %v4020, 0
      %v4085 = vsel %vm265, %v4022, 0
      %v4087 = vsel %vm265, %v4024, 0
      %v4089 = vsel %vm265, %v4026, 0
      %v4091 = vsel %vm265, %v4028, 0
      %v4093 = vsel %vm265, %v4030, 0
      %v4096 = vsel %vm362, %v3966, 0
      %4098 = vmatpush.msra.mxu0 0.0
      %4099 = vmatpush.msra.mxu0 0.0
      %4100 = vmatpush.msra.mxu0 0.0
      %4101 = vmatpush.msra.mxu0 0.0
      %4102 = vmatpush.msra.mxu0 0.0
      %4103 = vmatpush.msra.mxu0 0.0
      %4104 = vmatpush.msra.mxu0 0.0
      %4105 = vmatpush.msra.mxu0 0.0
      %4106 = vmatpush.msra.mxu0 0.0
      %4107 = vmatpush.msra.mxu0 0.0
      %4108 = vmatpush.msra.mxu0 0.0
      %4109 = vmatpush.msra.mxu0 0.0
      %4110 = vmatpush.msra.mxu0 0.0
      %4111 = vmatpush.msra.mxu0 0.0
      %4112 = vmatpush.msra.mxu0 0.0
      %4113 = vmatpush.msra.mxu0 %v4096
      %4114 = vmatmul.f32.gmra.mxu0 %v4031
      %v4115 = vpop.f32.mrf.mxu0
      %v4116 = vadd.f32 0.0, %v4115
      %4117 = vmatmul.f32.gmra.mxu0 %v4033
      %v4118 = vpop.f32.mrf.mxu0
      %v4119 = vadd.f32 0.0, %v4118
      %4120 = vmatmul.f32.gmra.mxu0 %v4035
      %v4121 = vpop.f32.mrf.mxu0
      %v4122 = vadd.f32 0.0, %v4121
      %4123 = vmatmul.f32.gmra.mxu0 %v4037
      %v4124 = vpop.f32.mrf.mxu0
      %v4125 = vadd.f32 0.0, %v4124
      %4126 = vmatmul.f32.gmra.mxu0 %v4039
      %v4127 = vpop.f32.mrf.mxu0
      %v4128 = vadd.f32 0.0, %v4127
      %4129 = vmatmul.f32.gmra.mxu0 %v4041
      %v4130 = vpop.f32.mrf.mxu0
      %v4131 = vadd.f32 0.0, %v4130
      %4132 = vmatmul.f32.gmra.mxu0 %v4043
      %v4133 = vpop.f32.mrf.mxu0
      %v4134 = vadd.f32 0.0, %v4133
      %4135 = vmatmul.f32.gmra.mxu0 %v4045
      %v4136 = vpop.f32.mrf.mxu0
      %v4137 = vadd.f32 0.0, %v4136
      %4138 = vmatmul.f32.gmra.mxu0 %v4047
      %v4139 = vpop.f32.mrf.mxu0
      %v4140 = vadd.f32 0.0, %v4139
      %4141 = vmatmul.f32.gmra.mxu0 %v4049
      %v4142 = vpop.f32.mrf.mxu0
      %v4143 = vadd.f32 0.0, %v4142
      %4144 = vmatmul.f32.gmra.mxu0 %v4051
      %v4145 = vpop.f32.mrf.mxu0
      %v4146 = vadd.f32 0.0, %v4145
      %4147 = vmatmul.f32.gmra.mxu0 %v4053
      %v4148 = vpop.f32.mrf.mxu0
      %v4149 = vadd.f32 0.0, %v4148
      %4150 = vmatmul.f32.gmra.mxu0 %v4055
      %v4151 = vpop.f32.mrf.mxu0
      %v4152 = vadd.f32 0.0, %v4151
      %4153 = vmatmul.f32.gmra.mxu0 %v4057
      %v4154 = vpop.f32.mrf.mxu0
      %v4155 = vadd.f32 0.0, %v4154
      %4156 = vmatmul.f32.gmra.mxu0 %v4059
      %v4157 = vpop.f32.mrf.mxu0
      %v4158 = vadd.f32 0.0, %v4157
      %4159 = vmatmul.f32.gmra.mxu0 %v4061
      %v4160 = vpop.f32.mrf.mxu0
      %v4161 = vadd.f32 0.0, %v4160
      %4162 = vmatmul.f32.gmra.mxu0 %v4063
      %v4163 = vpop.f32.mrf.mxu0
      %v4164 = vadd.f32 0.0, %v4163
      %4165 = vmatmul.f32.gmra.mxu0 %v4065
      %v4166 = vpop.f32.mrf.mxu0
      %v4167 = vadd.f32 0.0, %v4166
      %4168 = vmatmul.f32.gmra.mxu0 %v4067
      %v4169 = vpop.f32.mrf.mxu0
      %v4170 = vadd.f32 0.0, %v4169
      %4171 = vmatmul.f32.gmra.mxu0 %v4069
      %v4172 = vpop.f32.mrf.mxu0
      %v4173 = vadd.f32 0.0, %v4172
      %4174 = vmatmul.f32.gmra.mxu0 %v4071
      %v4175 = vpop.f32.mrf.mxu0
      %v4176 = vadd.f32 0.0, %v4175
      %4177 = vmatmul.f32.gmra.mxu0 %v4073
      %v4178 = vpop.f32.mrf.mxu0
      %v4179 = vadd.f32 0.0, %v4178
      %4180 = vmatmul.f32.gmra.mxu0 %v4075
      %v4181 = vpop.f32.mrf.mxu0
      %v4182 = vadd.f32 0.0, %v4181
      %4183 = vmatmul.f32.gmra.mxu0 %v4077
      %v4184 = vpop.f32.mrf.mxu0
      %v4185 = vadd.f32 0.0, %v4184
      %4186 = vmatmul.f32.gmra.mxu0 %v4079
      %v4187 = vpop.f32.mrf.mxu0
      %v4188 = vadd.f32 0.0, %v4187
      %4189 = vmatmul.f32.gmra.mxu0 %v4081
      %v4190 = vpop.f32.mrf.mxu0
      %v4191 = vadd.f32 0.0, %v4190
      %4192 = vmatmul.f32.gmra.mxu0 %v4083
      %v4193 = vpop.f32.mrf.mxu0
      %v4194 = vadd.f32 0.0, %v4193
      %4195 = vmatmul.f32.gmra.mxu0 %v4085
      %v4196 = vpop.f32.mrf.mxu0
      %v4197 = vadd.f32 0.0, %v4196
      %4198 = vmatmul.f32.gmra.mxu0 %v4087
      %v4199 = vpop.f32.mrf.mxu0
      %v4200 = vadd.f32 0.0, %v4199
      %4201 = vmatmul.f32.gmra.mxu0 %v4089
      %v4202 = vpop.f32.mrf.mxu0
      %v4203 = vadd.f32 0.0, %v4202
      %4204 = vmatmul.f32.gmra.mxu0 %v4091
      %v4205 = vpop.f32.mrf.mxu0
      %v4206 = vadd.f32 0.0, %v4205
      %4207 = vmatmul.f32.gmra.mxu0 %v4093
      %v4208 = vpop.f32.mrf.mxu0
      %v4209 = vadd.f32 0.0, %v4208
      %4210 = vdwg.mxu0
      %v4211 = vadd.f32 %v3933, %v4116
      %v4212 = vadd.f32 %v3934, %v4119
      %v4213 = vadd.f32 %v3935, %v4122
      %v4214 = vadd.f32 %v3936, %v4125
      %v4215 = vadd.f32 %v3937, %v4128
      %v4216 = vadd.f32 %v3938, %v4131
      %v4217 = vadd.f32 %v3939, %v4134
      %v4218 = vadd.f32 %v3940, %v4137
      %v4219 = vadd.f32 %v3941, %v4140
      %v4220 = vadd.f32 %v3942, %v4143
      %v4221 = vadd.f32 %v3943, %v4146
      %v4222 = vadd.f32 %v3944, %v4149
      %v4223 = vadd.f32 %v3945, %v4152
      %v4224 = vadd.f32 %v3946, %v4155
      %v4225 = vadd.f32 %v3947, %v4158
      %v4226 = vadd.f32 %v3948, %v4161
      %v4227 = vadd.f32 %v3949, %v4164
      %v4228 = vadd.f32 %v3950, %v4167
      %v4229 = vadd.f32 %v3951, %v4170
      %v4230 = vadd.f32 %v3952, %v4173
      %v4231 = vadd.f32 %v3953, %v4176
      %v4232 = vadd.f32 %v3954, %v4179
      %v4233 = vadd.f32 %v3955, %v4182
      %v4234 = vadd.f32 %v3956, %v4185
      %v4235 = vadd.f32 %v3957, %v4188
      %v4236 = vadd.f32 %v3958, %v4191
      %v4237 = vadd.f32 %v3959, %v4194
      %v4238 = vadd.f32 %v3960, %v4197
      %v4239 = vadd.f32 %v3961, %v4200
      %v4240 = vadd.f32 %v3962, %v4203
      %v4241 = vadd.f32 %v3963, %v4206
      %v4242 = vadd.f32 %v3964, %v4209
      %s4243 = scalar_lea.vmem %s1, 52
      %v4244 = vld [vmem:[%s4243] sm:$0xf]
      %4245 = vrot.lane.b32.xlu0 %v1805, 124
      %v4246 = vpop.permute.xlu0 %4245
      %4247 = vrot.lane.b32.xlu0 %v1806, 124
      %v4248 = vpop.permute.xlu0 %4247
      %4249 = vrot.lane.b32.xlu0 %v1807, 124
      %v4250 = vpop.permute.xlu0 %4249
      %4251 = vrot.lane.b32.xlu0 %v1808, 124
      %v4252 = vpop.permute.xlu0 %4251
      %4253 = vrot.lane.b32.xlu0 %v1809, 124
      %v4254 = vpop.permute.xlu0 %4253
      %4255 = vrot.lane.b32.xlu0 %v1810, 124
      %v4256 = vpop.permute.xlu0 %4255
      %4257 = vrot.lane.b32.xlu0 %v1811, 124
      %v4258 = vpop.permute.xlu0 %4257
      %4259 = vrot.lane.b32.xlu0 %v1812, 124
      %v4260 = vpop.permute.xlu0 %4259
      %4261 = vrot.lane.b32.xlu0 %v1813, 124
      %v4262 = vpop.permute.xlu0 %4261
      %4263 = vrot.lane.b32.xlu0 %v1814, 124
      %v4264 = vpop.permute.xlu0 %4263
      %4265 = vrot.lane.b32.xlu0 %v1815, 124
      %v4266 = vpop.permute.xlu0 %4265
      %4267 = vrot.lane.b32.xlu0 %v1816, 124
      %v4268 = vpop.permute.xlu0 %4267
      %4269 = vrot.lane.b32.xlu0 %v1817, 124
      %v4270 = vpop.permute.xlu0 %4269
      %4271 = vrot.lane.b32.xlu0 %v1818, 124
      %v4272 = vpop.permute.xlu0 %4271
      %4273 = vrot.lane.b32.xlu0 %v1819, 124
      %v4274 = vpop.permute.xlu0 %4273
      %4275 = vrot.lane.b32.xlu0 %v1820, 124
      %v4276 = vpop.permute.xlu0 %4275
      %4277 = vrot.lane.b32.xlu0 %v1821, 124
      %v4278 = vpop.permute.xlu0 %4277
      %4279 = vrot.lane.b32.xlu0 %v1822, 124
      %v4280 = vpop.permute.xlu0 %4279
      %4281 = vrot.lane.b32.xlu0 %v1823, 124
      %v4282 = vpop.permute.xlu0 %4281
      %4283 = vrot.lane.b32.xlu0 %v1824, 124
      %v4284 = vpop.permute.xlu0 %4283
      %4285 = vrot.lane.b32.xlu0 %v1825, 124
      %v4286 = vpop.permute.xlu0 %4285
      %4287 = vrot.lane.b32.xlu0 %v1826, 124
      %v4288 = vpop.permute.xlu0 %4287
      %4289 = vrot.lane.b32.xlu0 %v1827, 124
      %v4290 = vpop.permute.xlu0 %4289
      %4291 = vrot.lane.b32.xlu0 %v1828, 124
      %v4292 = vpop.permute.xlu0 %4291
      %4293 = vrot.lane.b32.xlu0 %v1829, 124
      %v4294 = vpop.permute.xlu0 %4293
      %4295 = vrot.lane.b32.xlu0 %v1830, 124
      %v4296 = vpop.permute.xlu0 %4295
      %4297 = vrot.lane.b32.xlu0 %v1831, 124
      %v4298 = vpop.permute.xlu0 %4297
      %4299 = vrot.lane.b32.xlu0 %v1832, 124
      %v4300 = vpop.permute.xlu0 %4299
      %4301 = vrot.lane.b32.xlu0 %v1833, 124
      %v4302 = vpop.permute.xlu0 %4301
      %4303 = vrot.lane.b32.xlu0 %v1834, 124
      %v4304 = vpop.permute.xlu0 %4303
      %4305 = vrot.lane.b32.xlu0 %v1835, 124
      %v4306 = vpop.permute.xlu0 %4305
      %4307 = vrot.lane.b32.xlu0 %v1836, 124
      %v4308 = vpop.permute.xlu0 %4307
      %v4309 = vsel %vm265, %v4246, 0
      %v4311 = vsel %vm265, %v4248, 0
      %v4313 = vsel %vm265, %v4250, 0
      %v4315 = vsel %vm265, %v4252, 0
      %v4317 = vsel %vm265, %v4254, 0
      %v4319 = vsel %vm265, %v4256, 0
      %v4321 = vsel %vm265, %v4258, 0
      %v4323 = vsel %vm265, %v4260, 0
      %v4325 = vsel %vm265, %v4262, 0
      %v4327 = vsel %vm265, %v4264, 0
      %v4329 = vsel %vm265, %v4266, 0
      %v4331 = vsel %vm265, %v4268, 0
      %v4333 = vsel %vm265, %v4270, 0
      %v4335 = vsel %vm265, %v4272, 0
      %v4337 = vsel %vm265, %v4274, 0
      %v4339 = vsel %vm265, %v4276, 0
      %v4341 = vsel %vm265, %v4278, 0
      %v4343 = vsel %vm265, %v4280, 0
      %v4345 = vsel %vm265, %v4282, 0
      %v4347 = vsel %vm265, %v4284, 0
      %v4349 = vsel %vm265, %v4286, 0
      %v4351 = vsel %vm265, %v4288, 0
      %v4353 = vsel %vm265, %v4290, 0
      %v4355 = vsel %vm265, %v4292, 0
      %v4357 = vsel %vm265, %v4294, 0
      %v4359 = vsel %vm265, %v4296, 0
      %v4361 = vsel %vm265, %v4298, 0
      %v4363 = vsel %vm265, %v4300, 0
      %v4365 = vsel %vm265, %v4302, 0
      %v4367 = vsel %vm265, %v4304, 0
      %v4369 = vsel %vm265, %v4306, 0
      %v4371 = vsel %vm265, %v4308, 0
      %v4374 = vsel %vm362, %v4244, 0
      %4376 = vmatpush.msra.mxu0 0.0
      %4377 = vmatpush.msra.mxu0 0.0
      %4378 = vmatpush.msra.mxu0 0.0
      %4379 = vmatpush.msra.mxu0 0.0
      %4380 = vmatpush.msra.mxu0 0.0
      %4381 = vmatpush.msra.mxu0 0.0
      %4382 = vmatpush.msra.mxu0 0.0
      %4383 = vmatpush.msra.mxu0 0.0
      %4384 = vmatpush.msra.mxu0 0.0
      %4385 = vmatpush.msra.mxu0 0.0
      %4386 = vmatpush.msra.mxu0 0.0
      %4387 = vmatpush.msra.mxu0 0.0
      %4388 = vmatpush.msra.mxu0 0.0
      %4389 = vmatpush.msra.mxu0 0.0
      %4390 = vmatpush.msra.mxu0 0.0
      %4391 = vmatpush.msra.mxu0 %v4374
      %4392 = vmatmul.f32.gmra.mxu0 %v4309
      %v4393 = vpop.f32.mrf.mxu0
      %v4394 = vadd.f32 0.0, %v4393
      %4395 = vmatmul.f32.gmra.mxu0 %v4311
      %v4396 = vpop.f32.mrf.mxu0
      %v4397 = vadd.f32 0.0, %v4396
      %4398 = vmatmul.f32.gmra.mxu0 %v4313
      %v4399 = vpop.f32.mrf.mxu0
      %v4400 = vadd.f32 0.0, %v4399
      %4401 = vmatmul.f32.gmra.mxu0 %v4315
      %v4402 = vpop.f32.mrf.mxu0
      %v4403 = vadd.f32 0.0, %v4402
      %4404 = vmatmul.f32.gmra.mxu0 %v4317
      %v4405 = vpop.f32.mrf.mxu0
      %v4406 = vadd.f32 0.0, %v4405
      %4407 = vmatmul.f32.gmra.mxu0 %v4319
      %v4408 = vpop.f32.mrf.mxu0
      %v4409 = vadd.f32 0.0, %v4408
      %4410 = vmatmul.f32.gmra.mxu0 %v4321
      %v4411 = vpop.f32.mrf.mxu0
      %v4412 = vadd.f32 0.0, %v4411
      %4413 = vmatmul.f32.gmra.mxu0 %v4323
      %v4414 = vpop.f32.mrf.mxu0
      %v4415 = vadd.f32 0.0, %v4414
      %4416 = vmatmul.f32.gmra.mxu0 %v4325
      %v4417 = vpop.f32.mrf.mxu0
      %v4418 = vadd.f32 0.0, %v4417
      %4419 = vmatmul.f32.gmra.mxu0 %v4327
      %v4420 = vpop.f32.mrf.mxu0
      %v4421 = vadd.f32 0.0, %v4420
      %4422 = vmatmul.f32.gmra.mxu0 %v4329
      %v4423 = vpop.f32.mrf.mxu0
      %v4424 = vadd.f32 0.0, %v4423
      %4425 = vmatmul.f32.gmra.mxu0 %v4331
      %v4426 = vpop.f32.mrf.mxu0
      %v4427 = vadd.f32 0.0, %v4426
      %4428 = vmatmul.f32.gmra.mxu0 %v4333
      %v4429 = vpop.f32.mrf.mxu0
      %v4430 = vadd.f32 0.0, %v4429
      %4431 = vmatmul.f32.gmra.mxu0 %v4335
      %v4432 = vpop.f32.mrf.mxu0
      %v4433 = vadd.f32 0.0, %v4432
      %4434 = vmatmul.f32.gmra.mxu0 %v4337
      %v4435 = vpop.f32.mrf.mxu0
      %v4436 = vadd.f32 0.0, %v4435
      %4437 = vmatmul.f32.gmra.mxu0 %v4339
      %v4438 = vpop.f32.mrf.mxu0
      %v4439 = vadd.f32 0.0, %v4438
      %4440 = vmatmul.f32.gmra.mxu0 %v4341
      %v4441 = vpop.f32.mrf.mxu0
      %v4442 = vadd.f32 0.0, %v4441
      %4443 = vmatmul.f32.gmra.mxu0 %v4343
      %v4444 = vpop.f32.mrf.mxu0
      %v4445 = vadd.f32 0.0, %v4444
      %4446 = vmatmul.f32.gmra.mxu0 %v4345
      %v4447 = vpop.f32.mrf.mxu0
      %v4448 = vadd.f32 0.0, %v4447
      %4449 = vmatmul.f32.gmra.mxu0 %v4347
      %v4450 = vpop.f32.mrf.mxu0
      %v4451 = vadd.f32 0.0, %v4450
      %4452 = vmatmul.f32.gmra.mxu0 %v4349
      %v4453 = vpop.f32.mrf.mxu0
      %v4454 = vadd.f32 0.0, %v4453
      %4455 = vmatmul.f32.gmra.mxu0 %v4351
      %v4456 = vpop.f32.mrf.mxu0
      %v4457 = vadd.f32 0.0, %v4456
      %4458 = vmatmul.f32.gmra.mxu0 %v4353
      %v4459 = vpop.f32.mrf.mxu0
      %v4460 = vadd.f32 0.0, %v4459
      %4461 = vmatmul.f32.gmra.mxu0 %v4355
      %v4462 = vpop.f32.mrf.mxu0
      %v4463 = vadd.f32 0.0, %v4462
      %4464 = vmatmul.f32.gmra.mxu0 %v4357
      %v4465 = vpop.f32.mrf.mxu0
      %v4466 = vadd.f32 0.0, %v4465
      %4467 = vmatmul.f32.gmra.mxu0 %v4359
      %v4468 = vpop.f32.mrf.mxu0
      %v4469 = vadd.f32 0.0, %v4468
      %4470 = vmatmul.f32.gmra.mxu0 %v4361
      %v4471 = vpop.f32.mrf.mxu0
      %v4472 = vadd.f32 0.0, %v4471
      %4473 = vmatmul.f32.gmra.mxu0 %v4363
      %v4474 = vpop.f32.mrf.mxu0
      %v4475 = vadd.f32 0.0, %v4474
      %4476 = vmatmul.f32.gmra.mxu0 %v4365
      %v4477 = vpop.f32.mrf.mxu0
      %v4478 = vadd.f32 0.0, %v4477
      %4479 = vmatmul.f32.gmra.mxu0 %v4367
      %v4480 = vpop.f32.mrf.mxu0
      %v4481 = vadd.f32 0.0, %v4480
      %4482 = vmatmul.f32.gmra.mxu0 %v4369
      %v4483 = vpop.f32.mrf.mxu0
      %v4484 = vadd.f32 0.0, %v4483
      %4485 = vmatmul.f32.gmra.mxu0 %v4371
      %v4486 = vpop.f32.mrf.mxu0
      %v4487 = vadd.f32 0.0, %v4486
      %4488 = vdwg.mxu0
      %v4489 = vadd.f32 %v4211, %v4394
      %v4490 = vadd.f32 %v4212, %v4397
      %v4491 = vadd.f32 %v4213, %v4400
      %v4492 = vadd.f32 %v4214, %v4403
      %v4493 = vadd.f32 %v4215, %v4406
      %v4494 = vadd.f32 %v4216, %v4409
      %v4495 = vadd.f32 %v4217, %v4412
      %v4496 = vadd.f32 %v4218, %v4415
      %v4497 = vadd.f32 %v4219, %v4418
      %v4498 = vadd.f32 %v4220, %v4421
      %v4499 = vadd.f32 %v4221, %v4424
      %v4500 = vadd.f32 %v4222, %v4427
      %v4501 = vadd.f32 %v4223, %v4430
      %v4502 = vadd.f32 %v4224, %v4433
      %v4503 = vadd.f32 %v4225, %v4436
      %v4504 = vadd.f32 %v4226, %v4439
      %v4505 = vadd.f32 %v4227, %v4442
      %v4506 = vadd.f32 %v4228, %v4445
      %v4507 = vadd.f32 %v4229, %v4448
      %v4508 = vadd.f32 %v4230, %v4451
      %v4509 = vadd.f32 %v4231, %v4454
      %v4510 = vadd.f32 %v4232, %v4457
      %v4511 = vadd.f32 %v4233, %v4460
      %v4512 = vadd.f32 %v4234, %v4463
      %v4513 = vadd.f32 %v4235, %v4466
      %v4514 = vadd.f32 %v4236, %v4469
      %v4515 = vadd.f32 %v4237, %v4472
      %v4516 = vadd.f32 %v4238, %v4475
      %v4517 = vadd.f32 %v4239, %v4478
      %v4518 = vadd.f32 %v4240, %v4481
      %v4519 = vadd.f32 %v4241, %v4484
      %v4520 = vadd.f32 %v4242, %v4487
      %s4521 = scalar_lea.vmem %s1, 60
      %v4522 = vld [vmem:[%s4521] sm:$0xf]
      %4523 = vrot.lane.b32.xlu0 %v2083, 124
      %v4524 = vpop.permute.xlu0 %4523
      %4525 = vrot.lane.b32.xlu0 %v2084, 124
      %v4526 = vpop.permute.xlu0 %4525
      %4527 = vrot.lane.b32.xlu0 %v2085, 124
      %v4528 = vpop.permute.xlu0 %4527
      %4529 = vrot.lane.b32.xlu0 %v2086, 124
      %v4530 = vpop.permute.xlu0 %4529
      %4531 = vrot.lane.b32.xlu0 %v2087, 124
      %v4532 = vpop.permute.xlu0 %4531
      %4533 = vrot.lane.b32.xlu0 %v2088, 124
      %v4534 = vpop.permute.xlu0 %4533
      %4535 = vrot.lane.b32.xlu0 %v2089, 124
      %v4536 = vpop.permute.xlu0 %4535
      %4537 = vrot.lane.b32.xlu0 %v2090, 124
      %v4538 = vpop.permute.xlu0 %4537
      %4539 = vrot.lane.b32.xlu0 %v2091, 124
      %v4540 = vpop.permute.xlu0 %4539
      %4541 = vrot.lane.b32.xlu0 %v2092, 124
      %v4542 = vpop.permute.xlu0 %4541
      %4543 = vrot.lane.b32.xlu0 %v2093, 124
      %v4544 = vpop.permute.xlu0 %4543
      %4545 = vrot.lane.b32.xlu0 %v2094, 124
      %v4546 = vpop.permute.xlu0 %4545
      %4547 = vrot.lane.b32.xlu0 %v2095, 124
      %v4548 = vpop.permute.xlu0 %4547
      %4549 = vrot.lane.b32.xlu0 %v2096, 124
      %v4550 = vpop.permute.xlu0 %4549
      %4551 = vrot.lane.b32.xlu0 %v2097, 124
      %v4552 = vpop.permute.xlu0 %4551
      %4553 = vrot.lane.b32.xlu0 %v2098, 124
      %v4554 = vpop.permute.xlu0 %4553
      %4555 = vrot.lane.b32.xlu0 %v2099, 124
      %v4556 = vpop.permute.xlu0 %4555
      %4557 = vrot.lane.b32.xlu0 %v2100, 124
      %v4558 = vpop.permute.xlu0 %4557
      %4559 = vrot.lane.b32.xlu0 %v2101, 124
      %v4560 = vpop.permute.xlu0 %4559
      %4561 = vrot.lane.b32.xlu0 %v2102, 124
      %v4562 = vpop.permute.xlu0 %4561
      %4563 = vrot.lane.b32.xlu0 %v2103, 124
      %v4564 = vpop.permute.xlu0 %4563
      %4565 = vrot.lane.b32.xlu0 %v2104, 124
      %v4566 = vpop.permute.xlu0 %4565
      %4567 = vrot.lane.b32.xlu0 %v2105, 124
      %v4568 = vpop.permute.xlu0 %4567
      %4569 = vrot.lane.b32.xlu0 %v2106, 124
      %v4570 = vpop.permute.xlu0 %4569
      %4571 = vrot.lane.b32.xlu0 %v2107, 124
      %v4572 = vpop.permute.xlu0 %4571
      %4573 = vrot.lane.b32.xlu0 %v2108, 124
      %v4574 = vpop.permute.xlu0 %4573
      %4575 = vrot.lane.b32.xlu0 %v2109, 124
      %v4576 = vpop.permute.xlu0 %4575
      %4577 = vrot.lane.b32.xlu0 %v2110, 124
      %v4578 = vpop.permute.xlu0 %4577
      %4579 = vrot.lane.b32.xlu0 %v2111, 124
      %v4580 = vpop.permute.xlu0 %4579
      %4581 = vrot.lane.b32.xlu0 %v2112, 124
      %v4582 = vpop.permute.xlu0 %4581
      %4583 = vrot.lane.b32.xlu0 %v2113, 124
      %v4584 = vpop.permute.xlu0 %4583
      %4585 = vrot.lane.b32.xlu0 %v2114, 124
      %v4586 = vpop.permute.xlu0 %4585
      %v4587 = vsel %vm265, %v4524, 0
      %v4589 = vsel %vm265, %v4526, 0
      %v4591 = vsel %vm265, %v4528, 0
      %v4593 = vsel %vm265, %v4530, 0
      %v4595 = vsel %vm265, %v4532, 0
      %v4597 = vsel %vm265, %v4534, 0
      %v4599 = vsel %vm265, %v4536, 0
      %v4601 = vsel %vm265, %v4538, 0
      %v4603 = vsel %vm265, %v4540, 0
      %v4605 = vsel %vm265, %v4542, 0
      %v4607 = vsel %vm265, %v4544, 0
      %v4609 = vsel %vm265, %v4546, 0
      %v4611 = vsel %vm265, %v4548, 0
      %v4613 = vsel %vm265, %v4550, 0
      %v4615 = vsel %vm265, %v4552, 0
      %v4617 = vsel %vm265, %v4554, 0
      %v4619 = vsel %vm265, %v4556, 0
      %v4621 = vsel %vm265, %v4558, 0
      %v4623 = vsel %vm265, %v4560, 0
      %v4625 = vsel %vm265, %v4562, 0
      %v4627 = vsel %vm265, %v4564, 0
      %v4629 = vsel %vm265, %v4566, 0
      %v4631 = vsel %vm265, %v4568, 0
      %v4633 = vsel %vm265, %v4570, 0
      %v4635 = vsel %vm265, %v4572, 0
      %v4637 = vsel %vm265, %v4574, 0
      %v4639 = vsel %vm265, %v4576, 0
      %v4641 = vsel %vm265, %v4578, 0
      %v4643 = vsel %vm265, %v4580, 0
      %v4645 = vsel %vm265, %v4582, 0
      %v4647 = vsel %vm265, %v4584, 0
      %v4649 = vsel %vm265, %v4586, 0
      %v4652 = vsel %vm362, %v4522, 0
      %4654 = vmatpush.msra.mxu0 0.0
      %4655 = vmatpush.msra.mxu0 0.0
      %4656 = vmatpush.msra.mxu0 0.0
      %4657 = vmatpush.msra.mxu0 0.0
      %4658 = vmatpush.msra.mxu0 0.0
      %4659 = vmatpush.msra.mxu0 0.0
      %4660 = vmatpush.msra.mxu0 0.0
      %4661 = vmatpush.msra.mxu0 0.0
      %4662 = vmatpush.msra.mxu0 0.0
      %4663 = vmatpush.msra.mxu0 0.0
      %4664 = vmatpush.msra.mxu0 0.0
      %4665 = vmatpush.msra.mxu0 0.0
      %4666 = vmatpush.msra.mxu0 0.0
      %4667 = vmatpush.msra.mxu0 0.0
      %4668 = vmatpush.msra.mxu0 0.0
      %4669 = vmatpush.msra.mxu0 %v4652
      %4670 = vmatmul.f32.gmra.mxu0 %v4587
      %v4671 = vpop.f32.mrf.mxu0
      %v4672 = vadd.f32 0.0, %v4671
      %4673 = vmatmul.f32.gmra.mxu0 %v4589
      %v4674 = vpop.f32.mrf.mxu0
      %v4675 = vadd.f32 0.0, %v4674
      %4676 = vmatmul.f32.gmra.mxu0 %v4591
      %v4677 = vpop.f32.mrf.mxu0
      %v4678 = vadd.f32 0.0, %v4677
      %4679 = vmatmul.f32.gmra.mxu0 %v4593
      %v4680 = vpop.f32.mrf.mxu0
      %v4681 = vadd.f32 0.0, %v4680
      %4682 = vmatmul.f32.gmra.mxu0 %v4595
      %v4683 = vpop.f32.mrf.mxu0
      %v4684 = vadd.f32 0.0, %v4683
      %4685 = vmatmul.f32.gmra.mxu0 %v4597
      %v4686 = vpop.f32.mrf.mxu0
      %v4687 = vadd.f32 0.0, %v4686
      %4688 = vmatmul.f32.gmra.mxu0 %v4599
      %v4689 = vpop.f32.mrf.mxu0
      %v4690 = vadd.f32 0.0, %v4689
      %4691 = vmatmul.f32.gmra.mxu0 %v4601
      %v4692 = vpop.f32.mrf.mxu0
      %v4693 = vadd.f32 0.0, %v4692
      %4694 = vmatmul.f32.gmra.mxu0 %v4603
      %v4695 = vpop.f32.mrf.mxu0
      %v4696 = vadd.f32 0.0, %v4695
      %4697 = vmatmul.f32.gmra.mxu0 %v4605
      %v4698 = vpop.f32.mrf.mxu0
      %v4699 = vadd.f32 0.0, %v4698
      %4700 = vmatmul.f32.gmra.mxu0 %v4607
      %v4701 = vpop.f32.mrf.mxu0
      %v4702 = vadd.f32 0.0, %v4701
      %4703 = vmatmul.f32.gmra.mxu0 %v4609
      %v4704 = vpop.f32.mrf.mxu0
      %v4705 = vadd.f32 0.0, %v4704
      %4706 = vmatmul.f32.gmra.mxu0 %v4611
      %v4707 = vpop.f32.mrf.mxu0
      %v4708 = vadd.f32 0.0, %v4707
      %4709 = vmatmul.f32.gmra.mxu0 %v4613
      %v4710 = vpop.f32.mrf.mxu0
      %v4711 = vadd.f32 0.0, %v4710
      %4712 = vmatmul.f32.gmra.mxu0 %v4615
      %v4713 = vpop.f32.mrf.mxu0
      %v4714 = vadd.f32 0.0, %v4713
      %4715 = vmatmul.f32.gmra.mxu0 %v4617
      %v4716 = vpop.f32.mrf.mxu0
      %v4717 = vadd.f32 0.0, %v4716
      %4718 = vmatmul.f32.gmra.mxu0 %v4619
      %v4719 = vpop.f32.mrf.mxu0
      %v4720 = vadd.f32 0.0, %v4719
      %4721 = vmatmul.f32.gmra.mxu0 %v4621
      %v4722 = vpop.f32.mrf.mxu0
      %v4723 = vadd.f32 0.0, %v4722
      %4724 = vmatmul.f32.gmra.mxu0 %v4623
      %v4725 = vpop.f32.mrf.mxu0
      %v4726 = vadd.f32 0.0, %v4725
      %4727 = vmatmul.f32.gmra.mxu0 %v4625
      %v4728 = vpop.f32.mrf.mxu0
      %v4729 = vadd.f32 0.0, %v4728
      %4730 = vmatmul.f32.gmra.mxu0 %v4627
      %v4731 = vpop.f32.mrf.mxu0
      %v4732 = vadd.f32 0.0, %v4731
      %4733 = vmatmul.f32.gmra.mxu0 %v4629
      %v4734 = vpop.f32.mrf.mxu0
      %v4735 = vadd.f32 0.0, %v4734
      %4736 = vmatmul.f32.gmra.mxu0 %v4631
      %v4737 = vpop.f32.mrf.mxu0
      %v4738 = vadd.f32 0.0, %v4737
      %4739 = vmatmul.f32.gmra.mxu0 %v4633
      %v4740 = vpop.f32.mrf.mxu0
      %v4741 = vadd.f32 0.0, %v4740
      %4742 = vmatmul.f32.gmra.mxu0 %v4635
      %v4743 = vpop.f32.mrf.mxu0
      %v4744 = vadd.f32 0.0, %v4743
      %4745 = vmatmul.f32.gmra.mxu0 %v4637
      %v4746 = vpop.f32.mrf.mxu0
      %v4747 = vadd.f32 0.0, %v4746
      %4748 = vmatmul.f32.gmra.mxu0 %v4639
      %v4749 = vpop.f32.mrf.mxu0
      %v4750 = vadd.f32 0.0, %v4749
      %4751 = vmatmul.f32.gmra.mxu0 %v4641
      %v4752 = vpop.f32.mrf.mxu0
      %v4753 = vadd.f32 0.0, %v4752
      %4754 = vmatmul.f32.gmra.mxu0 %v4643
      %v4755 = vpop.f32.mrf.mxu0
      %v4756 = vadd.f32 0.0, %v4755
      %4757 = vmatmul.f32.gmra.mxu0 %v4645
      %v4758 = vpop.f32.mrf.mxu0
      %v4759 = vadd.f32 0.0, %v4758
      %4760 = vmatmul.f32.gmra.mxu0 %v4647
      %v4761 = vpop.f32.mrf.mxu0
      %v4762 = vadd.f32 0.0, %v4761
      %4763 = vmatmul.f32.gmra.mxu0 %v4649
      %v4764 = vpop.f32.mrf.mxu0
      %v4765 = vadd.f32 0.0, %v4764
      %4766 = vdwg.mxu0
      %v4767 = vadd.f32 %v4489, %v4672
      %v4768 = vadd.f32 %v4490, %v4675
      %v4769 = vadd.f32 %v4491, %v4678
      %v4770 = vadd.f32 %v4492, %v4681
      %v4771 = vadd.f32 %v4493, %v4684
      %v4772 = vadd.f32 %v4494, %v4687
      %v4773 = vadd.f32 %v4495, %v4690
      %v4774 = vadd.f32 %v4496, %v4693
      %v4775 = vadd.f32 %v4497, %v4696
      %v4776 = vadd.f32 %v4498, %v4699
      %v4777 = vadd.f32 %v4499, %v4702
      %v4778 = vadd.f32 %v4500, %v4705
      %v4779 = vadd.f32 %v4501, %v4708
      %v4780 = vadd.f32 %v4502, %v4711
      %v4781 = vadd.f32 %v4503, %v4714
      %v4782 = vadd.f32 %v4504, %v4717
      %v4783 = vadd.f32 %v4505, %v4720
      %v4784 = vadd.f32 %v4506, %v4723
      %v4785 = vadd.f32 %v4507, %v4726
      %v4786 = vadd.f32 %v4508, %v4729
      %v4787 = vadd.f32 %v4509, %v4732
      %v4788 = vadd.f32 %v4510, %v4735
      %v4789 = vadd.f32 %v4511, %v4738
      %v4790 = vadd.f32 %v4512, %v4741
      %v4791 = vadd.f32 %v4513, %v4744
      %v4792 = vadd.f32 %v4514, %v4747
      %v4793 = vadd.f32 %v4515, %v4750
      %v4794 = vadd.f32 %v4516, %v4753
      %v4795 = vadd.f32 %v4517, %v4756
      %v4796 = vadd.f32 %v4518, %v4759
      %v4797 = vadd.f32 %v4519, %v4762
      %v4798 = vadd.f32 %v4520, %v4765
      %s4799 = scalar_lea.vmem %s1, 68
      %v4800 = vld [vmem:[%s4799] sm:$0xf]
      %4801 = vrot.lane.b32.xlu0 %v2361, 124
      %v4802 = vpop.permute.xlu0 %4801
      %4803 = vrot.lane.b32.xlu0 %v2362, 124
      %v4804 = vpop.permute.xlu0 %4803
      %4805 = vrot.lane.b32.xlu0 %v2363, 124
      %v4806 = vpop.permute.xlu0 %4805
      %4807 = vrot.lane.b32.xlu0 %v2364, 124
      %v4808 = vpop.permute.xlu0 %4807
      %4809 = vrot.lane.b32.xlu0 %v2365, 124
      %v4810 = vpop.permute.xlu0 %4809
      %4811 = vrot.lane.b32.xlu0 %v2366, 124
      %v4812 = vpop.permute.xlu0 %4811
      %4813 = vrot.lane.b32.xlu0 %v2367, 124
      %v4814 = vpop.permute.xlu0 %4813
      %4815 = vrot.lane.b32.xlu0 %v2368, 124
      %v4816 = vpop.permute.xlu0 %4815
      %4817 = vrot.lane.b32.xlu0 %v2369, 124
      %v4818 = vpop.permute.xlu0 %4817
      %4819 = vrot.lane.b32.xlu0 %v2370, 124
      %v4820 = vpop.permute.xlu0 %4819
      %4821 = vrot.lane.b32.xlu0 %v2371, 124
      %v4822 = vpop.permute.xlu0 %4821
      %4823 = vrot.lane.b32.xlu0 %v2372, 124
      %v4824 = vpop.permute.xlu0 %4823
      %4825 = vrot.lane.b32.xlu0 %v2373, 124
      %v4826 = vpop.permute.xlu0 %4825
      %4827 = vrot.lane.b32.xlu0 %v2374, 124
      %v4828 = vpop.permute.xlu0 %4827
      %4829 = vrot.lane.b32.xlu0 %v2375, 124
      %v4830 = vpop.permute.xlu0 %4829
      %4831 = vrot.lane.b32.xlu0 %v2376, 124
      %v4832 = vpop.permute.xlu0 %4831
      %4833 = vrot.lane.b32.xlu0 %v2377, 124
      %v4834 = vpop.permute.xlu0 %4833
      %4835 = vrot.lane.b32.xlu0 %v2378, 124
      %v4836 = vpop.permute.xlu0 %4835
      %4837 = vrot.lane.b32.xlu0 %v2379, 124
      %v4838 = vpop.permute.xlu0 %4837
      %4839 = vrot.lane.b32.xlu0 %v2380, 124
      %v4840 = vpop.permute.xlu0 %4839
      %4841 = vrot.lane.b32.xlu0 %v2381, 124
      %v4842 = vpop.permute.xlu0 %4841
      %4843 = vrot.lane.b32.xlu0 %v2382, 124
      %v4844 = vpop.permute.xlu0 %4843
      %4845 = vrot.lane.b32.xlu0 %v2383, 124
      %v4846 = vpop.permute.xlu0 %4845
      %4847 = vrot.lane.b32.xlu0 %v2384, 124
      %v4848 = vpop.permute.xlu0 %4847
      %4849 = vrot.lane.b32.xlu0 %v2385, 124
      %v4850 = vpop.permute.xlu0 %4849
      %4851 = vrot.lane.b32.xlu0 %v2386, 124
      %v4852 = vpop.permute.xlu0 %4851
      %4853 = vrot.lane.b32.xlu0 %v2387, 124
      %v4854 = vpop.permute.xlu0 %4853
      %4855 = vrot.lane.b32.xlu0 %v2388, 124
      %v4856 = vpop.permute.xlu0 %4855
      %4857 = vrot.lane.b32.xlu0 %v2389, 124
      %v4858 = vpop.permute.xlu0 %4857
      %4859 = vrot.lane.b32.xlu0 %v2390, 124
      %v4860 = vpop.permute.xlu0 %4859
      %4861 = vrot.lane.b32.xlu0 %v2391, 124
      %v4862 = vpop.permute.xlu0 %4861
      %4863 = vrot.lane.b32.xlu0 %v2392, 124
      %v4864 = vpop.permute.xlu0 %4863
      %v4865 = vsel %vm265, %v4802, 0
      %v4867 = vsel %vm265, %v4804, 0
      %v4869 = vsel %vm265, %v4806, 0
      %v4871 = vsel %vm265, %v4808, 0
      %v4873 = vsel %vm265, %v4810, 0
      %v4875 = vsel %vm265, %v4812, 0
      %v4877 = vsel %vm265, %v4814, 0
      %v4879 = vsel %vm265, %v4816, 0
      %v4881 = vsel %vm265, %v4818, 0
      %v4883 = vsel %vm265, %v4820, 0
      %v4885 = vsel %vm265, %v4822, 0
      %v4887 = vsel %vm265, %v4824, 0
      %v4889 = vsel %vm265, %v4826, 0
      %v4891 = vsel %vm265, %v4828, 0
      %v4893 = vsel %vm265, %v4830, 0
      %v4895 = vsel %vm265, %v4832, 0
      %v4897 = vsel %vm265, %v4834, 0
      %v4899 = vsel %vm265, %v4836, 0
      %v4901 = vsel %vm265, %v4838, 0
      %v4903 = vsel %vm265, %v4840, 0
      %v4905 = vsel %vm265, %v4842, 0
      %v4907 = vsel %vm265, %v4844, 0
      %v4909 = vsel %vm265, %v4846, 0
      %v4911 = vsel %vm265, %v4848, 0
      %v4913 = vsel %vm265, %v4850, 0
      %v4915 = vsel %vm265, %v4852, 0
      %v4917 = vsel %vm265, %v4854, 0
      %v4919 = vsel %vm265, %v4856, 0
      %v4921 = vsel %vm265, %v4858, 0
      %v4923 = vsel %vm265, %v4860, 0
      %v4925 = vsel %vm265, %v4862, 0
      %v4927 = vsel %vm265, %v4864, 0
      %v4930 = vsel %vm362, %v4800, 0
      %4932 = vmatpush.msra.mxu0 0.0
      %4933 = vmatpush.msra.mxu0 0.0
      %4934 = vmatpush.msra.mxu0 0.0
      %4935 = vmatpush.msra.mxu0 0.0
      %4936 = vmatpush.msra.mxu0 0.0
      %4937 = vmatpush.msra.mxu0 0.0
      %4938 = vmatpush.msra.mxu0 0.0
      %4939 = vmatpush.msra.mxu0 0.0
      %4940 = vmatpush.msra.mxu0 0.0
      %4941 = vmatpush.msra.mxu0 0.0
      %4942 = vmatpush.msra.mxu0 0.0
      %4943 = vmatpush.msra.mxu0 0.0
      %4944 = vmatpush.msra.mxu0 0.0
      %4945 = vmatpush.msra.mxu0 0.0
      %4946 = vmatpush.msra.mxu0 0.0
      %4947 = vmatpush.msra.mxu0 %v4930
      %4948 = vmatmul.f32.gmra.mxu0 %v4865
      %v4949 = vpop.f32.mrf.mxu0
      %v4950 = vadd.f32 0.0, %v4949
      %4951 = vmatmul.f32.gmra.mxu0 %v4867
      %v4952 = vpop.f32.mrf.mxu0
      %v4953 = vadd.f32 0.0, %v4952
      %4954 = vmatmul.f32.gmra.mxu0 %v4869
      %v4955 = vpop.f32.mrf.mxu0
      %v4956 = vadd.f32 0.0, %v4955
      %4957 = vmatmul.f32.gmra.mxu0 %v4871
      %v4958 = vpop.f32.mrf.mxu0
      %v4959 = vadd.f32 0.0, %v4958
      %4960 = vmatmul.f32.gmra.mxu0 %v4873
      %v4961 = vpop.f32.mrf.mxu0
      %v4962 = vadd.f32 0.0, %v4961
      %4963 = vmatmul.f32.gmra.mxu0 %v4875
      %v4964 = vpop.f32.mrf.mxu0
      %v4965 = vadd.f32 0.0, %v4964
      %4966 = vmatmul.f32.gmra.mxu0 %v4877
      %v4967 = vpop.f32.mrf.mxu0
      %v4968 = vadd.f32 0.0, %v4967
      %4969 = vmatmul.f32.gmra.mxu0 %v4879
      %v4970 = vpop.f32.mrf.mxu0
      %v4971 = vadd.f32 0.0, %v4970
      %4972 = vmatmul.f32.gmra.mxu0 %v4881
      %v4973 = vpop.f32.mrf.mxu0
      %v4974 = vadd.f32 0.0, %v4973
      %4975 = vmatmul.f32.gmra.mxu0 %v4883
      %v4976 = vpop.f32.mrf.mxu0
      %v4977 = vadd.f32 0.0, %v4976
      %4978 = vmatmul.f32.gmra.mxu0 %v4885
      %v4979 = vpop.f32.mrf.mxu0
      %v4980 = vadd.f32 0.0, %v4979
      %4981 = vmatmul.f32.gmra.mxu0 %v4887
      %v4982 = vpop.f32.mrf.mxu0
      %v4983 = vadd.f32 0.0, %v4982
      %4984 = vmatmul.f32.gmra.mxu0 %v4889
      %v4985 = vpop.f32.mrf.mxu0
      %v4986 = vadd.f32 0.0, %v4985
      %4987 = vmatmul.f32.gmra.mxu0 %v4891
      %v4988 = vpop.f32.mrf.mxu0
      %v4989 = vadd.f32 0.0, %v4988
      %4990 = vmatmul.f32.gmra.mxu0 %v4893
      %v4991 = vpop.f32.mrf.mxu0
      %v4992 = vadd.f32 0.0, %v4991
      %4993 = vmatmul.f32.gmra.mxu0 %v4895
      %v4994 = vpop.f32.mrf.mxu0
      %v4995 = vadd.f32 0.0, %v4994
      %4996 = vmatmul.f32.gmra.mxu0 %v4897
      %v4997 = vpop.f32.mrf.mxu0
      %v4998 = vadd.f32 0.0, %v4997
      %4999 = vmatmul.f32.gmra.mxu0 %v4899
      %v5000 = vpop.f32.mrf.mxu0
      %v5001 = vadd.f32 0.0, %v5000
      %5002 = vmatmul.f32.gmra.mxu0 %v4901
      %v5003 = vpop.f32.mrf.mxu0
      %v5004 = vadd.f32 0.0, %v5003
      %5005 = vmatmul.f32.gmra.mxu0 %v4903
      %v5006 = vpop.f32.mrf.mxu0
      %v5007 = vadd.f32 0.0, %v5006
      %5008 = vmatmul.f32.gmra.mxu0 %v4905
      %v5009 = vpop.f32.mrf.mxu0
      %v5010 = vadd.f32 0.0, %v5009
      %5011 = vmatmul.f32.gmra.mxu0 %v4907
      %v5012 = vpop.f32.mrf.mxu0
      %v5013 = vadd.f32 0.0, %v5012
      %5014 = vmatmul.f32.gmra.mxu0 %v4909
      %v5015 = vpop.f32.mrf.mxu0
      %v5016 = vadd.f32 0.0, %v5015
      %5017 = vmatmul.f32.gmra.mxu0 %v4911
      %v5018 = vpop.f32.mrf.mxu0
      %v5019 = vadd.f32 0.0, %v5018
      %5020 = vmatmul.f32.gmra.mxu0 %v4913
      %v5021 = vpop.f32.mrf.mxu0
      %v5022 = vadd.f32 0.0, %v5021
      %5023 = vmatmul.f32.gmra.mxu0 %v4915
      %v5024 = vpop.f32.mrf.mxu0
      %v5025 = vadd.f32 0.0, %v5024
      %5026 = vmatmul.f32.gmra.mxu0 %v4917
      %v5027 = vpop.f32.mrf.mxu0
      %v5028 = vadd.f32 0.0, %v5027
      %5029 = vmatmul.f32.gmra.mxu0 %v4919
      %v5030 = vpop.f32.mrf.mxu0
      %v5031 = vadd.f32 0.0, %v5030
      %5032 = vmatmul.f32.gmra.mxu0 %v4921
      %v5033 = vpop.f32.mrf.mxu0
      %v5034 = vadd.f32 0.0, %v5033
      %5035 = vmatmul.f32.gmra.mxu0 %v4923
      %v5036 = vpop.f32.mrf.mxu0
      %v5037 = vadd.f32 0.0, %v5036
      %5038 = vmatmul.f32.gmra.mxu0 %v4925
      %v5039 = vpop.f32.mrf.mxu0
      %v5040 = vadd.f32 0.0, %v5039
      %5041 = vmatmul.f32.gmra.mxu0 %v4927
      %v5042 = vpop.f32.mrf.mxu0
      %v5043 = vadd.f32 0.0, %v5042
      %5044 = vdwg.mxu0
      %v5045 = vadd.f32 %v4767, %v4950
      %v5046 = vadd.f32 %v4768, %v4953
      %v5047 = vadd.f32 %v4769, %v4956
      %v5048 = vadd.f32 %v4770, %v4959
      %v5049 = vadd.f32 %v4771, %v4962
      %v5050 = vadd.f32 %v4772, %v4965
      %v5051 = vadd.f32 %v4773, %v4968
      %v5052 = vadd.f32 %v4774, %v4971
      %v5053 = vadd.f32 %v4775, %v4974
      %v5054 = vadd.f32 %v4776, %v4977
      %v5055 = vadd.f32 %v4777, %v4980
      %v5056 = vadd.f32 %v4778, %v4983
      %v5057 = vadd.f32 %v4779, %v4986
      %v5058 = vadd.f32 %v4780, %v4989
      %v5059 = vadd.f32 %v4781, %v4992
      %v5060 = vadd.f32 %v4782, %v4995
      %v5061 = vadd.f32 %v4783, %v4998
      %v5062 = vadd.f32 %v4784, %v5001
      %v5063 = vadd.f32 %v4785, %v5004
      %v5064 = vadd.f32 %v4786, %v5007
      %v5065 = vadd.f32 %v4787, %v5010
      %v5066 = vadd.f32 %v4788, %v5013
      %v5067 = vadd.f32 %v4789, %v5016
      %v5068 = vadd.f32 %v4790, %v5019
      %v5069 = vadd.f32 %v4791, %v5022
      %v5070 = vadd.f32 %v4792, %v5025
      %v5071 = vadd.f32 %v4793, %v5028
      %v5072 = vadd.f32 %v4794, %v5031
      %v5073 = vadd.f32 %v4795, %v5034
      %v5074 = vadd.f32 %v4796, %v5037
      %v5075 = vadd.f32 %v4797, %v5040
      %v5076 = vadd.f32 %v4798, %v5043
      %5109 = vrot.lane.b32.xlu0 %v5045, 4
      %v5110 = vpop.permute.xlu0 %5109
      %5111 = vrot.lane.b32.xlu0 %v5046, 4
      %v5112 = vpop.permute.xlu0 %5111
      %5113 = vrot.lane.b32.xlu0 %v5047, 4
      %v5114 = vpop.permute.xlu0 %5113
      %5115 = vrot.lane.b32.xlu0 %v5048, 4
      %v5116 = vpop.permute.xlu0 %5115
      %5117 = vrot.lane.b32.xlu0 %v5049, 4
      %v5118 = vpop.permute.xlu0 %5117
      %5119 = vrot.lane.b32.xlu0 %v5050, 4
      %v5120 = vpop.permute.xlu0 %5119
      %5121 = vrot.lane.b32.xlu0 %v5051, 4
      %v5122 = vpop.permute.xlu0 %5121
      %5123 = vrot.lane.b32.xlu0 %v5052, 4
      %v5124 = vpop.permute.xlu0 %5123
      %5125 = vrot.lane.b32.xlu0 %v5053, 4
      %v5126 = vpop.permute.xlu0 %5125
      %5127 = vrot.lane.b32.xlu0 %v5054, 4
      %v5128 = vpop.permute.xlu0 %5127
      %5129 = vrot.lane.b32.xlu0 %v5055, 4
      %v5130 = vpop.permute.xlu0 %5129
      %5131 = vrot.lane.b32.xlu0 %v5056, 4
      %v5132 = vpop.permute.xlu0 %5131
      %5133 = vrot.lane.b32.xlu0 %v5057, 4
      %v5134 = vpop.permute.xlu0 %5133
      %5135 = vrot.lane.b32.xlu0 %v5058, 4
      %v5136 = vpop.permute.xlu0 %5135
      %5137 = vrot.lane.b32.xlu0 %v5059, 4
      %v5138 = vpop.permute.xlu0 %5137
      %5139 = vrot.lane.b32.xlu0 %v5060, 4
      %v5140 = vpop.permute.xlu0 %5139
      %5141 = vrot.lane.b32.xlu0 %v5061, 4
      %v5142 = vpop.permute.xlu0 %5141
      %5143 = vrot.lane.b32.xlu0 %v5062, 4
      %v5144 = vpop.permute.xlu0 %5143
      %5145 = vrot.lane.b32.xlu0 %v5063, 4
      %v5146 = vpop.permute.xlu0 %5145
      %5147 = vrot.lane.b32.xlu0 %v5064, 4
      %v5148 = vpop.permute.xlu0 %5147
      %5149 = vrot.lane.b32.xlu0 %v5065, 4
      %v5150 = vpop.permute.xlu0 %5149
      %5151 = vrot.lane.b32.xlu0 %v5066, 4
      %v5152 = vpop.permute.xlu0 %5151
      %5153 = vrot.lane.b32.xlu0 %v5067, 4
      %v5154 = vpop.permute.xlu0 %5153
      %5155 = vrot.lane.b32.xlu0 %v5068, 4
      %v5156 = vpop.permute.xlu0 %5155
      %5157 = vrot.lane.b32.xlu0 %v5069, 4
      %v5158 = vpop.permute.xlu0 %5157
      %5159 = vrot.lane.b32.xlu0 %v5070, 4
      %v5160 = vpop.permute.xlu0 %5159
      %5161 = vrot.lane.b32.xlu0 %v5071, 4
      %v5162 = vpop.permute.xlu0 %5161
      %5163 = vrot.lane.b32.xlu0 %v5072, 4
      %v5164 = vpop.permute.xlu0 %5163
      %5165 = vrot.lane.b32.xlu0 %v5073, 4
      %v5166 = vpop.permute.xlu0 %5165
      %5167 = vrot.lane.b32.xlu0 %v5074, 4
      %v5168 = vpop.permute.xlu0 %5167
      %5169 = vrot.lane.b32.xlu0 %v5075, 4
      %v5170 = vpop.permute.xlu0 %5169
      %5171 = vrot.lane.b32.xlu0 %v5076, 4
      %v5172 = vpop.permute.xlu0 %5171
      %v5205 = vsel %vm265, %v2607, %v5110
      %v5206 = vsel %vm265, %v2608, %v5112
      %v5207 = vsel %vm265, %v2609, %v5114
      %v5208 = vsel %vm265, %v2610, %v5116
      %v5209 = vsel %vm265, %v2611, %v5118
      %v5210 = vsel %vm265, %v2612, %v5120
      %v5211 = vsel %vm265, %v2613, %v5122
      %v5212 = vsel %vm265, %v2614, %v5124
      %v5213 = vsel %vm265, %v2615, %v5126
      %v5214 = vsel %vm265, %v2616, %v5128
      %v5215 = vsel %vm265, %v2617, %v5130
      %v5216 = vsel %vm265, %v2618, %v5132
      %v5217 = vsel %vm265, %v2619, %v5134
      %v5218 = vsel %vm265, %v2620, %v5136
      %v5219 = vsel %vm265, %v2621, %v5138
      %v5220 = vsel %vm265, %v2622, %v5140
      %v5221 = vsel %vm265, %v2623, %v5142
      %v5222 = vsel %vm265, %v2624, %v5144
      %v5223 = vsel %vm265, %v2625, %v5146
      %v5224 = vsel %vm265, %v2626, %v5148
      %v5225 = vsel %vm265, %v2627, %v5150
      %v5226 = vsel %vm265, %v2628, %v5152
      %v5227 = vsel %vm265, %v2629, %v5154
      %v5228 = vsel %vm265, %v2630, %v5156
      %v5229 = vsel %vm265, %v2631, %v5158
      %v5230 = vsel %vm265, %v2632, %v5160
      %v5231 = vsel %vm265, %v2633, %v5162
      %v5232 = vsel %vm265, %v2634, %v5164
      %v5233 = vsel %vm265, %v2635, %v5166
      %v5234 = vsel %vm265, %v2636, %v5168
      %v5235 = vsel %vm265, %v2637, %v5170
      %v5236 = vsel %vm265, %v2638, %v5172
      %v5237 = vld [vmem:[%s2] sm:$0x1]
      %v5239 = vperm.slane %v5237, 0
      %v5241 = vmul.f32 %v5205, %v5239
      %v5242 = vmul.f32 %v5206, %v5239
      %v5243 = vmul.f32 %v5207, %v5239
      %v5244 = vmul.f32 %v5208, %v5239
      %v5245 = vmul.f32 %v5209, %v5239
      %v5246 = vmul.f32 %v5210, %v5239
      %v5247 = vmul.f32 %v5211, %v5239
      %v5248 = vmul.f32 %v5212, %v5239
      %v5249 = vmul.f32 %v5213, %v5239
      %v5250 = vmul.f32 %v5214, %v5239
      %v5251 = vmul.f32 %v5215, %v5239
      %v5252 = vmul.f32 %v5216, %v5239
      %v5253 = vmul.f32 %v5217, %v5239
      %v5254 = vmul.f32 %v5218, %v5239
      %v5255 = vmul.f32 %v5219, %v5239
      %v5256 = vmul.f32 %v5220, %v5239
      %v5257 = vmul.f32 %v5221, %v5239
      %v5258 = vmul.f32 %v5222, %v5239
      %v5259 = vmul.f32 %v5223, %v5239
      %v5260 = vmul.f32 %v5224, %v5239
      %v5261 = vmul.f32 %v5225, %v5239
      %v5262 = vmul.f32 %v5226, %v5239
      %v5263 = vmul.f32 %v5227, %v5239
      %v5264 = vmul.f32 %v5228, %v5239
      %v5265 = vmul.f32 %v5229, %v5239
      %v5266 = vmul.f32 %v5230, %v5239
      %v5267 = vmul.f32 %v5231, %v5239
      %v5268 = vmul.f32 %v5232, %v5239
      %v5269 = vmul.f32 %v5233, %v5239
      %v5270 = vmul.f32 %v5234, %v5239
      %v5271 = vmul.f32 %v5235, %v5239
      %v5272 = vmul.f32 %v5236, %v5239
      %v5273 = vld [vmem:[%s3] sm:$0x1]
      %v5275 = vperm.slane %v5273, 0
      %v5277 = vadd.f32 %v5241, %v5275
      %v5278 = vadd.f32 %v5242, %v5275
      %v5279 = vadd.f32 %v5243, %v5275
      %v5280 = vadd.f32 %v5244, %v5275
      %v5281 = vadd.f32 %v5245, %v5275
      %v5282 = vadd.f32 %v5246, %v5275
      %v5283 = vadd.f32 %v5247, %v5275
      %v5284 = vadd.f32 %v5248, %v5275
      %v5285 = vadd.f32 %v5249, %v5275
      %v5286 = vadd.f32 %v5250, %v5275
      %v5287 = vadd.f32 %v5251, %v5275
      %v5288 = vadd.f32 %v5252, %v5275
      %v5289 = vadd.f32 %v5253, %v5275
      %v5290 = vadd.f32 %v5254, %v5275
      %v5291 = vadd.f32 %v5255, %v5275
      %v5292 = vadd.f32 %v5256, %v5275
      %v5293 = vadd.f32 %v5257, %v5275
      %v5294 = vadd.f32 %v5258, %v5275
      %v5295 = vadd.f32 %v5259, %v5275
      %v5296 = vadd.f32 %v5260, %v5275
      %v5297 = vadd.f32 %v5261, %v5275
      %v5298 = vadd.f32 %v5262, %v5275
      %v5299 = vadd.f32 %v5263, %v5275
      %v5300 = vadd.f32 %v5264, %v5275
      %v5301 = vadd.f32 %v5265, %v5275
      %v5302 = vadd.f32 %v5266, %v5275
      %v5303 = vadd.f32 %v5267, %v5275
      %v5304 = vadd.f32 %v5268, %v5275
      %v5305 = vadd.f32 %v5269, %v5275
      %v5306 = vadd.f32 %v5270, %v5275
      %v5307 = vadd.f32 %v5271, %v5275
      %v5308 = vadd.f32 %v5272, %v5275
      %v5309 = vmax.f32 %v5277, 0.0
      %v5310 = vmax.f32 %v5278, 0.0
      %v5311 = vmax.f32 %v5279, 0.0
      %v5312 = vmax.f32 %v5280, 0.0
      %v5313 = vmax.f32 %v5281, 0.0
      %v5314 = vmax.f32 %v5282, 0.0
      %v5315 = vmax.f32 %v5283, 0.0
      %v5316 = vmax.f32 %v5284, 0.0
      %v5317 = vmax.f32 %v5285, 0.0
      %v5318 = vmax.f32 %v5286, 0.0
      %v5319 = vmax.f32 %v5287, 0.0
      %v5320 = vmax.f32 %v5288, 0.0
      %v5321 = vmax.f32 %v5289, 0.0
      %v5322 = vmax.f32 %v5290, 0.0
      %v5323 = vmax.f32 %v5291, 0.0
      %v5324 = vmax.f32 %v5292, 0.0
      %v5325 = vmax.f32 %v5293, 0.0
      %v5326 = vmax.f32 %v5294, 0.0
      %v5327 = vmax.f32 %v5295, 0.0
      %v5328 = vmax.f32 %v5296, 0.0
      %v5329 = vmax.f32 %v5297, 0.0
      %v5330 = vmax.f32 %v5298, 0.0
      %v5331 = vmax.f32 %v5299, 0.0
      %v5332 = vmax.f32 %v5300, 0.0
      %v5333 = vmax.f32 %v5301, 0.0
      %v5334 = vmax.f32 %v5302, 0.0
      %v5335 = vmax.f32 %v5303, 0.0
      %v5336 = vmax.f32 %v5304, 0.0
      %v5337 = vmax.f32 %v5305, 0.0
      %v5338 = vmax.f32 %v5306, 0.0
      %v5339 = vmax.f32 %v5307, 0.0
      %v5340 = vmax.f32 %v5308, 0.0
      %vm5341 = vcmask 64512
      %5342 = vst.msk [vmem:[%s197] sm:$0xff] %vm5341, %v5309
      %5343 = vst.msk [vmem:[%s197 + $0x8] sm:$0xff] %vm5341, %v5310
      %5344 = vst.msk [vmem:[%s197 + $0x10] sm:$0xff] %vm5341, %v5311
      %5345 = vst.msk [vmem:[%s197 + $0x18] sm:$0xff] %vm5341, %v5312
      %5346 = vst.msk [vmem:[%s197 + $0x20] sm:$0xff] %vm5341, %v5313
      %5347 = vst.msk [vmem:[%s197 + $0x28] sm:$0xff] %vm5341, %v5314
      %5348 = vst.msk [vmem:[%s197 + $0x30] sm:$0xff] %vm5341, %v5315
      %5349 = vst.msk [vmem:[%s197 + $0x38] sm:$0xff] %vm5341, %v5316
      %5350 = vst.msk [vmem:[%s197 + $0x40] sm:$0xff] %vm5341, %v5317
      %5351 = vst.msk [vmem:[%s197 + $0x48] sm:$0xff] %vm5341, %v5318
      %5352 = vst.msk [vmem:[%s197 + $0x50] sm:$0xff] %vm5341, %v5319
      %5353 = vst.msk [vmem:[%s197 + $0x58] sm:$0xff] %vm5341, %v5320
      %5354 = vst.msk [vmem:[%s197 + $0x60] sm:$0xff] %vm5341, %v5321
      %5355 = vst.msk [vmem:[%s197 + $0x68] sm:$0xff] %vm5341, %v5322
      %5356 = vst.msk [vmem:[%s197 + $0x70] sm:$0xff] %vm5341, %v5323
      %5357 = vst.msk [vmem:[%s197 + $0x78] sm:$0xff] %vm5341, %v5324
      %5358 = vst.msk [vmem:[%s197 + $0x80] sm:$0xff] %vm5341, %v5325
      %5359 = vst.msk [vmem:[%s197 + $0x88] sm:$0xff] %vm5341, %v5326
      %5360 = vst.msk [vmem:[%s197 + $0x90] sm:$0xff] %vm5341, %v5327
      %5361 = vst.msk [vmem:[%s197 + $0x98] sm:$0xff] %vm5341, %v5328
      %5362 = vst.msk [vmem:[%s197 + $0xa0] sm:$0xff] %vm5341, %v5329
      %5363 = vst.msk [vmem:[%s197 + $0xa8] sm:$0xff] %vm5341, %v5330
      %5364 = vst.msk [vmem:[%s197 + $0xb0] sm:$0xff] %vm5341, %v5331
      %5365 = vst.msk [vmem:[%s197 + $0xb8] sm:$0xff] %vm5341, %v5332
      %5366 = vst.msk [vmem:[%s197 + $0xc0] sm:$0xff] %vm5341, %v5333
      %5367 = vst.msk [vmem:[%s197 + $0xc8] sm:$0xff] %vm5341, %v5334
      %5368 = vst.msk [vmem:[%s197 + $0xd0] sm:$0xff] %vm5341, %v5335
      %5369 = vst.msk [vmem:[%s197 + $0xd8] sm:$0xff] %vm5341, %v5336
      %5370 = vst.msk [vmem:[%s197 + $0xe0] sm:$0xff] %vm5341, %v5337
      %5371 = vst.msk [vmem:[%s197 + $0xe8] sm:$0xff] %vm5341, %v5338
      %5372 = vst.msk [vmem:[%s197 + $0xf0] sm:$0xff] %vm5341, %v5339
      %5373 = vst.msk [vmem:[%s197 + $0xf8] sm:$0xff] %vm5341, %v5340
      %p5374 = scmp.lt.s32.totalorder %s15, 1
      %s5375 = scalar_select %p5374, %s15, 1
      %s5376 = smul.addr %s5375, 32
      %s5377 = smul.addr %s5376, 8
      %s5378 = scalar_lea.vmem %s4, %s5377
      // Predicated region
      $region37: #{shuffle_v2_block_forward.5} parent=35 // pred_check
        %p5379 = pneg %p122
      $region38: #{shuffle_v2_block_forward.5} parent=35 // pred_check_branch
        %5381 = sbr.rel (%p5379) target = $region40
      $region39: #{shuffle_v2_block_forward.5} parent=35 // pred_region
        _
      $region40: #{shuffle_v2_block_forward.5} parent=35 // pred_fallthru
        _
    $region36: #{shuffle_v2_block_forward.5} parent=5 // pred_fallthru
      _
    %p5382 = scmp.le.s32.totalorder 2, %s10
    // Predicated region
    $region41: #{shuffle_v2_block_forward.5} parent=5 // pred_check
      %p5383 = pneg %p5382
    $region42: #{shuffle_v2_block_forward.5} parent=5 // pred_check_branch
      %5385 = sbr.rel (%p5383) target = $region44
    $region43: #{shuffle_v2_block_forward.5} parent=5 // pred_region
      %s5386 = ssub.s32 %s10, 2
      // Predicated region
      $region45: #{shuffle_v2_block_forward.5} parent=43 // pred_check
        %p5387 = pneg %p128
      $region46: #{shuffle_v2_block_forward.5} parent=43 // pred_check_branch
        %5389 = sbr.rel (%p5387) target = $region48
      $region47: #{shuffle_v2_block_forward.5} parent=43 // pred_region
        %p5390 = scmp.lt.s32.totalorder %s16, 1
        %s5391 = scalar_select %p5390, %s16, 1
        %s5392 = smul.addr %s5391, 32
        %s5393 = smul.addr %s5392, 8
        %s5394 = scalar_lea.vmem %s4, %s5393
      $region48: #{shuffle_v2_block_forward.5} parent=43 // pred_fallthru
        _
    $region44: #{shuffle_v2_block_forward.5} parent=5 // pred_fallthru
      _
  $region6: #{shuffle_v2_block_forward.5} parent=0 // loop_footer
    %s14 = sadd.s32 1, %s10
  $region7: #{shuffle_v2_block_forward.5} parent=0 // loop_footer_branch
    %9 = sbr.rel target = $region3
  $region8: #{shuffle_v2_block_forward.5} parent=0 // loop_exit
    _

</llo_original>
